<compile_context>
chip_gen: v7x
topology: tpu7x:2x2x1
jax: 0.10.0
libtpu: 0.0.40
codegen_flags: <defaults>
</compile_context>

<pallas_src>
import functools

import jax
import jax.numpy as jnp
from jax import lax
from jax.experimental import pallas as pl
from jax.experimental.pallas import tpu as pltpu

DROPOUT_P = 0.2          # matches `dropout = 0.2` in the PyTorch module
BLOCK_SIZE = 64          # matches `block_size = 64`


def _mha_kernel(seed_ref, x_ref, wqkv_ref, wo_ref, bo_ref, o_ref, heads_ref, *,
                num_heads, head_size, training, dropout_p):
    BB, T, C = x_ref.shape                       # BB batch elems per grid step
    H, D = num_heads, head_size
    HD = H * D

    x2d = x_ref[...].reshape(BB * T, C).astype(jnp.bfloat16)          # (BB*T, C)

    # --- fused, lane-dense QKV projection (scale already baked into Wq cols) ---
    qkv = jnp.dot(x2d, wqkv_ref[...],
                  preferred_element_type=jnp.float32)                 # (BB*T, 3*H*D)

    if training and dropout_p > 0.0:
        pltpu.prng_seed(seed_ref[0] + pl.program_id(0))
        thr = jnp.uint32(int(dropout_p * (2 ** 32)))
        inv_keep = 1.0 / (1.0 - dropout_p)

    # Causal mask (tril[:T,:T] == 0 -> -inf equivalent).
    row = lax.broadcasted_iota(jnp.int32, (T, T), 0)
    col = lax.broadcasted_iota(jnp.int32, (T, T), 1)
    causal = col <= row

    # --- per-(batch, head) attention on small (T, T) tiles -------------------
    for b in range(BB):                                   # static unroll (<=2)
        qkv_b = qkv[b * T:(b + 1) * T]                    # (T, 3*H*D)
        for h in range(H):                                # static unroll
            q = qkv_b[:, h * D:(h + 1) * D].astype(jnp.bfloat16)               # (T, D)
            k = qkv_b[:, HD + h * D:HD + (h + 1) * D].astype(jnp.bfloat16)     # (T, D)
            v = qkv_b[:, 2 * HD + h * D:2 * HD + (h + 1) * D].astype(jnp.bfloat16)

            # q @ k^T without materializing a transposed k.
            s = lax.dot_general(q, k, (((1,), (1,)), ((), ())),
                                preferred_element_type=jnp.float32)   # (T, T)
            s = jnp.where(causal, s, -1e30)

            m = jnp.max(s, axis=-1, keepdims=True)
            p = jnp.exp(s - m)
            l = jnp.sum(p, axis=-1, keepdims=True)
            wei = p * pl.reciprocal(l, approx=True)                   # softmax

            if training and dropout_p > 0.0:
                bits = pltpu.bitcast(pltpu.prng_random_bits(wei.shape), jnp.uint32)
                wei = jnp.where(bits >= thr, wei * inv_keep, 0.0)

            o_h = jnp.dot(wei.astype(jnp.bfloat16), v,
                          preferred_element_type=jnp.float32)          # (T, D)
            heads_ref[b * T:(b + 1) * T, h * D:(h + 1) * D] = o_h.astype(jnp.bfloat16)

    # --- fused output projection + bias --------------------------------------
    y = jnp.dot(heads_ref[...], wo_ref[...],
                preferred_element_type=jnp.float32) + bo_ref[...]      # (BB*T, C)

    if training and dropout_p > 0.0:
        bits = pltpu.bitcast(pltpu.prng_random_bits(y.shape), jnp.uint32)
        y = jnp.where(bits >= thr, y * inv_keep, 0.0)

    o_ref[...] = y.reshape(BB, T, C).astype(o_ref.dtype)


def fuse_weights(wq, wk, wv, wo, *, head_size):
    """Pack per-head weights into the kernel layout.

    wq/wk/wv: (H, n_embd, head_size); wo: (H, head_size, n_embd).
    Returns wqkv (n_embd, 3*H*head_size) bf16 with 1/sqrt(head_size) baked into
    the Wq columns (exact for head_size=64), and wo2 (H*head_size, n_embd) bf16.
    """
    H, C, D = wq.shape
    assert wk.shape == wq.shape and wv.shape == wq.shape
    assert wo.shape == (H, D, C)
    scale = 1.0 / (head_size ** 0.5)

    def to_cd(w):  # (H, C, D) -> (C, H*D), column index = h*D + d
        return jnp.transpose(w.astype(jnp.float32), (1, 0, 2)).reshape(C, H * D)

    wqkv = jnp.concatenate([to_cd(wq) * scale, to_cd(wk), to_cd(wv)],
                           axis=-1).astype(jnp.bfloat16)
    wo2 = wo.reshape(H * D, C).astype(jnp.bfloat16)
    return wqkv, wo2


def _batch_per_step(B):
    """v7x (2 TensorCores): keep one batch element per grid step so the
    'parallel' grid axis shards across cores.  Single-TC v5e/v6e: collapse the
    whole batch into one step (fewer fixed per-step costs, M=B*T MXU rows)."""
    try:
        kind = jax.devices()[0].device_kind.lower()
    except Exception:
        kind = ""
    if "v7" in kind or "7x" in kind:
        return 1
    return B


def multihead_attention_pallas(x, wqkv, wo2, bo, *, num_heads, head_size,
                               training=False, seed=0):
    """x: (B, T, n_embd) f32.  wqkv: (n_embd, 3*H*D) bf16 (from fuse_weights).
    wo2: (H*D, n_embd) bf16.  bo: (1, n_embd) f32.  Returns (B, T, n_embd)."""
    B, T, C = x.shape
    HD = num_heads * head_size
    assert wqkv.shape == (C, 3 * HD)
    assert wo2.shape == (HD, C)
    assert bo.shape == (1, C)

    bb = _batch_per_step(B)
    assert B % bb == 0
    grid = (B // bb,)

    seed_arr = jnp.array([seed], dtype=jnp.int32)
    kernel = functools.partial(_mha_kernel, num_heads=num_heads,
                               head_size=head_size, training=training,
                               dropout_p=DROPOUT_P)

    # Advisory cost estimate.
    flops = int(2 * B * T * C * 3 * HD                 # fused QKV projection
                + 4 * B * num_heads * T * T * head_size  # qk^T and wei@v
                + 2 * B * T * HD * C)                  # fused output projection
    transcendentals = int(B * num_heads * T * T)
    bytes_accessed = int(x.size * x.dtype.itemsize
                         + wqkv.size * wqkv.dtype.itemsize
                         + wo2.size * wo2.dtype.itemsize
                         + bo.size * bo.dtype.itemsize
                         + B * T * C * x.dtype.itemsize)

    out = pl.pallas_call(
        kernel,
        out_shape=jax.ShapeDtypeStruct((B, T, C), x.dtype),
        grid_spec=pltpu.PrefetchScalarGridSpec(
            num_scalar_prefetch=1,                      # dropout seed in SMEM
            grid=grid,
            in_specs=[
                pl.BlockSpec((bb, T, C), lambda i, s: (i, 0, 0)),   # x tile
                pl.BlockSpec((C, 3 * HD), lambda i, s: (0, 0)),     # Wqkv (resident)
                pl.BlockSpec((HD, C), lambda i, s: (0, 0)),         # Wproj (resident)
                pl.BlockSpec((1, C), lambda i, s: (0, 0)),          # proj bias
            ],
            out_specs=pl.BlockSpec((bb, T, C), lambda i, s: (i, 0, 0)),
            scratch_shapes=[pltpu.VMEM((bb * T, HD), jnp.bfloat16)],  # head concat
        ),
        compiler_params=pltpu.CompilerParams(
            dimension_semantics=("parallel",),
            vmem_limit_bytes=32 * 1024 * 1024),
        cost_estimate=pl.CostEstimate(flops=flops,
                                      transcendentals=transcendentals,
                                      bytes_accessed=bytes_accessed),
    )(seed_arr, x, wqkv, wo2, bo)
    return out


def init_params(key, n_embd, num_heads, head_size, w_dtype=jnp.bfloat16):
    """nn.Linear-style init (uniform +-1/sqrt(fan_in)); weights stored bf16.
    Per-head layout: wq/wk/wv (H, n_embd, head_size); wo (H, head_size, n_embd)
    is PyTorch's proj.weight (n_embd, H*head_size) transposed and split."""
    kq, kk, kv, kw, kb = jax.random.split(key, 5)
    s_in = 1.0 / (n_embd ** 0.5)
    s_pr = 1.0 / ((num_heads * head_size) ** 0.5)
    wq = jax.random.uniform(kq, (num_heads, n_embd, head_size), jnp.float32,
                            -s_in, s_in).astype(w_dtype)
    wk = jax.random.uniform(kk, (num_heads, n_embd, head_size), jnp.float32,
                            -s_in, s_in).astype(w_dtype)
    wv = jax.random.uniform(kv, (num_heads, n_embd, head_size), jnp.float32,
                            -s_in, s_in).astype(w_dtype)
    wo = jax.random.uniform(kw, (num_heads, head_size, n_embd), jnp.float32,
                            -s_pr, s_pr).astype(w_dtype)
    bo = jax.random.uniform(kb, (1, n_embd), jnp.float32, -s_pr, s_pr)
    return wq, wk, wv, wo, bo


if __name__ == "__main__":
    # Shapes consistent with the module: n_embd=384, seq=block_size=64,
    # 6 heads of size 64 (6*64 == n_embd).
    batch, seq = 2, BLOCK_SIZE
    num_heads, head_size = 6, 64
    n_embd = num_heads * head_size

    key = jax.random.PRNGKey(0)
    kx, kp = jax.random.split(key)
    x = jax.random.normal(kx, (batch, seq, n_embd), jnp.float32)
    wq, wk, wv, wo, bo = init_params(kp, n_embd, num_heads, head_size)
    wqkv, wo2 = fuse_weights(wq, wk, wv, wo, head_size=head_size)

    # Eval-mode forward (dropout = identity). Train-mode dropout is supported
    # in-kernel (training=True, TPU PRNG; not bit-identical to torch RNG).
    y = multihead_attention_pallas(x, wqkv, wo2, bo, num_heads=num_heads,
                                   head_size=head_size, training=False, seed=0)
    y = jax.block_until_ready(y)

    # Plain-JAX reference mirroring the kernel's bf16-operand / f32-accum math.
    f32, bf16 = jnp.float32, jnp.bfloat16
    xb = x.astype(bf16)
    q = jnp.einsum("btc,hcd->bhtd", xb, wq, preferred_element_type=f32)
    k = jnp.einsum("btc,hcd->bhtd", xb, wk, preferred_element_type=f32)
    v = jnp.einsum("btc,hcd->bhtd", xb, wv, preferred_element_type=f32)
    s = jnp.einsum("bhtd,bhsd->bhts", q.astype(bf16), k.astype(bf16),
                   preferred_element_type=f32) * (head_size ** -0.5)
    tril = jnp.tril(jnp.ones((seq, seq), bool))
    s = jnp.where(tril, s, -1e30)
    wei = jax.nn.softmax(s, axis=-1)
    o = jnp.einsum("bhts,bhsd->bhtd", wei.astype(bf16), v.astype(bf16),
                   preferred_element_type=f32)
    ref = jnp.einsum("bhtd,hdc->btc", o.astype(bf16), wo,
                     preferred_element_type=f32) + bo[0]

    assert y.shape == x.shape
    assert jnp.allclose(y, ref, atol=2e-2, rtol=2e-2), "mismatch vs reference"

    print("KERNEL_OK")
</pallas_src>

<mosaic_0001>
module attributes {stable_mosaic.version = 11 : i64} {
  func.func @_mha_kernel(%arg0: i32, %arg1: memref<1xi32, #tpu.memory_space<smem>>, %arg2: memref<2x64x384xf32, #tpu.memory_space<vmem>>, %arg3: memref<384x1152xbf16, #tpu.memory_space<vmem>>, %arg4: memref<384x384xbf16, #tpu.memory_space<vmem>>, %arg5: memref<1x384xf32, #tpu.memory_space<vmem>>, %arg6: memref<2x64x384xf32, #tpu.memory_space<vmem>>, %arg7: memref<128x384xbf16, #tpu.memory_space<vmem>>) attributes {dimension_semantics = [#tpu.dimension_semantics<parallel>], iteration_bounds = array<i64: 1>, scalar_prefetch = 1 : i64, scratch_operands = 1 : i64, tpu.core_type = #tpu.core_type<tc>, window_params = [{transform_indices = @transform_0, window_bounds = array<i64: 2, 64, 384>}, {pipeline_mode = #tpu.pipeline_mode<synchronous>, transform_indices = @transform_1, window_bounds = array<i64: 384, 1152>}, {pipeline_mode = #tpu.pipeline_mode<synchronous>, transform_indices = @transform_2, window_bounds = array<i64: 384, 384>}, {pipeline_mode = #tpu.pipeline_mode<synchronous>, transform_indices = @transform_3, window_bounds = array<i64: 1, 384>}, {transform_indices = @transform_4, window_bounds = array<i64: 2, 64, 384>}]} {
    %c0 = arith.constant 0 : index
    %c0_0 = arith.constant 0 : index
    %c0_1 = arith.constant 0 : index
    %0 = vector.load %arg2[%c0, %c0_0, %c0_1] : memref<2x64x384xf32, #tpu.memory_space<vmem>>, vector<2x64x384xf32>
    %1 = vector.shape_cast %0 : vector<2x64x384xf32> to vector<128x384xf32>
    %2 = arith.truncf %1 : vector<128x384xf32> to vector<128x384xbf16>
    %c0_2 = arith.constant 0 : index
    %c0_3 = arith.constant 0 : index
    %3 = vector.load %arg3[%c0_2, %c0_3] : memref<384x1152xbf16, #tpu.memory_space<vmem>>, vector<384x1152xbf16>
    %cst = arith.constant dense<0.000000e+00> : vector<128x1152xf32>
    %4 = tpu.matmul %2, %3, %cst {dimension_numbers = #tpu.dot_dimension_numbers<[1], [0], [0], [1], [0, 0, 1, 1], [], []>} : vector<128x384xbf16>, vector<384x1152xbf16>, vector<128x1152xf32> -> vector<128x1152xf32>
    %5 = tpu.iota {dimensions = array<i32: 0>} : vector<64x64xi32>
    %6 = tpu.iota {dimensions = array<i32: 1>} : vector<64x64xi32>
    %7 = arith.cmpi sle, %6, %5 : vector<64x64xi32>
    %8 = vector.extract_strided_slice %4 {offsets = [0, 0], sizes = [64, 1152], strides = [1, 1]} : vector<128x1152xf32> to vector<64x1152xf32>
    %9 = vector.extract_strided_slice %8 {offsets = [0, 0], sizes = [64, 64], strides = [1, 1]} : vector<64x1152xf32> to vector<64x64xf32>
    %10 = arith.truncf %9 : vector<64x64xf32> to vector<64x64xbf16>
    %11 = vector.extract_strided_slice %8 {offsets = [0, 384], sizes = [64, 64], strides = [1, 1]} : vector<64x1152xf32> to vector<64x64xf32>
    %12 = arith.truncf %11 : vector<64x64xf32> to vector<64x64xbf16>
    %13 = vector.extract_strided_slice %8 {offsets = [0, 768], sizes = [64, 64], strides = [1, 1]} : vector<64x1152xf32> to vector<64x64xf32>
    %14 = arith.truncf %13 : vector<64x64xf32> to vector<64x64xbf16>
    %cst_4 = arith.constant dense<0.000000e+00> : vector<64x64xf32>
    %15 = tpu.matmul %10, %12, %cst_4 {dimension_numbers = #tpu.dot_dimension_numbers<[1], [1], [0], [0], [0, 0, 1, 0], [], []>} : vector<64x64xbf16>, vector<64x64xbf16>, vector<64x64xf32> -> vector<64x64xf32>
    %cst_5 = arith.constant -1.000000e+30 : f32
    %16 = vector.broadcast %cst_5 : f32 to vector<64x64xf32>
    %17 = arith.select %7, %15, %16 : vector<64x64xi1>, vector<64x64xf32>
    %cst_6 = arith.constant dense<0xFF800000> : vector<64xf32>
    %18 = vector.multi_reduction <maximumf>, %17, %cst_6 [1] : vector<64x64xf32> to vector<64xf32>
    %19 = vector.shape_cast %18 : vector<64xf32> to vector<64x1xf32>
    %20 = vector.broadcast %19 : vector<64x1xf32> to vector<64x64xf32>
    %21 = arith.subf %17, %20 : vector<64x64xf32>
    %22 = math.exp %21 : vector<64x64xf32>
    %cst_7 = arith.constant dense<0.000000e+00> : vector<64xf32>
    %23 = vector.multi_reduction <add>, %22, %cst_7 [1] : vector<64x64xf32> to vector<64xf32>
    %24 = vector.shape_cast %23 : vector<64xf32> to vector<64x1xf32>
    %25 = tpu.reciprocal %24 {approx = true} : vector<64x1xf32> -> vector<64x1xf32>
    %26 = vector.broadcast %25 : vector<64x1xf32> to vector<64x64xf32>
    %27 = arith.mulf %22, %26 : vector<64x64xf32>
    %28 = arith.truncf %27 : vector<64x64xf32> to vector<64x64xbf16>
    %cst_8 = arith.constant dense<0.000000e+00> : vector<64x64xf32>
    %29 = tpu.matmul %28, %14, %cst_8 {dimension_numbers = #tpu.dot_dimension_numbers<[1], [0], [0], [1], [0, 0, 1, 1], [], []>} : vector<64x64xbf16>, vector<64x64xbf16>, vector<64x64xf32> -> vector<64x64xf32>
    %30 = arith.truncf %29 : vector<64x64xf32> to vector<64x64xbf16>
    %c0_9 = arith.constant 0 : index
    %c0_10 = arith.constant 0 : index
    %31 = vector.load %arg7[%c0_9, %c0_10] : memref<128x384xbf16, #tpu.memory_space<vmem>>, vector<64x64xbf16>
    tpu.vector_store %arg7[%c0_9, %c0_10], %30 {strides = array<i32>} : memref<128x384xbf16, #tpu.memory_space<vmem>>, vector<64x64xbf16>,
    %32 = vector.extract_strided_slice %8 {offsets = [0, 64], sizes = [64, 64], strides = [1, 1]} : vector<64x1152xf32> to vector<64x64xf32>
    %33 = arith.truncf %32 : vector<64x64xf32> to vector<64x64xbf16>
    %34 = vector.extract_strided_slice %8 {offsets = [0, 448], sizes = [64, 64], strides = [1, 1]} : vector<64x1152xf32> to vector<64x64xf32>
    %35 = arith.truncf %34 : vector<64x64xf32> to vector<64x64xbf16>
    %36 = vector.extract_strided_slice %8 {offsets = [0, 832], sizes = [64, 64], strides = [1, 1]} : vector<64x1152xf32> to vector<64x64xf32>
    %37 = arith.truncf %36 : vector<64x64xf32> to vector<64x64xbf16>
    %cst_11 = arith.constant dense<0.000000e+00> : vector<64x64xf32>
    %38 = tpu.matmul %33, %35, %cst_11 {dimension_numbers = #tpu.dot_dimension_numbers<[1], [1], [0], [0], [0, 0, 1, 0], [], []>} : vector<64x64xbf16>, vector<64x64xbf16>, vector<64x64xf32> -> vector<64x64xf32>
    %cst_12 = arith.constant -1.000000e+30 : f32
    %39 = vector.broadcast %cst_12 : f32 to vector<64x64xf32>
    %40 = arith.select %7, %38, %39 : vector<64x64xi1>, vector<64x64xf32>
    %cst_13 = arith.constant dense<0xFF800000> : vector<64xf32>
    %41 = vector.multi_reduction <maximumf>, %40, %cst_13 [1] : vector<64x64xf32> to vector<64xf32>
    %42 = vector.shape_cast %41 : vector<64xf32> to vector<64x1xf32>
    %43 = vector.broadcast %42 : vector<64x1xf32> to vector<64x64xf32>
    %44 = arith.subf %40, %43 : vector<64x64xf32>
    %45 = math.exp %44 : vector<64x64xf32>
    %cst_14 = arith.constant dense<0.000000e+00> : vector<64xf32>
    %46 = vector.multi_reduction <add>, %45, %cst_14 [1] : vector<64x64xf32> to vector<64xf32>
    %47 = vector.shape_cast %46 : vector<64xf32> to vector<64x1xf32>
    %48 = tpu.reciprocal %47 {approx = true} : vector<64x1xf32> -> vector<64x1xf32>
    %49 = vector.broadcast %48 : vector<64x1xf32> to vector<64x64xf32>
    %50 = arith.mulf %45, %49 : vector<64x64xf32>
    %51 = arith.truncf %50 : vector<64x64xf32> to vector<64x64xbf16>
    %cst_15 = arith.constant dense<0.000000e+00> : vector<64x64xf32>
    %52 = tpu.matmul %51, %37, %cst_15 {dimension_numbers = #tpu.dot_dimension_numbers<[1], [0], [0], [1], [0, 0, 1, 1], [], []>} : vector<64x64xbf16>, vector<64x64xbf16>, vector<64x64xf32> -> vector<64x64xf32>
    %53 = arith.truncf %52 : vector<64x64xf32> to vector<64x64xbf16>
    %c0_16 = arith.constant 0 : index
    %c64 = arith.constant 64 : index
    %54 = vector.load %arg7[%c0_16, %c64] : memref<128x384xbf16, #tpu.memory_space<vmem>>, vector<64x64xbf16>
    tpu.vector_store %arg7[%c0_16, %c64], %53 {strides = array<i32>} : memref<128x384xbf16, #tpu.memory_space<vmem>>, vector<64x64xbf16>,
    %55 = vector.extract_strided_slice %8 {offsets = [0, 128], sizes = [64, 64], strides = [1, 1]} : vector<64x1152xf32> to vector<64x64xf32>
    %56 = arith.truncf %55 : vector<64x64xf32> to vector<64x64xbf16>
    %57 = vector.extract_strided_slice %8 {offsets = [0, 512], sizes = [64, 64], strides = [1, 1]} : vector<64x1152xf32> to vector<64x64xf32>
    %58 = arith.truncf %57 : vector<64x64xf32> to vector<64x64xbf16>
    %59 = vector.extract_strided_slice %8 {offsets = [0, 896], sizes = [64, 64], strides = [1, 1]} : vector<64x1152xf32> to vector<64x64xf32>
    %60 = arith.truncf %59 : vector<64x64xf32> to vector<64x64xbf16>
    %cst_17 = arith.constant dense<0.000000e+00> : vector<64x64xf32>
    %61 = tpu.matmul %56, %58, %cst_17 {dimension_numbers = #tpu.dot_dimension_numbers<[1], [1], [0], [0], [0, 0, 1, 0], [], []>} : vector<64x64xbf16>, vector<64x64xbf16>, vector<64x64xf32> -> vector<64x64xf32>
    %cst_18 = arith.constant -1.000000e+30 : f32
    %62 = vector.broadcast %cst_18 : f32 to vector<64x64xf32>
    %63 = arith.select %7, %61, %62 : vector<64x64xi1>, vector<64x64xf32>
    %cst_19 = arith.constant dense<0xFF800000> : vector<64xf32>
    %64 = vector.multi_reduction <maximumf>, %63, %cst_19 [1] : vector<64x64xf32> to vector<64xf32>
    %65 = vector.shape_cast %64 : vector<64xf32> to vector<64x1xf32>
    %66 = vector.broadcast %65 : vector<64x1xf32> to vector<64x64xf32>
    %67 = arith.subf %63, %66 : vector<64x64xf32>
    %68 = math.exp %67 : vector<64x64xf32>
    %cst_20 = arith.constant dense<0.000000e+00> : vector<64xf32>
    %69 = vector.multi_reduction <add>, %68, %cst_20 [1] : vector<64x64xf32> to vector<64xf32>
    %70 = vector.shape_cast %69 : vector<64xf32> to vector<64x1xf32>
    %71 = tpu.reciprocal %70 {approx = true} : vector<64x1xf32> -> vector<64x1xf32>
    %72 = vector.broadcast %71 : vector<64x1xf32> to vector<64x64xf32>
    %73 = arith.mulf %68, %72 : vector<64x64xf32>
    %74 = arith.truncf %73 : vector<64x64xf32> to vector<64x64xbf16>
    %cst_21 = arith.constant dense<0.000000e+00> : vector<64x64xf32>
    %75 = tpu.matmul %74, %60, %cst_21 {dimension_numbers = #tpu.dot_dimension_numbers<[1], [0], [0], [1], [0, 0, 1, 1], [], []>} : vector<64x64xbf16>, vector<64x64xbf16>, vector<64x64xf32> -> vector<64x64xf32>
    %76 = arith.truncf %75 : vector<64x64xf32> to vector<64x64xbf16>
    %c0_22 = arith.constant 0 : index
    %c128 = arith.constant 128 : index
    %77 = vector.load %arg7[%c0_22, %c128] : memref<128x384xbf16, #tpu.memory_space<vmem>>, vector<64x64xbf16>
    tpu.vector_store %arg7[%c0_22, %c128], %76 {strides = array<i32>} : memref<128x384xbf16, #tpu.memory_space<vmem>>, vector<64x64xbf16>,
    %78 = vector.extract_strided_slice %8 {offsets = [0, 192], sizes = [64, 64], strides = [1, 1]} : vector<64x1152xf32> to vector<64x64xf32>
    %79 = arith.truncf %78 : vector<64x64xf32> to vector<64x64xbf16>
    %80 = vector.extract_strided_slice %8 {offsets = [0, 576], sizes = [64, 64], strides = [1, 1]} : vector<64x1152xf32> to vector<64x64xf32>
    %81 = arith.truncf %80 : vector<64x64xf32> to vector<64x64xbf16>
    %82 = vector.extract_strided_slice %8 {offsets = [0, 960], sizes = [64, 64], strides = [1, 1]} : vector<64x1152xf32> to vector<64x64xf32>
    %83 = arith.truncf %82 : vector<64x64xf32> to vector<64x64xbf16>
    %cst_23 = arith.constant dense<0.000000e+00> : vector<64x64xf32>
    %84 = tpu.matmul %79, %81, %cst_23 {dimension_numbers = #tpu.dot_dimension_numbers<[1], [1], [0], [0], [0, 0, 1, 0], [], []>} : vector<64x64xbf16>, vector<64x64xbf16>, vector<64x64xf32> -> vector<64x64xf32>
    %cst_24 = arith.constant -1.000000e+30 : f32
    %85 = vector.broadcast %cst_24 : f32 to vector<64x64xf32>
    %86 = arith.select %7, %84, %85 : vector<64x64xi1>, vector<64x64xf32>
    %cst_25 = arith.constant dense<0xFF800000> : vector<64xf32>
    %87 = vector.multi_reduction <maximumf>, %86, %cst_25 [1] : vector<64x64xf32> to vector<64xf32>
    %88 = vector.shape_cast %87 : vector<64xf32> to vector<64x1xf32>
    %89 = vector.broadcast %88 : vector<64x1xf32> to vector<64x64xf32>
    %90 = arith.subf %86, %89 : vector<64x64xf32>
    %91 = math.exp %90 : vector<64x64xf32>
    %cst_26 = arith.constant dense<0.000000e+00> : vector<64xf32>
    %92 = vector.multi_reduction <add>, %91, %cst_26 [1] : vector<64x64xf32> to vector<64xf32>
    %93 = vector.shape_cast %92 : vector<64xf32> to vector<64x1xf32>
    %94 = tpu.reciprocal %93 {approx = true} : vector<64x1xf32> -> vector<64x1xf32>
    %95 = vector.broadcast %94 : vector<64x1xf32> to vector<64x64xf32>
    %96 = arith.mulf %91, %95 : vector<64x64xf32>
    %97 = arith.truncf %96 : vector<64x64xf32> to vector<64x64xbf16>
    %cst_27 = arith.constant dense<0.000000e+00> : vector<64x64xf32>
    %98 = tpu.matmul %97, %83, %cst_27 {dimension_numbers = #tpu.dot_dimension_numbers<[1], [0], [0], [1], [0, 0, 1, 1], [], []>} : vector<64x64xbf16>, vector<64x64xbf16>, vector<64x64xf32> -> vector<64x64xf32>
    %99 = arith.truncf %98 : vector<64x64xf32> to vector<64x64xbf16>
    %c0_28 = arith.constant 0 : index
    %c192 = arith.constant 192 : index
    %100 = vector.load %arg7[%c0_28, %c192] : memref<128x384xbf16, #tpu.memory_space<vmem>>, vector<64x64xbf16>
    tpu.vector_store %arg7[%c0_28, %c192], %99 {strides = array<i32>} : memref<128x384xbf16, #tpu.memory_space<vmem>>, vector<64x64xbf16>,
    %101 = vector.extract_strided_slice %8 {offsets = [0, 256], sizes = [64, 64], strides = [1, 1]} : vector<64x1152xf32> to vector<64x64xf32>
    %102 = arith.truncf %101 : vector<64x64xf32> to vector<64x64xbf16>
    %103 = vector.extract_strided_slice %8 {offsets = [0, 640], sizes = [64, 64], strides = [1, 1]} : vector<64x1152xf32> to vector<64x64xf32>
    %104 = arith.truncf %103 : vector<64x64xf32> to vector<64x64xbf16>
    %105 = vector.extract_strided_slice %8 {offsets = [0, 1024], sizes = [64, 64], strides = [1, 1]} : vector<64x1152xf32> to vector<64x64xf32>
    %106 = arith.truncf %105 : vector<64x64xf32> to vector<64x64xbf16>
    %cst_29 = arith.constant dense<0.000000e+00> : vector<64x64xf32>
    %107 = tpu.matmul %102, %104, %cst_29 {dimension_numbers = #tpu.dot_dimension_numbers<[1], [1], [0], [0], [0, 0, 1, 0], [], []>} : vector<64x64xbf16>, vector<64x64xbf16>, vector<64x64xf32> -> vector<64x64xf32>
    %cst_30 = arith.constant -1.000000e+30 : f32
    %108 = vector.broadcast %cst_30 : f32 to vector<64x64xf32>
    %109 = arith.select %7, %107, %108 : vector<64x64xi1>, vector<64x64xf32>
    %cst_31 = arith.constant dense<0xFF800000> : vector<64xf32>
    %110 = vector.multi_reduction <maximumf>, %109, %cst_31 [1] : vector<64x64xf32> to vector<64xf32>
    %111 = vector.shape_cast %110 : vector<64xf32> to vector<64x1xf32>
    %112 = vector.broadcast %111 : vector<64x1xf32> to vector<64x64xf32>
    %113 = arith.subf %109, %112 : vector<64x64xf32>
    %114 = math.exp %113 : vector<64x64xf32>
    %cst_32 = arith.constant dense<0.000000e+00> : vector<64xf32>
    %115 = vector.multi_reduction <add>, %114, %cst_32 [1] : vector<64x64xf32> to vector<64xf32>
    %116 = vector.shape_cast %115 : vector<64xf32> to vector<64x1xf32>
    %117 = tpu.reciprocal %116 {approx = true} : vector<64x1xf32> -> vector<64x1xf32>
    %118 = vector.broadcast %117 : vector<64x1xf32> to vector<64x64xf32>
    %119 = arith.mulf %114, %118 : vector<64x64xf32>
    %120 = arith.truncf %119 : vector<64x64xf32> to vector<64x64xbf16>
    %cst_33 = arith.constant dense<0.000000e+00> : vector<64x64xf32>
    %121 = tpu.matmul %120, %106, %cst_33 {dimension_numbers = #tpu.dot_dimension_numbers<[1], [0], [0], [1], [0, 0, 1, 1], [], []>} : vector<64x64xbf16>, vector<64x64xbf16>, vector<64x64xf32> -> vector<64x64xf32>
    %122 = arith.truncf %121 : vector<64x64xf32> to vector<64x64xbf16>
    %c0_34 = arith.constant 0 : index
    %c256 = arith.constant 256 : index
    %123 = vector.load %arg7[%c0_34, %c256] : memref<128x384xbf16, #tpu.memory_space<vmem>>, vector<64x64xbf16>
    tpu.vector_store %arg7[%c0_34, %c256], %122 {strides = array<i32>} : memref<128x384xbf16, #tpu.memory_space<vmem>>, vector<64x64xbf16>,
    %124 = vector.extract_strided_slice %8 {offsets = [0, 320], sizes = [64, 64], strides = [1, 1]} : vector<64x1152xf32> to vector<64x64xf32>
    %125 = arith.truncf %124 : vector<64x64xf32> to vector<64x64xbf16>
    %126 = vector.extract_strided_slice %8 {offsets = [0, 704], sizes = [64, 64], strides = [1, 1]} : vector<64x1152xf32> to vector<64x64xf32>
    %127 = arith.truncf %126 : vector<64x64xf32> to vector<64x64xbf16>
    %128 = vector.extract_strided_slice %8 {offsets = [0, 1088], sizes = [64, 64], strides = [1, 1]} : vector<64x1152xf32> to vector<64x64xf32>
    %129 = arith.truncf %128 : vector<64x64xf32> to vector<64x64xbf16>
    %cst_35 = arith.constant dense<0.000000e+00> : vector<64x64xf32>
    %130 = tpu.matmul %125, %127, %cst_35 {dimension_numbers = #tpu.dot_dimension_numbers<[1], [1], [0], [0], [0, 0, 1, 0], [], []>} : vector<64x64xbf16>, vector<64x64xbf16>, vector<64x64xf32> -> vector<64x64xf32>
    %cst_36 = arith.constant -1.000000e+30 : f32
    %131 = vector.broadcast %cst_36 : f32 to vector<64x64xf32>
    %132 = arith.select %7, %130, %131 : vector<64x64xi1>, vector<64x64xf32>
    %cst_37 = arith.constant dense<0xFF800000> : vector<64xf32>
    %133 = vector.multi_reduction <maximumf>, %132, %cst_37 [1] : vector<64x64xf32> to vector<64xf32>
    %134 = vector.shape_cast %133 : vector<64xf32> to vector<64x1xf32>
    %135 = vector.broadcast %134 : vector<64x1xf32> to vector<64x64xf32>
    %136 = arith.subf %132, %135 : vector<64x64xf32>
    %137 = math.exp %136 : vector<64x64xf32>
    %cst_38 = arith.constant dense<0.000000e+00> : vector<64xf32>
    %138 = vector.multi_reduction <add>, %137, %cst_38 [1] : vector<64x64xf32> to vector<64xf32>
    %139 = vector.shape_cast %138 : vector<64xf32> to vector<64x1xf32>
    %140 = tpu.reciprocal %139 {approx = true} : vector<64x1xf32> -> vector<64x1xf32>
    %141 = vector.broadcast %140 : vector<64x1xf32> to vector<64x64xf32>
    %142 = arith.mulf %137, %141 : vector<64x64xf32>
    %143 = arith.truncf %142 : vector<64x64xf32> to vector<64x64xbf16>
    %cst_39 = arith.constant dense<0.000000e+00> : vector<64x64xf32>
    %144 = tpu.matmul %143, %129, %cst_39 {dimension_numbers = #tpu.dot_dimension_numbers<[1], [0], [0], [1], [0, 0, 1, 1], [], []>} : vector<64x64xbf16>, vector<64x64xbf16>, vector<64x64xf32> -> vector<64x64xf32>
    %145 = arith.truncf %144 : vector<64x64xf32> to vector<64x64xbf16>
    %c0_40 = arith.constant 0 : index
    %c320 = arith.constant 320 : index
    %146 = vector.load %arg7[%c0_40, %c320] : memref<128x384xbf16, #tpu.memory_space<vmem>>, vector<64x64xbf16>
    tpu.vector_store %arg7[%c0_40, %c320], %145 {strides = array<i32>} : memref<128x384xbf16, #tpu.memory_space<vmem>>, vector<64x64xbf16>,
    %147 = vector.extract_strided_slice %4 {offsets = [64, 0], sizes = [64, 1152], strides = [1, 1]} : vector<128x1152xf32> to vector<64x1152xf32>
    %148 = vector.extract_strided_slice %147 {offsets = [0, 0], sizes = [64, 64], strides = [1, 1]} : vector<64x1152xf32> to vector<64x64xf32>
    %149 = arith.truncf %148 : vector<64x64xf32> to vector<64x64xbf16>
    %150 = vector.extract_strided_slice %147 {offsets = [0, 384], sizes = [64, 64], strides = [1, 1]} : vector<64x1152xf32> to vector<64x64xf32>
    %151 = arith.truncf %150 : vector<64x64xf32> to vector<64x64xbf16>
    %152 = vector.extract_strided_slice %147 {offsets = [0, 768], sizes = [64, 64], strides = [1, 1]} : vector<64x1152xf32> to vector<64x64xf32>
    %153 = arith.truncf %152 : vector<64x64xf32> to vector<64x64xbf16>
    %cst_41 = arith.constant dense<0.000000e+00> : vector<64x64xf32>
    %154 = tpu.matmul %149, %151, %cst_41 {dimension_numbers = #tpu.dot_dimension_numbers<[1], [1], [0], [0], [0, 0, 1, 0], [], []>} : vector<64x64xbf16>, vector<64x64xbf16>, vector<64x64xf32> -> vector<64x64xf32>
    %cst_42 = arith.constant -1.000000e+30 : f32
    %155 = vector.broadcast %cst_42 : f32 to vector<64x64xf32>
    %156 = arith.select %7, %154, %155 : vector<64x64xi1>, vector<64x64xf32>
    %cst_43 = arith.constant dense<0xFF800000> : vector<64xf32>
    %157 = vector.multi_reduction <maximumf>, %156, %cst_43 [1] : vector<64x64xf32> to vector<64xf32>
    %158 = vector.shape_cast %157 : vector<64xf32> to vector<64x1xf32>
    %159 = vector.broadcast %158 : vector<64x1xf32> to vector<64x64xf32>
    %160 = arith.subf %156, %159 : vector<64x64xf32>
    %161 = math.exp %160 : vector<64x64xf32>
    %cst_44 = arith.constant dense<0.000000e+00> : vector<64xf32>
    %162 = vector.multi_reduction <add>, %161, %cst_44 [1] : vector<64x64xf32> to vector<64xf32>
    %163 = vector.shape_cast %162 : vector<64xf32> to vector<64x1xf32>
    %164 = tpu.reciprocal %163 {approx = true} : vector<64x1xf32> -> vector<64x1xf32>
    %165 = vector.broadcast %164 : vector<64x1xf32> to vector<64x64xf32>
    %166 = arith.mulf %161, %165 : vector<64x64xf32>
    %167 = arith.truncf %166 : vector<64x64xf32> to vector<64x64xbf16>
    %cst_45 = arith.constant dense<0.000000e+00> : vector<64x64xf32>
    %168 = tpu.matmul %167, %153, %cst_45 {dimension_numbers = #tpu.dot_dimension_numbers<[1], [0], [0], [1], [0, 0, 1, 1], [], []>} : vector<64x64xbf16>, vector<64x64xbf16>, vector<64x64xf32> -> vector<64x64xf32>
    %169 = arith.truncf %168 : vector<64x64xf32> to vector<64x64xbf16>
    %c64_46 = arith.constant 64 : index
    %c0_47 = arith.constant 0 : index
    %170 = vector.load %arg7[%c64_46, %c0_47] : memref<128x384xbf16, #tpu.memory_space<vmem>>, vector<64x64xbf16>
    tpu.vector_store %arg7[%c64_46, %c0_47], %169 {strides = array<i32>} : memref<128x384xbf16, #tpu.memory_space<vmem>>, vector<64x64xbf16>,
    %171 = vector.extract_strided_slice %147 {offsets = [0, 64], sizes = [64, 64], strides = [1, 1]} : vector<64x1152xf32> to vector<64x64xf32>
    %172 = arith.truncf %171 : vector<64x64xf32> to vector<64x64xbf16>
    %173 = vector.extract_strided_slice %147 {offsets = [0, 448], sizes = [64, 64], strides = [1, 1]} : vector<64x1152xf32> to vector<64x64xf32>
    %174 = arith.truncf %173 : vector<64x64xf32> to vector<64x64xbf16>
    %175 = vector.extract_strided_slice %147 {offsets = [0, 832], sizes = [64, 64], strides = [1, 1]} : vector<64x1152xf32> to vector<64x64xf32>
    %176 = arith.truncf %175 : vector<64x64xf32> to vector<64x64xbf16>
    %cst_48 = arith.constant dense<0.000000e+00> : vector<64x64xf32>
    %177 = tpu.matmul %172, %174, %cst_48 {dimension_numbers = #tpu.dot_dimension_numbers<[1], [1], [0], [0], [0, 0, 1, 0], [], []>} : vector<64x64xbf16>, vector<64x64xbf16>, vector<64x64xf32> -> vector<64x64xf32>
    %cst_49 = arith.constant -1.000000e+30 : f32
    %178 = vector.broadcast %cst_49 : f32 to vector<64x64xf32>
    %179 = arith.select %7, %177, %178 : vector<64x64xi1>, vector<64x64xf32>
    %cst_50 = arith.constant dense<0xFF800000> : vector<64xf32>
    %180 = vector.multi_reduction <maximumf>, %179, %cst_50 [1] : vector<64x64xf32> to vector<64xf32>
    %181 = vector.shape_cast %180 : vector<64xf32> to vector<64x1xf32>
    %182 = vector.broadcast %181 : vector<64x1xf32> to vector<64x64xf32>
    %183 = arith.subf %179, %182 : vector<64x64xf32>
    %184 = math.exp %183 : vector<64x64xf32>
    %cst_51 = arith.constant dense<0.000000e+00> : vector<64xf32>
    %185 = vector.multi_reduction <add>, %184, %cst_51 [1] : vector<64x64xf32> to vector<64xf32>
    %186 = vector.shape_cast %185 : vector<64xf32> to vector<64x1xf32>
    %187 = tpu.reciprocal %186 {approx = true} : vector<64x1xf32> -> vector<64x1xf32>
    %188 = vector.broadcast %187 : vector<64x1xf32> to vector<64x64xf32>
    %189 = arith.mulf %184, %188 : vector<64x64xf32>
    %190 = arith.truncf %189 : vector<64x64xf32> to vector<64x64xbf16>
    %cst_52 = arith.constant dense<0.000000e+00> : vector<64x64xf32>
    %191 = tpu.matmul %190, %176, %cst_52 {dimension_numbers = #tpu.dot_dimension_numbers<[1], [0], [0], [1], [0, 0, 1, 1], [], []>} : vector<64x64xbf16>, vector<64x64xbf16>, vector<64x64xf32> -> vector<64x64xf32>
    %192 = arith.truncf %191 : vector<64x64xf32> to vector<64x64xbf16>
    %c64_53 = arith.constant 64 : index
    %c64_54 = arith.constant 64 : index
    %193 = vector.load %arg7[%c64_53, %c64_54] : memref<128x384xbf16, #tpu.memory_space<vmem>>, vector<64x64xbf16>
    tpu.vector_store %arg7[%c64_53, %c64_54], %192 {strides = array<i32>} : memref<128x384xbf16, #tpu.memory_space<vmem>>, vector<64x64xbf16>,
    %194 = vector.extract_strided_slice %147 {offsets = [0, 128], sizes = [64, 64], strides = [1, 1]} : vector<64x1152xf32> to vector<64x64xf32>
    %195 = arith.truncf %194 : vector<64x64xf32> to vector<64x64xbf16>
    %196 = vector.extract_strided_slice %147 {offsets = [0, 512], sizes = [64, 64], strides = [1, 1]} : vector<64x1152xf32> to vector<64x64xf32>
    %197 = arith.truncf %196 : vector<64x64xf32> to vector<64x64xbf16>
    %198 = vector.extract_strided_slice %147 {offsets = [0, 896], sizes = [64, 64], strides = [1, 1]} : vector<64x1152xf32> to vector<64x64xf32>
    %199 = arith.truncf %198 : vector<64x64xf32> to vector<64x64xbf16>
    %cst_55 = arith.constant dense<0.000000e+00> : vector<64x64xf32>
    %200 = tpu.matmul %195, %197, %cst_55 {dimension_numbers = #tpu.dot_dimension_numbers<[1], [1], [0], [0], [0, 0, 1, 0], [], []>} : vector<64x64xbf16>, vector<64x64xbf16>, vector<64x64xf32> -> vector<64x64xf32>
    %cst_56 = arith.constant -1.000000e+30 : f32
    %201 = vector.broadcast %cst_56 : f32 to vector<64x64xf32>
    %202 = arith.select %7, %200, %201 : vector<64x64xi1>, vector<64x64xf32>
    %cst_57 = arith.constant dense<0xFF800000> : vector<64xf32>
    %203 = vector.multi_reduction <maximumf>, %202, %cst_57 [1] : vector<64x64xf32> to vector<64xf32>
    %204 = vector.shape_cast %203 : vector<64xf32> to vector<64x1xf32>
    %205 = vector.broadcast %204 : vector<64x1xf32> to vector<64x64xf32>
    %206 = arith.subf %202, %205 : vector<64x64xf32>
    %207 = math.exp %206 : vector<64x64xf32>
    %cst_58 = arith.constant dense<0.000000e+00> : vector<64xf32>
    %208 = vector.multi_reduction <add>, %207, %cst_58 [1] : vector<64x64xf32> to vector<64xf32>
    %209 = vector.shape_cast %208 : vector<64xf32> to vector<64x1xf32>
    %210 = tpu.reciprocal %209 {approx = true} : vector<64x1xf32> -> vector<64x1xf32>
    %211 = vector.broadcast %210 : vector<64x1xf32> to vector<64x64xf32>
    %212 = arith.mulf %207, %211 : vector<64x64xf32>
    %213 = arith.truncf %212 : vector<64x64xf32> to vector<64x64xbf16>
    %cst_59 = arith.constant dense<0.000000e+00> : vector<64x64xf32>
    %214 = tpu.matmul %213, %199, %cst_59 {dimension_numbers = #tpu.dot_dimension_numbers<[1], [0], [0], [1], [0, 0, 1, 1], [], []>} : vector<64x64xbf16>, vector<64x64xbf16>, vector<64x64xf32> -> vector<64x64xf32>
    %215 = arith.truncf %214 : vector<64x64xf32> to vector<64x64xbf16>
    %c64_60 = arith.constant 64 : index
    %c128_61 = arith.constant 128 : index
    %216 = vector.load %arg7[%c64_60, %c128_61] : memref<128x384xbf16, #tpu.memory_space<vmem>>, vector<64x64xbf16>
    tpu.vector_store %arg7[%c64_60, %c128_61], %215 {strides = array<i32>} : memref<128x384xbf16, #tpu.memory_space<vmem>>, vector<64x64xbf16>,
    %217 = vector.extract_strided_slice %147 {offsets = [0, 192], sizes = [64, 64], strides = [1, 1]} : vector<64x1152xf32> to vector<64x64xf32>
    %218 = arith.truncf %217 : vector<64x64xf32> to vector<64x64xbf16>
    %219 = vector.extract_strided_slice %147 {offsets = [0, 576], sizes = [64, 64], strides = [1, 1]} : vector<64x1152xf32> to vector<64x64xf32>
    %220 = arith.truncf %219 : vector<64x64xf32> to vector<64x64xbf16>
    %221 = vector.extract_strided_slice %147 {offsets = [0, 960], sizes = [64, 64], strides = [1, 1]} : vector<64x1152xf32> to vector<64x64xf32>
    %222 = arith.truncf %221 : vector<64x64xf32> to vector<64x64xbf16>
    %cst_62 = arith.constant dense<0.000000e+00> : vector<64x64xf32>
    %223 = tpu.matmul %218, %220, %cst_62 {dimension_numbers = #tpu.dot_dimension_numbers<[1], [1], [0], [0], [0, 0, 1, 0], [], []>} : vector<64x64xbf16>, vector<64x64xbf16>, vector<64x64xf32> -> vector<64x64xf32>
    %cst_63 = arith.constant -1.000000e+30 : f32
    %224 = vector.broadcast %cst_63 : f32 to vector<64x64xf32>
    %225 = arith.select %7, %223, %224 : vector<64x64xi1>, vector<64x64xf32>
    %cst_64 = arith.constant dense<0xFF800000> : vector<64xf32>
    %226 = vector.multi_reduction <maximumf>, %225, %cst_64 [1] : vector<64x64xf32> to vector<64xf32>
    %227 = vector.shape_cast %226 : vector<64xf32> to vector<64x1xf32>
    %228 = vector.broadcast %227 : vector<64x1xf32> to vector<64x64xf32>
    %229 = arith.subf %225, %228 : vector<64x64xf32>
    %230 = math.exp %229 : vector<64x64xf32>
    %cst_65 = arith.constant dense<0.000000e+00> : vector<64xf32>
    %231 = vector.multi_reduction <add>, %230, %cst_65 [1] : vector<64x64xf32> to vector<64xf32>
    %232 = vector.shape_cast %231 : vector<64xf32> to vector<64x1xf32>
    %233 = tpu.reciprocal %232 {approx = true} : vector<64x1xf32> -> vector<64x1xf32>
    %234 = vector.broadcast %233 : vector<64x1xf32> to vector<64x64xf32>
    %235 = arith.mulf %230, %234 : vector<64x64xf32>
    %236 = arith.truncf %235 : vector<64x64xf32> to vector<64x64xbf16>
    %cst_66 = arith.constant dense<0.000000e+00> : vector<64x64xf32>
    %237 = tpu.matmul %236, %222, %cst_66 {dimension_numbers = #tpu.dot_dimension_numbers<[1], [0], [0], [1], [0, 0, 1, 1], [], []>} : vector<64x64xbf16>, vector<64x64xbf16>, vector<64x64xf32> -> vector<64x64xf32>
    %238 = arith.truncf %237 : vector<64x64xf32> to vector<64x64xbf16>
    %c64_67 = arith.constant 64 : index
    %c192_68 = arith.constant 192 : index
    %239 = vector.load %arg7[%c64_67, %c192_68] : memref<128x384xbf16, #tpu.memory_space<vmem>>, vector<64x64xbf16>
    tpu.vector_store %arg7[%c64_67, %c192_68], %238 {strides = array<i32>} : memref<128x384xbf16, #tpu.memory_space<vmem>>, vector<64x64xbf16>,
    %240 = vector.extract_strided_slice %147 {offsets = [0, 256], sizes = [64, 64], strides = [1, 1]} : vector<64x1152xf32> to vector<64x64xf32>
    %241 = arith.truncf %240 : vector<64x64xf32> to vector<64x64xbf16>
    %242 = vector.extract_strided_slice %147 {offsets = [0, 640], sizes = [64, 64], strides = [1, 1]} : vector<64x1152xf32> to vector<64x64xf32>
    %243 = arith.truncf %242 : vector<64x64xf32> to vector<64x64xbf16>
    %244 = vector.extract_strided_slice %147 {offsets = [0, 1024], sizes = [64, 64], strides = [1, 1]} : vector<64x1152xf32> to vector<64x64xf32>
    %245 = arith.truncf %244 : vector<64x64xf32> to vector<64x64xbf16>
    %cst_69 = arith.constant dense<0.000000e+00> : vector<64x64xf32>
    %246 = tpu.matmul %241, %243, %cst_69 {dimension_numbers = #tpu.dot_dimension_numbers<[1], [1], [0], [0], [0, 0, 1, 0], [], []>} : vector<64x64xbf16>, vector<64x64xbf16>, vector<64x64xf32> -> vector<64x64xf32>
    %cst_70 = arith.constant -1.000000e+30 : f32
    %247 = vector.broadcast %cst_70 : f32 to vector<64x64xf32>
    %248 = arith.select %7, %246, %247 : vector<64x64xi1>, vector<64x64xf32>
    %cst_71 = arith.constant dense<0xFF800000> : vector<64xf32>
    %249 = vector.multi_reduction <maximumf>, %248, %cst_71 [1] : vector<64x64xf32> to vector<64xf32>
    %250 = vector.shape_cast %249 : vector<64xf32> to vector<64x1xf32>
    %251 = vector.broadcast %250 : vector<64x1xf32> to vector<64x64xf32>
    %252 = arith.subf %248, %251 : vector<64x64xf32>
    %253 = math.exp %252 : vector<64x64xf32>
    %cst_72 = arith.constant dense<0.000000e+00> : vector<64xf32>
    %254 = vector.multi_reduction <add>, %253, %cst_72 [1] : vector<64x64xf32> to vector<64xf32>
    %255 = vector.shape_cast %254 : vector<64xf32> to vector<64x1xf32>
    %256 = tpu.reciprocal %255 {approx = true} : vector<64x1xf32> -> vector<64x1xf32>
    %257 = vector.broadcast %256 : vector<64x1xf32> to vector<64x64xf32>
    %258 = arith.mulf %253, %257 : vector<64x64xf32>
    %259 = arith.truncf %258 : vector<64x64xf32> to vector<64x64xbf16>
    %cst_73 = arith.constant dense<0.000000e+00> : vector<64x64xf32>
    %260 = tpu.matmul %259, %245, %cst_73 {dimension_numbers = #tpu.dot_dimension_numbers<[1], [0], [0], [1], [0, 0, 1, 1], [], []>} : vector<64x64xbf16>, vector<64x64xbf16>, vector<64x64xf32> -> vector<64x64xf32>
    %261 = arith.truncf %260 : vector<64x64xf32> to vector<64x64xbf16>
    %c64_74 = arith.constant 64 : index
    %c256_75 = arith.constant 256 : index
    %262 = vector.load %arg7[%c64_74, %c256_75] : memref<128x384xbf16, #tpu.memory_space<vmem>>, vector<64x64xbf16>
    tpu.vector_store %arg7[%c64_74, %c256_75], %261 {strides = array<i32>} : memref<128x384xbf16, #tpu.memory_space<vmem>>, vector<64x64xbf16>,
    %263 = vector.extract_strided_slice %147 {offsets = [0, 320], sizes = [64, 64], strides = [1, 1]} : vector<64x1152xf32> to vector<64x64xf32>
    %264 = arith.truncf %263 : vector<64x64xf32> to vector<64x64xbf16>
    %265 = vector.extract_strided_slice %147 {offsets = [0, 704], sizes = [64, 64], strides = [1, 1]} : vector<64x1152xf32> to vector<64x64xf32>
    %266 = arith.truncf %265 : vector<64x64xf32> to vector<64x64xbf16>
    %267 = vector.extract_strided_slice %147 {offsets = [0, 1088], sizes = [64, 64], strides = [1, 1]} : vector<64x1152xf32> to vector<64x64xf32>
    %268 = arith.truncf %267 : vector<64x64xf32> to vector<64x64xbf16>
    %cst_76 = arith.constant dense<0.000000e+00> : vector<64x64xf32>
    %269 = tpu.matmul %264, %266, %cst_76 {dimension_numbers = #tpu.dot_dimension_numbers<[1], [1], [0], [0], [0, 0, 1, 0], [], []>} : vector<64x64xbf16>, vector<64x64xbf16>, vector<64x64xf32> -> vector<64x64xf32>
    %cst_77 = arith.constant -1.000000e+30 : f32
    %270 = vector.broadcast %cst_77 : f32 to vector<64x64xf32>
    %271 = arith.select %7, %269, %270 : vector<64x64xi1>, vector<64x64xf32>
    %cst_78 = arith.constant dense<0xFF800000> : vector<64xf32>
    %272 = vector.multi_reduction <maximumf>, %271, %cst_78 [1] : vector<64x64xf32> to vector<64xf32>
    %273 = vector.shape_cast %272 : vector<64xf32> to vector<64x1xf32>
    %274 = vector.broadcast %273 : vector<64x1xf32> to vector<64x64xf32>
    %275 = arith.subf %271, %274 : vector<64x64xf32>
    %276 = math.exp %275 : vector<64x64xf32>
    %cst_79 = arith.constant dense<0.000000e+00> : vector<64xf32>
    %277 = vector.multi_reduction <add>, %276, %cst_79 [1] : vector<64x64xf32> to vector<64xf32>
    %278 = vector.shape_cast %277 : vector<64xf32> to vector<64x1xf32>
    %279 = tpu.reciprocal %278 {approx = true} : vector<64x1xf32> -> vector<64x1xf32>
    %280 = vector.broadcast %279 : vector<64x1xf32> to vector<64x64xf32>
    %281 = arith.mulf %276, %280 : vector<64x64xf32>
    %282 = arith.truncf %281 : vector<64x64xf32> to vector<64x64xbf16>
    %cst_80 = arith.constant dense<0.000000e+00> : vector<64x64xf32>
    %283 = tpu.matmul %282, %268, %cst_80 {dimension_numbers = #tpu.dot_dimension_numbers<[1], [0], [0], [1], [0, 0, 1, 1], [], []>} : vector<64x64xbf16>, vector<64x64xbf16>, vector<64x64xf32> -> vector<64x64xf32>
    %284 = arith.truncf %283 : vector<64x64xf32> to vector<64x64xbf16>
    %c64_81 = arith.constant 64 : index
    %c320_82 = arith.constant 320 : index
    %285 = vector.load %arg7[%c64_81, %c320_82] : memref<128x384xbf16, #tpu.memory_space<vmem>>, vector<64x64xbf16>
    tpu.vector_store %arg7[%c64_81, %c320_82], %284 {strides = array<i32>} : memref<128x384xbf16, #tpu.memory_space<vmem>>, vector<64x64xbf16>,
    %c0_83 = arith.constant 0 : index
    %c0_84 = arith.constant 0 : index
    %286 = vector.load %arg7[%c0_83, %c0_84] : memref<128x384xbf16, #tpu.memory_space<vmem>>, vector<128x384xbf16>
    %c0_85 = arith.constant 0 : index
    %c0_86 = arith.constant 0 : index
    %287 = vector.load %arg4[%c0_85, %c0_86] : memref<384x384xbf16, #tpu.memory_space<vmem>>, vector<384x384xbf16>
    %cst_87 = arith.constant dense<0.000000e+00> : vector<128x384xf32>
    %288 = tpu.matmul %286, %287, %cst_87 {dimension_numbers = #tpu.dot_dimension_numbers<[1], [0], [0], [1], [0, 0, 1, 1], [], []>} : vector<128x384xbf16>, vector<384x384xbf16>, vector<128x384xf32> -> vector<128x384xf32>
    %c0_88 = arith.constant 0 : index
    %c0_89 = arith.constant 0 : index
    %289 = vector.load %arg5[%c0_88, %c0_89] : memref<1x384xf32, #tpu.memory_space<vmem>>, vector<1x384xf32>
    %290 = vector.broadcast %289 : vector<1x384xf32> to vector<128x384xf32>
    %291 = arith.addf %288, %290 : vector<128x384xf32>
    %292 = vector.shape_cast %291 : vector<128x384xf32> to vector<2x64x384xf32>
    %c0_90 = arith.constant 0 : index
    %c0_91 = arith.constant 0 : index
    %c0_92 = arith.constant 0 : index
    %293 = vector.load %arg6[%c0_90, %c0_91, %c0_92] : memref<2x64x384xf32, #tpu.memory_space<vmem>>, vector<2x64x384xf32>
    tpu.vector_store %arg6[%c0_90, %c0_91, %c0_92], %292 {strides = array<i32>} : memref<2x64x384xf32, #tpu.memory_space<vmem>>, vector<2x64x384xf32>,
    return
  }
  func.func @transform_0(%arg0: i32, %arg1: memref<1xi32, #tpu.memory_space<smem>>) -> (i32, i32, i32) {
    %c0_i32 = arith.constant 0 : i32
    %c0_i32_0 = arith.constant 0 : i32
    %c0_i32_1 = arith.constant 0 : i32
    return %arg0, %c0_i32, %c0_i32_0 : i32, i32, i32
  }
  func.func @transform_1(%arg0: i32, %arg1: memref<1xi32, #tpu.memory_space<smem>>) -> (i32, i32) {
    %c0_i32 = arith.constant 0 : i32
    %c0_i32_0 = arith.constant 0 : i32
    %c0_i32_1 = arith.constant 0 : i32
    return %c0_i32, %c0_i32_0 : i32, i32
  }
  func.func @transform_2(%arg0: i32, %arg1: memref<1xi32, #tpu.memory_space<smem>>) -> (i32, i32) {
    %c0_i32 = arith.constant 0 : i32
    %c0_i32_0 = arith.constant 0 : i32
    %c0_i32_1 = arith.constant 0 : i32
    return %c0_i32, %c0_i32_0 : i32, i32
  }
  func.func @transform_3(%arg0: i32, %arg1: memref<1xi32, #tpu.memory_space<smem>>) -> (i32, i32) {
    %c0_i32 = arith.constant 0 : i32
    %c0_i32_0 = arith.constant 0 : i32
    %c0_i32_1 = arith.constant 0 : i32
    return %c0_i32, %c0_i32_0 : i32, i32
  }
  func.func @transform_4(%arg0: i32, %arg1: memref<1xi32, #tpu.memory_space<smem>>) -> (i32, i32, i32) {
    %c0_i32 = arith.constant 0 : i32
    %c0_i32_0 = arith.constant 0 : i32
    %c0_i32_1 = arith.constant 0 : i32
    return %arg0, %c0_i32, %c0_i32_0 : i32, i32, i32
  }
}

</mosaic_0001>

<llo_original>
// kernel: tpu_custom_call.1
$region0: #{tpu_custom_call.1}
  #allocation0 [shape = 'u32[]', space=smem, size = 0x4, offset = 0x4, fixed_abs, tag = 'smem constant byte address 0x4 - core index']
  #allocation1 [shape = 'u32[144,128]{1,0:T(1,128)}', space=vmem, size = 0x12000, scoped, tag = 'internal scratch']
  #allocation2 [shape = 'bf16[128,384]{1,0:T(16,128)(2,1)}', space=vmem, size = 0x18000, scoped, tag = 'scratch operand']
  #allocation3 [shape = 's32[1]{0}', space=sflag, size = 0x4, scoped, tag = 'scoped memory for tpu_custom_call.1']
  #allocation4 [shape = 's32[1]{0:T(128)S(6)}', space=smem, size = 0x200, scoped, tag = 'prefetched SMEM operand 0']
  %s0 = inlined_call_operand.<no memory space> [shape: s32[1], index: 0, kind: input, shape index: {}]
  %s1 = inlined_call_operand.hbm [shape: f32[2,64,384], index: 1, kind: input, shape index: {}]
  %s2 = inlined_call_operand.hbm [shape: bf16[384,1152], index: 2, kind: input, shape index: {}]
  %s3 = inlined_call_operand.hbm [shape: bf16[384,384], index: 3, kind: input, shape index: {}]
  %s4 = inlined_call_operand.vmem [shape: f32[1,384], index: 4, kind: input, shape index: {}]
  %s5 = inlined_call_operand.hbm [shape: f32[2,64,384], index: 5, kind: output, shape index: {}]
  %s6 = sld [smem:[#allocation0]]
  $region38: #{tpu_custom_call.1} parent=0
    _
  %s8 = ssub.s32 1, %s6
  %s9 = scalar_select 0, %s8, %s6
  %10 = sst [smem:[#allocation4]] %s0
  $region1: #{tpu_custom_call.1} parent=0
    #allocation5 [shape = 'u8[196608]{0}', space=vmem, size = 0x30000, scoped, tag = 'input window, operand 1, single buffered']
    #allocation6 [shape = 's32[1]{0}', space=sflag, size = 0x4, scoped, tag = 'scoped memory for tpu_custom_call.1']
    #allocation7 [shape = 's32[1]{0}', space=sflag, size = 0x4, scoped, tag = 'scoped memory for tpu_custom_call.1']
    #allocation8 [shape = 'u8[884736]{0}', space=vmem, size = 0xd8000, scoped, tag = 'input window, operand 2, single buffered']
    #allocation9 [shape = 's32[1]{0}', space=sflag, size = 0x4, scoped, tag = 'scoped memory for tpu_custom_call.1']
    #allocation10 [shape = 'u8[294912]{0}', space=vmem, size = 0x48000, scoped, tag = 'input window, operand 3, single buffered']
    #allocation11 [shape = 'u8[196608]{0}', space=vmem, size = 0x30000, scoped, tag = 'output window, operand 0, single buffered']
    %11 = vsyncpa [#allocation6], 0
    %12 = vsyncpa [#allocation9], 0
    %13 = vsyncpa [#allocation7], 0
    // Predicated region
    $region2: #{tpu_custom_call.1} parent=1 // pred_check
      _
    $region3: #{tpu_custom_call.1} parent=1 // pred_check_branch
      %15 = sbr.rel (0) target = $region5
    $region4: #{tpu_custom_call.1} parent=1 // pred_region
      %s17 = ssub.s32 6144, 6144
      %18 = vsyncadd [#allocation6], %s17
      %s19 = sshll.u32 [#allocation5], 4
      %s20 = int_to_ptr.vmem [resolvable:$true] %s19
      %25 = dma.hbm_to_vmem [thread:$0]  %s1, 6144, %s20, [#allocation6], 384, 384, 24
    $region5: #{tpu_custom_call.1} parent=1 // pred_fallthru
      _
    // Predicated region
    $region6: #{tpu_custom_call.1} parent=1 // pred_check
      _
    $region7: #{tpu_custom_call.1} parent=1 // pred_check_branch
      %27 = sbr.rel (0) target = $region9
    $region8: #{tpu_custom_call.1} parent=1 // pred_region
      %s29 = ssub.s32 27648, 27648
      %30 = vsyncadd [#allocation9], %s29
      %s31 = sshll.u32 [#allocation8], 4
      %s32 = int_to_ptr.vmem [resolvable:$true] %s31
      %37 = dma.hbm_to_vmem [thread:$0]  %s2, 27648, %s32, [#allocation9], 576, 576, 36
    $region9: #{tpu_custom_call.1} parent=1 // pred_fallthru
      _
    // Predicated region
    $region10: #{tpu_custom_call.1} parent=1 // pred_check
      _
    $region11: #{tpu_custom_call.1} parent=1 // pred_check_branch
      %39 = sbr.rel (0) target = $region13
    $region12: #{tpu_custom_call.1} parent=1 // pred_region
      %s41 = ssub.s32 9216, 9216
      %42 = vsyncadd [#allocation9], %s41
      %s43 = sshll.u32 [#allocation10], 4
      %s44 = int_to_ptr.vmem [resolvable:$true] %s43
      %49 = dma.hbm_to_vmem [thread:$0]  %s3, 9216, %s44, [#allocation9], 192, 192, 12
    $region13: #{tpu_custom_call.1} parent=1 // pred_fallthru
      _
    // Predicated region
    $region14: #{tpu_custom_call.1} parent=1 // pred_check
      _
    $region15: #{tpu_custom_call.1} parent=1 // pred_check_branch
      %51 = sbr.rel (0) target = $region17
    $region16: #{tpu_custom_call.1} parent=1 // pred_region
      _
    $region17: #{tpu_custom_call.1} parent=1 // pred_fallthru
      _
    // Predicated region
    $region18: #{tpu_custom_call.1} parent=1 // pred_check
      _
    $region19: #{tpu_custom_call.1} parent=1 // pred_check_branch
      %53 = sbr.rel (0) target = $region21
    $region20: #{tpu_custom_call.1} parent=1 // pred_region
      %54 = dma.done [#allocation6], 6144
    $region21: #{tpu_custom_call.1} parent=1 // pred_fallthru
      _
    // Predicated region
    $region22: #{tpu_custom_call.1} parent=1 // pred_check
      _
    $region23: #{tpu_custom_call.1} parent=1 // pred_check_branch
      %56 = sbr.rel (0) target = $region25
    $region24: #{tpu_custom_call.1} parent=1 // pred_region
      %57 = dma.done [#allocation9], 27648
    $region25: #{tpu_custom_call.1} parent=1 // pred_fallthru
      _
    // Predicated region
    $region26: #{tpu_custom_call.1} parent=1 // pred_check
      _
    $region27: #{tpu_custom_call.1} parent=1 // pred_check_branch
      %59 = sbr.rel (0) target = $region29
    $region28: #{tpu_custom_call.1} parent=1 // pred_region
      %60 = dma.done [#allocation9], 9216
    $region29: #{tpu_custom_call.1} parent=1 // pred_fallthru
      _
    %v62 = vld [vmem:[#allocation5] sm:$0xff]
    %v63 = vld [vmem:[#allocation5 + $0x8] sm:$0xff]
    %v64 = vld [vmem:[#allocation5 + $0x10] sm:$0xff]
    %v65 = vld [vmem:[#allocation5 + $0x18] sm:$0xff]
    %v66 = vld [vmem:[#allocation5 + $0x20] sm:$0xff]
    %v67 = vld [vmem:[#allocation5 + $0x28] sm:$0xff]
    %v68 = vld [vmem:[#allocation5 + $0x30] sm:$0xff]
    %v69 = vld [vmem:[#allocation5 + $0x38] sm:$0xff]
    %v70 = vld [vmem:[#allocation5 + $0x40] sm:$0xff]
    %v71 = vld [vmem:[#allocation5 + $0x48] sm:$0xff]
    %v72 = vld [vmem:[#allocation5 + $0x50] sm:$0xff]
    %v73 = vld [vmem:[#allocation5 + $0x58] sm:$0xff]
    %v74 = vld [vmem:[#allocation5 + $0x60] sm:$0xff]
    %v75 = vld [vmem:[#allocation5 + $0x68] sm:$0xff]
    %v76 = vld [vmem:[#allocation5 + $0x70] sm:$0xff]
    %v77 = vld [vmem:[#allocation5 + $0x78] sm:$0xff]
    %v78 = vld [vmem:[#allocation5 + $0x80] sm:$0xff]
    %v79 = vld [vmem:[#allocation5 + $0x88] sm:$0xff]
    %v80 = vld [vmem:[#allocation5 + $0x90] sm:$0xff]
    %v81 = vld [vmem:[#allocation5 + $0x98] sm:$0xff]
    %v82 = vld [vmem:[#allocation5 + $0xa0] sm:$0xff]
    %v83 = vld [vmem:[#allocation5 + $0xa8] sm:$0xff]
    %v84 = vld [vmem:[#allocation5 + $0xb0] sm:$0xff]
    %v85 = vld [vmem:[#allocation5 + $0xb8] sm:$0xff]
    %v86 = vld [vmem:[#allocation5 + $0xc0] sm:$0xff]
    %v87 = vld [vmem:[#allocation5 + $0xc8] sm:$0xff]
    %v88 = vld [vmem:[#allocation5 + $0xd0] sm:$0xff]
    %v89 = vld [vmem:[#allocation5 + $0xd8] sm:$0xff]
    %v90 = vld [vmem:[#allocation5 + $0xe0] sm:$0xff]
    %v91 = vld [vmem:[#allocation5 + $0xe8] sm:$0xff]
    %v92 = vld [vmem:[#allocation5 + $0xf0] sm:$0xff]
    %v93 = vld [vmem:[#allocation5 + $0xf8] sm:$0xff]
    %v94 = vld [vmem:[#allocation5 + $0x100] sm:$0xff]
    %v95 = vld [vmem:[#allocation5 + $0x108] sm:$0xff]
    %v96 = vld [vmem:[#allocation5 + $0x110] sm:$0xff]
    %v97 = vld [vmem:[#allocation5 + $0x118] sm:$0xff]
    %v98 = vld [vmem:[#allocation5 + $0x120] sm:$0xff]
    %v99 = vld [vmem:[#allocation5 + $0x128] sm:$0xff]
    %v100 = vld [vmem:[#allocation5 + $0x130] sm:$0xff]
    %v101 = vld [vmem:[#allocation5 + $0x138] sm:$0xff]
    %v102 = vld [vmem:[#allocation5 + $0x140] sm:$0xff]
    %v103 = vld [vmem:[#allocation5 + $0x148] sm:$0xff]
    %v104 = vld [vmem:[#allocation5 + $0x150] sm:$0xff]
    %v105 = vld [vmem:[#allocation5 + $0x158] sm:$0xff]
    %v106 = vld [vmem:[#allocation5 + $0x160] sm:$0xff]
    %v107 = vld [vmem:[#allocation5 + $0x168] sm:$0xff]
    %v108 = vld [vmem:[#allocation5 + $0x170] sm:$0xff]
    %v109 = vld [vmem:[#allocation5 + $0x178] sm:$0xff]
    %v110 = vpack.c.bf16 %v65, %v62
    %v111 = vpack.c.bf16 %v66, %v63
    %v112 = vpack.c.bf16 %v67, %v64
    %v113 = vpack.c.bf16 %v71, %v68
    %v114 = vpack.c.bf16 %v72, %v69
    %v115 = vpack.c.bf16 %v73, %v70
    %v116 = vpack.c.bf16 %v77, %v74
    %v117 = vpack.c.bf16 %v78, %v75
    %v118 = vpack.c.bf16 %v79, %v76
    %v119 = vpack.c.bf16 %v83, %v80
    %v120 = vpack.c.bf16 %v84, %v81
    %v121 = vpack.c.bf16 %v85, %v82
    %v122 = vpack.c.bf16 %v89, %v86
    %v123 = vpack.c.bf16 %v90, %v87
    %v124 = vpack.c.bf16 %v91, %v88
    %v125 = vpack.c.bf16 %v95, %v92
    %v126 = vpack.c.bf16 %v96, %v93
    %v127 = vpack.c.bf16 %v97, %v94
    %v128 = vpack.c.bf16 %v101, %v98
    %v129 = vpack.c.bf16 %v102, %v99
    %v130 = vpack.c.bf16 %v103, %v100
    %v131 = vpack.c.bf16 %v107, %v104
    %v132 = vpack.c.bf16 %v108, %v105
    %v133 = vpack.c.bf16 %v109, %v106
    %v134 = vld [vmem:[#allocation8] sm:$0xff]
    %v135 = vld [vmem:[#allocation8 + $0x8] sm:$0xff]
    %v136 = vld [vmem:[#allocation8 + $0x10] sm:$0xff]
    %v137 = vld [vmem:[#allocation8 + $0x18] sm:$0xff]
    %v138 = vld [vmem:[#allocation8 + $0x20] sm:$0xf]
    %v139 = vld [vmem:[#allocation8 + $0x24] sm:$0xff]
    %v140 = vld [vmem:[#allocation8 + $0x2c] sm:$0xff]
    %v141 = vld [vmem:[#allocation8 + $0x34] sm:$0xff]
    %v142 = vld [vmem:[#allocation8 + $0x3c] sm:$0xff]
    %v143 = vld [vmem:[#allocation8 + $0x44] sm:$0xf]
    %v144 = vld [vmem:[#allocation8 + $0x48] sm:$0xff]
    %v145 = vld [vmem:[#allocation8 + $0x50] sm:$0xff]
    %v146 = vld [vmem:[#allocation8 + $0x58] sm:$0xff]
    %v147 = vld [vmem:[#allocation8 + $0x60] sm:$0xff]
    %v148 = vld [vmem:[#allocation8 + $0x68] sm:$0xf]
    %v149 = vld [vmem:[#allocation8 + $0x6c] sm:$0xff]
    %v150 = vld [vmem:[#allocation8 + $0x74] sm:$0xff]
    %v151 = vld [vmem:[#allocation8 + $0x7c] sm:$0xff]
    %v152 = vld [vmem:[#allocation8 + $0x84] sm:$0xff]
    %v153 = vld [vmem:[#allocation8 + $0x8c] sm:$0xf]
    %v154 = vld [vmem:[#allocation8 + $0x90] sm:$0xff]
    %v155 = vld [vmem:[#allocation8 + $0x98] sm:$0xff]
    %v156 = vld [vmem:[#allocation8 + $0xa0] sm:$0xff]
    %v157 = vld [vmem:[#allocation8 + $0xa8] sm:$0xff]
    %v158 = vld [vmem:[#allocation8 + $0xb0] sm:$0xf]
    %v159 = vld [vmem:[#allocation8 + $0xb4] sm:$0xff]
    %v160 = vld [vmem:[#allocation8 + $0xbc] sm:$0xff]
    %v161 = vld [vmem:[#allocation8 + $0xc4] sm:$0xff]
    %v162 = vld [vmem:[#allocation8 + $0xcc] sm:$0xff]
    %v163 = vld [vmem:[#allocation8 + $0xd4] sm:$0xf]
    %v164 = vld [vmem:[#allocation8 + $0xd8] sm:$0xff]
    %v165 = vld [vmem:[#allocation8 + $0xe0] sm:$0xff]
    %v166 = vld [vmem:[#allocation8 + $0xe8] sm:$0xff]
    %v167 = vld [vmem:[#allocation8 + $0xf0] sm:$0xff]
    %v168 = vld [vmem:[#allocation8 + $0xf8] sm:$0xf]
    %v169 = vld [vmem:[#allocation8 + $0xfc] sm:$0xff]
    %v170 = vld [vmem:[#allocation8 + $0x104] sm:$0xff]
    %v171 = vld [vmem:[#allocation8 + $0x10c] sm:$0xff]
    %v172 = vld [vmem:[#allocation8 + $0x114] sm:$0xff]
    %v173 = vld [vmem:[#allocation8 + $0x11c] sm:$0xf]
    %v174 = vld [vmem:[#allocation8 + $0x120] sm:$0xff]
    %v175 = vld [vmem:[#allocation8 + $0x128] sm:$0xff]
    %v176 = vld [vmem:[#allocation8 + $0x130] sm:$0xff]
    %v177 = vld [vmem:[#allocation8 + $0x138] sm:$0xff]
    %v178 = vld [vmem:[#allocation8 + $0x140] sm:$0xf]
    %v179 = vld [vmem:[#allocation8 + $0x144] sm:$0xff]
    %v180 = vld [vmem:[#allocation8 + $0x14c] sm:$0xff]
    %v181 = vld [vmem:[#allocation8 + $0x154] sm:$0xff]
    %v182 = vld [vmem:[#allocation8 + $0x15c] sm:$0xff]
    %v183 = vld [vmem:[#allocation8 + $0x164] sm:$0xf]
    %v184 = vld [vmem:[#allocation8 + $0x168] sm:$0xff]
    %v185 = vld [vmem:[#allocation8 + $0x170] sm:$0xff]
    %v186 = vld [vmem:[#allocation8 + $0x178] sm:$0xff]
    %v187 = vld [vmem:[#allocation8 + $0x180] sm:$0xff]
    %v188 = vld [vmem:[#allocation8 + $0x188] sm:$0xf]
    %v189 = vld [vmem:[#allocation8 + $0x18c] sm:$0xff]
    %v190 = vld [vmem:[#allocation8 + $0x194] sm:$0xff]
    %v191 = vld [vmem:[#allocation8 + $0x19c] sm:$0xff]
    %v192 = vld [vmem:[#allocation8 + $0x1a4] sm:$0xff]
    %v193 = vld [vmem:[#allocation8 + $0x1ac] sm:$0xf]
    %v194 = vld [vmem:[#allocation8 + $0x1b0] sm:$0xff]
    %v195 = vld [vmem:[#allocation8 + $0x1b8] sm:$0xff]
    %v196 = vld [vmem:[#allocation8 + $0x1c0] sm:$0xff]
    %v197 = vld [vmem:[#allocation8 + $0x1c8] sm:$0xff]
    %v198 = vld [vmem:[#allocation8 + $0x1d0] sm:$0xf]
    %v199 = vld [vmem:[#allocation8 + $0x1d4] sm:$0xff]
    %v200 = vld [vmem:[#allocation8 + $0x1dc] sm:$0xff]
    %v201 = vld [vmem:[#allocation8 + $0x1e4] sm:$0xff]
    %v202 = vld [vmem:[#allocation8 + $0x1ec] sm:$0xff]
    %v203 = vld [vmem:[#allocation8 + $0x1f4] sm:$0xf]
    %v204 = vld [vmem:[#allocation8 + $0x1f8] sm:$0xff]
    %v205 = vld [vmem:[#allocation8 + $0x200] sm:$0xff]
    %v206 = vld [vmem:[#allocation8 + $0x208] sm:$0xff]
    %v207 = vld [vmem:[#allocation8 + $0x210] sm:$0xff]
    %v208 = vld [vmem:[#allocation8 + $0x218] sm:$0xf]
    %v209 = vld [vmem:[#allocation8 + $0x21c] sm:$0xff]
    %v210 = vld [vmem:[#allocation8 + $0x224] sm:$0xff]
    %v211 = vld [vmem:[#allocation8 + $0x22c] sm:$0xff]
    %v212 = vld [vmem:[#allocation8 + $0x234] sm:$0xff]
    %v213 = vld [vmem:[#allocation8 + $0x23c] sm:$0xf]
    %v214 = vld [vmem:[#allocation8 + $0x240] sm:$0xff]
    %v215 = vld [vmem:[#allocation8 + $0x248] sm:$0xff]
    %v216 = vld [vmem:[#allocation8 + $0x250] sm:$0xff]
    %v217 = vld [vmem:[#allocation8 + $0x258] sm:$0xff]
    %v218 = vld [vmem:[#allocation8 + $0x260] sm:$0xf]
    %v219 = vld [vmem:[#allocation8 + $0x264] sm:$0xff]
    %v220 = vld [vmem:[#allocation8 + $0x26c] sm:$0xff]
    %v221 = vld [vmem:[#allocation8 + $0x274] sm:$0xff]
    %v222 = vld [vmem:[#allocation8 + $0x27c] sm:$0xff]
    %v223 = vld [vmem:[#allocation8 + $0x284] sm:$0xf]
    %v224 = vld [vmem:[#allocation8 + $0x288] sm:$0xff]
    %v225 = vld [vmem:[#allocation8 + $0x290] sm:$0xff]
    %v226 = vld [vmem:[#allocation8 + $0x298] sm:$0xff]
    %v227 = vld [vmem:[#allocation8 + $0x2a0] sm:$0xff]
    %v228 = vld [vmem:[#allocation8 + $0x2a8] sm:$0xf]
    %v229 = vld [vmem:[#allocation8 + $0x2ac] sm:$0xff]
    %v230 = vld [vmem:[#allocation8 + $0x2b4] sm:$0xff]
    %v231 = vld [vmem:[#allocation8 + $0x2bc] sm:$0xff]
    %v232 = vld [vmem:[#allocation8 + $0x2c4] sm:$0xff]
    %v233 = vld [vmem:[#allocation8 + $0x2cc] sm:$0xf]
    %v234 = vld [vmem:[#allocation8 + $0x2d0] sm:$0xff]
    %v235 = vld [vmem:[#allocation8 + $0x2d8] sm:$0xff]
    %v236 = vld [vmem:[#allocation8 + $0x2e0] sm:$0xff]
    %v237 = vld [vmem:[#allocation8 + $0x2e8] sm:$0xff]
    %v238 = vld [vmem:[#allocation8 + $0x2f0] sm:$0xf]
    %v239 = vld [vmem:[#allocation8 + $0x2f4] sm:$0xff]
    %v240 = vld [vmem:[#allocation8 + $0x2fc] sm:$0xff]
    %v241 = vld [vmem:[#allocation8 + $0x304] sm:$0xff]
    %v242 = vld [vmem:[#allocation8 + $0x30c] sm:$0xff]
    %v243 = vld [vmem:[#allocation8 + $0x314] sm:$0xf]
    %v244 = vld [vmem:[#allocation8 + $0x318] sm:$0xff]
    %v245 = vld [vmem:[#allocation8 + $0x320] sm:$0xff]
    %v246 = vld [vmem:[#allocation8 + $0x328] sm:$0xff]
    %v247 = vld [vmem:[#allocation8 + $0x330] sm:$0xff]
    %v248 = vld [vmem:[#allocation8 + $0x338] sm:$0xf]
    %v249 = vld [vmem:[#allocation8 + $0x33c] sm:$0xff]
    %v250 = vld [vmem:[#allocation8 + $0x344] sm:$0xff]
    %v251 = vld [vmem:[#allocation8 + $0x34c] sm:$0xff]
    %v252 = vld [vmem:[#allocation8 + $0x354] sm:$0xff]
    %v253 = vld [vmem:[#allocation8 + $0x35c] sm:$0xf]
    %v254 = vld [vmem:[#allocation8 + $0x360] sm:$0xff]
    %v255 = vld [vmem:[#allocation8 + $0x368] sm:$0xff]
    %v256 = vld [vmem:[#allocation8 + $0x370] sm:$0xff]
    %v257 = vld [vmem:[#allocation8 + $0x378] sm:$0xff]
    %v258 = vld [vmem:[#allocation8 + $0x380] sm:$0xf]
    %v259 = vld [vmem:[#allocation8 + $0x384] sm:$0xff]
    %v260 = vld [vmem:[#allocation8 + $0x38c] sm:$0xff]
    %v261 = vld [vmem:[#allocation8 + $0x394] sm:$0xff]
    %v262 = vld [vmem:[#allocation8 + $0x39c] sm:$0xff]
    %v263 = vld [vmem:[#allocation8 + $0x3a4] sm:$0xf]
    %v264 = vld [vmem:[#allocation8 + $0x3a8] sm:$0xff]
    %v265 = vld [vmem:[#allocation8 + $0x3b0] sm:$0xff]
    %v266 = vld [vmem:[#allocation8 + $0x3b8] sm:$0xff]
    %v267 = vld [vmem:[#allocation8 + $0x3c0] sm:$0xff]
    %v268 = vld [vmem:[#allocation8 + $0x3c8] sm:$0xf]
    %v269 = vld [vmem:[#allocation8 + $0x3cc] sm:$0xff]
    %v270 = vld [vmem:[#allocation8 + $0x3d4] sm:$0xff]
    %v271 = vld [vmem:[#allocation8 + $0x3dc] sm:$0xff]
    %v272 = vld [vmem:[#allocation8 + $0x3e4] sm:$0xff]
    %v273 = vld [vmem:[#allocation8 + $0x3ec] sm:$0xf]
    %v274 = vld [vmem:[#allocation8 + $0x3f0] sm:$0xff]
    %v275 = vld [vmem:[#allocation8 + $0x3f8] sm:$0xff]
    %v276 = vld [vmem:[#allocation8 + $0x400] sm:$0xff]
    %v277 = vld [vmem:[#allocation8 + $0x408] sm:$0xff]
    %v278 = vld [vmem:[#allocation8 + $0x410] sm:$0xf]
    %v279 = vld [vmem:[#allocation8 + $0x414] sm:$0xff]
    %v280 = vld [vmem:[#allocation8 + $0x41c] sm:$0xff]
    %v281 = vld [vmem:[#allocation8 + $0x424] sm:$0xff]
    %v282 = vld [vmem:[#allocation8 + $0x42c] sm:$0xff]
    %v283 = vld [vmem:[#allocation8 + $0x434] sm:$0xf]
    %v284 = vld [vmem:[#allocation8 + $0x438] sm:$0xff]
    %v285 = vld [vmem:[#allocation8 + $0x440] sm:$0xff]
    %v286 = vld [vmem:[#allocation8 + $0x448] sm:$0xff]
    %v287 = vld [vmem:[#allocation8 + $0x450] sm:$0xff]
    %v288 = vld [vmem:[#allocation8 + $0x458] sm:$0xf]
    %v289 = vld [vmem:[#allocation8 + $0x45c] sm:$0xff]
    %v290 = vld [vmem:[#allocation8 + $0x464] sm:$0xff]
    %v291 = vld [vmem:[#allocation8 + $0x46c] sm:$0xff]
    %v292 = vld [vmem:[#allocation8 + $0x474] sm:$0xff]
    %v293 = vld [vmem:[#allocation8 + $0x47c] sm:$0xf]
    %v294 = vld [vmem:[#allocation8 + $0x480] sm:$0xff]
    %v295 = vld [vmem:[#allocation8 + $0x488] sm:$0xff]
    %v296 = vld [vmem:[#allocation8 + $0x490] sm:$0xff]
    %v297 = vld [vmem:[#allocation8 + $0x498] sm:$0xff]
    %v298 = vld [vmem:[#allocation8 + $0x4a0] sm:$0xf]
    %v299 = vld [vmem:[#allocation8 + $0x4a4] sm:$0xff]
    %v300 = vld [vmem:[#allocation8 + $0x4ac] sm:$0xff]
    %v301 = vld [vmem:[#allocation8 + $0x4b4] sm:$0xff]
    %v302 = vld [vmem:[#allocation8 + $0x4bc] sm:$0xff]
    %v303 = vld [vmem:[#allocation8 + $0x4c4] sm:$0xf]
    %v304 = vld [vmem:[#allocation8 + $0x4c8] sm:$0xff]
    %v305 = vld [vmem:[#allocation8 + $0x4d0] sm:$0xff]
    %v306 = vld [vmem:[#allocation8 + $0x4d8] sm:$0xff]
    %v307 = vld [vmem:[#allocation8 + $0x4e0] sm:$0xff]
    %v308 = vld [vmem:[#allocation8 + $0x4e8] sm:$0xf]
    %v309 = vld [vmem:[#allocation8 + $0x4ec] sm:$0xff]
    %v310 = vld [vmem:[#allocation8 + $0x4f4] sm:$0xff]
    %v311 = vld [vmem:[#allocation8 + $0x4fc] sm:$0xff]
    %v312 = vld [vmem:[#allocation8 + $0x504] sm:$0xff]
    %v313 = vld [vmem:[#allocation8 + $0x50c] sm:$0xf]
    %v314 = vld [vmem:[#allocation8 + $0x510] sm:$0xff]
    %v315 = vld [vmem:[#allocation8 + $0x518] sm:$0xff]
    %v316 = vld [vmem:[#allocation8 + $0x520] sm:$0xff]
    %v317 = vld [vmem:[#allocation8 + $0x528] sm:$0xff]
    %v318 = vld [vmem:[#allocation8 + $0x530] sm:$0xf]
    %v319 = vld [vmem:[#allocation8 + $0x534] sm:$0xff]
    %v320 = vld [vmem:[#allocation8 + $0x53c] sm:$0xff]
    %v321 = vld [vmem:[#allocation8 + $0x544] sm:$0xff]
    %v322 = vld [vmem:[#allocation8 + $0x54c] sm:$0xff]
    %v323 = vld [vmem:[#allocation8 + $0x554] sm:$0xf]
    %v324 = vld [vmem:[#allocation8 + $0x558] sm:$0xff]
    %v325 = vld [vmem:[#allocation8 + $0x560] sm:$0xff]
    %v326 = vld [vmem:[#allocation8 + $0x568] sm:$0xff]
    %v327 = vld [vmem:[#allocation8 + $0x570] sm:$0xff]
    %v328 = vld [vmem:[#allocation8 + $0x578] sm:$0xf]
    %v329 = vld [vmem:[#allocation8 + $0x57c] sm:$0xff]
    %v330 = vld [vmem:[#allocation8 + $0x584] sm:$0xff]
    %v331 = vld [vmem:[#allocation8 + $0x58c] sm:$0xff]
    %v332 = vld [vmem:[#allocation8 + $0x594] sm:$0xff]
    %v333 = vld [vmem:[#allocation8 + $0x59c] sm:$0xf]
    %v334 = vld [vmem:[#allocation8 + $0x5a0] sm:$0xff]
    %v335 = vld [vmem:[#allocation8 + $0x5a8] sm:$0xff]
    %v336 = vld [vmem:[#allocation8 + $0x5b0] sm:$0xff]
    %v337 = vld [vmem:[#allocation8 + $0x5b8] sm:$0xff]
    %v338 = vld [vmem:[#allocation8 + $0x5c0] sm:$0xf]
    %v339 = vld [vmem:[#allocation8 + $0x5c4] sm:$0xff]
    %v340 = vld [vmem:[#allocation8 + $0x5cc] sm:$0xff]
    %v341 = vld [vmem:[#allocation8 + $0x5d4] sm:$0xff]
    %v342 = vld [vmem:[#allocation8 + $0x5dc] sm:$0xff]
    %v343 = vld [vmem:[#allocation8 + $0x5e4] sm:$0xf]
    %v344 = vld [vmem:[#allocation8 + $0x5e8] sm:$0xff]
    %v345 = vld [vmem:[#allocation8 + $0x5f0] sm:$0xff]
    %v346 = vld [vmem:[#allocation8 + $0x5f8] sm:$0xff]
    %v347 = vld [vmem:[#allocation8 + $0x600] sm:$0xff]
    %v348 = vld [vmem:[#allocation8 + $0x608] sm:$0xf]
    %v349 = vld [vmem:[#allocation8 + $0x60c] sm:$0xff]
    %v350 = vld [vmem:[#allocation8 + $0x614] sm:$0xff]
    %v351 = vld [vmem:[#allocation8 + $0x61c] sm:$0xff]
    %v352 = vld [vmem:[#allocation8 + $0x624] sm:$0xff]
    %v353 = vld [vmem:[#allocation8 + $0x62c] sm:$0xf]
    %v354 = vld [vmem:[#allocation8 + $0x630] sm:$0xff]
    %v355 = vld [vmem:[#allocation8 + $0x638] sm:$0xff]
    %v356 = vld [vmem:[#allocation8 + $0x640] sm:$0xff]
    %v357 = vld [vmem:[#allocation8 + $0x648] sm:$0xff]
    %v358 = vld [vmem:[#allocation8 + $0x650] sm:$0xf]
    %v359 = vld [vmem:[#allocation8 + $0x654] sm:$0xff]
    %v360 = vld [vmem:[#allocation8 + $0x65c] sm:$0xff]
    %v361 = vld [vmem:[#allocation8 + $0x664] sm:$0xff]
    %v362 = vld [vmem:[#allocation8 + $0x66c] sm:$0xff]
    %v363 = vld [vmem:[#allocation8 + $0x674] sm:$0xf]
    %v364 = vld [vmem:[#allocation8 + $0x678] sm:$0xff]
    %v365 = vld [vmem:[#allocation8 + $0x680] sm:$0xff]
    %v366 = vld [vmem:[#allocation8 + $0x688] sm:$0xff]
    %v367 = vld [vmem:[#allocation8 + $0x690] sm:$0xff]
    %v368 = vld [vmem:[#allocation8 + $0x698] sm:$0xf]
    %v369 = vld [vmem:[#allocation8 + $0x69c] sm:$0xff]
    %v370 = vld [vmem:[#allocation8 + $0x6a4] sm:$0xff]
    %v371 = vld [vmem:[#allocation8 + $0x6ac] sm:$0xff]
    %v372 = vld [vmem:[#allocation8 + $0x6b4] sm:$0xff]
    %v373 = vld [vmem:[#allocation8 + $0x6bc] sm:$0xf]
    %v614 = vunpack.c.l.b16 %v134
    %v615 = vunpack.c.h.b16 %v134
    %v616 = vunpack.c.l.b16 %v135
    %v617 = vunpack.c.h.b16 %v135
    %v618 = vunpack.c.l.b16 %v136
    %v619 = vunpack.c.h.b16 %v136
    %v620 = vunpack.c.l.b16 %v137
    %v621 = vunpack.c.h.b16 %v137
    %v622 = vunpack.c.l.b16 %v138
    %v623 = vunpack.c.l.b16 %v139
    %v624 = vunpack.c.h.b16 %v139
    %v625 = vunpack.c.l.b16 %v140
    %v626 = vunpack.c.h.b16 %v140
    %v627 = vunpack.c.l.b16 %v141
    %v628 = vunpack.c.h.b16 %v141
    %v629 = vunpack.c.l.b16 %v142
    %v630 = vunpack.c.h.b16 %v142
    %v631 = vunpack.c.l.b16 %v143
    %v632 = vunpack.c.l.b16 %v144
    %v633 = vunpack.c.h.b16 %v144
    %v634 = vunpack.c.l.b16 %v145
    %v635 = vunpack.c.h.b16 %v145
    %v636 = vunpack.c.l.b16 %v146
    %v637 = vunpack.c.h.b16 %v146
    %v638 = vunpack.c.l.b16 %v147
    %v639 = vunpack.c.h.b16 %v147
    %v640 = vunpack.c.l.b16 %v148
    %v641 = vunpack.c.l.b16 %v149
    %v642 = vunpack.c.h.b16 %v149
    %v643 = vunpack.c.l.b16 %v150
    %v644 = vunpack.c.h.b16 %v150
    %v645 = vunpack.c.l.b16 %v151
    %v646 = vunpack.c.h.b16 %v151
    %v647 = vunpack.c.l.b16 %v152
    %v648 = vunpack.c.h.b16 %v152
    %v649 = vunpack.c.l.b16 %v153
    %v650 = vunpack.c.l.b16 %v154
    %v651 = vunpack.c.h.b16 %v154
    %v652 = vunpack.c.l.b16 %v155
    %v653 = vunpack.c.h.b16 %v155
    %v654 = vunpack.c.l.b16 %v156
    %v655 = vunpack.c.h.b16 %v156
    %v656 = vunpack.c.l.b16 %v157
    %v657 = vunpack.c.h.b16 %v157
    %v658 = vunpack.c.l.b16 %v158
    %v659 = vunpack.c.l.b16 %v159
    %v660 = vunpack.c.h.b16 %v159
    %v661 = vunpack.c.l.b16 %v160
    %v662 = vunpack.c.h.b16 %v160
    %v663 = vunpack.c.l.b16 %v161
    %v664 = vunpack.c.h.b16 %v161
    %v665 = vunpack.c.l.b16 %v162
    %v666 = vunpack.c.h.b16 %v162
    %v667 = vunpack.c.l.b16 %v163
    %v668 = vunpack.c.l.b16 %v164
    %v669 = vunpack.c.h.b16 %v164
    %v670 = vunpack.c.l.b16 %v165
    %v671 = vunpack.c.h.b16 %v165
    %v672 = vunpack.c.l.b16 %v166
    %v673 = vunpack.c.h.b16 %v166
    %v674 = vunpack.c.l.b16 %v167
    %v675 = vunpack.c.h.b16 %v167
    %v676 = vunpack.c.l.b16 %v168
    %v677 = vunpack.c.l.b16 %v169
    %v678 = vunpack.c.h.b16 %v169
    %v679 = vunpack.c.l.b16 %v170
    %v680 = vunpack.c.h.b16 %v170
    %v681 = vunpack.c.l.b16 %v171
    %v682 = vunpack.c.h.b16 %v171
    %v683 = vunpack.c.l.b16 %v172
    %v684 = vunpack.c.h.b16 %v172
    %v685 = vunpack.c.l.b16 %v173
    %v686 = vunpack.c.l.b16 %v174
    %v687 = vunpack.c.h.b16 %v174
    %v688 = vunpack.c.l.b16 %v175
    %v689 = vunpack.c.h.b16 %v175
    %v690 = vunpack.c.l.b16 %v176
    %v691 = vunpack.c.h.b16 %v176
    %v692 = vunpack.c.l.b16 %v177
    %v693 = vunpack.c.h.b16 %v177
    %v694 = vunpack.c.l.b16 %v178
    %v695 = vunpack.c.l.b16 %v179
    %v696 = vunpack.c.h.b16 %v179
    %v697 = vunpack.c.l.b16 %v180
    %v698 = vunpack.c.h.b16 %v180
    %v699 = vunpack.c.l.b16 %v181
    %v700 = vunpack.c.h.b16 %v181
    %v701 = vunpack.c.l.b16 %v182
    %v702 = vunpack.c.h.b16 %v182
    %v703 = vunpack.c.l.b16 %v183
    %v704 = vunpack.c.l.b16 %v184
    %v705 = vunpack.c.h.b16 %v184
    %v706 = vunpack.c.l.b16 %v185
    %v707 = vunpack.c.h.b16 %v185
    %v708 = vunpack.c.l.b16 %v186
    %v709 = vunpack.c.h.b16 %v186
    %v710 = vunpack.c.l.b16 %v187
    %v711 = vunpack.c.h.b16 %v187
    %v712 = vunpack.c.l.b16 %v188
    %v713 = vunpack.c.l.b16 %v189
    %v714 = vunpack.c.h.b16 %v189
    %v715 = vunpack.c.l.b16 %v190
    %v716 = vunpack.c.h.b16 %v190
    %v717 = vunpack.c.l.b16 %v191
    %v718 = vunpack.c.h.b16 %v191
    %v719 = vunpack.c.l.b16 %v192
    %v720 = vunpack.c.h.b16 %v192
    %v721 = vunpack.c.l.b16 %v193
    %v722 = vunpack.c.l.b16 %v194
    %v723 = vunpack.c.h.b16 %v194
    %v724 = vunpack.c.l.b16 %v195
    %v725 = vunpack.c.h.b16 %v195
    %v726 = vunpack.c.l.b16 %v196
    %v727 = vunpack.c.h.b16 %v196
    %v728 = vunpack.c.l.b16 %v197
    %v729 = vunpack.c.h.b16 %v197
    %v730 = vunpack.c.l.b16 %v198
    %v731 = vunpack.c.l.b16 %v199
    %v732 = vunpack.c.h.b16 %v199
    %v733 = vunpack.c.l.b16 %v200
    %v734 = vunpack.c.h.b16 %v200
    %v735 = vunpack.c.l.b16 %v201
    %v736 = vunpack.c.h.b16 %v201
    %v737 = vunpack.c.l.b16 %v202
    %v738 = vunpack.c.h.b16 %v202
    %v739 = vunpack.c.l.b16 %v203
    %v740 = vunpack.c.l.b16 %v204
    %v741 = vunpack.c.h.b16 %v204
    %v742 = vunpack.c.l.b16 %v205
    %v743 = vunpack.c.h.b16 %v205
    %v744 = vunpack.c.l.b16 %v206
    %v745 = vunpack.c.h.b16 %v206
    %v746 = vunpack.c.l.b16 %v207
    %v747 = vunpack.c.h.b16 %v207
    %v748 = vunpack.c.l.b16 %v208
    %v749 = vunpack.c.l.b16 %v209
    %v750 = vunpack.c.h.b16 %v209
    %v751 = vunpack.c.l.b16 %v210
    %v752 = vunpack.c.h.b16 %v210
    %v753 = vunpack.c.l.b16 %v211
    %v754 = vunpack.c.h.b16 %v211
    %v755 = vunpack.c.l.b16 %v212
    %v756 = vunpack.c.h.b16 %v212
    %v757 = vunpack.c.l.b16 %v213
    %v758 = vunpack.c.l.b16 %v214
    %v759 = vunpack.c.h.b16 %v214
    %v760 = vunpack.c.l.b16 %v215
    %v761 = vunpack.c.h.b16 %v215
    %v762 = vunpack.c.l.b16 %v216
    %v763 = vunpack.c.h.b16 %v216
    %v764 = vunpack.c.l.b16 %v217
    %v765 = vunpack.c.h.b16 %v217
    %v766 = vunpack.c.l.b16 %v218
    %v767 = vunpack.c.l.b16 %v219
    %v768 = vunpack.c.h.b16 %v219
    %v769 = vunpack.c.l.b16 %v220
    %v770 = vunpack.c.h.b16 %v220
    %v771 = vunpack.c.l.b16 %v221
    %v772 = vunpack.c.h.b16 %v221
    %v773 = vunpack.c.l.b16 %v222
    %v774 = vunpack.c.h.b16 %v222
    %v775 = vunpack.c.l.b16 %v223
    %v776 = vunpack.c.l.b16 %v224
    %v777 = vunpack.c.h.b16 %v224
    %v778 = vunpack.c.l.b16 %v225
    %v779 = vunpack.c.h.b16 %v225
    %v780 = vunpack.c.l.b16 %v226
    %v781 = vunpack.c.h.b16 %v226
    %v782 = vunpack.c.l.b16 %v227
    %v783 = vunpack.c.h.b16 %v227
    %v784 = vunpack.c.l.b16 %v228
    %v785 = vunpack.c.l.b16 %v229
    %v786 = vunpack.c.h.b16 %v229
    %v787 = vunpack.c.l.b16 %v230
    %v788 = vunpack.c.h.b16 %v230
    %v789 = vunpack.c.l.b16 %v231
    %v790 = vunpack.c.h.b16 %v231
    %v791 = vunpack.c.l.b16 %v232
    %v792 = vunpack.c.h.b16 %v232
    %v793 = vunpack.c.l.b16 %v233
    %v794 = vunpack.c.l.b16 %v234
    %v795 = vunpack.c.h.b16 %v234
    %v796 = vunpack.c.l.b16 %v235
    %v797 = vunpack.c.h.b16 %v235
    %v798 = vunpack.c.l.b16 %v236
    %v799 = vunpack.c.h.b16 %v236
    %v800 = vunpack.c.l.b16 %v237
    %v801 = vunpack.c.h.b16 %v237
    %v802 = vunpack.c.l.b16 %v238
    %v803 = vunpack.c.l.b16 %v239
    %v804 = vunpack.c.h.b16 %v239
    %v805 = vunpack.c.l.b16 %v240
    %v806 = vunpack.c.h.b16 %v240
    %v807 = vunpack.c.l.b16 %v241
    %v808 = vunpack.c.h.b16 %v241
    %v809 = vunpack.c.l.b16 %v242
    %v810 = vunpack.c.h.b16 %v242
    %v811 = vunpack.c.l.b16 %v243
    %v812 = vunpack.c.l.b16 %v244
    %v813 = vunpack.c.h.b16 %v244
    %v814 = vunpack.c.l.b16 %v245
    %v815 = vunpack.c.h.b16 %v245
    %v816 = vunpack.c.l.b16 %v246
    %v817 = vunpack.c.h.b16 %v246
    %v818 = vunpack.c.l.b16 %v247
    %v819 = vunpack.c.h.b16 %v247
    %v820 = vunpack.c.l.b16 %v248
    %v821 = vunpack.c.l.b16 %v249
    %v822 = vunpack.c.h.b16 %v249
    %v823 = vunpack.c.l.b16 %v250
    %v824 = vunpack.c.h.b16 %v250
    %v825 = vunpack.c.l.b16 %v251
    %v826 = vunpack.c.h.b16 %v251
    %v827 = vunpack.c.l.b16 %v252
    %v828 = vunpack.c.h.b16 %v252
    %v829 = vunpack.c.l.b16 %v253
    %v830 = vunpack.c.l.b16 %v254
    %v831 = vunpack.c.h.b16 %v254
    %v832 = vunpack.c.l.b16 %v255
    %v833 = vunpack.c.h.b16 %v255
    %v834 = vunpack.c.l.b16 %v256
    %v835 = vunpack.c.h.b16 %v256
    %v836 = vunpack.c.l.b16 %v257
    %v837 = vunpack.c.h.b16 %v257
    %v838 = vunpack.c.l.b16 %v258
    %v839 = vunpack.c.l.b16 %v259
    %v840 = vunpack.c.h.b16 %v259
    %v841 = vunpack.c.l.b16 %v260
    %v842 = vunpack.c.h.b16 %v260
    %v843 = vunpack.c.l.b16 %v261
    %v844 = vunpack.c.h.b16 %v261
    %v845 = vunpack.c.l.b16 %v262
    %v846 = vunpack.c.h.b16 %v262
    %v847 = vunpack.c.l.b16 %v263
    %v848 = vunpack.c.l.b16 %v264
    %v849 = vunpack.c.h.b16 %v264
    %v850 = vunpack.c.l.b16 %v265
    %v851 = vunpack.c.h.b16 %v265
    %v852 = vunpack.c.l.b16 %v266
    %v853 = vunpack.c.h.b16 %v266
    %v854 = vunpack.c.l.b16 %v267
    %v855 = vunpack.c.h.b16 %v267
    %v856 = vunpack.c.l.b16 %v268
    %v857 = vunpack.c.l.b16 %v269
    %v858 = vunpack.c.h.b16 %v269
    %v859 = vunpack.c.l.b16 %v270
    %v860 = vunpack.c.h.b16 %v270
    %v861 = vunpack.c.l.b16 %v271
    %v862 = vunpack.c.h.b16 %v271
    %v863 = vunpack.c.l.b16 %v272
    %v864 = vunpack.c.h.b16 %v272
    %v865 = vunpack.c.l.b16 %v273
    %v866 = vunpack.c.l.b16 %v274
    %v867 = vunpack.c.h.b16 %v274
    %v868 = vunpack.c.l.b16 %v275
    %v869 = vunpack.c.h.b16 %v275
    %v870 = vunpack.c.l.b16 %v276
    %v871 = vunpack.c.h.b16 %v276
    %v872 = vunpack.c.l.b16 %v277
    %v873 = vunpack.c.h.b16 %v277
    %v874 = vunpack.c.l.b16 %v278
    %v875 = vunpack.c.l.b16 %v279
    %v876 = vunpack.c.h.b16 %v279
    %v877 = vunpack.c.l.b16 %v280
    %v878 = vunpack.c.h.b16 %v280
    %v879 = vunpack.c.l.b16 %v281
    %v880 = vunpack.c.h.b16 %v281
    %v881 = vunpack.c.l.b16 %v282
    %v882 = vunpack.c.h.b16 %v282
    %v883 = vunpack.c.l.b16 %v283
    %v884 = vunpack.c.l.b16 %v284
    %v885 = vunpack.c.h.b16 %v284
    %v886 = vunpack.c.l.b16 %v285
    %v887 = vunpack.c.h.b16 %v285
    %v888 = vunpack.c.l.b16 %v286
    %v889 = vunpack.c.h.b16 %v286
    %v890 = vunpack.c.l.b16 %v287
    %v891 = vunpack.c.h.b16 %v287
    %v892 = vunpack.c.l.b16 %v288
    %v893 = vunpack.c.l.b16 %v289
    %v894 = vunpack.c.h.b16 %v289
    %v895 = vunpack.c.l.b16 %v290
    %v896 = vunpack.c.h.b16 %v290
    %v897 = vunpack.c.l.b16 %v291
    %v898 = vunpack.c.h.b16 %v291
    %v899 = vunpack.c.l.b16 %v292
    %v900 = vunpack.c.h.b16 %v292
    %v901 = vunpack.c.l.b16 %v293
    %v902 = vunpack.c.l.b16 %v294
    %v903 = vunpack.c.h.b16 %v294
    %v904 = vunpack.c.l.b16 %v295
    %v905 = vunpack.c.h.b16 %v295
    %v906 = vunpack.c.l.b16 %v296
    %v907 = vunpack.c.h.b16 %v296
    %v908 = vunpack.c.l.b16 %v297
    %v909 = vunpack.c.h.b16 %v297
    %v910 = vunpack.c.l.b16 %v298
    %v911 = vunpack.c.l.b16 %v299
    %v912 = vunpack.c.h.b16 %v299
    %v913 = vunpack.c.l.b16 %v300
    %v914 = vunpack.c.h.b16 %v300
    %v915 = vunpack.c.l.b16 %v301
    %v916 = vunpack.c.h.b16 %v301
    %v917 = vunpack.c.l.b16 %v302
    %v918 = vunpack.c.h.b16 %v302
    %v919 = vunpack.c.l.b16 %v303
    %v920 = vunpack.c.l.b16 %v304
    %v921 = vunpack.c.h.b16 %v304
    %v922 = vunpack.c.l.b16 %v305
    %v923 = vunpack.c.h.b16 %v305
    %v924 = vunpack.c.l.b16 %v306
    %v925 = vunpack.c.h.b16 %v306
    %v926 = vunpack.c.l.b16 %v307
    %v927 = vunpack.c.h.b16 %v307
    %v928 = vunpack.c.l.b16 %v308
    %v929 = vunpack.c.l.b16 %v309
    %v930 = vunpack.c.h.b16 %v309
    %v931 = vunpack.c.l.b16 %v310
    %v932 = vunpack.c.h.b16 %v310
    %v933 = vunpack.c.l.b16 %v311
    %v934 = vunpack.c.h.b16 %v311
    %v935 = vunpack.c.l.b16 %v312
    %v936 = vunpack.c.h.b16 %v312
    %v937 = vunpack.c.l.b16 %v313
    %v938 = vunpack.c.l.b16 %v314
    %v939 = vunpack.c.h.b16 %v314
    %v940 = vunpack.c.l.b16 %v315
    %v941 = vunpack.c.h.b16 %v315
    %v942 = vunpack.c.l.b16 %v316
    %v943 = vunpack.c.h.b16 %v316
    %v944 = vunpack.c.l.b16 %v317
    %v945 = vunpack.c.h.b16 %v317
    %v946 = vunpack.c.l.b16 %v318
    %v947 = vunpack.c.l.b16 %v319
    %v948 = vunpack.c.h.b16 %v319
    %v949 = vunpack.c.l.b16 %v320
    %v950 = vunpack.c.h.b16 %v320
    %v951 = vunpack.c.l.b16 %v321
    %v952 = vunpack.c.h.b16 %v321
    %v953 = vunpack.c.l.b16 %v322
    %v954 = vunpack.c.h.b16 %v322
    %v955 = vunpack.c.l.b16 %v323
    %v956 = vunpack.c.l.b16 %v324
    %v957 = vunpack.c.h.b16 %v324
    %v958 = vunpack.c.l.b16 %v325
    %v959 = vunpack.c.h.b16 %v325
    %v960 = vunpack.c.l.b16 %v326
    %v961 = vunpack.c.h.b16 %v326
    %v962 = vunpack.c.l.b16 %v327
    %v963 = vunpack.c.h.b16 %v327
    %v964 = vunpack.c.l.b16 %v328
    %v965 = vunpack.c.l.b16 %v329
    %v966 = vunpack.c.h.b16 %v329
    %v967 = vunpack.c.l.b16 %v330
    %v968 = vunpack.c.h.b16 %v330
    %v969 = vunpack.c.l.b16 %v331
    %v970 = vunpack.c.h.b16 %v331
    %v971 = vunpack.c.l.b16 %v332
    %v972 = vunpack.c.h.b16 %v332
    %v973 = vunpack.c.l.b16 %v333
    %v974 = vunpack.c.l.b16 %v334
    %v975 = vunpack.c.h.b16 %v334
    %v976 = vunpack.c.l.b16 %v335
    %v977 = vunpack.c.h.b16 %v335
    %v978 = vunpack.c.l.b16 %v336
    %v979 = vunpack.c.h.b16 %v336
    %v980 = vunpack.c.l.b16 %v337
    %v981 = vunpack.c.h.b16 %v337
    %v982 = vunpack.c.l.b16 %v338
    %v983 = vunpack.c.l.b16 %v339
    %v984 = vunpack.c.h.b16 %v339
    %v985 = vunpack.c.l.b16 %v340
    %v986 = vunpack.c.h.b16 %v340
    %v987 = vunpack.c.l.b16 %v341
    %v988 = vunpack.c.h.b16 %v341
    %v989 = vunpack.c.l.b16 %v342
    %v990 = vunpack.c.h.b16 %v342
    %v991 = vunpack.c.l.b16 %v343
    %v992 = vunpack.c.l.b16 %v344
    %v993 = vunpack.c.h.b16 %v344
    %v994 = vunpack.c.l.b16 %v345
    %v995 = vunpack.c.h.b16 %v345
    %v996 = vunpack.c.l.b16 %v346
    %v997 = vunpack.c.h.b16 %v346
    %v998 = vunpack.c.l.b16 %v347
    %v999 = vunpack.c.h.b16 %v347
    %v1000 = vunpack.c.l.b16 %v348
    %v1001 = vunpack.c.l.b16 %v349
    %v1002 = vunpack.c.h.b16 %v349
    %v1003 = vunpack.c.l.b16 %v350
    %v1004 = vunpack.c.h.b16 %v350
    %v1005 = vunpack.c.l.b16 %v351
    %v1006 = vunpack.c.h.b16 %v351
    %v1007 = vunpack.c.l.b16 %v352
    %v1008 = vunpack.c.h.b16 %v352
    %v1009 = vunpack.c.l.b16 %v353
    %v1010 = vunpack.c.l.b16 %v354
    %v1011 = vunpack.c.h.b16 %v354
    %v1012 = vunpack.c.l.b16 %v355
    %v1013 = vunpack.c.h.b16 %v355
    %v1014 = vunpack.c.l.b16 %v356
    %v1015 = vunpack.c.h.b16 %v356
    %v1016 = vunpack.c.l.b16 %v357
    %v1017 = vunpack.c.h.b16 %v357
    %v1018 = vunpack.c.l.b16 %v358
    %v1019 = vunpack.c.l.b16 %v359
    %v1020 = vunpack.c.h.b16 %v359
    %v1021 = vunpack.c.l.b16 %v360
    %v1022 = vunpack.c.h.b16 %v360
    %v1023 = vunpack.c.l.b16 %v361
    %v1024 = vunpack.c.h.b16 %v361
    %v1025 = vunpack.c.l.b16 %v362
    %v1026 = vunpack.c.h.b16 %v362
    %v1027 = vunpack.c.l.b16 %v363
    %v1028 = vunpack.c.l.b16 %v364
    %v1029 = vunpack.c.h.b16 %v364
    %v1030 = vunpack.c.l.b16 %v365
    %v1031 = vunpack.c.h.b16 %v365
    %v1032 = vunpack.c.l.b16 %v366
    %v1033 = vunpack.c.h.b16 %v366
    %v1034 = vunpack.c.l.b16 %v367
    %v1035 = vunpack.c.h.b16 %v367
    %v1036 = vunpack.c.l.b16 %v368
    %v1037 = vunpack.c.l.b16 %v369
    %v1038 = vunpack.c.h.b16 %v369
    %v1039 = vunpack.c.l.b16 %v370
    %v1040 = vunpack.c.h.b16 %v370
    %v1041 = vunpack.c.l.b16 %v371
    %v1042 = vunpack.c.h.b16 %v371
    %v1043 = vunpack.c.l.b16 %v372
    %v1044 = vunpack.c.h.b16 %v372
    %v1045 = vunpack.c.l.b16 %v373
    %v1046 = vpack.c.b16 %v623, %v614
    %v1047 = vpack.c.b16 %v624, %v615
    %v1048 = vpack.c.b16 %v625, %v616
    %v1049 = vpack.c.b16 %v626, %v617
    %v1050 = vpack.c.b16 %v627, %v618
    %v1051 = vpack.c.b16 %v628, %v619
    %v1052 = vpack.c.b16 %v629, %v620
    %v1053 = vpack.c.b16 %v630, %v621
    %v1054 = vpack.c.b16 %v631, %v622
    %v1055 = vpack.c.b16 %v641, %v632
    %v1056 = vpack.c.b16 %v642, %v633
    %v1057 = vpack.c.b16 %v643, %v634
    %v1058 = vpack.c.b16 %v644, %v635
    %v1059 = vpack.c.b16 %v645, %v636
    %v1060 = vpack.c.b16 %v646, %v637
    %v1061 = vpack.c.b16 %v647, %v638
    %v1062 = vpack.c.b16 %v648, %v639
    %v1063 = vpack.c.b16 %v649, %v640
    %v1064 = vpack.c.b16 %v659, %v650
    %v1065 = vpack.c.b16 %v660, %v651
    %v1066 = vpack.c.b16 %v661, %v652
    %v1067 = vpack.c.b16 %v662, %v653
    %v1068 = vpack.c.b16 %v663, %v654
    %v1069 = vpack.c.b16 %v664, %v655
    %v1070 = vpack.c.b16 %v665, %v656
    %v1071 = vpack.c.b16 %v666, %v657
    %v1072 = vpack.c.b16 %v667, %v658
    %v1073 = vpack.c.b16 %v677, %v668
    %v1074 = vpack.c.b16 %v678, %v669
    %v1075 = vpack.c.b16 %v679, %v670
    %v1076 = vpack.c.b16 %v680, %v671
    %v1077 = vpack.c.b16 %v681, %v672
    %v1078 = vpack.c.b16 %v682, %v673
    %v1079 = vpack.c.b16 %v683, %v674
    %v1080 = vpack.c.b16 %v684, %v675
    %v1081 = vpack.c.b16 %v685, %v676
    %v1082 = vpack.c.b16 %v695, %v686
    %v1083 = vpack.c.b16 %v696, %v687
    %v1084 = vpack.c.b16 %v697, %v688
    %v1085 = vpack.c.b16 %v698, %v689
    %v1086 = vpack.c.b16 %v699, %v690
    %v1087 = vpack.c.b16 %v700, %v691
    %v1088 = vpack.c.b16 %v701, %v692
    %v1089 = vpack.c.b16 %v702, %v693
    %v1090 = vpack.c.b16 %v703, %v694
    %v1091 = vpack.c.b16 %v713, %v704
    %v1092 = vpack.c.b16 %v714, %v705
    %v1093 = vpack.c.b16 %v715, %v706
    %v1094 = vpack.c.b16 %v716, %v707
    %v1095 = vpack.c.b16 %v717, %v708
    %v1096 = vpack.c.b16 %v718, %v709
    %v1097 = vpack.c.b16 %v719, %v710
    %v1098 = vpack.c.b16 %v720, %v711
    %v1099 = vpack.c.b16 %v721, %v712
    %v1100 = vpack.c.b16 %v731, %v722
    %v1101 = vpack.c.b16 %v732, %v723
    %v1102 = vpack.c.b16 %v733, %v724
    %v1103 = vpack.c.b16 %v734, %v725
    %v1104 = vpack.c.b16 %v735, %v726
    %v1105 = vpack.c.b16 %v736, %v727
    %v1106 = vpack.c.b16 %v737, %v728
    %v1107 = vpack.c.b16 %v738, %v729
    %v1108 = vpack.c.b16 %v739, %v730
    %v1109 = vpack.c.b16 %v749, %v740
    %v1110 = vpack.c.b16 %v750, %v741
    %v1111 = vpack.c.b16 %v751, %v742
    %v1112 = vpack.c.b16 %v752, %v743
    %v1113 = vpack.c.b16 %v753, %v744
    %v1114 = vpack.c.b16 %v754, %v745
    %v1115 = vpack.c.b16 %v755, %v746
    %v1116 = vpack.c.b16 %v756, %v747
    %v1117 = vpack.c.b16 %v757, %v748
    %v1118 = vpack.c.b16 %v767, %v758
    %v1119 = vpack.c.b16 %v768, %v759
    %v1120 = vpack.c.b16 %v769, %v760
    %v1121 = vpack.c.b16 %v770, %v761
    %v1122 = vpack.c.b16 %v771, %v762
    %v1123 = vpack.c.b16 %v772, %v763
    %v1124 = vpack.c.b16 %v773, %v764
    %v1125 = vpack.c.b16 %v774, %v765
    %v1126 = vpack.c.b16 %v775, %v766
    %v1127 = vpack.c.b16 %v785, %v776
    %v1128 = vpack.c.b16 %v786, %v777
    %v1129 = vpack.c.b16 %v787, %v778
    %v1130 = vpack.c.b16 %v788, %v779
    %v1131 = vpack.c.b16 %v789, %v780
    %v1132 = vpack.c.b16 %v790, %v781
    %v1133 = vpack.c.b16 %v791, %v782
    %v1134 = vpack.c.b16 %v792, %v783
    %v1135 = vpack.c.b16 %v793, %v784
    %v1136 = vpack.c.b16 %v803, %v794
    %v1137 = vpack.c.b16 %v804, %v795
    %v1138 = vpack.c.b16 %v805, %v796
    %v1139 = vpack.c.b16 %v806, %v797
    %v1140 = vpack.c.b16 %v807, %v798
    %v1141 = vpack.c.b16 %v808, %v799
    %v1142 = vpack.c.b16 %v809, %v800
    %v1143 = vpack.c.b16 %v810, %v801
    %v1144 = vpack.c.b16 %v811, %v802
    %v1145 = vpack.c.b16 %v821, %v812
    %v1146 = vpack.c.b16 %v822, %v813
    %v1147 = vpack.c.b16 %v823, %v814
    %v1148 = vpack.c.b16 %v824, %v815
    %v1149 = vpack.c.b16 %v825, %v816
    %v1150 = vpack.c.b16 %v826, %v817
    %v1151 = vpack.c.b16 %v827, %v818
    %v1152 = vpack.c.b16 %v828, %v819
    %v1153 = vpack.c.b16 %v829, %v820
    %v1154 = vpack.c.b16 %v839, %v830
    %v1155 = vpack.c.b16 %v840, %v831
    %v1156 = vpack.c.b16 %v841, %v832
    %v1157 = vpack.c.b16 %v842, %v833
    %v1158 = vpack.c.b16 %v843, %v834
    %v1159 = vpack.c.b16 %v844, %v835
    %v1160 = vpack.c.b16 %v845, %v836
    %v1161 = vpack.c.b16 %v846, %v837
    %v1162 = vpack.c.b16 %v847, %v838
    %v1163 = vpack.c.b16 %v857, %v848
    %v1164 = vpack.c.b16 %v858, %v849
    %v1165 = vpack.c.b16 %v859, %v850
    %v1166 = vpack.c.b16 %v860, %v851
    %v1167 = vpack.c.b16 %v861, %v852
    %v1168 = vpack.c.b16 %v862, %v853
    %v1169 = vpack.c.b16 %v863, %v854
    %v1170 = vpack.c.b16 %v864, %v855
    %v1171 = vpack.c.b16 %v865, %v856
    %v1172 = vpack.c.b16 %v875, %v866
    %v1173 = vpack.c.b16 %v876, %v867
    %v1174 = vpack.c.b16 %v877, %v868
    %v1175 = vpack.c.b16 %v878, %v869
    %v1176 = vpack.c.b16 %v879, %v870
    %v1177 = vpack.c.b16 %v880, %v871
    %v1178 = vpack.c.b16 %v881, %v872
    %v1179 = vpack.c.b16 %v882, %v873
    %v1180 = vpack.c.b16 %v883, %v874
    %v1181 = vpack.c.b16 %v893, %v884
    %v1182 = vpack.c.b16 %v894, %v885
    %v1183 = vpack.c.b16 %v895, %v886
    %v1184 = vpack.c.b16 %v896, %v887
    %v1185 = vpack.c.b16 %v897, %v888
    %v1186 = vpack.c.b16 %v898, %v889
    %v1187 = vpack.c.b16 %v899, %v890
    %v1188 = vpack.c.b16 %v900, %v891
    %v1189 = vpack.c.b16 %v901, %v892
    %v1190 = vpack.c.b16 %v911, %v902
    %v1191 = vpack.c.b16 %v912, %v903
    %v1192 = vpack.c.b16 %v913, %v904
    %v1193 = vpack.c.b16 %v914, %v905
    %v1194 = vpack.c.b16 %v915, %v906
    %v1195 = vpack.c.b16 %v916, %v907
    %v1196 = vpack.c.b16 %v917, %v908
    %v1197 = vpack.c.b16 %v918, %v909
    %v1198 = vpack.c.b16 %v919, %v910
    %v1199 = vpack.c.b16 %v929, %v920
    %v1200 = vpack.c.b16 %v930, %v921
    %v1201 = vpack.c.b16 %v931, %v922
    %v1202 = vpack.c.b16 %v932, %v923
    %v1203 = vpack.c.b16 %v933, %v924
    %v1204 = vpack.c.b16 %v934, %v925
    %v1205 = vpack.c.b16 %v935, %v926
    %v1206 = vpack.c.b16 %v936, %v927
    %v1207 = vpack.c.b16 %v937, %v928
    %v1208 = vpack.c.b16 %v947, %v938
    %v1209 = vpack.c.b16 %v948, %v939
    %v1210 = vpack.c.b16 %v949, %v940
    %v1211 = vpack.c.b16 %v950, %v941
    %v1212 = vpack.c.b16 %v951, %v942
    %v1213 = vpack.c.b16 %v952, %v943
    %v1214 = vpack.c.b16 %v953, %v944
    %v1215 = vpack.c.b16 %v954, %v945
    %v1216 = vpack.c.b16 %v955, %v946
    %v1217 = vpack.c.b16 %v965, %v956
    %v1218 = vpack.c.b16 %v966, %v957
    %v1219 = vpack.c.b16 %v967, %v958
    %v1220 = vpack.c.b16 %v968, %v959
    %v1221 = vpack.c.b16 %v969, %v960
    %v1222 = vpack.c.b16 %v970, %v961
    %v1223 = vpack.c.b16 %v971, %v962
    %v1224 = vpack.c.b16 %v972, %v963
    %v1225 = vpack.c.b16 %v973, %v964
    %v1226 = vpack.c.b16 %v983, %v974
    %v1227 = vpack.c.b16 %v984, %v975
    %v1228 = vpack.c.b16 %v985, %v976
    %v1229 = vpack.c.b16 %v986, %v977
    %v1230 = vpack.c.b16 %v987, %v978
    %v1231 = vpack.c.b16 %v988, %v979
    %v1232 = vpack.c.b16 %v989, %v980
    %v1233 = vpack.c.b16 %v990, %v981
    %v1234 = vpack.c.b16 %v991, %v982
    %v1235 = vpack.c.b16 %v1001, %v992
    %v1236 = vpack.c.b16 %v1002, %v993
    %v1237 = vpack.c.b16 %v1003, %v994
    %v1238 = vpack.c.b16 %v1004, %v995
    %v1239 = vpack.c.b16 %v1005, %v996
    %v1240 = vpack.c.b16 %v1006, %v997
    %v1241 = vpack.c.b16 %v1007, %v998
    %v1242 = vpack.c.b16 %v1008, %v999
    %v1243 = vpack.c.b16 %v1009, %v1000
    %v1244 = vpack.c.b16 %v1019, %v1010
    %v1245 = vpack.c.b16 %v1020, %v1011
    %v1246 = vpack.c.b16 %v1021, %v1012
    %v1247 = vpack.c.b16 %v1022, %v1013
    %v1248 = vpack.c.b16 %v1023, %v1014
    %v1249 = vpack.c.b16 %v1024, %v1015
    %v1250 = vpack.c.b16 %v1025, %v1016
    %v1251 = vpack.c.b16 %v1026, %v1017
    %v1252 = vpack.c.b16 %v1027, %v1018
    %v1253 = vpack.c.b16 %v1037, %v1028
    %v1254 = vpack.c.b16 %v1038, %v1029
    %v1255 = vpack.c.b16 %v1039, %v1030
    %v1256 = vpack.c.b16 %v1040, %v1031
    %v1257 = vpack.c.b16 %v1041, %v1032
    %v1258 = vpack.c.b16 %v1042, %v1033
    %v1259 = vpack.c.b16 %v1043, %v1034
    %v1260 = vpack.c.b16 %v1044, %v1035
    %v1261 = vpack.c.b16 %v1045, %v1036
    %1478 = vmatprep.subr.bf16.mxu0 %v1047
    %1479 = vmatpush1.bf16.msra.mxu0 %v1046
    %1480 = vmatprep.subr.bf16.mxu0 %v1056
    %1481 = vmatpush1.bf16.msra.mxu0 %v1055
    %1482 = vmatprep.subr.bf16.mxu0 %v1065
    %1483 = vmatpush1.bf16.msra.mxu0 %v1064
    %1484 = vmatprep.subr.bf16.mxu0 %v1074
    %1485 = vmatpush1.bf16.msra.mxu0 %v1073
    %1486 = vmatprep.subr.bf16.mxu0 %v1083
    %1487 = vmatpush1.bf16.msra.mxu0 %v1082
    %1488 = vmatprep.subr.bf16.mxu0 %v1092
    %1489 = vmatpush1.bf16.msra.mxu0 %v1091
    %1490 = vmatprep.subr.bf16.mxu0 %v1101
    %1491 = vmatpush1.bf16.msra.mxu0 %v1100
    %1492 = vmatprep.subr.bf16.mxu0 %v1110
    %1493 = vmatpush1.bf16.msra.mxu0 %v1109
    %1494 = vmatprep.subr.bf16.mxu0 %v1119
    %1495 = vmatpush1.bf16.msra.mxu0 %v1118
    %1496 = vmatprep.subr.bf16.mxu0 %v1128
    %1497 = vmatpush1.bf16.msra.mxu0 %v1127
    %1498 = vmatprep.subr.bf16.mxu0 %v1137
    %1499 = vmatpush1.bf16.msra.mxu0 %v1136
    %1500 = vmatprep.subr.bf16.mxu0 %v1146
    %1501 = vmatpush1.bf16.msra.mxu0 %v1145
    %1502 = vmatprep.subr.bf16.mxu0 %v1155
    %1503 = vmatpush1.bf16.msra.mxu0 %v1154
    %1504 = vmatprep.subr.bf16.mxu0 %v1164
    %1505 = vmatpush1.bf16.msra.mxu0 %v1163
    %1506 = vmatprep.subr.bf16.mxu0 %v1173
    %1507 = vmatpush1.bf16.msra.mxu0 %v1172
    %1508 = vmatprep.subr.bf16.mxu0 %v1182
    %1509 = vmatpush1.bf16.msra.mxu0 %v1181
    %1510 = vmatprep.mubr.bf16.mxu0 %v111
    %1511 = vmatmul.mubr.bf16.gmra.mrb[0].mxu0 %v110
    %v1512 = vpop.f32.mrb[0].mxu0
    %v1513 = vadd.f32 0.0, %v1512
    %v1514 = vpop.f32.mrb[0].mxu0
    %v1515 = vadd.f32 0.0, %v1514
    %v1516 = vpop.f32.mrb[0].mxu0
    %v1517 = vadd.f32 0.0, %v1516
    %v1518 = vpop.f32.mrb[0].mxu0
    %v1519 = vadd.f32 0.0, %v1518
    %1520 = vmatprep.mubr.bf16.mxu0 %v114
    %1521 = vmatmul.mubr.bf16.gmra.mrb[0].mxu0 %v113
    %v1522 = vpop.f32.mrb[0].mxu0
    %v1523 = vadd.f32 0.0, %v1522
    %v1524 = vpop.f32.mrb[0].mxu0
    %v1525 = vadd.f32 0.0, %v1524
    %v1526 = vpop.f32.mrb[0].mxu0
    %v1527 = vadd.f32 0.0, %v1526
    %v1528 = vpop.f32.mrb[0].mxu0
    %v1529 = vadd.f32 0.0, %v1528
    %1530 = vmatprep.mubr.bf16.mxu0 %v117
    %1531 = vmatmul.mubr.bf16.gmra.mrb[0].mxu0 %v116
    %v1532 = vpop.f32.mrb[0].mxu0
    %v1533 = vadd.f32 0.0, %v1532
    %v1534 = vpop.f32.mrb[0].mxu0
    %v1535 = vadd.f32 0.0, %v1534
    %v1536 = vpop.f32.mrb[0].mxu0
    %v1537 = vadd.f32 0.0, %v1536
    %v1538 = vpop.f32.mrb[0].mxu0
    %v1539 = vadd.f32 0.0, %v1538
    %1540 = vmatprep.mubr.bf16.mxu0 %v120
    %1541 = vmatmul.mubr.bf16.gmra.mrb[0].mxu0 %v119
    %v1542 = vpop.f32.mrb[0].mxu0
    %v1543 = vadd.f32 0.0, %v1542
    %v1544 = vpop.f32.mrb[0].mxu0
    %v1545 = vadd.f32 0.0, %v1544
    %v1546 = vpop.f32.mrb[0].mxu0
    %v1547 = vadd.f32 0.0, %v1546
    %v1548 = vpop.f32.mrb[0].mxu0
    %v1549 = vadd.f32 0.0, %v1548
    %1550 = vmatprep.mubr.bf16.mxu0 %v123
    %1551 = vmatmul.mubr.bf16.gmra.mrb[0].mxu0 %v122
    %v1552 = vpop.f32.mrb[0].mxu0
    %v1553 = vadd.f32 0.0, %v1552
    %v1554 = vpop.f32.mrb[0].mxu0
    %v1555 = vadd.f32 0.0, %v1554
    %v1556 = vpop.f32.mrb[0].mxu0
    %v1557 = vadd.f32 0.0, %v1556
    %v1558 = vpop.f32.mrb[0].mxu0
    %v1559 = vadd.f32 0.0, %v1558
    %1560 = vmatprep.mubr.bf16.mxu0 %v126
    %1561 = vmatmul.mubr.bf16.gmra.mrb[0].mxu0 %v125
    %v1562 = vpop.f32.mrb[0].mxu0
    %v1563 = vadd.f32 0.0, %v1562
    %v1564 = vpop.f32.mrb[0].mxu0
    %v1565 = vadd.f32 0.0, %v1564
    %v1566 = vpop.f32.mrb[0].mxu0
    %v1567 = vadd.f32 0.0, %v1566
    %v1568 = vpop.f32.mrb[0].mxu0
    %v1569 = vadd.f32 0.0, %v1568
    %1570 = vmatprep.mubr.bf16.mxu0 %v129
    %1571 = vmatmul.mubr.bf16.gmra.mrb[0].mxu0 %v128
    %v1572 = vpop.f32.mrb[0].mxu0
    %v1573 = vadd.f32 0.0, %v1572
    %v1574 = vpop.f32.mrb[0].mxu0
    %v1575 = vadd.f32 0.0, %v1574
    %v1576 = vpop.f32.mrb[0].mxu0
    %v1577 = vadd.f32 0.0, %v1576
    %v1578 = vpop.f32.mrb[0].mxu0
    %v1579 = vadd.f32 0.0, %v1578
    %1580 = vmatprep.mubr.bf16.mxu0 %v132
    %1581 = vmatmul.mubr.bf16.gmra.mrb[0].mxu0 %v131
    %v1582 = vpop.f32.mrb[0].mxu0
    %v1583 = vadd.f32 0.0, %v1582
    %v1584 = vpop.f32.mrb[0].mxu0
    %v1585 = vadd.f32 0.0, %v1584
    %v1586 = vpop.f32.mrb[0].mxu0
    %v1587 = vadd.f32 0.0, %v1586
    %v1588 = vpop.f32.mrb[0].mxu0
    %v1589 = vadd.f32 0.0, %v1588
    %1590 = vdwg.mxu0
    %1591 = vmatprep.subr.bf16.mxu0 %v1191
    %1592 = vmatpush1.bf16.msra.mxu0 %v1190
    %1593 = vmatprep.subr.bf16.mxu0 %v1200
    %1594 = vmatpush1.bf16.msra.mxu0 %v1199
    %1595 = vmatprep.subr.bf16.mxu0 %v1209
    %1596 = vmatpush1.bf16.msra.mxu0 %v1208
    %1597 = vmatprep.subr.bf16.mxu0 %v1218
    %1598 = vmatpush1.bf16.msra.mxu0 %v1217
    %1599 = vmatprep.subr.bf16.mxu0 %v1227
    %1600 = vmatpush1.bf16.msra.mxu0 %v1226
    %1601 = vmatprep.subr.bf16.mxu0 %v1236
    %1602 = vmatpush1.bf16.msra.mxu0 %v1235
    %1603 = vmatprep.subr.bf16.mxu0 %v1245
    %1604 = vmatpush1.bf16.msra.mxu0 %v1244
    %1605 = vmatprep.subr.bf16.mxu0 %v1254
    %1606 = vmatpush1.bf16.msra.mxu0 %v1253
    %1607 = vmatprep.subr.bf16.mxu0 0
    %1608 = vmatpush1.bf16.msra.mxu0 0
    %1609 = vmatprep.subr.bf16.mxu0 0
    %1610 = vmatpush1.bf16.msra.mxu0 0
    %1611 = vmatprep.subr.bf16.mxu0 0
    %1612 = vmatpush1.bf16.msra.mxu0 0
    %1613 = vmatprep.subr.bf16.mxu0 0
    %1614 = vmatpush1.bf16.msra.mxu0 0
    %1615 = vmatprep.subr.bf16.mxu0 0
    %1616 = vmatpush1.bf16.msra.mxu0 0
    %1617 = vmatprep.subr.bf16.mxu0 0
    %1618 = vmatpush1.bf16.msra.mxu0 0
    %1619 = vmatprep.subr.bf16.mxu0 0
    %1620 = vmatpush1.bf16.msra.mxu0 0
    %1621 = vmatprep.subr.bf16.mxu0 0
    %1622 = vmatpush1.bf16.msra.mxu0 0
    %1623 = vmatprep.mubr.bf16.mxu0 0
    %1624 = vmatmul.mubr.bf16.gmra.mrb[0].mxu0 %v112
    %v1625 = vpop.f32.mrb[0].mxu0
    %v1626 = vadd.f32 %v1513, %v1625
    %v1627 = vpop.f32.mrb[0].mxu0
    %v1628 = vadd.f32 %v1515, %v1627
    %v1629 = vpop.f32.mrb[0].mxu0
    %v1630 = vadd.f32 %v1517, %v1629
    %v1631 = vpop.f32.mrb[0].mxu0
    %v1632 = vadd.f32 %v1519, %v1631
    %1633 = vmatprep.mubr.bf16.mxu0 0
    %1634 = vmatmul.mubr.bf16.gmra.mrb[0].mxu0 %v115
    %v1635 = vpop.f32.mrb[0].mxu0
    %v1636 = vadd.f32 %v1523, %v1635
    %v1637 = vpop.f32.mrb[0].mxu0
    %v1638 = vadd.f32 %v1525, %v1637
    %v1639 = vpop.f32.mrb[0].mxu0
    %v1640 = vadd.f32 %v1527, %v1639
    %v1641 = vpop.f32.mrb[0].mxu0
    %v1642 = vadd.f32 %v1529, %v1641
    %1643 = vmatprep.mubr.bf16.mxu0 0
    %1644 = vmatmul.mubr.bf16.gmra.mrb[0].mxu0 %v118
    %v1645 = vpop.f32.mrb[0].mxu0
    %v1646 = vadd.f32 %v1533, %v1645
    %v1647 = vpop.f32.mrb[0].mxu0
    %v1648 = vadd.f32 %v1535, %v1647
    %v1649 = vpop.f32.mrb[0].mxu0
    %v1650 = vadd.f32 %v1537, %v1649
    %v1651 = vpop.f32.mrb[0].mxu0
    %v1652 = vadd.f32 %v1539, %v1651
    %1653 = vmatprep.mubr.bf16.mxu0 0
    %1654 = vmatmul.mubr.bf16.gmra.mrb[0].mxu0 %v121
    %v1655 = vpop.f32.mrb[0].mxu0
    %v1656 = vadd.f32 %v1543, %v1655
    %v1657 = vpop.f32.mrb[0].mxu0
    %v1658 = vadd.f32 %v1545, %v1657
    %v1659 = vpop.f32.mrb[0].mxu0
    %v1660 = vadd.f32 %v1547, %v1659
    %v1661 = vpop.f32.mrb[0].mxu0
    %v1662 = vadd.f32 %v1549, %v1661
    %1663 = vmatprep.mubr.bf16.mxu0 0
    %1664 = vmatmul.mubr.bf16.gmra.mrb[0].mxu0 %v124
    %v1665 = vpop.f32.mrb[0].mxu0
    %v1666 = vadd.f32 %v1553, %v1665
    %v1667 = vpop.f32.mrb[0].mxu0
    %v1668 = vadd.f32 %v1555, %v1667
    %v1669 = vpop.f32.mrb[0].mxu0
    %v1670 = vadd.f32 %v1557, %v1669
    %v1671 = vpop.f32.mrb[0].mxu0
    %v1672 = vadd.f32 %v1559, %v1671
    %1673 = vmatprep.mubr.bf16.mxu0 0
    %1674 = vmatmul.mubr.bf16.gmra.mrb[0].mxu0 %v127
    %v1675 = vpop.f32.mrb[0].mxu0
    %v1676 = vadd.f32 %v1563, %v1675
    %v1677 = vpop.f32.mrb[0].mxu0
    %v1678 = vadd.f32 %v1565, %v1677
    %v1679 = vpop.f32.mrb[0].mxu0
    %v1680 = vadd.f32 %v1567, %v1679
    %v1681 = vpop.f32.mrb[0].mxu0
    %v1682 = vadd.f32 %v1569, %v1681
    %1683 = vmatprep.mubr.bf16.mxu0 0
    %1684 = vmatmul.mubr.bf16.gmra.mrb[0].mxu0 %v130
    %v1685 = vpop.f32.mrb[0].mxu0
    %v1686 = vadd.f32 %v1573, %v1685
    %v1687 = vpop.f32.mrb[0].mxu0
    %v1688 = vadd.f32 %v1575, %v1687
    %v1689 = vpop.f32.mrb[0].mxu0
    %v1690 = vadd.f32 %v1577, %v1689
    %v1691 = vpop.f32.mrb[0].mxu0
    %v1692 = vadd.f32 %v1579, %v1691
    %1693 = vmatprep.mubr.bf16.mxu0 0
    %1694 = vmatmul.mubr.bf16.gmra.mrb[0].mxu0 %v133
    %v1695 = vpop.f32.mrb[0].mxu0
    %v1696 = vadd.f32 %v1583, %v1695
    %v1697 = vpop.f32.mrb[0].mxu0
    %v1698 = vadd.f32 %v1585, %v1697
    %v1699 = vpop.f32.mrb[0].mxu0
    %v1700 = vadd.f32 %v1587, %v1699
    %v1701 = vpop.f32.mrb[0].mxu0
    %v1702 = vadd.f32 %v1589, %v1701
    %1703 = vdwg.mxu0
    %1704 = vmatprep.subr.bf16.mxu0 %v1049
    %1705 = vmatpush1.bf16.msra.mxu0 %v1048
    %1706 = vmatprep.subr.bf16.mxu0 %v1058
    %1707 = vmatpush1.bf16.msra.mxu0 %v1057
    %1708 = vmatprep.subr.bf16.mxu0 %v1067
    %1709 = vmatpush1.bf16.msra.mxu0 %v1066
    %1710 = vmatprep.subr.bf16.mxu0 %v1076
    %1711 = vmatpush1.bf16.msra.mxu0 %v1075
    %1712 = vmatprep.subr.bf16.mxu0 %v1085
    %1713 = vmatpush1.bf16.msra.mxu0 %v1084
    %1714 = vmatprep.subr.bf16.mxu0 %v1094
    %1715 = vmatpush1.bf16.msra.mxu0 %v1093
    %1716 = vmatprep.subr.bf16.mxu0 %v1103
    %1717 = vmatpush1.bf16.msra.mxu0 %v1102
    %1718 = vmatprep.subr.bf16.mxu0 %v1112
    %1719 = vmatpush1.bf16.msra.mxu0 %v1111
    %1720 = vmatprep.subr.bf16.mxu0 %v1121
    %1721 = vmatpush1.bf16.msra.mxu0 %v1120
    %1722 = vmatprep.subr.bf16.mxu0 %v1130
    %1723 = vmatpush1.bf16.msra.mxu0 %v1129
    %1724 = vmatprep.subr.bf16.mxu0 %v1139
    %1725 = vmatpush1.bf16.msra.mxu0 %v1138
    %1726 = vmatprep.subr.bf16.mxu0 %v1148
    %1727 = vmatpush1.bf16.msra.mxu0 %v1147
    %1728 = vmatprep.subr.bf16.mxu0 %v1157
    %1729 = vmatpush1.bf16.msra.mxu0 %v1156
    %1730 = vmatprep.subr.bf16.mxu0 %v1166
    %1731 = vmatpush1.bf16.msra.mxu0 %v1165
    %1732 = vmatprep.subr.bf16.mxu0 %v1175
    %1733 = vmatpush1.bf16.msra.mxu0 %v1174
    %1734 = vmatprep.subr.bf16.mxu0 %v1184
    %1735 = vmatpush1.bf16.msra.mxu0 %v1183
    %1736 = vmatprep.mubr.bf16.mxu0 %v111
    %1737 = vmatmul.mubr.bf16.gmra.mrb[0].mxu0 %v110
    %v1738 = vpop.f32.mrb[0].mxu0
    %v1739 = vadd.f32 0.0, %v1738
    %v1740 = vpop.f32.mrb[0].mxu0
    %v1741 = vadd.f32 0.0, %v1740
    %v1742 = vpop.f32.mrb[0].mxu0
    %v1743 = vadd.f32 0.0, %v1742
    %v1744 = vpop.f32.mrb[0].mxu0
    %v1745 = vadd.f32 0.0, %v1744
    %1746 = vmatprep.mubr.bf16.mxu0 %v114
    %1747 = vmatmul.mubr.bf16.gmra.mrb[0].mxu0 %v113
    %v1748 = vpop.f32.mrb[0].mxu0
    %v1749 = vadd.f32 0.0, %v1748
    %v1750 = vpop.f32.mrb[0].mxu0
    %v1751 = vadd.f32 0.0, %v1750
    %v1752 = vpop.f32.mrb[0].mxu0
    %v1753 = vadd.f32 0.0, %v1752
    %v1754 = vpop.f32.mrb[0].mxu0
    %v1755 = vadd.f32 0.0, %v1754
    %1756 = vmatprep.mubr.bf16.mxu0 %v117
    %1757 = vmatmul.mubr.bf16.gmra.mrb[0].mxu0 %v116
    %v1758 = vpop.f32.mrb[0].mxu0
    %v1759 = vadd.f32 0.0, %v1758
    %v1760 = vpop.f32.mrb[0].mxu0
    %v1761 = vadd.f32 0.0, %v1760
    %v1762 = vpop.f32.mrb[0].mxu0
    %v1763 = vadd.f32 0.0, %v1762
    %v1764 = vpop.f32.mrb[0].mxu0
    %v1765 = vadd.f32 0.0, %v1764
    %1766 = vmatprep.mubr.bf16.mxu0 %v120
    %1767 = vmatmul.mubr.bf16.gmra.mrb[0].mxu0 %v119
    %v1768 = vpop.f32.mrb[0].mxu0
    %v1769 = vadd.f32 0.0, %v1768
    %v1770 = vpop.f32.mrb[0].mxu0
    %v1771 = vadd.f32 0.0, %v1770
    %v1772 = vpop.f32.mrb[0].mxu0
    %v1773 = vadd.f32 0.0, %v1772
    %v1774 = vpop.f32.mrb[0].mxu0
    %v1775 = vadd.f32 0.0, %v1774
    %1776 = vmatprep.mubr.bf16.mxu0 %v123
    %1777 = vmatmul.mubr.bf16.gmra.mrb[0].mxu0 %v122
    %v1778 = vpop.f32.mrb[0].mxu0
    %v1779 = vadd.f32 0.0, %v1778
    %v1780 = vpop.f32.mrb[0].mxu0
    %v1781 = vadd.f32 0.0, %v1780
    %v1782 = vpop.f32.mrb[0].mxu0
    %v1783 = vadd.f32 0.0, %v1782
    %v1784 = vpop.f32.mrb[0].mxu0
    %v1785 = vadd.f32 0.0, %v1784
    %1786 = vmatprep.mubr.bf16.mxu0 %v126
    %1787 = vmatmul.mubr.bf16.gmra.mrb[0].mxu0 %v125
    %v1788 = vpop.f32.mrb[0].mxu0
    %v1789 = vadd.f32 0.0, %v1788
    %v1790 = vpop.f32.mrb[0].mxu0
    %v1791 = vadd.f32 0.0, %v1790
    %v1792 = vpop.f32.mrb[0].mxu0
    %v1793 = vadd.f32 0.0, %v1792
    %v1794 = vpop.f32.mrb[0].mxu0
    %v1795 = vadd.f32 0.0, %v1794
    %1796 = vmatprep.mubr.bf16.mxu0 %v129
    %1797 = vmatmul.mubr.bf16.gmra.mrb[0].mxu0 %v128
    %v1798 = vpop.f32.mrb[0].mxu0
    %v1799 = vadd.f32 0.0, %v1798
    %v1800 = vpop.f32.mrb[0].mxu0
    %v1801 = vadd.f32 0.0, %v1800
    %v1802 = vpop.f32.mrb[0].mxu0
    %v1803 = vadd.f32 0.0, %v1802
    %v1804 = vpop.f32.mrb[0].mxu0
    %v1805 = vadd.f32 0.0, %v1804
    %1806 = vmatprep.mubr.bf16.mxu0 %v132
    %1807 = vmatmul.mubr.bf16.gmra.mrb[0].mxu0 %v131
    %v1808 = vpop.f32.mrb[0].mxu0
    %v1809 = vadd.f32 0.0, %v1808
    %v1810 = vpop.f32.mrb[0].mxu0
    %v1811 = vadd.f32 0.0, %v1810
    %v1812 = vpop.f32.mrb[0].mxu0
    %v1813 = vadd.f32 0.0, %v1812
    %v1814 = vpop.f32.mrb[0].mxu0
    %v1815 = vadd.f32 0.0, %v1814
    %1816 = vdwg.mxu0
    %1817 = vmatprep.subr.bf16.mxu0 %v1193
    %1818 = vmatpush1.bf16.msra.mxu0 %v1192
    %1819 = vmatprep.subr.bf16.mxu0 %v1202
    %1820 = vmatpush1.bf16.msra.mxu0 %v1201
    %1821 = vmatprep.subr.bf16.mxu0 %v1211
    %1822 = vmatpush1.bf16.msra.mxu0 %v1210
    %1823 = vmatprep.subr.bf16.mxu0 %v1220
    %1824 = vmatpush1.bf16.msra.mxu0 %v1219
    %1825 = vmatprep.subr.bf16.mxu0 %v1229
    %1826 = vmatpush1.bf16.msra.mxu0 %v1228
    %1827 = vmatprep.subr.bf16.mxu0 %v1238
    %1828 = vmatpush1.bf16.msra.mxu0 %v1237
    %1829 = vmatprep.subr.bf16.mxu0 %v1247
    %1830 = vmatpush1.bf16.msra.mxu0 %v1246
    %1831 = vmatprep.subr.bf16.mxu0 %v1256
    %1832 = vmatpush1.bf16.msra.mxu0 %v1255
    %1833 = vmatprep.subr.bf16.mxu0 0
    %1834 = vmatpush1.bf16.msra.mxu0 0
    %1835 = vmatprep.subr.bf16.mxu0 0
    %1836 = vmatpush1.bf16.msra.mxu0 0
    %1837 = vmatprep.subr.bf16.mxu0 0
    %1838 = vmatpush1.bf16.msra.mxu0 0
    %1839 = vmatprep.subr.bf16.mxu0 0
    %1840 = vmatpush1.bf16.msra.mxu0 0
    %1841 = vmatprep.subr.bf16.mxu0 0
    %1842 = vmatpush1.bf16.msra.mxu0 0
    %1843 = vmatprep.subr.bf16.mxu0 0
    %1844 = vmatpush1.bf16.msra.mxu0 0
    %1845 = vmatprep.subr.bf16.mxu0 0
    %1846 = vmatpush1.bf16.msra.mxu0 0
    %1847 = vmatprep.subr.bf16.mxu0 0
    %1848 = vmatpush1.bf16.msra.mxu0 0
    %1849 = vmatprep.mubr.bf16.mxu0 0
    %1850 = vmatmul.mubr.bf16.gmra.mrb[0].mxu0 %v112
    %v1851 = vpop.f32.mrb[0].mxu0
    %v1852 = vadd.f32 %v1739, %v1851
    %v1853 = vpop.f32.mrb[0].mxu0
    %v1854 = vadd.f32 %v1741, %v1853
    %v1855 = vpop.f32.mrb[0].mxu0
    %v1856 = vadd.f32 %v1743, %v1855
    %v1857 = vpop.f32.mrb[0].mxu0
    %v1858 = vadd.f32 %v1745, %v1857
    %1859 = vmatprep.mubr.bf16.mxu0 0
    %1860 = vmatmul.mubr.bf16.gmra.mrb[0].mxu0 %v115
    %v1861 = vpop.f32.mrb[0].mxu0
    %v1862 = vadd.f32 %v1749, %v1861
    %v1863 = vpop.f32.mrb[0].mxu0
    %v1864 = vadd.f32 %v1751, %v1863
    %v1865 = vpop.f32.mrb[0].mxu0
    %v1866 = vadd.f32 %v1753, %v1865
    %v1867 = vpop.f32.mrb[0].mxu0
    %v1868 = vadd.f32 %v1755, %v1867
    %1869 = vmatprep.mubr.bf16.mxu0 0
    %1870 = vmatmul.mubr.bf16.gmra.mrb[0].mxu0 %v118
    %v1871 = vpop.f32.mrb[0].mxu0
    %v1872 = vadd.f32 %v1759, %v1871
    %v1873 = vpop.f32.mrb[0].mxu0
    %v1874 = vadd.f32 %v1761, %v1873
    %v1875 = vpop.f32.mrb[0].mxu0
    %v1876 = vadd.f32 %v1763, %v1875
    %v1877 = vpop.f32.mrb[0].mxu0
    %v1878 = vadd.f32 %v1765, %v1877
    %1879 = vmatprep.mubr.bf16.mxu0 0
    %1880 = vmatmul.mubr.bf16.gmra.mrb[0].mxu0 %v121
    %v1881 = vpop.f32.mrb[0].mxu0
    %v1882 = vadd.f32 %v1769, %v1881
    %v1883 = vpop.f32.mrb[0].mxu0
    %v1884 = vadd.f32 %v1771, %v1883
    %v1885 = vpop.f32.mrb[0].mxu0
    %v1886 = vadd.f32 %v1773, %v1885
    %v1887 = vpop.f32.mrb[0].mxu0
    %v1888 = vadd.f32 %v1775, %v1887
    %1889 = vmatprep.mubr.bf16.mxu0 0
    %1890 = vmatmul.mubr.bf16.gmra.mrb[0].mxu0 %v124
    %v1891 = vpop.f32.mrb[0].mxu0
    %v1892 = vadd.f32 %v1779, %v1891
    %v1893 = vpop.f32.mrb[0].mxu0
    %v1894 = vadd.f32 %v1781, %v1893
    %v1895 = vpop.f32.mrb[0].mxu0
    %v1896 = vadd.f32 %v1783, %v1895
    %v1897 = vpop.f32.mrb[0].mxu0
    %v1898 = vadd.f32 %v1785, %v1897
    %1899 = vmatprep.mubr.bf16.mxu0 0
    %1900 = vmatmul.mubr.bf16.gmra.mrb[0].mxu0 %v127
    %v1901 = vpop.f32.mrb[0].mxu0
    %v1902 = vadd.f32 %v1789, %v1901
    %v1903 = vpop.f32.mrb[0].mxu0
    %v1904 = vadd.f32 %v1791, %v1903
    %v1905 = vpop.f32.mrb[0].mxu0
    %v1906 = vadd.f32 %v1793, %v1905
    %v1907 = vpop.f32.mrb[0].mxu0
    %v1908 = vadd.f32 %v1795, %v1907
    %1909 = vmatprep.mubr.bf16.mxu0 0
    %1910 = vmatmul.mubr.bf16.gmra.mrb[0].mxu0 %v130
    %v1911 = vpop.f32.mrb[0].mxu0
    %v1912 = vadd.f32 %v1799, %v1911
    %v1913 = vpop.f32.mrb[0].mxu0
    %v1914 = vadd.f32 %v1801, %v1913
    %v1915 = vpop.f32.mrb[0].mxu0
    %v1916 = vadd.f32 %v1803, %v1915
    %v1917 = vpop.f32.mrb[0].mxu0
    %v1918 = vadd.f32 %v1805, %v1917
    %1919 = vmatprep.mubr.bf16.mxu0 0
    %1920 = vmatmul.mubr.bf16.gmra.mrb[0].mxu0 %v133
    %v1921 = vpop.f32.mrb[0].mxu0
    %v1922 = vadd.f32 %v1809, %v1921
    %v1923 = vpop.f32.mrb[0].mxu0
    %v1924 = vadd.f32 %v1811, %v1923
    %v1925 = vpop.f32.mrb[0].mxu0
    %v1926 = vadd.f32 %v1813, %v1925
    %v1927 = vpop.f32.mrb[0].mxu0
    %v1928 = vadd.f32 %v1815, %v1927
    %1929 = vdwg.mxu0
    %1930 = vmatprep.subr.bf16.mxu0 %v1051
    %1931 = vmatpush1.bf16.msra.mxu0 %v1050
    %1932 = vmatprep.subr.bf16.mxu0 %v1060
    %1933 = vmatpush1.bf16.msra.mxu0 %v1059
    %1934 = vmatprep.subr.bf16.mxu0 %v1069
    %1935 = vmatpush1.bf16.msra.mxu0 %v1068
    %1936 = vmatprep.subr.bf16.mxu0 %v1078
    %1937 = vmatpush1.bf16.msra.mxu0 %v1077
    %1938 = vmatprep.subr.bf16.mxu0 %v1087
    %1939 = vmatpush1.bf16.msra.mxu0 %v1086
    %1940 = vmatprep.subr.bf16.mxu0 %v1096
    %1941 = vmatpush1.bf16.msra.mxu0 %v1095
    %1942 = vmatprep.subr.bf16.mxu0 %v1105
    %1943 = vmatpush1.bf16.msra.mxu0 %v1104
    %1944 = vmatprep.subr.bf16.mxu0 %v1114
    %1945 = vmatpush1.bf16.msra.mxu0 %v1113
    %1946 = vmatprep.subr.bf16.mxu0 %v1123
    %1947 = vmatpush1.bf16.msra.mxu0 %v1122
    %1948 = vmatprep.subr.bf16.mxu0 %v1132
    %1949 = vmatpush1.bf16.msra.mxu0 %v1131
    %1950 = vmatprep.subr.bf16.mxu0 %v1141
    %1951 = vmatpush1.bf16.msra.mxu0 %v1140
    %1952 = vmatprep.subr.bf16.mxu0 %v1150
    %1953 = vmatpush1.bf16.msra.mxu0 %v1149
    %1954 = vmatprep.subr.bf16.mxu0 %v1159
    %1955 = vmatpush1.bf16.msra.mxu0 %v1158
    %1956 = vmatprep.subr.bf16.mxu0 %v1168
    %1957 = vmatpush1.bf16.msra.mxu0 %v1167
    %1958 = vmatprep.subr.bf16.mxu0 %v1177
    %1959 = vmatpush1.bf16.msra.mxu0 %v1176
    %1960 = vmatprep.subr.bf16.mxu0 %v1186
    %1961 = vmatpush1.bf16.msra.mxu0 %v1185
    %1962 = vmatprep.mubr.bf16.mxu0 %v111
    %1963 = vmatmul.mubr.bf16.gmra.mrb[0].mxu0 %v110
    %v1964 = vpop.f32.mrb[0].mxu0
    %v1965 = vadd.f32 0.0, %v1964
    %v1966 = vpop.f32.mrb[0].mxu0
    %v1967 = vadd.f32 0.0, %v1966
    %v1968 = vpop.f32.mrb[0].mxu0
    %v1969 = vadd.f32 0.0, %v1968
    %v1970 = vpop.f32.mrb[0].mxu0
    %v1971 = vadd.f32 0.0, %v1970
    %1972 = vmatprep.mubr.bf16.mxu0 %v114
    %1973 = vmatmul.mubr.bf16.gmra.mrb[0].mxu0 %v113
    %v1974 = vpop.f32.mrb[0].mxu0
    %v1975 = vadd.f32 0.0, %v1974
    %v1976 = vpop.f32.mrb[0].mxu0
    %v1977 = vadd.f32 0.0, %v1976
    %v1978 = vpop.f32.mrb[0].mxu0
    %v1979 = vadd.f32 0.0, %v1978
    %v1980 = vpop.f32.mrb[0].mxu0
    %v1981 = vadd.f32 0.0, %v1980
    %1982 = vmatprep.mubr.bf16.mxu0 %v117
    %1983 = vmatmul.mubr.bf16.gmra.mrb[0].mxu0 %v116
    %v1984 = vpop.f32.mrb[0].mxu0
    %v1985 = vadd.f32 0.0, %v1984
    %v1986 = vpop.f32.mrb[0].mxu0
    %v1987 = vadd.f32 0.0, %v1986
    %v1988 = vpop.f32.mrb[0].mxu0
    %v1989 = vadd.f32 0.0, %v1988
    %v1990 = vpop.f32.mrb[0].mxu0
    %v1991 = vadd.f32 0.0, %v1990
    %1992 = vmatprep.mubr.bf16.mxu0 %v120
    %1993 = vmatmul.mubr.bf16.gmra.mrb[0].mxu0 %v119
    %v1994 = vpop.f32.mrb[0].mxu0
    %v1995 = vadd.f32 0.0, %v1994
    %v1996 = vpop.f32.mrb[0].mxu0
    %v1997 = vadd.f32 0.0, %v1996
    %v1998 = vpop.f32.mrb[0].mxu0
    %v1999 = vadd.f32 0.0, %v1998
    %v2000 = vpop.f32.mrb[0].mxu0
    %v2001 = vadd.f32 0.0, %v2000
    %2002 = vmatprep.mubr.bf16.mxu0 %v123
    %2003 = vmatmul.mubr.bf16.gmra.mrb[0].mxu0 %v122
    %v2004 = vpop.f32.mrb[0].mxu0
    %v2005 = vadd.f32 0.0, %v2004
    %v2006 = vpop.f32.mrb[0].mxu0
    %v2007 = vadd.f32 0.0, %v2006
    %v2008 = vpop.f32.mrb[0].mxu0
    %v2009 = vadd.f32 0.0, %v2008
    %v2010 = vpop.f32.mrb[0].mxu0
    %v2011 = vadd.f32 0.0, %v2010
    %2012 = vmatprep.mubr.bf16.mxu0 %v126
    %2013 = vmatmul.mubr.bf16.gmra.mrb[0].mxu0 %v125
    %v2014 = vpop.f32.mrb[0].mxu0
    %v2015 = vadd.f32 0.0, %v2014
    %v2016 = vpop.f32.mrb[0].mxu0
    %v2017 = vadd.f32 0.0, %v2016
    %v2018 = vpop.f32.mrb[0].mxu0
    %v2019 = vadd.f32 0.0, %v2018
    %v2020 = vpop.f32.mrb[0].mxu0
    %v2021 = vadd.f32 0.0, %v2020
    %2022 = vmatprep.mubr.bf16.mxu0 %v129
    %2023 = vmatmul.mubr.bf16.gmra.mrb[0].mxu0 %v128
    %v2024 = vpop.f32.mrb[0].mxu0
    %v2025 = vadd.f32 0.0, %v2024
    %v2026 = vpop.f32.mrb[0].mxu0
    %v2027 = vadd.f32 0.0, %v2026
    %v2028 = vpop.f32.mrb[0].mxu0
    %v2029 = vadd.f32 0.0, %v2028
    %v2030 = vpop.f32.mrb[0].mxu0
    %v2031 = vadd.f32 0.0, %v2030
    %2032 = vmatprep.mubr.bf16.mxu0 %v132
    %2033 = vmatmul.mubr.bf16.gmra.mrb[0].mxu0 %v131
    %v2034 = vpop.f32.mrb[0].mxu0
    %v2035 = vadd.f32 0.0, %v2034
    %v2036 = vpop.f32.mrb[0].mxu0
    %v2037 = vadd.f32 0.0, %v2036
    %v2038 = vpop.f32.mrb[0].mxu0
    %v2039 = vadd.f32 0.0, %v2038
    %v2040 = vpop.f32.mrb[0].mxu0
    %v2041 = vadd.f32 0.0, %v2040
    %2042 = vdwg.mxu0
    %2043 = vmatprep.subr.bf16.mxu0 %v1195
    %2044 = vmatpush1.bf16.msra.mxu0 %v1194
    %2045 = vmatprep.subr.bf16.mxu0 %v1204
    %2046 = vmatpush1.bf16.msra.mxu0 %v1203
    %2047 = vmatprep.subr.bf16.mxu0 %v1213
    %2048 = vmatpush1.bf16.msra.mxu0 %v1212
    %2049 = vmatprep.subr.bf16.mxu0 %v1222
    %2050 = vmatpush1.bf16.msra.mxu0 %v1221
    %2051 = vmatprep.subr.bf16.mxu0 %v1231
    %2052 = vmatpush1.bf16.msra.mxu0 %v1230
    %2053 = vmatprep.subr.bf16.mxu0 %v1240
    %2054 = vmatpush1.bf16.msra.mxu0 %v1239
    %2055 = vmatprep.subr.bf16.mxu0 %v1249
    %2056 = vmatpush1.bf16.msra.mxu0 %v1248
    %2057 = vmatprep.subr.bf16.mxu0 %v1258
    %2058 = vmatpush1.bf16.msra.mxu0 %v1257
    %2059 = vmatprep.subr.bf16.mxu0 0
    %2060 = vmatpush1.bf16.msra.mxu0 0
    %2061 = vmatprep.subr.bf16.mxu0 0
    %2062 = vmatpush1.bf16.msra.mxu0 0
    %2063 = vmatprep.subr.bf16.mxu0 0
    %2064 = vmatpush1.bf16.msra.mxu0 0
    %2065 = vmatprep.subr.bf16.mxu0 0
    %2066 = vmatpush1.bf16.msra.mxu0 0
    %2067 = vmatprep.subr.bf16.mxu0 0
    %2068 = vmatpush1.bf16.msra.mxu0 0
    %2069 = vmatprep.subr.bf16.mxu0 0
    %2070 = vmatpush1.bf16.msra.mxu0 0
    %2071 = vmatprep.subr.bf16.mxu0 0
    %2072 = vmatpush1.bf16.msra.mxu0 0
    %2073 = vmatprep.subr.bf16.mxu0 0
    %2074 = vmatpush1.bf16.msra.mxu0 0
    %2075 = vmatprep.mubr.bf16.mxu0 0
    %2076 = vmatmul.mubr.bf16.gmra.mrb[0].mxu0 %v112
    %v2077 = vpop.f32.mrb[0].mxu0
    %v2078 = vadd.f32 %v1965, %v2077
    %v2079 = vpop.f32.mrb[0].mxu0
    %v2080 = vadd.f32 %v1967, %v2079
    %v2081 = vpop.f32.mrb[0].mxu0
    %v2082 = vadd.f32 %v1969, %v2081
    %v2083 = vpop.f32.mrb[0].mxu0
    %v2084 = vadd.f32 %v1971, %v2083
    %2085 = vmatprep.mubr.bf16.mxu0 0
    %2086 = vmatmul.mubr.bf16.gmra.mrb[0].mxu0 %v115
    %v2087 = vpop.f32.mrb[0].mxu0
    %v2088 = vadd.f32 %v1975, %v2087
    %v2089 = vpop.f32.mrb[0].mxu0
    %v2090 = vadd.f32 %v1977, %v2089
    %v2091 = vpop.f32.mrb[0].mxu0
    %v2092 = vadd.f32 %v1979, %v2091
    %v2093 = vpop.f32.mrb[0].mxu0
    %v2094 = vadd.f32 %v1981, %v2093
    %2095 = vmatprep.mubr.bf16.mxu0 0
    %2096 = vmatmul.mubr.bf16.gmra.mrb[0].mxu0 %v118
    %v2097 = vpop.f32.mrb[0].mxu0
    %v2098 = vadd.f32 %v1985, %v2097
    %v2099 = vpop.f32.mrb[0].mxu0
    %v2100 = vadd.f32 %v1987, %v2099
    %v2101 = vpop.f32.mrb[0].mxu0
    %v2102 = vadd.f32 %v1989, %v2101
    %v2103 = vpop.f32.mrb[0].mxu0
    %v2104 = vadd.f32 %v1991, %v2103
    %2105 = vmatprep.mubr.bf16.mxu0 0
    %2106 = vmatmul.mubr.bf16.gmra.mrb[0].mxu0 %v121
    %v2107 = vpop.f32.mrb[0].mxu0
    %v2108 = vadd.f32 %v1995, %v2107
    %v2109 = vpop.f32.mrb[0].mxu0
    %v2110 = vadd.f32 %v1997, %v2109
    %v2111 = vpop.f32.mrb[0].mxu0
    %v2112 = vadd.f32 %v1999, %v2111
    %v2113 = vpop.f32.mrb[0].mxu0
    %v2114 = vadd.f32 %v2001, %v2113
    %2115 = vmatprep.mubr.bf16.mxu0 0
    %2116 = vmatmul.mubr.bf16.gmra.mrb[0].mxu0 %v124
    %v2117 = vpop.f32.mrb[0].mxu0
    %v2118 = vadd.f32 %v2005, %v2117
    %v2119 = vpop.f32.mrb[0].mxu0
    %v2120 = vadd.f32 %v2007, %v2119
    %v2121 = vpop.f32.mrb[0].mxu0
    %v2122 = vadd.f32 %v2009, %v2121
    %v2123 = vpop.f32.mrb[0].mxu0
    %v2124 = vadd.f32 %v2011, %v2123
    %2125 = vmatprep.mubr.bf16.mxu0 0
    %2126 = vmatmul.mubr.bf16.gmra.mrb[0].mxu0 %v127
    %v2127 = vpop.f32.mrb[0].mxu0
    %v2128 = vadd.f32 %v2015, %v2127
    %v2129 = vpop.f32.mrb[0].mxu0
    %v2130 = vadd.f32 %v2017, %v2129
    %v2131 = vpop.f32.mrb[0].mxu0
    %v2132 = vadd.f32 %v2019, %v2131
    %v2133 = vpop.f32.mrb[0].mxu0
    %v2134 = vadd.f32 %v2021, %v2133
    %2135 = vmatprep.mubr.bf16.mxu0 0
    %2136 = vmatmul.mubr.bf16.gmra.mrb[0].mxu0 %v130
    %v2137 = vpop.f32.mrb[0].mxu0
    %v2138 = vadd.f32 %v2025, %v2137
    %v2139 = vpop.f32.mrb[0].mxu0
    %v2140 = vadd.f32 %v2027, %v2139
    %v2141 = vpop.f32.mrb[0].mxu0
    %v2142 = vadd.f32 %v2029, %v2141
    %v2143 = vpop.f32.mrb[0].mxu0
    %v2144 = vadd.f32 %v2031, %v2143
    %2145 = vmatprep.mubr.bf16.mxu0 0
    %2146 = vmatmul.mubr.bf16.gmra.mrb[0].mxu0 %v133
    %v2147 = vpop.f32.mrb[0].mxu0
    %v2148 = vadd.f32 %v2035, %v2147
    %v2149 = vpop.f32.mrb[0].mxu0
    %v2150 = vadd.f32 %v2037, %v2149
    %v2151 = vpop.f32.mrb[0].mxu0
    %v2152 = vadd.f32 %v2039, %v2151
    %v2153 = vpop.f32.mrb[0].mxu0
    %v2154 = vadd.f32 %v2041, %v2153
    %2155 = vdwg.mxu0
    %2156 = vmatprep.subr.bf16.mxu0 %v1053
    %2157 = vmatpush1.bf16.msra.mxu0 %v1052
    %2158 = vmatprep.subr.bf16.mxu0 %v1062
    %2159 = vmatpush1.bf16.msra.mxu0 %v1061
    %2160 = vmatprep.subr.bf16.mxu0 %v1071
    %2161 = vmatpush1.bf16.msra.mxu0 %v1070
    %2162 = vmatprep.subr.bf16.mxu0 %v1080
    %2163 = vmatpush1.bf16.msra.mxu0 %v1079
    %2164 = vmatprep.subr.bf16.mxu0 %v1089
    %2165 = vmatpush1.bf16.msra.mxu0 %v1088
    %2166 = vmatprep.subr.bf16.mxu0 %v1098
    %2167 = vmatpush1.bf16.msra.mxu0 %v1097
    %2168 = vmatprep.subr.bf16.mxu0 %v1107
    %2169 = vmatpush1.bf16.msra.mxu0 %v1106
    %2170 = vmatprep.subr.bf16.mxu0 %v1116
    %2171 = vmatpush1.bf16.msra.mxu0 %v1115
    %2172 = vmatprep.subr.bf16.mxu0 %v1125
    %2173 = vmatpush1.bf16.msra.mxu0 %v1124
    %2174 = vmatprep.subr.bf16.mxu0 %v1134
    %2175 = vmatpush1.bf16.msra.mxu0 %v1133
    %2176 = vmatprep.subr.bf16.mxu0 %v1143
    %2177 = vmatpush1.bf16.msra.mxu0 %v1142
    %2178 = vmatprep.subr.bf16.mxu0 %v1152
    %2179 = vmatpush1.bf16.msra.mxu0 %v1151
    %2180 = vmatprep.subr.bf16.mxu0 %v1161
    %2181 = vmatpush1.bf16.msra.mxu0 %v1160
    %2182 = vmatprep.subr.bf16.mxu0 %v1170
    %2183 = vmatpush1.bf16.msra.mxu0 %v1169
    %2184 = vmatprep.subr.bf16.mxu0 %v1179
    %2185 = vmatpush1.bf16.msra.mxu0 %v1178
    %2186 = vmatprep.subr.bf16.mxu0 %v1188
    %2187 = vmatpush1.bf16.msra.mxu0 %v1187
    %2188 = vmatprep.mubr.bf16.mxu0 %v111
    %2189 = vmatmul.mubr.bf16.gmra.mrb[0].mxu0 %v110
    %v2190 = vpop.f32.mrb[0].mxu0
    %v2191 = vadd.f32 0.0, %v2190
    %v2192 = vpop.f32.mrb[0].mxu0
    %v2193 = vadd.f32 0.0, %v2192
    %v2194 = vpop.f32.mrb[0].mxu0
    %v2195 = vadd.f32 0.0, %v2194
    %v2196 = vpop.f32.mrb[0].mxu0
    %v2197 = vadd.f32 0.0, %v2196
    %2198 = vmatprep.mubr.bf16.mxu0 %v114
    %2199 = vmatmul.mubr.bf16.gmra.mrb[0].mxu0 %v113
    %v2200 = vpop.f32.mrb[0].mxu0
    %v2201 = vadd.f32 0.0, %v2200
    %v2202 = vpop.f32.mrb[0].mxu0
    %v2203 = vadd.f32 0.0, %v2202
    %v2204 = vpop.f32.mrb[0].mxu0
    %v2205 = vadd.f32 0.0, %v2204
    %v2206 = vpop.f32.mrb[0].mxu0
    %v2207 = vadd.f32 0.0, %v2206
    %2208 = vmatprep.mubr.bf16.mxu0 %v117
    %2209 = vmatmul.mubr.bf16.gmra.mrb[0].mxu0 %v116
    %v2210 = vpop.f32.mrb[0].mxu0
    %v2211 = vadd.f32 0.0, %v2210
    %v2212 = vpop.f32.mrb[0].mxu0
    %v2213 = vadd.f32 0.0, %v2212
    %v2214 = vpop.f32.mrb[0].mxu0
    %v2215 = vadd.f32 0.0, %v2214
    %v2216 = vpop.f32.mrb[0].mxu0
    %v2217 = vadd.f32 0.0, %v2216
    %2218 = vmatprep.mubr.bf16.mxu0 %v120
    %2219 = vmatmul.mubr.bf16.gmra.mrb[0].mxu0 %v119
    %v2220 = vpop.f32.mrb[0].mxu0
    %v2221 = vadd.f32 0.0, %v2220
    %v2222 = vpop.f32.mrb[0].mxu0
    %v2223 = vadd.f32 0.0, %v2222
    %v2224 = vpop.f32.mrb[0].mxu0
    %v2225 = vadd.f32 0.0, %v2224
    %v2226 = vpop.f32.mrb[0].mxu0
    %v2227 = vadd.f32 0.0, %v2226
    %2228 = vmatprep.mubr.bf16.mxu0 %v123
    %2229 = vmatmul.mubr.bf16.gmra.mrb[0].mxu0 %v122
    %v2230 = vpop.f32.mrb[0].mxu0
    %v2231 = vadd.f32 0.0, %v2230
    %v2232 = vpop.f32.mrb[0].mxu0
    %v2233 = vadd.f32 0.0, %v2232
    %v2234 = vpop.f32.mrb[0].mxu0
    %v2235 = vadd.f32 0.0, %v2234
    %v2236 = vpop.f32.mrb[0].mxu0
    %v2237 = vadd.f32 0.0, %v2236
    %2238 = vmatprep.mubr.bf16.mxu0 %v126
    %2239 = vmatmul.mubr.bf16.gmra.mrb[0].mxu0 %v125
    %v2240 = vpop.f32.mrb[0].mxu0
    %v2241 = vadd.f32 0.0, %v2240
    %v2242 = vpop.f32.mrb[0].mxu0
    %v2243 = vadd.f32 0.0, %v2242
    %v2244 = vpop.f32.mrb[0].mxu0
    %v2245 = vadd.f32 0.0, %v2244
    %v2246 = vpop.f32.mrb[0].mxu0
    %v2247 = vadd.f32 0.0, %v2246
    %2248 = vmatprep.mubr.bf16.mxu0 %v129
    %2249 = vmatmul.mubr.bf16.gmra.mrb[0].mxu0 %v128
    %v2250 = vpop.f32.mrb[0].mxu0
    %v2251 = vadd.f32 0.0, %v2250
    %v2252 = vpop.f32.mrb[0].mxu0
    %v2253 = vadd.f32 0.0, %v2252
    %v2254 = vpop.f32.mrb[0].mxu0
    %v2255 = vadd.f32 0.0, %v2254
    %v2256 = vpop.f32.mrb[0].mxu0
    %v2257 = vadd.f32 0.0, %v2256
    %2258 = vmatprep.mubr.bf16.mxu0 %v132
    %2259 = vmatmul.mubr.bf16.gmra.mrb[0].mxu0 %v131
    %v2260 = vpop.f32.mrb[0].mxu0
    %v2261 = vadd.f32 0.0, %v2260
    %v2262 = vpop.f32.mrb[0].mxu0
    %v2263 = vadd.f32 0.0, %v2262
    %v2264 = vpop.f32.mrb[0].mxu0
    %v2265 = vadd.f32 0.0, %v2264
    %v2266 = vpop.f32.mrb[0].mxu0
    %v2267 = vadd.f32 0.0, %v2266
    %2268 = vdwg.mxu0
    %2269 = vmatprep.subr.bf16.mxu0 %v1197
    %2270 = vmatpush1.bf16.msra.mxu0 %v1196
    %2271 = vmatprep.subr.bf16.mxu0 %v1206
    %2272 = vmatpush1.bf16.msra.mxu0 %v1205
    %2273 = vmatprep.subr.bf16.mxu0 %v1215
    %2274 = vmatpush1.bf16.msra.mxu0 %v1214
    %2275 = vmatprep.subr.bf16.mxu0 %v1224
    %2276 = vmatpush1.bf16.msra.mxu0 %v1223
    %2277 = vmatprep.subr.bf16.mxu0 %v1233
    %2278 = vmatpush1.bf16.msra.mxu0 %v1232
    %2279 = vmatprep.subr.bf16.mxu0 %v1242
    %2280 = vmatpush1.bf16.msra.mxu0 %v1241
    %2281 = vmatprep.subr.bf16.mxu0 %v1251
    %2282 = vmatpush1.bf16.msra.mxu0 %v1250
    %2283 = vmatprep.subr.bf16.mxu0 %v1260
    %2284 = vmatpush1.bf16.msra.mxu0 %v1259
    %2285 = vmatprep.subr.bf16.mxu0 0
    %2286 = vmatpush1.bf16.msra.mxu0 0
    %2287 = vmatprep.subr.bf16.mxu0 0
    %2288 = vmatpush1.bf16.msra.mxu0 0
    %2289 = vmatprep.subr.bf16.mxu0 0
    %2290 = vmatpush1.bf16.msra.mxu0 0
    %2291 = vmatprep.subr.bf16.mxu0 0
    %2292 = vmatpush1.bf16.msra.mxu0 0
    %2293 = vmatprep.subr.bf16.mxu0 0
    %2294 = vmatpush1.bf16.msra.mxu0 0
    %2295 = vmatprep.subr.bf16.mxu0 0
    %2296 = vmatpush1.bf16.msra.mxu0 0
    %2297 = vmatprep.subr.bf16.mxu0 0
    %2298 = vmatpush1.bf16.msra.mxu0 0
    %2299 = vmatprep.subr.bf16.mxu0 0
    %2300 = vmatpush1.bf16.msra.mxu0 0
    %2301 = vmatprep.mubr.bf16.mxu0 0
    %2302 = vmatmul.mubr.bf16.gmra.mrb[0].mxu0 %v112
    %v2303 = vpop.f32.mrb[0].mxu0
    %v2304 = vadd.f32 %v2191, %v2303
    %v2305 = vpop.f32.mrb[0].mxu0
    %v2306 = vadd.f32 %v2193, %v2305
    %v2307 = vpop.f32.mrb[0].mxu0
    %v2308 = vadd.f32 %v2195, %v2307
    %v2309 = vpop.f32.mrb[0].mxu0
    %v2310 = vadd.f32 %v2197, %v2309
    %2311 = vmatprep.mubr.bf16.mxu0 0
    %2312 = vmatmul.mubr.bf16.gmra.mrb[0].mxu0 %v115
    %v2313 = vpop.f32.mrb[0].mxu0
    %v2314 = vadd.f32 %v2201, %v2313
    %v2315 = vpop.f32.mrb[0].mxu0
    %v2316 = vadd.f32 %v2203, %v2315
    %v2317 = vpop.f32.mrb[0].mxu0
    %v2318 = vadd.f32 %v2205, %v2317
    %v2319 = vpop.f32.mrb[0].mxu0
    %v2320 = vadd.f32 %v2207, %v2319
    %2321 = vmatprep.mubr.bf16.mxu0 0
    %2322 = vmatmul.mubr.bf16.gmra.mrb[0].mxu0 %v118
    %v2323 = vpop.f32.mrb[0].mxu0
    %v2324 = vadd.f32 %v2211, %v2323
    %v2325 = vpop.f32.mrb[0].mxu0
    %v2326 = vadd.f32 %v2213, %v2325
    %v2327 = vpop.f32.mrb[0].mxu0
    %v2328 = vadd.f32 %v2215, %v2327
    %v2329 = vpop.f32.mrb[0].mxu0
    %v2330 = vadd.f32 %v2217, %v2329
    %2331 = vmatprep.mubr.bf16.mxu0 0
    %2332 = vmatmul.mubr.bf16.gmra.mrb[0].mxu0 %v121
    %v2333 = vpop.f32.mrb[0].mxu0
    %v2334 = vadd.f32 %v2221, %v2333
    %v2335 = vpop.f32.mrb[0].mxu0
    %v2336 = vadd.f32 %v2223, %v2335
    %v2337 = vpop.f32.mrb[0].mxu0
    %v2338 = vadd.f32 %v2225, %v2337
    %v2339 = vpop.f32.mrb[0].mxu0
    %v2340 = vadd.f32 %v2227, %v2339
    %2341 = vmatprep.mubr.bf16.mxu0 0
    %2342 = vmatmul.mubr.bf16.gmra.mrb[0].mxu0 %v124
    %v2343 = vpop.f32.mrb[0].mxu0
    %v2344 = vadd.f32 %v2231, %v2343
    %v2345 = vpop.f32.mrb[0].mxu0
    %v2346 = vadd.f32 %v2233, %v2345
    %v2347 = vpop.f32.mrb[0].mxu0
    %v2348 = vadd.f32 %v2235, %v2347
    %v2349 = vpop.f32.mrb[0].mxu0
    %v2350 = vadd.f32 %v2237, %v2349
    %2351 = vmatprep.mubr.bf16.mxu0 0
    %2352 = vmatmul.mubr.bf16.gmra.mrb[0].mxu0 %v127
    %v2353 = vpop.f32.mrb[0].mxu0
    %v2354 = vadd.f32 %v2241, %v2353
    %v2355 = vpop.f32.mrb[0].mxu0
    %v2356 = vadd.f32 %v2243, %v2355
    %v2357 = vpop.f32.mrb[0].mxu0
    %v2358 = vadd.f32 %v2245, %v2357
    %v2359 = vpop.f32.mrb[0].mxu0
    %v2360 = vadd.f32 %v2247, %v2359
    %2361 = vmatprep.mubr.bf16.mxu0 0
    %2362 = vmatmul.mubr.bf16.gmra.mrb[0].mxu0 %v130
    %v2363 = vpop.f32.mrb[0].mxu0
    %v2364 = vadd.f32 %v2251, %v2363
    %v2365 = vpop.f32.mrb[0].mxu0
    %v2366 = vadd.f32 %v2253, %v2365
    %v2367 = vpop.f32.mrb[0].mxu0
    %v2368 = vadd.f32 %v2255, %v2367
    %v2369 = vpop.f32.mrb[0].mxu0
    %v2370 = vadd.f32 %v2257, %v2369
    %2371 = vmatprep.mubr.bf16.mxu0 0
    %2372 = vmatmul.mubr.bf16.gmra.mrb[0].mxu0 %v133
    %v2373 = vpop.f32.mrb[0].mxu0
    %v2374 = vadd.f32 %v2261, %v2373
    %v2375 = vpop.f32.mrb[0].mxu0
    %v2376 = vadd.f32 %v2263, %v2375
    %v2377 = vpop.f32.mrb[0].mxu0
    %v2378 = vadd.f32 %v2265, %v2377
    %v2379 = vpop.f32.mrb[0].mxu0
    %v2380 = vadd.f32 %v2267, %v2379
    %2381 = vdwg.mxu0
    %2382 = vmatprep.subr.bf16.mxu0 0
    %2383 = vmatpush1.bf16.msra.mxu0 %v1054
    %2384 = vmatprep.subr.bf16.mxu0 0
    %2385 = vmatpush1.bf16.msra.mxu0 %v1063
    %2386 = vmatprep.subr.bf16.mxu0 0
    %2387 = vmatpush1.bf16.msra.mxu0 %v1072
    %2388 = vmatprep.subr.bf16.mxu0 0
    %2389 = vmatpush1.bf16.msra.mxu0 %v1081
    %2390 = vmatprep.subr.bf16.mxu0 0
    %2391 = vmatpush1.bf16.msra.mxu0 %v1090
    %2392 = vmatprep.subr.bf16.mxu0 0
    %2393 = vmatpush1.bf16.msra.mxu0 %v1099
    %2394 = vmatprep.subr.bf16.mxu0 0
    %2395 = vmatpush1.bf16.msra.mxu0 %v1108
    %2396 = vmatprep.subr.bf16.mxu0 0
    %2397 = vmatpush1.bf16.msra.mxu0 %v1117
    %2398 = vmatprep.subr.bf16.mxu0 0
    %2399 = vmatpush1.bf16.msra.mxu0 %v1126
    %2400 = vmatprep.subr.bf16.mxu0 0
    %2401 = vmatpush1.bf16.msra.mxu0 %v1135
    %2402 = vmatprep.subr.bf16.mxu0 0
    %2403 = vmatpush1.bf16.msra.mxu0 %v1144
    %2404 = vmatprep.subr.bf16.mxu0 0
    %2405 = vmatpush1.bf16.msra.mxu0 %v1153
    %2406 = vmatprep.subr.bf16.mxu0 0
    %2407 = vmatpush1.bf16.msra.mxu0 %v1162
    %2408 = vmatprep.subr.bf16.mxu0 0
    %2409 = vmatpush1.bf16.msra.mxu0 %v1171
    %2410 = vmatprep.subr.bf16.mxu0 0
    %2411 = vmatpush1.bf16.msra.mxu0 %v1180
    %2412 = vmatprep.subr.bf16.mxu0 0
    %2413 = vmatpush1.bf16.msra.mxu0 %v1189
    %2414 = vmatprep.mubr.bf16.mxu0 %v111
    %2415 = vmatmul.mubr.bf16.gmra.mrb[0].mxu0 %v110
    %v2416 = vpop.f32.mrb[0].mxu0
    %v2417 = vadd.f32 0.0, %v2416
    %v2418 = vpop.f32.mrb[0].mxu0
    %v2419 = vpop.f32.mrb[0].mxu0
    %v2420 = vadd.f32 0.0, %v2419
    %v2421 = vpop.f32.mrb[0].mxu0
    %2422 = vmatprep.mubr.bf16.mxu0 %v114
    %2423 = vmatmul.mubr.bf16.gmra.mrb[0].mxu0 %v113
    %v2424 = vpop.f32.mrb[0].mxu0
    %v2425 = vadd.f32 0.0, %v2424
    %v2426 = vpop.f32.mrb[0].mxu0
    %v2427 = vpop.f32.mrb[0].mxu0
    %v2428 = vadd.f32 0.0, %v2427
    %v2429 = vpop.f32.mrb[0].mxu0
    %2430 = vmatprep.mubr.bf16.mxu0 %v117
    %2431 = vmatmul.mubr.bf16.gmra.mrb[0].mxu0 %v116
    %v2432 = vpop.f32.mrb[0].mxu0
    %v2433 = vadd.f32 0.0, %v2432
    %v2434 = vpop.f32.mrb[0].mxu0
    %v2435 = vpop.f32.mrb[0].mxu0
    %v2436 = vadd.f32 0.0, %v2435
    %v2437 = vpop.f32.mrb[0].mxu0
    %2438 = vmatprep.mubr.bf16.mxu0 %v120
    %2439 = vmatmul.mubr.bf16.gmra.mrb[0].mxu0 %v119
    %v2440 = vpop.f32.mrb[0].mxu0
    %v2441 = vadd.f32 0.0, %v2440
    %v2442 = vpop.f32.mrb[0].mxu0
    %v2443 = vpop.f32.mrb[0].mxu0
    %v2444 = vadd.f32 0.0, %v2443
    %v2445 = vpop.f32.mrb[0].mxu0
    %2446 = vmatprep.mubr.bf16.mxu0 %v123
    %2447 = vmatmul.mubr.bf16.gmra.mrb[0].mxu0 %v122
    %v2448 = vpop.f32.mrb[0].mxu0
    %v2449 = vadd.f32 0.0, %v2448
    %v2450 = vpop.f32.mrb[0].mxu0
    %v2451 = vpop.f32.mrb[0].mxu0
    %v2452 = vadd.f32 0.0, %v2451
    %v2453 = vpop.f32.mrb[0].mxu0
    %2454 = vmatprep.mubr.bf16.mxu0 %v126
    %2455 = vmatmul.mubr.bf16.gmra.mrb[0].mxu0 %v125
    %v2456 = vpop.f32.mrb[0].mxu0
    %v2457 = vadd.f32 0.0, %v2456
    %v2458 = vpop.f32.mrb[0].mxu0
    %v2459 = vpop.f32.mrb[0].mxu0
    %v2460 = vadd.f32 0.0, %v2459
    %v2461 = vpop.f32.mrb[0].mxu0
    %2462 = vmatprep.mubr.bf16.mxu0 %v129
    %2463 = vmatmul.mubr.bf16.gmra.mrb[0].mxu0 %v128
    %v2464 = vpop.f32.mrb[0].mxu0
    %v2465 = vadd.f32 0.0, %v2464
    %v2466 = vpop.f32.mrb[0].mxu0
    %v2467 = vpop.f32.mrb[0].mxu0
    %v2468 = vadd.f32 0.0, %v2467
    %v2469 = vpop.f32.mrb[0].mxu0
    %2470 = vmatprep.mubr.bf16.mxu0 %v132
    %2471 = vmatmul.mubr.bf16.gmra.mrb[0].mxu0 %v131
    %v2472 = vpop.f32.mrb[0].mxu0
    %v2473 = vadd.f32 0.0, %v2472
    %v2474 = vpop.f32.mrb[0].mxu0
    %v2475 = vpop.f32.mrb[0].mxu0
    %v2476 = vadd.f32 0.0, %v2475
    %v2477 = vpop.f32.mrb[0].mxu0
    %2478 = vdwg.mxu0
    %2479 = vmatprep.subr.bf16.mxu0 0
    %2480 = vmatpush1.bf16.msra.mxu0 %v1198
    %2481 = vmatprep.subr.bf16.mxu0 0
    %2482 = vmatpush1.bf16.msra.mxu0 %v1207
    %2483 = vmatprep.subr.bf16.mxu0 0
    %2484 = vmatpush1.bf16.msra.mxu0 %v1216
    %2485 = vmatprep.subr.bf16.mxu0 0
    %2486 = vmatpush1.bf16.msra.mxu0 %v1225
    %2487 = vmatprep.subr.bf16.mxu0 0
    %2488 = vmatpush1.bf16.msra.mxu0 %v1234
    %2489 = vmatprep.subr.bf16.mxu0 0
    %2490 = vmatpush1.bf16.msra.mxu0 %v1243
    %2491 = vmatprep.subr.bf16.mxu0 0
    %2492 = vmatpush1.bf16.msra.mxu0 %v1252
    %2493 = vmatprep.subr.bf16.mxu0 0
    %2494 = vmatpush1.bf16.msra.mxu0 %v1261
    %2495 = vmatprep.subr.bf16.mxu0 0
    %2496 = vmatpush1.bf16.msra.mxu0 0
    %2497 = vmatprep.subr.bf16.mxu0 0
    %2498 = vmatpush1.bf16.msra.mxu0 0
    %2499 = vmatprep.subr.bf16.mxu0 0
    %2500 = vmatpush1.bf16.msra.mxu0 0
    %2501 = vmatprep.subr.bf16.mxu0 0
    %2502 = vmatpush1.bf16.msra.mxu0 0
    %2503 = vmatprep.subr.bf16.mxu0 0
    %2504 = vmatpush1.bf16.msra.mxu0 0
    %2505 = vmatprep.subr.bf16.mxu0 0
    %2506 = vmatpush1.bf16.msra.mxu0 0
    %2507 = vmatprep.subr.bf16.mxu0 0
    %2508 = vmatpush1.bf16.msra.mxu0 0
    %2509 = vmatprep.subr.bf16.mxu0 0
    %2510 = vmatpush1.bf16.msra.mxu0 0
    %2511 = vmatprep.mubr.bf16.mxu0 0
    %2512 = vmatmul.mubr.bf16.gmra.mrb[0].mxu0 %v112
    %v2513 = vpop.f32.mrb[0].mxu0
    %v2514 = vadd.f32 %v2417, %v2513
    %v2515 = vpop.f32.mrb[0].mxu0
    %v2516 = vpop.f32.mrb[0].mxu0
    %v2517 = vadd.f32 %v2420, %v2516
    %v2518 = vpop.f32.mrb[0].mxu0
    %2519 = vmatprep.mubr.bf16.mxu0 0
    %2520 = vmatmul.mubr.bf16.gmra.mrb[0].mxu0 %v115
    %v2521 = vpop.f32.mrb[0].mxu0
    %v2522 = vadd.f32 %v2425, %v2521
    %v2523 = vpop.f32.mrb[0].mxu0
    %v2524 = vpop.f32.mrb[0].mxu0
    %v2525 = vadd.f32 %v2428, %v2524
    %v2526 = vpop.f32.mrb[0].mxu0
    %2527 = vmatprep.mubr.bf16.mxu0 0
    %2528 = vmatmul.mubr.bf16.gmra.mrb[0].mxu0 %v118
    %v2529 = vpop.f32.mrb[0].mxu0
    %v2530 = vadd.f32 %v2433, %v2529
    %v2531 = vpop.f32.mrb[0].mxu0
    %v2532 = vpop.f32.mrb[0].mxu0
    %v2533 = vadd.f32 %v2436, %v2532
    %v2534 = vpop.f32.mrb[0].mxu0
    %2535 = vmatprep.mubr.bf16.mxu0 0
    %2536 = vmatmul.mubr.bf16.gmra.mrb[0].mxu0 %v121
    %v2537 = vpop.f32.mrb[0].mxu0
    %v2538 = vadd.f32 %v2441, %v2537
    %v2539 = vpop.f32.mrb[0].mxu0
    %v2540 = vpop.f32.mrb[0].mxu0
    %v2541 = vadd.f32 %v2444, %v2540
    %v2542 = vpop.f32.mrb[0].mxu0
    %2543 = vmatprep.mubr.bf16.mxu0 0
    %2544 = vmatmul.mubr.bf16.gmra.mrb[0].mxu0 %v124
    %v2545 = vpop.f32.mrb[0].mxu0
    %v2546 = vadd.f32 %v2449, %v2545
    %v2547 = vpop.f32.mrb[0].mxu0
    %v2548 = vpop.f32.mrb[0].mxu0
    %v2549 = vadd.f32 %v2452, %v2548
    %v2550 = vpop.f32.mrb[0].mxu0
    %2551 = vmatprep.mubr.bf16.mxu0 0
    %2552 = vmatmul.mubr.bf16.gmra.mrb[0].mxu0 %v127
    %v2553 = vpop.f32.mrb[0].mxu0
    %v2554 = vadd.f32 %v2457, %v2553
    %v2555 = vpop.f32.mrb[0].mxu0
    %v2556 = vpop.f32.mrb[0].mxu0
    %v2557 = vadd.f32 %v2460, %v2556
    %v2558 = vpop.f32.mrb[0].mxu0
    %2559 = vmatprep.mubr.bf16.mxu0 0
    %2560 = vmatmul.mubr.bf16.gmra.mrb[0].mxu0 %v130
    %v2561 = vpop.f32.mrb[0].mxu0
    %v2562 = vadd.f32 %v2465, %v2561
    %v2563 = vpop.f32.mrb[0].mxu0
    %v2564 = vpop.f32.mrb[0].mxu0
    %v2565 = vadd.f32 %v2468, %v2564
    %v2566 = vpop.f32.mrb[0].mxu0
    %2567 = vmatprep.mubr.bf16.mxu0 0
    %2568 = vmatmul.mubr.bf16.gmra.mrb[0].mxu0 %v133
    %v2569 = vpop.f32.mrb[0].mxu0
    %v2570 = vadd.f32 %v2473, %v2569
    %v2571 = vpop.f32.mrb[0].mxu0
    %v2572 = vpop.f32.mrb[0].mxu0
    %v2573 = vadd.f32 %v2476, %v2572
    %v2574 = vpop.f32.mrb[0].mxu0
    %2575 = vdwg.mxu0
    %v2576 = vlaneseq
    %v2577 = vshrl.u32 %v2576, 7
    %v2578 = vadd.s32 %v2577, 8
    %v2579 = vadd.s32 %v2577, 16
    %v2580 = vadd.s32 %v2577, 24
    %v2581 = vadd.s32 %v2577, 32
    %v2582 = vadd.s32 %v2577, 40
    %v2583 = vadd.s32 %v2577, 48
    %v2584 = vadd.s32 %v2577, 56
    %v2585 = vlaneseq
    %v2586 = vand.u32 %v2585, 127
    %vm2587 = vcmp.le.s32.totalorder %v2586, %v2577
    %vm2588 = vcmp.le.s32.totalorder %v2586, %v2578
    %vm2589 = vcmp.le.s32.totalorder %v2586, %v2579
    %vm2590 = vcmp.le.s32.totalorder %v2586, %v2580
    %vm2591 = vcmp.le.s32.totalorder %v2586, %v2581
    %vm2592 = vcmp.le.s32.totalorder %v2586, %v2582
    %vm2593 = vcmp.le.s32.totalorder %v2586, %v2583
    %vm2594 = vcmp.le.s32.totalorder %v2586, %v2584
    %v2595 = vpack.c.bf16 %v1630, %v1626
    %v2596 = vpack.c.bf16 %v1640, %v1636
    %v2597 = vpack.c.bf16 %v1650, %v1646
    %v2598 = vpack.c.bf16 %v1660, %v1656
    %v2599 = vpack.c.bf16 %v1858, %v1854
    %v2600 = vpack.c.bf16 %v1868, %v1864
    %v2601 = vpack.c.bf16 %v1878, %v1874
    %v2602 = vpack.c.bf16 %v1888, %v1884
    %v2603 = vpack.c.bf16 %v2308, %v2304
    %v2604 = vpack.c.bf16 %v2318, %v2314
    %v2605 = vpack.c.bf16 %v2328, %v2324
    %v2606 = vpack.c.bf16 %v2338, %v2334
    %vm2607 = vcmask 523264
    %v2609 = vsel %vm2607, %v2595, 0
    %v2612 = vsel %vm2607, %v2596, 0
    %v2615 = vsel %vm2607, %v2597, 0
    %v2618 = vsel %vm2607, %v2598, 0
    %v2621 = vsel %vm2607, %v2599, 0
    %v2624 = vsel %vm2607, %v2600, 0
    %v2627 = vsel %vm2607, %v2601, 0
    %v2630 = vsel %vm2607, %v2602, 0
    %2632 = vmatprep.subr.bf16.mxu0 0
    %2633 = vmatpush1.bf16.xpose.msra.mxu0 %v2621
    %2634 = vmatprep.subr.bf16.mxu0 0
    %2635 = vmatpush1.bf16.xpose.msra.mxu0 %v2624
    %2636 = vmatprep.subr.bf16.mxu0 0
    %2637 = vmatpush1.bf16.xpose.msra.mxu0 %v2627
    %2638 = vmatprep.subr.bf16.mxu0 0
    %2639 = vmatpush1.bf16.xpose.msra.mxu0 %v2630
    %2640 = vmatprep.subr.bf16.mxu0 0
    %2641 = vmatpush1.bf16.xpose.msra.mxu0 0
    %2642 = vmatprep.subr.bf16.mxu0 0
    %2643 = vmatpush1.bf16.xpose.msra.mxu0 0
    %2644 = vmatprep.subr.bf16.mxu0 0
    %2645 = vmatpush1.bf16.xpose.msra.mxu0 0
    %2646 = vmatprep.subr.bf16.mxu0 0
    %2647 = vmatpush1.bf16.xpose.msra.mxu0 0
    %2648 = vmatprep.subr.bf16.mxu0 0
    %2649 = vmatpush1.bf16.xpose.msra.mxu0 0
    %2650 = vmatprep.subr.bf16.mxu0 0
    %2651 = vmatpush1.bf16.xpose.msra.mxu0 0
    %2652 = vmatprep.subr.bf16.mxu0 0
    %2653 = vmatpush1.bf16.xpose.msra.mxu0 0
    %2654 = vmatprep.subr.bf16.mxu0 0
    %2655 = vmatpush1.bf16.xpose.msra.mxu0 0
    %2656 = vmatprep.subr.bf16.mxu0 0
    %2657 = vmatpush1.bf16.xpose.msra.mxu0 0
    %2658 = vmatprep.subr.bf16.mxu0 0
    %2659 = vmatpush1.bf16.xpose.msra.mxu0 0
    %2660 = vmatprep.subr.bf16.mxu0 0
    %2661 = vmatpush1.bf16.xpose.msra.mxu0 0
    %2662 = vmatprep.subr.bf16.mxu0 0
    %2663 = vmatpush1.bf16.xpose.msra.mxu0 0
    %2664 = vmatprep.mubr.bf16.mxu0 0
    %2665 = vmatmul.mubr.bf16.gmra.mrb[0].mxu0 %v2609
    %v2666 = vpop.f32.mrb[0].mxu0
    %v2667 = vadd.f32 0.0, %v2666
    %v2668 = vpop.f32.mrb[0].mxu0
    %v2669 = vpop.f32.mrb[0].mxu0
    %v2670 = vadd.f32 0.0, %v2669
    %v2671 = vpop.f32.mrb[0].mxu0
    %2672 = vmatprep.mubr.bf16.mxu0 0
    %2673 = vmatmul.mubr.bf16.gmra.mrb[0].mxu0 %v2612
    %v2674 = vpop.f32.mrb[0].mxu0
    %v2675 = vadd.f32 0.0, %v2674
    %v2676 = vpop.f32.mrb[0].mxu0
    %v2677 = vpop.f32.mrb[0].mxu0
    %v2678 = vadd.f32 0.0, %v2677
    %v2679 = vpop.f32.mrb[0].mxu0
    %2680 = vmatprep.mubr.bf16.mxu0 0
    %2681 = vmatmul.mubr.bf16.gmra.mrb[0].mxu0 %v2615
    %v2682 = vpop.f32.mrb[0].mxu0
    %v2683 = vadd.f32 0.0, %v2682
    %v2684 = vpop.f32.mrb[0].mxu0
    %v2685 = vpop.f32.mrb[0].mxu0
    %v2686 = vadd.f32 0.0, %v2685
    %v2687 = vpop.f32.mrb[0].mxu0
    %2688 = vmatprep.mubr.bf16.mxu0 0
    %2689 = vmatmul.mubr.bf16.gmra.mrb[0].mxu0 %v2618
    %v2690 = vpop.f32.mrb[0].mxu0
    %v2691 = vadd.f32 0.0, %v2690
    %v2692 = vpop.f32.mrb[0].mxu0
    %v2693 = vpop.f32.mrb[0].mxu0
    %v2694 = vadd.f32 0.0, %v2693
    %v2695 = vpop.f32.mrb[0].mxu0
    %2696 = vdwg.mxu0
    %v2697 = vsel %vm2587, %v2667, -1e+30
    %v2698 = vsel %vm2588, %v2670, -1e+30
    %v2699 = vsel %vm2589, %v2675, -1e+30
    %v2700 = vsel %vm2590, %v2678, -1e+30
    %v2701 = vsel %vm2591, %v2683, -1e+30
    %v2702 = vsel %vm2592, %v2686, -1e+30
    %v2703 = vsel %vm2593, %v2691, -1e+30
    %v2704 = vsel %vm2594, %v2694, -1e+30
    %v2705 = vsel %vm2607, %v2697, -inf
    %2706 = vmax.xlane.f32.xlu0 %v2705
    %v2707 = vpop.xlane.xlu0 %2706
    %v2708 = vsel %vm2607, %v2698, -inf
    %2709 = vmax.xlane.f32.xlu0 %v2708
    %v2710 = vpop.xlane.xlu0 %2709
    %v2711 = vsel %vm2607, %v2699, -inf
    %2712 = vmax.xlane.f32.xlu0 %v2711
    %v2713 = vpop.xlane.xlu0 %2712
    %v2714 = vsel %vm2607, %v2700, -inf
    %2715 = vmax.xlane.f32.xlu0 %v2714
    %v2716 = vpop.xlane.xlu0 %2715
    %v2717 = vsel %vm2607, %v2701, -inf
    %2718 = vmax.xlane.f32.xlu0 %v2717
    %v2719 = vpop.xlane.xlu0 %2718
    %v2720 = vsel %vm2607, %v2702, -inf
    %2721 = vmax.xlane.f32.xlu0 %v2720
    %v2722 = vpop.xlane.xlu0 %2721
    %v2723 = vsel %vm2607, %v2703, -inf
    %2724 = vmax.xlane.f32.xlu0 %v2723
    %v2725 = vpop.xlane.xlu0 %2724
    %v2726 = vsel %vm2607, %v2704, -inf
    %2727 = vmax.xlane.f32.xlu0 %v2726
    %v2728 = vpop.xlane.xlu0 %2727
    %v2729 = vsub.f32 %v2697, %v2707
    %v2730 = vsub.f32 %v2698, %v2710
    %v2731 = vsub.f32 %v2699, %v2713
    %v2732 = vsub.f32 %v2700, %v2716
    %v2733 = vsub.f32 %v2701, %v2719
    %v2734 = vsub.f32 %v2702, %v2722
    %v2735 = vsub.f32 %v2703, %v2725
    %v2736 = vsub.f32 %v2704, %v2728
    %v2737 = vmul.f32 %v2729, 1.442695
    %v2738 = vpow.pop %v2737
    %v2739 = vmul.f32 %v2730, 1.442695
    %v2740 = vpow.pop %v2739
    %v2741 = vmul.f32 %v2731, 1.442695
    %v2742 = vpow.pop %v2741
    %v2743 = vmul.f32 %v2732, 1.442695
    %v2744 = vpow.pop %v2743
    %v2745 = vmul.f32 %v2733, 1.442695
    %v2746 = vpow.pop %v2745
    %v2747 = vmul.f32 %v2734, 1.442695
    %v2748 = vpow.pop %v2747
    %v2749 = vmul.f32 %v2735, 1.442695
    %v2750 = vpow.pop %v2749
    %v2751 = vmul.f32 %v2736, 1.442695
    %v2752 = vpow.pop %v2751
    %v2753 = vsel %vm2607, %v2738, 0.0
    %2754 = vadd.xlane.f32.xlu0 %v2753
    %v2755 = vpop.xlane.xlu0 %2754
    %v2756 = vsel %vm2607, %v2740, 0.0
    %2757 = vadd.xlane.f32.xlu0 %v2756
    %v2758 = vpop.xlane.xlu0 %2757
    %v2759 = vsel %vm2607, %v2742, 0.0
    %2760 = vadd.xlane.f32.xlu0 %v2759
    %v2761 = vpop.xlane.xlu0 %2760
    %v2762 = vsel %vm2607, %v2744, 0.0
    %2763 = vadd.xlane.f32.xlu0 %v2762
    %v2764 = vpop.xlane.xlu0 %2763
    %v2765 = vsel %vm2607, %v2746, 0.0
    %2766 = vadd.xlane.f32.xlu0 %v2765
    %v2767 = vpop.xlane.xlu0 %2766
    %v2768 = vsel %vm2607, %v2748, 0.0
    %2769 = vadd.xlane.f32.xlu0 %v2768
    %v2770 = vpop.xlane.xlu0 %2769
    %v2771 = vsel %vm2607, %v2750, 0.0
    %2772 = vadd.xlane.f32.xlu0 %v2771
    %v2773 = vpop.xlane.xlu0 %2772
    %v2774 = vsel %vm2607, %v2752, 0.0
    %2775 = vadd.xlane.f32.xlu0 %v2774
    %v2776 = vpop.xlane.xlu0 %2775
    %v2777 = vrcp.pop %v2755
    %v2778 = vrcp.pop %v2758
    %v2779 = vrcp.pop %v2761
    %v2780 = vrcp.pop %v2764
    %v2781 = vrcp.pop %v2767
    %v2782 = vrcp.pop %v2770
    %v2783 = vrcp.pop %v2773
    %v2784 = vrcp.pop %v2776
    %v2785 = vmul.f32 %v2738, %v2777
    %v2786 = vmul.f32 %v2740, %v2778
    %v2787 = vmul.f32 %v2742, %v2779
    %v2788 = vmul.f32 %v2744, %v2780
    %v2789 = vmul.f32 %v2746, %v2781
    %v2790 = vmul.f32 %v2748, %v2782
    %v2791 = vmul.f32 %v2750, %v2783
    %v2792 = vmul.f32 %v2752, %v2784
    %v2793 = vpack.c.bf16 %v2786, %v2785
    %v2794 = vpack.c.bf16 %v2788, %v2787
    %v2795 = vpack.c.bf16 %v2790, %v2789
    %v2796 = vpack.c.bf16 %v2792, %v2791
    %v2798 = vsel %vm2607, %v2793, 0
    %v2801 = vsel %vm2607, %v2794, 0
    %v2804 = vsel %vm2607, %v2795, 0
    %v2807 = vsel %vm2607, %v2796, 0
    %2809 = vmatprep.subr.bf16.mxu0 0
    %2810 = vmatpush1.bf16.msra.mxu0 %v2603
    %2811 = vmatprep.subr.bf16.mxu0 0
    %2812 = vmatpush1.bf16.msra.mxu0 %v2604
    %2813 = vmatprep.subr.bf16.mxu0 0
    %2814 = vmatpush1.bf16.msra.mxu0 %v2605
    %2815 = vmatprep.subr.bf16.mxu0 0
    %2816 = vmatpush1.bf16.msra.mxu0 %v2606
    %2817 = vmatprep.subr.bf16.mxu0 0
    %2818 = vmatpush1.bf16.msra.mxu0 0
    %2819 = vmatprep.subr.bf16.mxu0 0
    %2820 = vmatpush1.bf16.msra.mxu0 0
    %2821 = vmatprep.subr.bf16.mxu0 0
    %2822 = vmatpush1.bf16.msra.mxu0 0
    %2823 = vmatprep.subr.bf16.mxu0 0
    %2824 = vmatpush1.bf16.msra.mxu0 0
    %2825 = vmatprep.subr.bf16.mxu0 0
    %2826 = vmatpush1.bf16.msra.mxu0 0
    %2827 = vmatprep.subr.bf16.mxu0 0
    %2828 = vmatpush1.bf16.msra.mxu0 0
    %2829 = vmatprep.subr.bf16.mxu0 0
    %2830 = vmatpush1.bf16.msra.mxu0 0
    %2831 = vmatprep.subr.bf16.mxu0 0
    %2832 = vmatpush1.bf16.msra.mxu0 0
    %2833 = vmatprep.subr.bf16.mxu0 0
    %2834 = vmatpush1.bf16.msra.mxu0 0
    %2835 = vmatprep.subr.bf16.mxu0 0
    %2836 = vmatpush1.bf16.msra.mxu0 0
    %2837 = vmatprep.subr.bf16.mxu0 0
    %2838 = vmatpush1.bf16.msra.mxu0 0
    %2839 = vmatprep.subr.bf16.mxu0 0
    %2840 = vmatpush1.bf16.msra.mxu0 0
    %2841 = vmatprep.mubr.bf16.mxu0 0
    %2842 = vmatmul.mubr.bf16.gmra.mrb[0].mxu0 %v2798
    %v2843 = vpop.f32.mrb[0].mxu0
    %v2844 = vadd.f32 0.0, %v2843
    %v2845 = vpop.f32.mrb[0].mxu0
    %v2846 = vpop.f32.mrb[0].mxu0
    %v2847 = vadd.f32 0.0, %v2846
    %v2848 = vpop.f32.mrb[0].mxu0
    %2849 = vmatprep.mubr.bf16.mxu0 0
    %2850 = vmatmul.mubr.bf16.gmra.mrb[0].mxu0 %v2801
    %v2851 = vpop.f32.mrb[0].mxu0
    %v2852 = vadd.f32 0.0, %v2851
    %v2853 = vpop.f32.mrb[0].mxu0
    %v2854 = vpop.f32.mrb[0].mxu0
    %v2855 = vadd.f32 0.0, %v2854
    %v2856 = vpop.f32.mrb[0].mxu0
    %2857 = vmatprep.mubr.bf16.mxu0 0
    %2858 = vmatmul.mubr.bf16.gmra.mrb[0].mxu0 %v2804
    %v2859 = vpop.f32.mrb[0].mxu0
    %v2860 = vadd.f32 0.0, %v2859
    %v2861 = vpop.f32.mrb[0].mxu0
    %v2862 = vpop.f32.mrb[0].mxu0
    %v2863 = vadd.f32 0.0, %v2862
    %v2864 = vpop.f32.mrb[0].mxu0
    %2865 = vmatprep.mubr.bf16.mxu0 0
    %2866 = vmatmul.mubr.bf16.gmra.mrb[0].mxu0 %v2807
    %v2867 = vpop.f32.mrb[0].mxu0
    %v2868 = vadd.f32 0.0, %v2867
    %v2869 = vpop.f32.mrb[0].mxu0
    %v2870 = vpop.f32.mrb[0].mxu0
    %v2871 = vadd.f32 0.0, %v2870
    %v2872 = vpop.f32.mrb[0].mxu0
    %2873 = vdwg.mxu0
    %v2874 = vpack.c.bf16 %v2847, %v2844
    %v2875 = vpack.c.bf16 %v2855, %v2852
    %v2876 = vpack.c.bf16 %v2863, %v2860
    %v2877 = vpack.c.bf16 %v2871, %v2868
    %2878 = vst.msk [vmem:[#allocation2] sm:$0xff] %vm2607, %v2874
    %2879 = vst.msk [vmem:[#allocation2 + $0x18] sm:$0xff] %vm2607, %v2875
    %2880 = vst.msk [vmem:[#allocation2 + $0x30] sm:$0xff] %vm2607, %v2876
    %2881 = vst.msk [vmem:[#allocation2 + $0x48] sm:$0xff] %vm2607, %v2877
    %2886 = vrot.lane.b32.xlu0 %v2595, 64
    %v2887 = vpop.permute.xlu0 %2886
    %2888 = vrot.lane.b32.xlu0 %v2596, 64
    %v2889 = vpop.permute.xlu0 %2888
    %2890 = vrot.lane.b32.xlu0 %v2597, 64
    %v2891 = vpop.permute.xlu0 %2890
    %2892 = vrot.lane.b32.xlu0 %v2598, 64
    %v2893 = vpop.permute.xlu0 %2892
    %2898 = vrot.lane.b32.xlu0 %v2599, 64
    %v2899 = vpop.permute.xlu0 %2898
    %2900 = vrot.lane.b32.xlu0 %v2600, 64
    %v2901 = vpop.permute.xlu0 %2900
    %2902 = vrot.lane.b32.xlu0 %v2601, 64
    %v2903 = vpop.permute.xlu0 %2902
    %2904 = vrot.lane.b32.xlu0 %v2602, 64
    %v2905 = vpop.permute.xlu0 %2904
    %v2907 = vsel %vm2607, %v2887, 0
    %v2910 = vsel %vm2607, %v2889, 0
    %v2913 = vsel %vm2607, %v2891, 0
    %v2916 = vsel %vm2607, %v2893, 0
    %v2919 = vsel %vm2607, %v2899, 0
    %v2922 = vsel %vm2607, %v2901, 0
    %v2925 = vsel %vm2607, %v2903, 0
    %v2928 = vsel %vm2607, %v2905, 0
    %2930 = vmatprep.subr.bf16.mxu0 0
    %2931 = vmatpush1.bf16.xpose.msra.mxu0 %v2919
    %2932 = vmatprep.subr.bf16.mxu0 0
    %2933 = vmatpush1.bf16.xpose.msra.mxu0 %v2922
    %2934 = vmatprep.subr.bf16.mxu0 0
    %2935 = vmatpush1.bf16.xpose.msra.mxu0 %v2925
    %2936 = vmatprep.subr.bf16.mxu0 0
    %2937 = vmatpush1.bf16.xpose.msra.mxu0 %v2928
    %2938 = vmatprep.subr.bf16.mxu0 0
    %2939 = vmatpush1.bf16.xpose.msra.mxu0 0
    %2940 = vmatprep.subr.bf16.mxu0 0
    %2941 = vmatpush1.bf16.xpose.msra.mxu0 0
    %2942 = vmatprep.subr.bf16.mxu0 0
    %2943 = vmatpush1.bf16.xpose.msra.mxu0 0
    %2944 = vmatprep.subr.bf16.mxu0 0
    %2945 = vmatpush1.bf16.xpose.msra.mxu0 0
    %2946 = vmatprep.subr.bf16.mxu0 0
    %2947 = vmatpush1.bf16.xpose.msra.mxu0 0
    %2948 = vmatprep.subr.bf16.mxu0 0
    %2949 = vmatpush1.bf16.xpose.msra.mxu0 0
    %2950 = vmatprep.subr.bf16.mxu0 0
    %2951 = vmatpush1.bf16.xpose.msra.mxu0 0
    %2952 = vmatprep.subr.bf16.mxu0 0
    %2953 = vmatpush1.bf16.xpose.msra.mxu0 0
    %2954 = vmatprep.subr.bf16.mxu0 0
    %2955 = vmatpush1.bf16.xpose.msra.mxu0 0
    %2956 = vmatprep.subr.bf16.mxu0 0
    %2957 = vmatpush1.bf16.xpose.msra.mxu0 0
    %2958 = vmatprep.subr.bf16.mxu0 0
    %2959 = vmatpush1.bf16.xpose.msra.mxu0 0
    %2960 = vmatprep.subr.bf16.mxu0 0
    %2961 = vmatpush1.bf16.xpose.msra.mxu0 0
    %2962 = vmatprep.mubr.bf16.mxu0 0
    %2963 = vmatmul.mubr.bf16.gmra.mrb[0].mxu0 %v2907
    %v2964 = vpop.f32.mrb[0].mxu0
    %v2965 = vadd.f32 0.0, %v2964
    %v2966 = vpop.f32.mrb[0].mxu0
    %v2967 = vpop.f32.mrb[0].mxu0
    %v2968 = vadd.f32 0.0, %v2967
    %v2969 = vpop.f32.mrb[0].mxu0
    %2970 = vmatprep.mubr.bf16.mxu0 0
    %2971 = vmatmul.mubr.bf16.gmra.mrb[0].mxu0 %v2910
    %v2972 = vpop.f32.mrb[0].mxu0
    %v2973 = vadd.f32 0.0, %v2972
    %v2974 = vpop.f32.mrb[0].mxu0
    %v2975 = vpop.f32.mrb[0].mxu0
    %v2976 = vadd.f32 0.0, %v2975
    %v2977 = vpop.f32.mrb[0].mxu0
    %2978 = vmatprep.mubr.bf16.mxu0 0
    %2979 = vmatmul.mubr.bf16.gmra.mrb[0].mxu0 %v2913
    %v2980 = vpop.f32.mrb[0].mxu0
    %v2981 = vadd.f32 0.0, %v2980
    %v2982 = vpop.f32.mrb[0].mxu0
    %v2983 = vpop.f32.mrb[0].mxu0
    %v2984 = vadd.f32 0.0, %v2983
    %v2985 = vpop.f32.mrb[0].mxu0
    %2986 = vmatprep.mubr.bf16.mxu0 0
    %2987 = vmatmul.mubr.bf16.gmra.mrb[0].mxu0 %v2916
    %v2988 = vpop.f32.mrb[0].mxu0
    %v2989 = vadd.f32 0.0, %v2988
    %v2990 = vpop.f32.mrb[0].mxu0
    %v2991 = vpop.f32.mrb[0].mxu0
    %v2992 = vadd.f32 0.0, %v2991
    %v2993 = vpop.f32.mrb[0].mxu0
    %2994 = vdwg.mxu0
    %v2995 = vsel %vm2587, %v2965, -1e+30
    %v2996 = vsel %vm2588, %v2968, -1e+30
    %v2997 = vsel %vm2589, %v2973, -1e+30
    %v2998 = vsel %vm2590, %v2976, -1e+30
    %v2999 = vsel %vm2591, %v2981, -1e+30
    %v3000 = vsel %vm2592, %v2984, -1e+30
    %v3001 = vsel %vm2593, %v2989, -1e+30
    %v3002 = vsel %vm2594, %v2992, -1e+30
    %v3003 = vsel %vm2607, %v2995, -inf
    %3004 = vmax.xlane.f32.xlu0 %v3003
    %v3005 = vpop.xlane.xlu0 %3004
    %v3006 = vsel %vm2607, %v2996, -inf
    %3007 = vmax.xlane.f32.xlu0 %v3006
    %v3008 = vpop.xlane.xlu0 %3007
    %v3009 = vsel %vm2607, %v2997, -inf
    %3010 = vmax.xlane.f32.xlu0 %v3009
    %v3011 = vpop.xlane.xlu0 %3010
    %v3012 = vsel %vm2607, %v2998, -inf
    %3013 = vmax.xlane.f32.xlu0 %v3012
    %v3014 = vpop.xlane.xlu0 %3013
    %v3015 = vsel %vm2607, %v2999, -inf
    %3016 = vmax.xlane.f32.xlu0 %v3015
    %v3017 = vpop.xlane.xlu0 %3016
    %v3018 = vsel %vm2607, %v3000, -inf
    %3019 = vmax.xlane.f32.xlu0 %v3018
    %v3020 = vpop.xlane.xlu0 %3019
    %v3021 = vsel %vm2607, %v3001, -inf
    %3022 = vmax.xlane.f32.xlu0 %v3021
    %v3023 = vpop.xlane.xlu0 %3022
    %v3024 = vsel %vm2607, %v3002, -inf
    %3025 = vmax.xlane.f32.xlu0 %v3024
    %v3026 = vpop.xlane.xlu0 %3025
    %v3027 = vsub.f32 %v2995, %v3005
    %v3028 = vsub.f32 %v2996, %v3008
    %v3029 = vsub.f32 %v2997, %v3011
    %v3030 = vsub.f32 %v2998, %v3014
    %v3031 = vsub.f32 %v2999, %v3017
    %v3032 = vsub.f32 %v3000, %v3020
    %v3033 = vsub.f32 %v3001, %v3023
    %v3034 = vsub.f32 %v3002, %v3026
    %v3035 = vmul.f32 %v3027, 1.442695
    %v3036 = vpow.pop %v3035
    %v3037 = vmul.f32 %v3028, 1.442695
    %v3038 = vpow.pop %v3037
    %v3039 = vmul.f32 %v3029, 1.442695
    %v3040 = vpow.pop %v3039
    %v3041 = vmul.f32 %v3030, 1.442695
    %v3042 = vpow.pop %v3041
    %v3043 = vmul.f32 %v3031, 1.442695
    %v3044 = vpow.pop %v3043
    %v3045 = vmul.f32 %v3032, 1.442695
    %v3046 = vpow.pop %v3045
    %v3047 = vmul.f32 %v3033, 1.442695
    %v3048 = vpow.pop %v3047
    %v3049 = vmul.f32 %v3034, 1.442695
    %v3050 = vpow.pop %v3049
    %v3051 = vsel %vm2607, %v3036, 0.0
    %3052 = vadd.xlane.f32.xlu0 %v3051
    %v3053 = vpop.xlane.xlu0 %3052
    %v3054 = vsel %vm2607, %v3038, 0.0
    %3055 = vadd.xlane.f32.xlu0 %v3054
    %v3056 = vpop.xlane.xlu0 %3055
    %v3057 = vsel %vm2607, %v3040, 0.0
    %3058 = vadd.xlane.f32.xlu0 %v3057
    %v3059 = vpop.xlane.xlu0 %3058
    %v3060 = vsel %vm2607, %v3042, 0.0
    %3061 = vadd.xlane.f32.xlu0 %v3060
    %v3062 = vpop.xlane.xlu0 %3061
    %v3063 = vsel %vm2607, %v3044, 0.0
    %3064 = vadd.xlane.f32.xlu0 %v3063
    %v3065 = vpop.xlane.xlu0 %3064
    %v3066 = vsel %vm2607, %v3046, 0.0
    %3067 = vadd.xlane.f32.xlu0 %v3066
    %v3068 = vpop.xlane.xlu0 %3067
    %v3069 = vsel %vm2607, %v3048, 0.0
    %3070 = vadd.xlane.f32.xlu0 %v3069
    %v3071 = vpop.xlane.xlu0 %3070
    %v3072 = vsel %vm2607, %v3050, 0.0
    %3073 = vadd.xlane.f32.xlu0 %v3072
    %v3074 = vpop.xlane.xlu0 %3073
    %v3075 = vrcp.pop %v3053
    %v3076 = vrcp.pop %v3056
    %v3077 = vrcp.pop %v3059
    %v3078 = vrcp.pop %v3062
    %v3079 = vrcp.pop %v3065
    %v3080 = vrcp.pop %v3068
    %v3081 = vrcp.pop %v3071
    %v3082 = vrcp.pop %v3074
    %v3083 = vmul.f32 %v3036, %v3075
    %v3084 = vmul.f32 %v3038, %v3076
    %v3085 = vmul.f32 %v3040, %v3077
    %v3086 = vmul.f32 %v3042, %v3078
    %v3087 = vmul.f32 %v3044, %v3079
    %v3088 = vmul.f32 %v3046, %v3080
    %v3089 = vmul.f32 %v3048, %v3081
    %v3090 = vmul.f32 %v3050, %v3082
    %v3091 = vpack.c.bf16 %v3084, %v3083
    %v3092 = vpack.c.bf16 %v3086, %v3085
    %v3093 = vpack.c.bf16 %v3088, %v3087
    %v3094 = vpack.c.bf16 %v3090, %v3089
    %3099 = vrot.lane.b32.xlu0 %v2603, 64
    %v3100 = vpop.permute.xlu0 %3099
    %3101 = vrot.lane.b32.xlu0 %v2604, 64
    %v3102 = vpop.permute.xlu0 %3101
    %3103 = vrot.lane.b32.xlu0 %v2605, 64
    %v3104 = vpop.permute.xlu0 %3103
    %3105 = vrot.lane.b32.xlu0 %v2606, 64
    %v3106 = vpop.permute.xlu0 %3105
    %v3112 = vsel %vm2607, %v3091, 0
    %v3115 = vsel %vm2607, %v3092, 0
    %v3118 = vsel %vm2607, %v3093, 0
    %v3121 = vsel %vm2607, %v3094, 0
    %3123 = vmatprep.subr.bf16.mxu0 0
    %3124 = vmatpush1.bf16.msra.mxu0 %v3100
    %3125 = vmatprep.subr.bf16.mxu0 0
    %3126 = vmatpush1.bf16.msra.mxu0 %v3102
    %3127 = vmatprep.subr.bf16.mxu0 0
    %3128 = vmatpush1.bf16.msra.mxu0 %v3104
    %3129 = vmatprep.subr.bf16.mxu0 0
    %3130 = vmatpush1.bf16.msra.mxu0 %v3106
    %3131 = vmatprep.subr.bf16.mxu0 0
    %3132 = vmatpush1.bf16.msra.mxu0 0
    %3133 = vmatprep.subr.bf16.mxu0 0
    %3134 = vmatpush1.bf16.msra.mxu0 0
    %3135 = vmatprep.subr.bf16.mxu0 0
    %3136 = vmatpush1.bf16.msra.mxu0 0
    %3137 = vmatprep.subr.bf16.mxu0 0
    %3138 = vmatpush1.bf16.msra.mxu0 0
    %3139 = vmatprep.subr.bf16.mxu0 0
    %3140 = vmatpush1.bf16.msra.mxu0 0
    %3141 = vmatprep.subr.bf16.mxu0 0
    %3142 = vmatpush1.bf16.msra.mxu0 0
    %3143 = vmatprep.subr.bf16.mxu0 0
    %3144 = vmatpush1.bf16.msra.mxu0 0
    %3145 = vmatprep.subr.bf16.mxu0 0
    %3146 = vmatpush1.bf16.msra.mxu0 0
    %3147 = vmatprep.subr.bf16.mxu0 0
    %3148 = vmatpush1.bf16.msra.mxu0 0
    %3149 = vmatprep.subr.bf16.mxu0 0
    %3150 = vmatpush1.bf16.msra.mxu0 0
    %3151 = vmatprep.subr.bf16.mxu0 0
    %3152 = vmatpush1.bf16.msra.mxu0 0
    %3153 = vmatprep.subr.bf16.mxu0 0
    %3154 = vmatpush1.bf16.msra.mxu0 0
    %3155 = vmatprep.mubr.bf16.mxu0 0
    %3156 = vmatmul.mubr.bf16.gmra.mrb[0].mxu0 %v3112
    %v3157 = vpop.f32.mrb[0].mxu0
    %v3158 = vadd.f32 0.0, %v3157
    %v3159 = vpop.f32.mrb[0].mxu0
    %v3160 = vpop.f32.mrb[0].mxu0
    %v3161 = vadd.f32 0.0, %v3160
    %v3162 = vpop.f32.mrb[0].mxu0
    %3163 = vmatprep.mubr.bf16.mxu0 0
    %3164 = vmatmul.mubr.bf16.gmra.mrb[0].mxu0 %v3115
    %v3165 = vpop.f32.mrb[0].mxu0
    %v3166 = vadd.f32 0.0, %v3165
    %v3167 = vpop.f32.mrb[0].mxu0
    %v3168 = vpop.f32.mrb[0].mxu0
    %v3169 = vadd.f32 0.0, %v3168
    %v3170 = vpop.f32.mrb[0].mxu0
    %3171 = vmatprep.mubr.bf16.mxu0 0
    %3172 = vmatmul.mubr.bf16.gmra.mrb[0].mxu0 %v3118
    %v3173 = vpop.f32.mrb[0].mxu0
    %v3174 = vadd.f32 0.0, %v3173
    %v3175 = vpop.f32.mrb[0].mxu0
    %v3176 = vpop.f32.mrb[0].mxu0
    %v3177 = vadd.f32 0.0, %v3176
    %v3178 = vpop.f32.mrb[0].mxu0
    %3179 = vmatprep.mubr.bf16.mxu0 0
    %3180 = vmatmul.mubr.bf16.gmra.mrb[0].mxu0 %v3121
    %v3181 = vpop.f32.mrb[0].mxu0
    %v3182 = vadd.f32 0.0, %v3181
    %v3183 = vpop.f32.mrb[0].mxu0
    %v3184 = vpop.f32.mrb[0].mxu0
    %v3185 = vadd.f32 0.0, %v3184
    %v3186 = vpop.f32.mrb[0].mxu0
    %3187 = vdwg.mxu0
    %v3188 = vpack.c.bf16 %v3161, %v3158
    %v3189 = vpack.c.bf16 %v3169, %v3166
    %v3190 = vpack.c.bf16 %v3177, %v3174
    %v3191 = vpack.c.bf16 %v3185, %v3182
    %3196 = vrot.lane.b32.xlu0 %v3188, 64
    %v3197 = vpop.permute.xlu0 %3196
    %3198 = vrot.lane.b32.xlu0 %v3189, 64
    %v3199 = vpop.permute.xlu0 %3198
    %3200 = vrot.lane.b32.xlu0 %v3190, 64
    %v3201 = vpop.permute.xlu0 %3200
    %3202 = vrot.lane.b32.xlu0 %v3191, 64
    %v3203 = vpop.permute.xlu0 %3202
    %vm3208 = vcmask 1048064
    %3209 = vst.msk [vmem:[#allocation2] sm:$0xff] %vm3208, %v3197
    %3210 = vst.msk [vmem:[#allocation2 + $0x18] sm:$0xff] %vm3208, %v3199
    %3211 = vst.msk [vmem:[#allocation2 + $0x30] sm:$0xff] %vm3208, %v3201
    %3212 = vst.msk [vmem:[#allocation2 + $0x48] sm:$0xff] %vm3208, %v3203
    %v3213 = vpack.c.bf16 %v1632, %v1628
    %v3214 = vpack.c.bf16 %v1642, %v1638
    %v3215 = vpack.c.bf16 %v1652, %v1648
    %v3216 = vpack.c.bf16 %v1662, %v1658
    %v3217 = vpack.c.bf16 %v2082, %v2078
    %v3218 = vpack.c.bf16 %v2092, %v2088
    %v3219 = vpack.c.bf16 %v2102, %v2098
    %v3220 = vpack.c.bf16 %v2112, %v2108
    %v3221 = vpack.c.bf16 %v2310, %v2306
    %v3222 = vpack.c.bf16 %v2320, %v2316
    %v3223 = vpack.c.bf16 %v2330, %v2326
    %v3224 = vpack.c.bf16 %v2340, %v2336
    %v3226 = vsel %vm2607, %v3213, 0
    %v3229 = vsel %vm2607, %v3214, 0
    %v3232 = vsel %vm2607, %v3215, 0
    %v3235 = vsel %vm2607, %v3216, 0
    %v3238 = vsel %vm2607, %v3217, 0
    %v3241 = vsel %vm2607, %v3218, 0
    %v3244 = vsel %vm2607, %v3219, 0
    %v3247 = vsel %vm2607, %v3220, 0
    %3249 = vmatprep.subr.bf16.mxu0 0
    %3250 = vmatpush1.bf16.xpose.msra.mxu0 %v3238
    %3251 = vmatprep.subr.bf16.mxu0 0
    %3252 = vmatpush1.bf16.xpose.msra.mxu0 %v3241
    %3253 = vmatprep.subr.bf16.mxu0 0
    %3254 = vmatpush1.bf16.xpose.msra.mxu0 %v3244
    %3255 = vmatprep.subr.bf16.mxu0 0
    %3256 = vmatpush1.bf16.xpose.msra.mxu0 %v3247
    %3257 = vmatprep.subr.bf16.mxu0 0
    %3258 = vmatpush1.bf16.xpose.msra.mxu0 0
    %3259 = vmatprep.subr.bf16.mxu0 0
    %3260 = vmatpush1.bf16.xpose.msra.mxu0 0
    %3261 = vmatprep.subr.bf16.mxu0 0
    %3262 = vmatpush1.bf16.xpose.msra.mxu0 0
    %3263 = vmatprep.subr.bf16.mxu0 0
    %3264 = vmatpush1.bf16.xpose.msra.mxu0 0
    %3265 = vmatprep.subr.bf16.mxu0 0
    %3266 = vmatpush1.bf16.xpose.msra.mxu0 0
    %3267 = vmatprep.subr.bf16.mxu0 0
    %3268 = vmatpush1.bf16.xpose.msra.mxu0 0
    %3269 = vmatprep.subr.bf16.mxu0 0
    %3270 = vmatpush1.bf16.xpose.msra.mxu0 0
    %3271 = vmatprep.subr.bf16.mxu0 0
    %3272 = vmatpush1.bf16.xpose.msra.mxu0 0
    %3273 = vmatprep.subr.bf16.mxu0 0
    %3274 = vmatpush1.bf16.xpose.msra.mxu0 0
    %3275 = vmatprep.subr.bf16.mxu0 0
    %3276 = vmatpush1.bf16.xpose.msra.mxu0 0
    %3277 = vmatprep.subr.bf16.mxu0 0
    %3278 = vmatpush1.bf16.xpose.msra.mxu0 0
    %3279 = vmatprep.subr.bf16.mxu0 0
    %3280 = vmatpush1.bf16.xpose.msra.mxu0 0
    %3281 = vmatprep.mubr.bf16.mxu0 0
    %3282 = vmatmul.mubr.bf16.gmra.mrb[0].mxu0 %v3226
    %v3283 = vpop.f32.mrb[0].mxu0
    %v3284 = vadd.f32 0.0, %v3283
    %v3285 = vpop.f32.mrb[0].mxu0
    %v3286 = vpop.f32.mrb[0].mxu0
    %v3287 = vadd.f32 0.0, %v3286
    %v3288 = vpop.f32.mrb[0].mxu0
    %3289 = vmatprep.mubr.bf16.mxu0 0
    %3290 = vmatmul.mubr.bf16.gmra.mrb[0].mxu0 %v3229
    %v3291 = vpop.f32.mrb[0].mxu0
    %v3292 = vadd.f32 0.0, %v3291
    %v3293 = vpop.f32.mrb[0].mxu0
    %v3294 = vpop.f32.mrb[0].mxu0
    %v3295 = vadd.f32 0.0, %v3294
    %v3296 = vpop.f32.mrb[0].mxu0
    %3297 = vmatprep.mubr.bf16.mxu0 0
    %3298 = vmatmul.mubr.bf16.gmra.mrb[0].mxu0 %v3232
    %v3299 = vpop.f32.mrb[0].mxu0
    %v3300 = vadd.f32 0.0, %v3299
    %v3301 = vpop.f32.mrb[0].mxu0
    %v3302 = vpop.f32.mrb[0].mxu0
    %v3303 = vadd.f32 0.0, %v3302
    %v3304 = vpop.f32.mrb[0].mxu0
    %3305 = vmatprep.mubr.bf16.mxu0 0
    %3306 = vmatmul.mubr.bf16.gmra.mrb[0].mxu0 %v3235
    %v3307 = vpop.f32.mrb[0].mxu0
    %v3308 = vadd.f32 0.0, %v3307
    %v3309 = vpop.f32.mrb[0].mxu0
    %v3310 = vpop.f32.mrb[0].mxu0
    %v3311 = vadd.f32 0.0, %v3310
    %v3312 = vpop.f32.mrb[0].mxu0
    %3313 = vdwg.mxu0
    %v3314 = vsel %vm2587, %v3284, -1e+30
    %v3315 = vsel %vm2588, %v3287, -1e+30
    %v3316 = vsel %vm2589, %v3292, -1e+30
    %v3317 = vsel %vm2590, %v3295, -1e+30
    %v3318 = vsel %vm2591, %v3300, -1e+30
    %v3319 = vsel %vm2592, %v3303, -1e+30
    %v3320 = vsel %vm2593, %v3308, -1e+30
    %v3321 = vsel %vm2594, %v3311, -1e+30
    %v3322 = vsel %vm2607, %v3314, -inf
    %3323 = vmax.xlane.f32.xlu0 %v3322
    %v3324 = vpop.xlane.xlu0 %3323
    %v3325 = vsel %vm2607, %v3315, -inf
    %3326 = vmax.xlane.f32.xlu0 %v3325
    %v3327 = vpop.xlane.xlu0 %3326
    %v3328 = vsel %vm2607, %v3316, -inf
    %3329 = vmax.xlane.f32.xlu0 %v3328
    %v3330 = vpop.xlane.xlu0 %3329
    %v3331 = vsel %vm2607, %v3317, -inf
    %3332 = vmax.xlane.f32.xlu0 %v3331
    %v3333 = vpop.xlane.xlu0 %3332
    %v3334 = vsel %vm2607, %v3318, -inf
    %3335 = vmax.xlane.f32.xlu0 %v3334
    %v3336 = vpop.xlane.xlu0 %3335
    %v3337 = vsel %vm2607, %v3319, -inf
    %3338 = vmax.xlane.f32.xlu0 %v3337
    %v3339 = vpop.xlane.xlu0 %3338
    %v3340 = vsel %vm2607, %v3320, -inf
    %3341 = vmax.xlane.f32.xlu0 %v3340
    %v3342 = vpop.xlane.xlu0 %3341
    %v3343 = vsel %vm2607, %v3321, -inf
    %3344 = vmax.xlane.f32.xlu0 %v3343
    %v3345 = vpop.xlane.xlu0 %3344
    %v3346 = vsub.f32 %v3314, %v3324
    %v3347 = vsub.f32 %v3315, %v3327
    %v3348 = vsub.f32 %v3316, %v3330
    %v3349 = vsub.f32 %v3317, %v3333
    %v3350 = vsub.f32 %v3318, %v3336
    %v3351 = vsub.f32 %v3319, %v3339
    %v3352 = vsub.f32 %v3320, %v3342
    %v3353 = vsub.f32 %v3321, %v3345
    %v3354 = vmul.f32 %v3346, 1.442695
    %v3355 = vpow.pop %v3354
    %v3356 = vmul.f32 %v3347, 1.442695
    %v3357 = vpow.pop %v3356
    %v3358 = vmul.f32 %v3348, 1.442695
    %v3359 = vpow.pop %v3358
    %v3360 = vmul.f32 %v3349, 1.442695
    %v3361 = vpow.pop %v3360
    %v3362 = vmul.f32 %v3350, 1.442695
    %v3363 = vpow.pop %v3362
    %v3364 = vmul.f32 %v3351, 1.442695
    %v3365 = vpow.pop %v3364
    %v3366 = vmul.f32 %v3352, 1.442695
    %v3367 = vpow.pop %v3366
    %v3368 = vmul.f32 %v3353, 1.442695
    %v3369 = vpow.pop %v3368
    %v3370 = vsel %vm2607, %v3355, 0.0
    %3371 = vadd.xlane.f32.xlu0 %v3370
    %v3372 = vpop.xlane.xlu0 %3371
    %v3373 = vsel %vm2607, %v3357, 0.0
    %3374 = vadd.xlane.f32.xlu0 %v3373
    %v3375 = vpop.xlane.xlu0 %3374
    %v3376 = vsel %vm2607, %v3359, 0.0
    %3377 = vadd.xlane.f32.xlu0 %v3376
    %v3378 = vpop.xlane.xlu0 %3377
    %v3379 = vsel %vm2607, %v3361, 0.0
    %3380 = vadd.xlane.f32.xlu0 %v3379
    %v3381 = vpop.xlane.xlu0 %3380
    %v3382 = vsel %vm2607, %v3363, 0.0
    %3383 = vadd.xlane.f32.xlu0 %v3382
    %v3384 = vpop.xlane.xlu0 %3383
    %v3385 = vsel %vm2607, %v3365, 0.0
    %3386 = vadd.xlane.f32.xlu0 %v3385
    %v3387 = vpop.xlane.xlu0 %3386
    %v3388 = vsel %vm2607, %v3367, 0.0
    %3389 = vadd.xlane.f32.xlu0 %v3388
    %v3390 = vpop.xlane.xlu0 %3389
    %v3391 = vsel %vm2607, %v3369, 0.0
    %3392 = vadd.xlane.f32.xlu0 %v3391
    %v3393 = vpop.xlane.xlu0 %3392
    %v3394 = vrcp.pop %v3372
    %v3395 = vrcp.pop %v3375
    %v3396 = vrcp.pop %v3378
    %v3397 = vrcp.pop %v3381
    %v3398 = vrcp.pop %v3384
    %v3399 = vrcp.pop %v3387
    %v3400 = vrcp.pop %v3390
    %v3401 = vrcp.pop %v3393
    %v3402 = vmul.f32 %v3355, %v3394
    %v3403 = vmul.f32 %v3357, %v3395
    %v3404 = vmul.f32 %v3359, %v3396
    %v3405 = vmul.f32 %v3361, %v3397
    %v3406 = vmul.f32 %v3363, %v3398
    %v3407 = vmul.f32 %v3365, %v3399
    %v3408 = vmul.f32 %v3367, %v3400
    %v3409 = vmul.f32 %v3369, %v3401
    %v3410 = vpack.c.bf16 %v3403, %v3402
    %v3411 = vpack.c.bf16 %v3405, %v3404
    %v3412 = vpack.c.bf16 %v3407, %v3406
    %v3413 = vpack.c.bf16 %v3409, %v3408
    %v3415 = vsel %vm2607, %v3410, 0
    %v3418 = vsel %vm2607, %v3411, 0
    %v3421 = vsel %vm2607, %v3412, 0
    %v3424 = vsel %vm2607, %v3413, 0
    %3426 = vmatprep.subr.bf16.mxu0 0
    %3427 = vmatpush1.bf16.msra.mxu0 %v3221
    %3428 = vmatprep.subr.bf16.mxu0 0
    %3429 = vmatpush1.bf16.msra.mxu0 %v3222
    %3430 = vmatprep.subr.bf16.mxu0 0
    %3431 = vmatpush1.bf16.msra.mxu0 %v3223
    %3432 = vmatprep.subr.bf16.mxu0 0
    %3433 = vmatpush1.bf16.msra.mxu0 %v3224
    %3434 = vmatprep.subr.bf16.mxu0 0
    %3435 = vmatpush1.bf16.msra.mxu0 0
    %3436 = vmatprep.subr.bf16.mxu0 0
    %3437 = vmatpush1.bf16.msra.mxu0 0
    %3438 = vmatprep.subr.bf16.mxu0 0
    %3439 = vmatpush1.bf16.msra.mxu0 0
    %3440 = vmatprep.subr.bf16.mxu0 0
    %3441 = vmatpush1.bf16.msra.mxu0 0
    %3442 = vmatprep.subr.bf16.mxu0 0
    %3443 = vmatpush1.bf16.msra.mxu0 0
    %3444 = vmatprep.subr.bf16.mxu0 0
    %3445 = vmatpush1.bf16.msra.mxu0 0
    %3446 = vmatprep.subr.bf16.mxu0 0
    %3447 = vmatpush1.bf16.msra.mxu0 0
    %3448 = vmatprep.subr.bf16.mxu0 0
    %3449 = vmatpush1.bf16.msra.mxu0 0
    %3450 = vmatprep.subr.bf16.mxu0 0
    %3451 = vmatpush1.bf16.msra.mxu0 0
    %3452 = vmatprep.subr.bf16.mxu0 0
    %3453 = vmatpush1.bf16.msra.mxu0 0
    %3454 = vmatprep.subr.bf16.mxu0 0
    %3455 = vmatpush1.bf16.msra.mxu0 0
    %3456 = vmatprep.subr.bf16.mxu0 0
    %3457 = vmatpush1.bf16.msra.mxu0 0
    %3458 = vmatprep.mubr.bf16.mxu0 0
    %3459 = vmatmul.mubr.bf16.gmra.mrb[0].mxu0 %v3415
    %v3460 = vpop.f32.mrb[0].mxu0
    %v3461 = vadd.f32 0.0, %v3460
    %v3462 = vpop.f32.mrb[0].mxu0
    %v3463 = vpop.f32.mrb[0].mxu0
    %v3464 = vadd.f32 0.0, %v3463
    %v3465 = vpop.f32.mrb[0].mxu0
    %3466 = vmatprep.mubr.bf16.mxu0 0
    %3467 = vmatmul.mubr.bf16.gmra.mrb[0].mxu0 %v3418
    %v3468 = vpop.f32.mrb[0].mxu0
    %v3469 = vadd.f32 0.0, %v3468
    %v3470 = vpop.f32.mrb[0].mxu0
    %v3471 = vpop.f32.mrb[0].mxu0
    %v3472 = vadd.f32 0.0, %v3471
    %v3473 = vpop.f32.mrb[0].mxu0
    %3474 = vmatprep.mubr.bf16.mxu0 0
    %3475 = vmatmul.mubr.bf16.gmra.mrb[0].mxu0 %v3421
    %v3476 = vpop.f32.mrb[0].mxu0
    %v3477 = vadd.f32 0.0, %v3476
    %v3478 = vpop.f32.mrb[0].mxu0
    %v3479 = vpop.f32.mrb[0].mxu0
    %v3480 = vadd.f32 0.0, %v3479
    %v3481 = vpop.f32.mrb[0].mxu0
    %3482 = vmatprep.mubr.bf16.mxu0 0
    %3483 = vmatmul.mubr.bf16.gmra.mrb[0].mxu0 %v3424
    %v3484 = vpop.f32.mrb[0].mxu0
    %v3485 = vadd.f32 0.0, %v3484
    %v3486 = vpop.f32.mrb[0].mxu0
    %v3487 = vpop.f32.mrb[0].mxu0
    %v3488 = vadd.f32 0.0, %v3487
    %v3489 = vpop.f32.mrb[0].mxu0
    %3490 = vdwg.mxu0
    %v3491 = vpack.c.bf16 %v3464, %v3461
    %v3492 = vpack.c.bf16 %v3472, %v3469
    %v3493 = vpack.c.bf16 %v3480, %v3477
    %v3494 = vpack.c.bf16 %v3488, %v3485
    %3495 = vst.msk [vmem:[#allocation2 + $0x8] sm:$0xff] %vm2607, %v3491
    %3496 = vst.msk [vmem:[#allocation2 + $0x20] sm:$0xff] %vm2607, %v3492
    %3497 = vst.msk [vmem:[#allocation2 + $0x38] sm:$0xff] %vm2607, %v3493
    %3498 = vst.msk [vmem:[#allocation2 + $0x50] sm:$0xff] %vm2607, %v3494
    %3503 = vrot.lane.b32.xlu0 %v3213, 64
    %v3504 = vpop.permute.xlu0 %3503
    %3505 = vrot.lane.b32.xlu0 %v3214, 64
    %v3506 = vpop.permute.xlu0 %3505
    %3507 = vrot.lane.b32.xlu0 %v3215, 64
    %v3508 = vpop.permute.xlu0 %3507
    %3509 = vrot.lane.b32.xlu0 %v3216, 64
    %v3510 = vpop.permute.xlu0 %3509
    %3515 = vrot.lane.b32.xlu0 %v3217, 64
    %v3516 = vpop.permute.xlu0 %3515
    %3517 = vrot.lane.b32.xlu0 %v3218, 64
    %v3518 = vpop.permute.xlu0 %3517
    %3519 = vrot.lane.b32.xlu0 %v3219, 64
    %v3520 = vpop.permute.xlu0 %3519
    %3521 = vrot.lane.b32.xlu0 %v3220, 64
    %v3522 = vpop.permute.xlu0 %3521
    %v3524 = vsel %vm2607, %v3504, 0
    %v3527 = vsel %vm2607, %v3506, 0
    %v3530 = vsel %vm2607, %v3508, 0
    %v3533 = vsel %vm2607, %v3510, 0
    %v3536 = vsel %vm2607, %v3516, 0
    %v3539 = vsel %vm2607, %v3518, 0
    %v3542 = vsel %vm2607, %v3520, 0
    %v3545 = vsel %vm2607, %v3522, 0
    %3547 = vmatprep.subr.bf16.mxu0 0
    %3548 = vmatpush1.bf16.xpose.msra.mxu0 %v3536
    %3549 = vmatprep.subr.bf16.mxu0 0
    %3550 = vmatpush1.bf16.xpose.msra.mxu0 %v3539
    %3551 = vmatprep.subr.bf16.mxu0 0
    %3552 = vmatpush1.bf16.xpose.msra.mxu0 %v3542
    %3553 = vmatprep.subr.bf16.mxu0 0
    %3554 = vmatpush1.bf16.xpose.msra.mxu0 %v3545
    %3555 = vmatprep.subr.bf16.mxu0 0
    %3556 = vmatpush1.bf16.xpose.msra.mxu0 0
    %3557 = vmatprep.subr.bf16.mxu0 0
    %3558 = vmatpush1.bf16.xpose.msra.mxu0 0
    %3559 = vmatprep.subr.bf16.mxu0 0
    %3560 = vmatpush1.bf16.xpose.msra.mxu0 0
    %3561 = vmatprep.subr.bf16.mxu0 0
    %3562 = vmatpush1.bf16.xpose.msra.mxu0 0
    %3563 = vmatprep.subr.bf16.mxu0 0
    %3564 = vmatpush1.bf16.xpose.msra.mxu0 0
    %3565 = vmatprep.subr.bf16.mxu0 0
    %3566 = vmatpush1.bf16.xpose.msra.mxu0 0
    %3567 = vmatprep.subr.bf16.mxu0 0
    %3568 = vmatpush1.bf16.xpose.msra.mxu0 0
    %3569 = vmatprep.subr.bf16.mxu0 0
    %3570 = vmatpush1.bf16.xpose.msra.mxu0 0
    %3571 = vmatprep.subr.bf16.mxu0 0
    %3572 = vmatpush1.bf16.xpose.msra.mxu0 0
    %3573 = vmatprep.subr.bf16.mxu0 0
    %3574 = vmatpush1.bf16.xpose.msra.mxu0 0
    %3575 = vmatprep.subr.bf16.mxu0 0
    %3576 = vmatpush1.bf16.xpose.msra.mxu0 0
    %3577 = vmatprep.subr.bf16.mxu0 0
    %3578 = vmatpush1.bf16.xpose.msra.mxu0 0
    %3579 = vmatprep.mubr.bf16.mxu0 0
    %3580 = vmatmul.mubr.bf16.gmra.mrb[0].mxu0 %v3524
    %v3581 = vpop.f32.mrb[0].mxu0
    %v3582 = vadd.f32 0.0, %v3581
    %v3583 = vpop.f32.mrb[0].mxu0
    %v3584 = vpop.f32.mrb[0].mxu0
    %v3585 = vadd.f32 0.0, %v3584
    %v3586 = vpop.f32.mrb[0].mxu0
    %3587 = vmatprep.mubr.bf16.mxu0 0
    %3588 = vmatmul.mubr.bf16.gmra.mrb[0].mxu0 %v3527
    %v3589 = vpop.f32.mrb[0].mxu0
    %v3590 = vadd.f32 0.0, %v3589
    %v3591 = vpop.f32.mrb[0].mxu0
    %v3592 = vpop.f32.mrb[0].mxu0
    %v3593 = vadd.f32 0.0, %v3592
    %v3594 = vpop.f32.mrb[0].mxu0
    %3595 = vmatprep.mubr.bf16.mxu0 0
    %3596 = vmatmul.mubr.bf16.gmra.mrb[0].mxu0 %v3530
    %v3597 = vpop.f32.mrb[0].mxu0
    %v3598 = vadd.f32 0.0, %v3597
    %v3599 = vpop.f32.mrb[0].mxu0
    %v3600 = vpop.f32.mrb[0].mxu0
    %v3601 = vadd.f32 0.0, %v3600
    %v3602 = vpop.f32.mrb[0].mxu0
    %3603 = vmatprep.mubr.bf16.mxu0 0
    %3604 = vmatmul.mubr.bf16.gmra.mrb[0].mxu0 %v3533
    %v3605 = vpop.f32.mrb[0].mxu0
    %v3606 = vadd.f32 0.0, %v3605
    %v3607 = vpop.f32.mrb[0].mxu0
    %v3608 = vpop.f32.mrb[0].mxu0
    %v3609 = vadd.f32 0.0, %v3608
    %v3610 = vpop.f32.mrb[0].mxu0
    %3611 = vdwg.mxu0
    %v3612 = vsel %vm2587, %v3582, -1e+30
    %v3613 = vsel %vm2588, %v3585, -1e+30
    %v3614 = vsel %vm2589, %v3590, -1e+30
    %v3615 = vsel %vm2590, %v3593, -1e+30
    %v3616 = vsel %vm2591, %v3598, -1e+30
    %v3617 = vsel %vm2592, %v3601, -1e+30
    %v3618 = vsel %vm2593, %v3606, -1e+30
    %v3619 = vsel %vm2594, %v3609, -1e+30
    %v3620 = vsel %vm2607, %v3612, -inf
    %3621 = vmax.xlane.f32.xlu0 %v3620
    %v3622 = vpop.xlane.xlu0 %3621
    %v3623 = vsel %vm2607, %v3613, -inf
    %3624 = vmax.xlane.f32.xlu0 %v3623
    %v3625 = vpop.xlane.xlu0 %3624
    %v3626 = vsel %vm2607, %v3614, -inf
    %3627 = vmax.xlane.f32.xlu0 %v3626
    %v3628 = vpop.xlane.xlu0 %3627
    %v3629 = vsel %vm2607, %v3615, -inf
    %3630 = vmax.xlane.f32.xlu0 %v3629
    %v3631 = vpop.xlane.xlu0 %3630
    %v3632 = vsel %vm2607, %v3616, -inf
    %3633 = vmax.xlane.f32.xlu0 %v3632
    %v3634 = vpop.xlane.xlu0 %3633
    %v3635 = vsel %vm2607, %v3617, -inf
    %3636 = vmax.xlane.f32.xlu0 %v3635
    %v3637 = vpop.xlane.xlu0 %3636
    %v3638 = vsel %vm2607, %v3618, -inf
    %3639 = vmax.xlane.f32.xlu0 %v3638
    %v3640 = vpop.xlane.xlu0 %3639
    %v3641 = vsel %vm2607, %v3619, -inf
    %3642 = vmax.xlane.f32.xlu0 %v3641
    %v3643 = vpop.xlane.xlu0 %3642
    %v3644 = vsub.f32 %v3612, %v3622
    %v3645 = vsub.f32 %v3613, %v3625
    %v3646 = vsub.f32 %v3614, %v3628
    %v3647 = vsub.f32 %v3615, %v3631
    %v3648 = vsub.f32 %v3616, %v3634
    %v3649 = vsub.f32 %v3617, %v3637
    %v3650 = vsub.f32 %v3618, %v3640
    %v3651 = vsub.f32 %v3619, %v3643
    %v3652 = vmul.f32 %v3644, 1.442695
    %v3653 = vpow.pop %v3652
    %v3654 = vmul.f32 %v3645, 1.442695
    %v3655 = vpow.pop %v3654
    %v3656 = vmul.f32 %v3646, 1.442695
    %v3657 = vpow.pop %v3656
    %v3658 = vmul.f32 %v3647, 1.442695
    %v3659 = vpow.pop %v3658
    %v3660 = vmul.f32 %v3648, 1.442695
    %v3661 = vpow.pop %v3660
    %v3662 = vmul.f32 %v3649, 1.442695
    %v3663 = vpow.pop %v3662
    %v3664 = vmul.f32 %v3650, 1.442695
    %v3665 = vpow.pop %v3664
    %v3666 = vmul.f32 %v3651, 1.442695
    %v3667 = vpow.pop %v3666
    %v3668 = vsel %vm2607, %v3653, 0.0
    %3669 = vadd.xlane.f32.xlu0 %v3668
    %v3670 = vpop.xlane.xlu0 %3669
    %v3671 = vsel %vm2607, %v3655, 0.0
    %3672 = vadd.xlane.f32.xlu0 %v3671
    %v3673 = vpop.xlane.xlu0 %3672
    %v3674 = vsel %vm2607, %v3657, 0.0
    %3675 = vadd.xlane.f32.xlu0 %v3674
    %v3676 = vpop.xlane.xlu0 %3675
    %v3677 = vsel %vm2607, %v3659, 0.0
    %3678 = vadd.xlane.f32.xlu0 %v3677
    %v3679 = vpop.xlane.xlu0 %3678
    %v3680 = vsel %vm2607, %v3661, 0.0
    %3681 = vadd.xlane.f32.xlu0 %v3680
    %v3682 = vpop.xlane.xlu0 %3681
    %v3683 = vsel %vm2607, %v3663, 0.0
    %3684 = vadd.xlane.f32.xlu0 %v3683
    %v3685 = vpop.xlane.xlu0 %3684
    %v3686 = vsel %vm2607, %v3665, 0.0
    %3687 = vadd.xlane.f32.xlu0 %v3686
    %v3688 = vpop.xlane.xlu0 %3687
    %v3689 = vsel %vm2607, %v3667, 0.0
    %3690 = vadd.xlane.f32.xlu0 %v3689
    %v3691 = vpop.xlane.xlu0 %3690
    %v3692 = vrcp.pop %v3670
    %v3693 = vrcp.pop %v3673
    %v3694 = vrcp.pop %v3676
    %v3695 = vrcp.pop %v3679
    %v3696 = vrcp.pop %v3682
    %v3697 = vrcp.pop %v3685
    %v3698 = vrcp.pop %v3688
    %v3699 = vrcp.pop %v3691
    %v3700 = vmul.f32 %v3653, %v3692
    %v3701 = vmul.f32 %v3655, %v3693
    %v3702 = vmul.f32 %v3657, %v3694
    %v3703 = vmul.f32 %v3659, %v3695
    %v3704 = vmul.f32 %v3661, %v3696
    %v3705 = vmul.f32 %v3663, %v3697
    %v3706 = vmul.f32 %v3665, %v3698
    %v3707 = vmul.f32 %v3667, %v3699
    %v3708 = vpack.c.bf16 %v3701, %v3700
    %v3709 = vpack.c.bf16 %v3703, %v3702
    %v3710 = vpack.c.bf16 %v3705, %v3704
    %v3711 = vpack.c.bf16 %v3707, %v3706
    %3716 = vrot.lane.b32.xlu0 %v3221, 64
    %v3717 = vpop.permute.xlu0 %3716
    %3718 = vrot.lane.b32.xlu0 %v3222, 64
    %v3719 = vpop.permute.xlu0 %3718
    %3720 = vrot.lane.b32.xlu0 %v3223, 64
    %v3721 = vpop.permute.xlu0 %3720
    %3722 = vrot.lane.b32.xlu0 %v3224, 64
    %v3723 = vpop.permute.xlu0 %3722
    %v3729 = vsel %vm2607, %v3708, 0
    %v3732 = vsel %vm2607, %v3709, 0
    %v3735 = vsel %vm2607, %v3710, 0
    %v3738 = vsel %vm2607, %v3711, 0
    %3740 = vmatprep.subr.bf16.mxu0 0
    %3741 = vmatpush1.bf16.msra.mxu0 %v3717
    %3742 = vmatprep.subr.bf16.mxu0 0
    %3743 = vmatpush1.bf16.msra.mxu0 %v3719
    %3744 = vmatprep.subr.bf16.mxu0 0
    %3745 = vmatpush1.bf16.msra.mxu0 %v3721
    %3746 = vmatprep.subr.bf16.mxu0 0
    %3747 = vmatpush1.bf16.msra.mxu0 %v3723
    %3748 = vmatprep.subr.bf16.mxu0 0
    %3749 = vmatpush1.bf16.msra.mxu0 0
    %3750 = vmatprep.subr.bf16.mxu0 0
    %3751 = vmatpush1.bf16.msra.mxu0 0
    %3752 = vmatprep.subr.bf16.mxu0 0
    %3753 = vmatpush1.bf16.msra.mxu0 0
    %3754 = vmatprep.subr.bf16.mxu0 0
    %3755 = vmatpush1.bf16.msra.mxu0 0
    %3756 = vmatprep.subr.bf16.mxu0 0
    %3757 = vmatpush1.bf16.msra.mxu0 0
    %3758 = vmatprep.subr.bf16.mxu0 0
    %3759 = vmatpush1.bf16.msra.mxu0 0
    %3760 = vmatprep.subr.bf16.mxu0 0
    %3761 = vmatpush1.bf16.msra.mxu0 0
    %3762 = vmatprep.subr.bf16.mxu0 0
    %3763 = vmatpush1.bf16.msra.mxu0 0
    %3764 = vmatprep.subr.bf16.mxu0 0
    %3765 = vmatpush1.bf16.msra.mxu0 0
    %3766 = vmatprep.subr.bf16.mxu0 0
    %3767 = vmatpush1.bf16.msra.mxu0 0
    %3768 = vmatprep.subr.bf16.mxu0 0
    %3769 = vmatpush1.bf16.msra.mxu0 0
    %3770 = vmatprep.subr.bf16.mxu0 0
    %3771 = vmatpush1.bf16.msra.mxu0 0
    %3772 = vmatprep.mubr.bf16.mxu0 0
    %3773 = vmatmul.mubr.bf16.gmra.mrb[0].mxu0 %v3729
    %v3774 = vpop.f32.mrb[0].mxu0
    %v3775 = vadd.f32 0.0, %v3774
    %v3776 = vpop.f32.mrb[0].mxu0
    %v3777 = vpop.f32.mrb[0].mxu0
    %v3778 = vadd.f32 0.0, %v3777
    %v3779 = vpop.f32.mrb[0].mxu0
    %3780 = vmatprep.mubr.bf16.mxu0 0
    %3781 = vmatmul.mubr.bf16.gmra.mrb[0].mxu0 %v3732
    %v3782 = vpop.f32.mrb[0].mxu0
    %v3783 = vadd.f32 0.0, %v3782
    %v3784 = vpop.f32.mrb[0].mxu0
    %v3785 = vpop.f32.mrb[0].mxu0
    %v3786 = vadd.f32 0.0, %v3785
    %v3787 = vpop.f32.mrb[0].mxu0
    %3788 = vmatprep.mubr.bf16.mxu0 0
    %3789 = vmatmul.mubr.bf16.gmra.mrb[0].mxu0 %v3735
    %v3790 = vpop.f32.mrb[0].mxu0
    %v3791 = vadd.f32 0.0, %v3790
    %v3792 = vpop.f32.mrb[0].mxu0
    %v3793 = vpop.f32.mrb[0].mxu0
    %v3794 = vadd.f32 0.0, %v3793
    %v3795 = vpop.f32.mrb[0].mxu0
    %3796 = vmatprep.mubr.bf16.mxu0 0
    %3797 = vmatmul.mubr.bf16.gmra.mrb[0].mxu0 %v3738
    %v3798 = vpop.f32.mrb[0].mxu0
    %v3799 = vadd.f32 0.0, %v3798
    %v3800 = vpop.f32.mrb[0].mxu0
    %v3801 = vpop.f32.mrb[0].mxu0
    %v3802 = vadd.f32 0.0, %v3801
    %v3803 = vpop.f32.mrb[0].mxu0
    %3804 = vdwg.mxu0
    %v3805 = vpack.c.bf16 %v3778, %v3775
    %v3806 = vpack.c.bf16 %v3786, %v3783
    %v3807 = vpack.c.bf16 %v3794, %v3791
    %v3808 = vpack.c.bf16 %v3802, %v3799
    %3813 = vrot.lane.b32.xlu0 %v3805, 64
    %v3814 = vpop.permute.xlu0 %3813
    %3815 = vrot.lane.b32.xlu0 %v3806, 64
    %v3816 = vpop.permute.xlu0 %3815
    %3817 = vrot.lane.b32.xlu0 %v3807, 64
    %v3818 = vpop.permute.xlu0 %3817
    %3819 = vrot.lane.b32.xlu0 %v3808, 64
    %v3820 = vpop.permute.xlu0 %3819
    %3825 = vst.msk [vmem:[#allocation2 + $0x8] sm:$0xff] %vm3208, %v3814
    %3826 = vst.msk [vmem:[#allocation2 + $0x20] sm:$0xff] %vm3208, %v3816
    %3827 = vst.msk [vmem:[#allocation2 + $0x38] sm:$0xff] %vm3208, %v3818
    %3828 = vst.msk [vmem:[#allocation2 + $0x50] sm:$0xff] %vm3208, %v3820
    %v3829 = vpack.c.bf16 %v1856, %v1852
    %v3830 = vpack.c.bf16 %v1866, %v1862
    %v3831 = vpack.c.bf16 %v1876, %v1872
    %v3832 = vpack.c.bf16 %v1886, %v1882
    %v3833 = vpack.c.bf16 %v2084, %v2080
    %v3834 = vpack.c.bf16 %v2094, %v2090
    %v3835 = vpack.c.bf16 %v2104, %v2100
    %v3836 = vpack.c.bf16 %v2114, %v2110
    %v3837 = vpack.c.bf16 %v2517, %v2514
    %v3838 = vpack.c.bf16 %v2525, %v2522
    %v3839 = vpack.c.bf16 %v2533, %v2530
    %v3840 = vpack.c.bf16 %v2541, %v2538
    %v3842 = vsel %vm2607, %v3829, 0
    %v3845 = vsel %vm2607, %v3830, 0
    %v3848 = vsel %vm2607, %v3831, 0
    %v3851 = vsel %vm2607, %v3832, 0
    %v3854 = vsel %vm2607, %v3833, 0
    %v3857 = vsel %vm2607, %v3834, 0
    %v3860 = vsel %vm2607, %v3835, 0
    %v3863 = vsel %vm2607, %v3836, 0
    %3865 = vmatprep.subr.bf16.mxu0 0
    %3866 = vmatpush1.bf16.xpose.msra.mxu0 %v3854
    %3867 = vmatprep.subr.bf16.mxu0 0
    %3868 = vmatpush1.bf16.xpose.msra.mxu0 %v3857
    %3869 = vmatprep.subr.bf16.mxu0 0
    %3870 = vmatpush1.bf16.xpose.msra.mxu0 %v3860
    %3871 = vmatprep.subr.bf16.mxu0 0
    %3872 = vmatpush1.bf16.xpose.msra.mxu0 %v3863
    %3873 = vmatprep.subr.bf16.mxu0 0
    %3874 = vmatpush1.bf16.xpose.msra.mxu0 0
    %3875 = vmatprep.subr.bf16.mxu0 0
    %3876 = vmatpush1.bf16.xpose.msra.mxu0 0
    %3877 = vmatprep.subr.bf16.mxu0 0
    %3878 = vmatpush1.bf16.xpose.msra.mxu0 0
    %3879 = vmatprep.subr.bf16.mxu0 0
    %3880 = vmatpush1.bf16.xpose.msra.mxu0 0
    %3881 = vmatprep.subr.bf16.mxu0 0
    %3882 = vmatpush1.bf16.xpose.msra.mxu0 0
    %3883 = vmatprep.subr.bf16.mxu0 0
    %3884 = vmatpush1.bf16.xpose.msra.mxu0 0
    %3885 = vmatprep.subr.bf16.mxu0 0
    %3886 = vmatpush1.bf16.xpose.msra.mxu0 0
    %3887 = vmatprep.subr.bf16.mxu0 0
    %3888 = vmatpush1.bf16.xpose.msra.mxu0 0
    %3889 = vmatprep.subr.bf16.mxu0 0
    %3890 = vmatpush1.bf16.xpose.msra.mxu0 0
    %3891 = vmatprep.subr.bf16.mxu0 0
    %3892 = vmatpush1.bf16.xpose.msra.mxu0 0
    %3893 = vmatprep.subr.bf16.mxu0 0
    %3894 = vmatpush1.bf16.xpose.msra.mxu0 0
    %3895 = vmatprep.subr.bf16.mxu0 0
    %3896 = vmatpush1.bf16.xpose.msra.mxu0 0
    %3897 = vmatprep.mubr.bf16.mxu0 0
    %3898 = vmatmul.mubr.bf16.gmra.mrb[0].mxu0 %v3842
    %v3899 = vpop.f32.mrb[0].mxu0
    %v3900 = vadd.f32 0.0, %v3899
    %v3901 = vpop.f32.mrb[0].mxu0
    %v3902 = vpop.f32.mrb[0].mxu0
    %v3903 = vadd.f32 0.0, %v3902
    %v3904 = vpop.f32.mrb[0].mxu0
    %3905 = vmatprep.mubr.bf16.mxu0 0
    %3906 = vmatmul.mubr.bf16.gmra.mrb[0].mxu0 %v3845
    %v3907 = vpop.f32.mrb[0].mxu0
    %v3908 = vadd.f32 0.0, %v3907
    %v3909 = vpop.f32.mrb[0].mxu0
    %v3910 = vpop.f32.mrb[0].mxu0
    %v3911 = vadd.f32 0.0, %v3910
    %v3912 = vpop.f32.mrb[0].mxu0
    %3913 = vmatprep.mubr.bf16.mxu0 0
    %3914 = vmatmul.mubr.bf16.gmra.mrb[0].mxu0 %v3848
    %v3915 = vpop.f32.mrb[0].mxu0
    %v3916 = vadd.f32 0.0, %v3915
    %v3917 = vpop.f32.mrb[0].mxu0
    %v3918 = vpop.f32.mrb[0].mxu0
    %v3919 = vadd.f32 0.0, %v3918
    %v3920 = vpop.f32.mrb[0].mxu0
    %3921 = vmatprep.mubr.bf16.mxu0 0
    %3922 = vmatmul.mubr.bf16.gmra.mrb[0].mxu0 %v3851
    %v3923 = vpop.f32.mrb[0].mxu0
    %v3924 = vadd.f32 0.0, %v3923
    %v3925 = vpop.f32.mrb[0].mxu0
    %v3926 = vpop.f32.mrb[0].mxu0
    %v3927 = vadd.f32 0.0, %v3926
    %v3928 = vpop.f32.mrb[0].mxu0
    %3929 = vdwg.mxu0
    %v3930 = vsel %vm2587, %v3900, -1e+30
    %v3931 = vsel %vm2588, %v3903, -1e+30
    %v3932 = vsel %vm2589, %v3908, -1e+30
    %v3933 = vsel %vm2590, %v3911, -1e+30
    %v3934 = vsel %vm2591, %v3916, -1e+30
    %v3935 = vsel %vm2592, %v3919, -1e+30
    %v3936 = vsel %vm2593, %v3924, -1e+30
    %v3937 = vsel %vm2594, %v3927, -1e+30
    %v3938 = vsel %vm2607, %v3930, -inf
    %3939 = vmax.xlane.f32.xlu0 %v3938
    %v3940 = vpop.xlane.xlu0 %3939
    %v3941 = vsel %vm2607, %v3931, -inf
    %3942 = vmax.xlane.f32.xlu0 %v3941
    %v3943 = vpop.xlane.xlu0 %3942
    %v3944 = vsel %vm2607, %v3932, -inf
    %3945 = vmax.xlane.f32.xlu0 %v3944
    %v3946 = vpop.xlane.xlu0 %3945
    %v3947 = vsel %vm2607, %v3933, -inf
    %3948 = vmax.xlane.f32.xlu0 %v3947
    %v3949 = vpop.xlane.xlu0 %3948
    %v3950 = vsel %vm2607, %v3934, -inf
    %3951 = vmax.xlane.f32.xlu0 %v3950
    %v3952 = vpop.xlane.xlu0 %3951
    %v3953 = vsel %vm2607, %v3935, -inf
    %3954 = vmax.xlane.f32.xlu0 %v3953
    %v3955 = vpop.xlane.xlu0 %3954
    %v3956 = vsel %vm2607, %v3936, -inf
    %3957 = vmax.xlane.f32.xlu0 %v3956
    %v3958 = vpop.xlane.xlu0 %3957
    %v3959 = vsel %vm2607, %v3937, -inf
    %3960 = vmax.xlane.f32.xlu0 %v3959
    %v3961 = vpop.xlane.xlu0 %3960
    %v3962 = vsub.f32 %v3930, %v3940
    %v3963 = vsub.f32 %v3931, %v3943
    %v3964 = vsub.f32 %v3932, %v3946
    %v3965 = vsub.f32 %v3933, %v3949
    %v3966 = vsub.f32 %v3934, %v3952
    %v3967 = vsub.f32 %v3935, %v3955
    %v3968 = vsub.f32 %v3936, %v3958
    %v3969 = vsub.f32 %v3937, %v3961
    %v3970 = vmul.f32 %v3962, 1.442695
    %v3971 = vpow.pop %v3970
    %v3972 = vmul.f32 %v3963, 1.442695
    %v3973 = vpow.pop %v3972
    %v3974 = vmul.f32 %v3964, 1.442695
    %v3975 = vpow.pop %v3974
    %v3976 = vmul.f32 %v3965, 1.442695
    %v3977 = vpow.pop %v3976
    %v3978 = vmul.f32 %v3966, 1.442695
    %v3979 = vpow.pop %v3978
    %v3980 = vmul.f32 %v3967, 1.442695
    %v3981 = vpow.pop %v3980
    %v3982 = vmul.f32 %v3968, 1.442695
    %v3983 = vpow.pop %v3982
    %v3984 = vmul.f32 %v3969, 1.442695
    %v3985 = vpow.pop %v3984
    %v3986 = vsel %vm2607, %v3971, 0.0
    %3987 = vadd.xlane.f32.xlu0 %v3986
    %v3988 = vpop.xlane.xlu0 %3987
    %v3989 = vsel %vm2607, %v3973, 0.0
    %3990 = vadd.xlane.f32.xlu0 %v3989
    %v3991 = vpop.xlane.xlu0 %3990
    %v3992 = vsel %vm2607, %v3975, 0.0
    %3993 = vadd.xlane.f32.xlu0 %v3992
    %v3994 = vpop.xlane.xlu0 %3993
    %v3995 = vsel %vm2607, %v3977, 0.0
    %3996 = vadd.xlane.f32.xlu0 %v3995
    %v3997 = vpop.xlane.xlu0 %3996
    %v3998 = vsel %vm2607, %v3979, 0.0
    %3999 = vadd.xlane.f32.xlu0 %v3998
    %v4000 = vpop.xlane.xlu0 %3999
    %v4001 = vsel %vm2607, %v3981, 0.0
    %4002 = vadd.xlane.f32.xlu0 %v4001
    %v4003 = vpop.xlane.xlu0 %4002
    %v4004 = vsel %vm2607, %v3983, 0.0
    %4005 = vadd.xlane.f32.xlu0 %v4004
    %v4006 = vpop.xlane.xlu0 %4005
    %v4007 = vsel %vm2607, %v3985, 0.0
    %4008 = vadd.xlane.f32.xlu0 %v4007
    %v4009 = vpop.xlane.xlu0 %4008
    %v4010 = vrcp.pop %v3988
    %v4011 = vrcp.pop %v3991
    %v4012 = vrcp.pop %v3994
    %v4013 = vrcp.pop %v3997
    %v4014 = vrcp.pop %v4000
    %v4015 = vrcp.pop %v4003
    %v4016 = vrcp.pop %v4006
    %v4017 = vrcp.pop %v4009
    %v4018 = vmul.f32 %v3971, %v4010
    %v4019 = vmul.f32 %v3973, %v4011
    %v4020 = vmul.f32 %v3975, %v4012
    %v4021 = vmul.f32 %v3977, %v4013
    %v4022 = vmul.f32 %v3979, %v4014
    %v4023 = vmul.f32 %v3981, %v4015
    %v4024 = vmul.f32 %v3983, %v4016
    %v4025 = vmul.f32 %v3985, %v4017
    %v4026 = vpack.c.bf16 %v4019, %v4018
    %v4027 = vpack.c.bf16 %v4021, %v4020
    %v4028 = vpack.c.bf16 %v4023, %v4022
    %v4029 = vpack.c.bf16 %v4025, %v4024
    %v4031 = vsel %vm2607, %v4026, 0
    %v4034 = vsel %vm2607, %v4027, 0
    %v4037 = vsel %vm2607, %v4028, 0
    %v4040 = vsel %vm2607, %v4029, 0
    %4042 = vmatprep.subr.bf16.mxu0 0
    %4043 = vmatpush1.bf16.msra.mxu0 %v3837
    %4044 = vmatprep.subr.bf16.mxu0 0
    %4045 = vmatpush1.bf16.msra.mxu0 %v3838
    %4046 = vmatprep.subr.bf16.mxu0 0
    %4047 = vmatpush1.bf16.msra.mxu0 %v3839
    %4048 = vmatprep.subr.bf16.mxu0 0
    %4049 = vmatpush1.bf16.msra.mxu0 %v3840
    %4050 = vmatprep.subr.bf16.mxu0 0
    %4051 = vmatpush1.bf16.msra.mxu0 0
    %4052 = vmatprep.subr.bf16.mxu0 0
    %4053 = vmatpush1.bf16.msra.mxu0 0
    %4054 = vmatprep.subr.bf16.mxu0 0
    %4055 = vmatpush1.bf16.msra.mxu0 0
    %4056 = vmatprep.subr.bf16.mxu0 0
    %4057 = vmatpush1.bf16.msra.mxu0 0
    %4058 = vmatprep.subr.bf16.mxu0 0
    %4059 = vmatpush1.bf16.msra.mxu0 0
    %4060 = vmatprep.subr.bf16.mxu0 0
    %4061 = vmatpush1.bf16.msra.mxu0 0
    %4062 = vmatprep.subr.bf16.mxu0 0
    %4063 = vmatpush1.bf16.msra.mxu0 0
    %4064 = vmatprep.subr.bf16.mxu0 0
    %4065 = vmatpush1.bf16.msra.mxu0 0
    %4066 = vmatprep.subr.bf16.mxu0 0
    %4067 = vmatpush1.bf16.msra.mxu0 0
    %4068 = vmatprep.subr.bf16.mxu0 0
    %4069 = vmatpush1.bf16.msra.mxu0 0
    %4070 = vmatprep.subr.bf16.mxu0 0
    %4071 = vmatpush1.bf16.msra.mxu0 0
    %4072 = vmatprep.subr.bf16.mxu0 0
    %4073 = vmatpush1.bf16.msra.mxu0 0
    %4074 = vmatprep.mubr.bf16.mxu0 0
    %4075 = vmatmul.mubr.bf16.gmra.mrb[0].mxu0 %v4031
    %v4076 = vpop.f32.mrb[0].mxu0
    %v4077 = vadd.f32 0.0, %v4076
    %v4078 = vpop.f32.mrb[0].mxu0
    %v4079 = vpop.f32.mrb[0].mxu0
    %v4080 = vadd.f32 0.0, %v4079
    %v4081 = vpop.f32.mrb[0].mxu0
    %4082 = vmatprep.mubr.bf16.mxu0 0
    %4083 = vmatmul.mubr.bf16.gmra.mrb[0].mxu0 %v4034
    %v4084 = vpop.f32.mrb[0].mxu0
    %v4085 = vadd.f32 0.0, %v4084
    %v4086 = vpop.f32.mrb[0].mxu0
    %v4087 = vpop.f32.mrb[0].mxu0
    %v4088 = vadd.f32 0.0, %v4087
    %v4089 = vpop.f32.mrb[0].mxu0
    %4090 = vmatprep.mubr.bf16.mxu0 0
    %4091 = vmatmul.mubr.bf16.gmra.mrb[0].mxu0 %v4037
    %v4092 = vpop.f32.mrb[0].mxu0
    %v4093 = vadd.f32 0.0, %v4092
    %v4094 = vpop.f32.mrb[0].mxu0
    %v4095 = vpop.f32.mrb[0].mxu0
    %v4096 = vadd.f32 0.0, %v4095
    %v4097 = vpop.f32.mrb[0].mxu0
    %4098 = vmatprep.mubr.bf16.mxu0 0
    %4099 = vmatmul.mubr.bf16.gmra.mrb[0].mxu0 %v4040
    %v4100 = vpop.f32.mrb[0].mxu0
    %v4101 = vadd.f32 0.0, %v4100
    %v4102 = vpop.f32.mrb[0].mxu0
    %v4103 = vpop.f32.mrb[0].mxu0
    %v4104 = vadd.f32 0.0, %v4103
    %v4105 = vpop.f32.mrb[0].mxu0
    %4106 = vdwg.mxu0
    %v4107 = vpack.c.bf16 %v4080, %v4077
    %v4108 = vpack.c.bf16 %v4088, %v4085
    %v4109 = vpack.c.bf16 %v4096, %v4093
    %v4110 = vpack.c.bf16 %v4104, %v4101
    %4111 = vst.msk [vmem:[#allocation2 + $0x10] sm:$0xff] %vm2607, %v4107
    %4112 = vst.msk [vmem:[#allocation2 + $0x28] sm:$0xff] %vm2607, %v4108
    %4113 = vst.msk [vmem:[#allocation2 + $0x40] sm:$0xff] %vm2607, %v4109
    %4114 = vst.msk [vmem:[#allocation2 + $0x58] sm:$0xff] %vm2607, %v4110
    %4119 = vrot.lane.b32.xlu0 %v3829, 64
    %v4120 = vpop.permute.xlu0 %4119
    %4121 = vrot.lane.b32.xlu0 %v3830, 64
    %v4122 = vpop.permute.xlu0 %4121
    %4123 = vrot.lane.b32.xlu0 %v3831, 64
    %v4124 = vpop.permute.xlu0 %4123
    %4125 = vrot.lane.b32.xlu0 %v3832, 64
    %v4126 = vpop.permute.xlu0 %4125
    %4131 = vrot.lane.b32.xlu0 %v3833, 64
    %v4132 = vpop.permute.xlu0 %4131
    %4133 = vrot.lane.b32.xlu0 %v3834, 64
    %v4134 = vpop.permute.xlu0 %4133
    %4135 = vrot.lane.b32.xlu0 %v3835, 64
    %v4136 = vpop.permute.xlu0 %4135
    %4137 = vrot.lane.b32.xlu0 %v3836, 64
    %v4138 = vpop.permute.xlu0 %4137
    %v4140 = vsel %vm2607, %v4120, 0
    %v4143 = vsel %vm2607, %v4122, 0
    %v4146 = vsel %vm2607, %v4124, 0
    %v4149 = vsel %vm2607, %v4126, 0
    %v4152 = vsel %vm2607, %v4132, 0
    %v4155 = vsel %vm2607, %v4134, 0
    %v4158 = vsel %vm2607, %v4136, 0
    %v4161 = vsel %vm2607, %v4138, 0
    %4163 = vmatprep.subr.bf16.mxu0 0
    %4164 = vmatpush1.bf16.xpose.msra.mxu0 %v4152
    %4165 = vmatprep.subr.bf16.mxu0 0
    %4166 = vmatpush1.bf16.xpose.msra.mxu0 %v4155
    %4167 = vmatprep.subr.bf16.mxu0 0
    %4168 = vmatpush1.bf16.xpose.msra.mxu0 %v4158
    %4169 = vmatprep.subr.bf16.mxu0 0
    %4170 = vmatpush1.bf16.xpose.msra.mxu0 %v4161
    %4171 = vmatprep.subr.bf16.mxu0 0
    %4172 = vmatpush1.bf16.xpose.msra.mxu0 0
    %4173 = vmatprep.subr.bf16.mxu0 0
    %4174 = vmatpush1.bf16.xpose.msra.mxu0 0
    %4175 = vmatprep.subr.bf16.mxu0 0
    %4176 = vmatpush1.bf16.xpose.msra.mxu0 0
    %4177 = vmatprep.subr.bf16.mxu0 0
    %4178 = vmatpush1.bf16.xpose.msra.mxu0 0
    %4179 = vmatprep.subr.bf16.mxu0 0
    %4180 = vmatpush1.bf16.xpose.msra.mxu0 0
    %4181 = vmatprep.subr.bf16.mxu0 0
    %4182 = vmatpush1.bf16.xpose.msra.mxu0 0
    %4183 = vmatprep.subr.bf16.mxu0 0
    %4184 = vmatpush1.bf16.xpose.msra.mxu0 0
    %4185 = vmatprep.subr.bf16.mxu0 0
    %4186 = vmatpush1.bf16.xpose.msra.mxu0 0
    %4187 = vmatprep.subr.bf16.mxu0 0
    %4188 = vmatpush1.bf16.xpose.msra.mxu0 0
    %4189 = vmatprep.subr.bf16.mxu0 0
    %4190 = vmatpush1.bf16.xpose.msra.mxu0 0
    %4191 = vmatprep.subr.bf16.mxu0 0
    %4192 = vmatpush1.bf16.xpose.msra.mxu0 0
    %4193 = vmatprep.subr.bf16.mxu0 0
    %4194 = vmatpush1.bf16.xpose.msra.mxu0 0
    %4195 = vmatprep.mubr.bf16.mxu0 0
    %4196 = vmatmul.mubr.bf16.gmra.mrb[0].mxu0 %v4140
    %v4197 = vpop.f32.mrb[0].mxu0
    %v4198 = vadd.f32 0.0, %v4197
    %v4199 = vpop.f32.mrb[0].mxu0
    %v4200 = vpop.f32.mrb[0].mxu0
    %v4201 = vadd.f32 0.0, %v4200
    %v4202 = vpop.f32.mrb[0].mxu0
    %4203 = vmatprep.mubr.bf16.mxu0 0
    %4204 = vmatmul.mubr.bf16.gmra.mrb[0].mxu0 %v4143
    %v4205 = vpop.f32.mrb[0].mxu0
    %v4206 = vadd.f32 0.0, %v4205
    %v4207 = vpop.f32.mrb[0].mxu0
    %v4208 = vpop.f32.mrb[0].mxu0
    %v4209 = vadd.f32 0.0, %v4208
    %v4210 = vpop.f32.mrb[0].mxu0
    %4211 = vmatprep.mubr.bf16.mxu0 0
    %4212 = vmatmul.mubr.bf16.gmra.mrb[0].mxu0 %v4146
    %v4213 = vpop.f32.mrb[0].mxu0
    %v4214 = vadd.f32 0.0, %v4213
    %v4215 = vpop.f32.mrb[0].mxu0
    %v4216 = vpop.f32.mrb[0].mxu0
    %v4217 = vadd.f32 0.0, %v4216
    %v4218 = vpop.f32.mrb[0].mxu0
    %4219 = vmatprep.mubr.bf16.mxu0 0
    %4220 = vmatmul.mubr.bf16.gmra.mrb[0].mxu0 %v4149
    %v4221 = vpop.f32.mrb[0].mxu0
    %v4222 = vadd.f32 0.0, %v4221
    %v4223 = vpop.f32.mrb[0].mxu0
    %v4224 = vpop.f32.mrb[0].mxu0
    %v4225 = vadd.f32 0.0, %v4224
    %v4226 = vpop.f32.mrb[0].mxu0
    %4227 = vdwg.mxu0
    %v4228 = vsel %vm2587, %v4198, -1e+30
    %v4229 = vsel %vm2588, %v4201, -1e+30
    %v4230 = vsel %vm2589, %v4206, -1e+30
    %v4231 = vsel %vm2590, %v4209, -1e+30
    %v4232 = vsel %vm2591, %v4214, -1e+30
    %v4233 = vsel %vm2592, %v4217, -1e+30
    %v4234 = vsel %vm2593, %v4222, -1e+30
    %v4235 = vsel %vm2594, %v4225, -1e+30
    %v4236 = vsel %vm2607, %v4228, -inf
    %4237 = vmax.xlane.f32.xlu0 %v4236
    %v4238 = vpop.xlane.xlu0 %4237
    %v4239 = vsel %vm2607, %v4229, -inf
    %4240 = vmax.xlane.f32.xlu0 %v4239
    %v4241 = vpop.xlane.xlu0 %4240
    %v4242 = vsel %vm2607, %v4230, -inf
    %4243 = vmax.xlane.f32.xlu0 %v4242
    %v4244 = vpop.xlane.xlu0 %4243
    %v4245 = vsel %vm2607, %v4231, -inf
    %4246 = vmax.xlane.f32.xlu0 %v4245
    %v4247 = vpop.xlane.xlu0 %4246
    %v4248 = vsel %vm2607, %v4232, -inf
    %4249 = vmax.xlane.f32.xlu0 %v4248
    %v4250 = vpop.xlane.xlu0 %4249
    %v4251 = vsel %vm2607, %v4233, -inf
    %4252 = vmax.xlane.f32.xlu0 %v4251
    %v4253 = vpop.xlane.xlu0 %4252
    %v4254 = vsel %vm2607, %v4234, -inf
    %4255 = vmax.xlane.f32.xlu0 %v4254
    %v4256 = vpop.xlane.xlu0 %4255
    %v4257 = vsel %vm2607, %v4235, -inf
    %4258 = vmax.xlane.f32.xlu0 %v4257
    %v4259 = vpop.xlane.xlu0 %4258
    %v4260 = vsub.f32 %v4228, %v4238
    %v4261 = vsub.f32 %v4229, %v4241
    %v4262 = vsub.f32 %v4230, %v4244
    %v4263 = vsub.f32 %v4231, %v4247
    %v4264 = vsub.f32 %v4232, %v4250
    %v4265 = vsub.f32 %v4233, %v4253
    %v4266 = vsub.f32 %v4234, %v4256
    %v4267 = vsub.f32 %v4235, %v4259
    %v4268 = vmul.f32 %v4260, 1.442695
    %v4269 = vpow.pop %v4268
    %v4270 = vmul.f32 %v4261, 1.442695
    %v4271 = vpow.pop %v4270
    %v4272 = vmul.f32 %v4262, 1.442695
    %v4273 = vpow.pop %v4272
    %v4274 = vmul.f32 %v4263, 1.442695
    %v4275 = vpow.pop %v4274
    %v4276 = vmul.f32 %v4264, 1.442695
    %v4277 = vpow.pop %v4276
    %v4278 = vmul.f32 %v4265, 1.442695
    %v4279 = vpow.pop %v4278
    %v4280 = vmul.f32 %v4266, 1.442695
    %v4281 = vpow.pop %v4280
    %v4282 = vmul.f32 %v4267, 1.442695
    %v4283 = vpow.pop %v4282
    %v4284 = vsel %vm2607, %v4269, 0.0
    %4285 = vadd.xlane.f32.xlu0 %v4284
    %v4286 = vpop.xlane.xlu0 %4285
    %v4287 = vsel %vm2607, %v4271, 0.0
    %4288 = vadd.xlane.f32.xlu0 %v4287
    %v4289 = vpop.xlane.xlu0 %4288
    %v4290 = vsel %vm2607, %v4273, 0.0
    %4291 = vadd.xlane.f32.xlu0 %v4290
    %v4292 = vpop.xlane.xlu0 %4291
    %v4293 = vsel %vm2607, %v4275, 0.0
    %4294 = vadd.xlane.f32.xlu0 %v4293
    %v4295 = vpop.xlane.xlu0 %4294
    %v4296 = vsel %vm2607, %v4277, 0.0
    %4297 = vadd.xlane.f32.xlu0 %v4296
    %v4298 = vpop.xlane.xlu0 %4297
    %v4299 = vsel %vm2607, %v4279, 0.0
    %4300 = vadd.xlane.f32.xlu0 %v4299
    %v4301 = vpop.xlane.xlu0 %4300
    %v4302 = vsel %vm2607, %v4281, 0.0
    %4303 = vadd.xlane.f32.xlu0 %v4302
    %v4304 = vpop.xlane.xlu0 %4303
    %v4305 = vsel %vm2607, %v4283, 0.0
    %4306 = vadd.xlane.f32.xlu0 %v4305
    %v4307 = vpop.xlane.xlu0 %4306
    %v4308 = vrcp.pop %v4286
    %v4309 = vrcp.pop %v4289
    %v4310 = vrcp.pop %v4292
    %v4311 = vrcp.pop %v4295
    %v4312 = vrcp.pop %v4298
    %v4313 = vrcp.pop %v4301
    %v4314 = vrcp.pop %v4304
    %v4315 = vrcp.pop %v4307
    %v4316 = vmul.f32 %v4269, %v4308
    %v4317 = vmul.f32 %v4271, %v4309
    %v4318 = vmul.f32 %v4273, %v4310
    %v4319 = vmul.f32 %v4275, %v4311
    %v4320 = vmul.f32 %v4277, %v4312
    %v4321 = vmul.f32 %v4279, %v4313
    %v4322 = vmul.f32 %v4281, %v4314
    %v4323 = vmul.f32 %v4283, %v4315
    %v4324 = vpack.c.bf16 %v4317, %v4316
    %v4325 = vpack.c.bf16 %v4319, %v4318
    %v4326 = vpack.c.bf16 %v4321, %v4320
    %v4327 = vpack.c.bf16 %v4323, %v4322
    %4332 = vrot.lane.b32.xlu0 %v3837, 64
    %v4333 = vpop.permute.xlu0 %4332
    %4334 = vrot.lane.b32.xlu0 %v3838, 64
    %v4335 = vpop.permute.xlu0 %4334
    %4336 = vrot.lane.b32.xlu0 %v3839, 64
    %v4337 = vpop.permute.xlu0 %4336
    %4338 = vrot.lane.b32.xlu0 %v3840, 64
    %v4339 = vpop.permute.xlu0 %4338
    %v4345 = vsel %vm2607, %v4324, 0
    %v4348 = vsel %vm2607, %v4325, 0
    %v4351 = vsel %vm2607, %v4326, 0
    %v4354 = vsel %vm2607, %v4327, 0
    %4356 = vmatprep.subr.bf16.mxu0 0
    %4357 = vmatpush1.bf16.msra.mxu0 %v4333
    %4358 = vmatprep.subr.bf16.mxu0 0
    %4359 = vmatpush1.bf16.msra.mxu0 %v4335
    %4360 = vmatprep.subr.bf16.mxu0 0
    %4361 = vmatpush1.bf16.msra.mxu0 %v4337
    %4362 = vmatprep.subr.bf16.mxu0 0
    %4363 = vmatpush1.bf16.msra.mxu0 %v4339
    %4364 = vmatprep.subr.bf16.mxu0 0
    %4365 = vmatpush1.bf16.msra.mxu0 0
    %4366 = vmatprep.subr.bf16.mxu0 0
    %4367 = vmatpush1.bf16.msra.mxu0 0
    %4368 = vmatprep.subr.bf16.mxu0 0
    %4369 = vmatpush1.bf16.msra.mxu0 0
    %4370 = vmatprep.subr.bf16.mxu0 0
    %4371 = vmatpush1.bf16.msra.mxu0 0
    %4372 = vmatprep.subr.bf16.mxu0 0
    %4373 = vmatpush1.bf16.msra.mxu0 0
    %4374 = vmatprep.subr.bf16.mxu0 0
    %4375 = vmatpush1.bf16.msra.mxu0 0
    %4376 = vmatprep.subr.bf16.mxu0 0
    %4377 = vmatpush1.bf16.msra.mxu0 0
    %4378 = vmatprep.subr.bf16.mxu0 0
    %4379 = vmatpush1.bf16.msra.mxu0 0
    %4380 = vmatprep.subr.bf16.mxu0 0
    %4381 = vmatpush1.bf16.msra.mxu0 0
    %4382 = vmatprep.subr.bf16.mxu0 0
    %4383 = vmatpush1.bf16.msra.mxu0 0
    %4384 = vmatprep.subr.bf16.mxu0 0
    %4385 = vmatpush1.bf16.msra.mxu0 0
    %4386 = vmatprep.subr.bf16.mxu0 0
    %4387 = vmatpush1.bf16.msra.mxu0 0
    %4388 = vmatprep.mubr.bf16.mxu0 0
    %4389 = vmatmul.mubr.bf16.gmra.mrb[0].mxu0 %v4345
    %v4390 = vpop.f32.mrb[0].mxu0
    %v4391 = vadd.f32 0.0, %v4390
    %v4392 = vpop.f32.mrb[0].mxu0
    %v4393 = vpop.f32.mrb[0].mxu0
    %v4394 = vadd.f32 0.0, %v4393
    %v4395 = vpop.f32.mrb[0].mxu0
    %4396 = vmatprep.mubr.bf16.mxu0 0
    %4397 = vmatmul.mubr.bf16.gmra.mrb[0].mxu0 %v4348
    %v4398 = vpop.f32.mrb[0].mxu0
    %v4399 = vadd.f32 0.0, %v4398
    %v4400 = vpop.f32.mrb[0].mxu0
    %v4401 = vpop.f32.mrb[0].mxu0
    %v4402 = vadd.f32 0.0, %v4401
    %v4403 = vpop.f32.mrb[0].mxu0
    %4404 = vmatprep.mubr.bf16.mxu0 0
    %4405 = vmatmul.mubr.bf16.gmra.mrb[0].mxu0 %v4351
    %v4406 = vpop.f32.mrb[0].mxu0
    %v4407 = vadd.f32 0.0, %v4406
    %v4408 = vpop.f32.mrb[0].mxu0
    %v4409 = vpop.f32.mrb[0].mxu0
    %v4410 = vadd.f32 0.0, %v4409
    %v4411 = vpop.f32.mrb[0].mxu0
    %4412 = vmatprep.mubr.bf16.mxu0 0
    %4413 = vmatmul.mubr.bf16.gmra.mrb[0].mxu0 %v4354
    %v4414 = vpop.f32.mrb[0].mxu0
    %v4415 = vadd.f32 0.0, %v4414
    %v4416 = vpop.f32.mrb[0].mxu0
    %v4417 = vpop.f32.mrb[0].mxu0
    %v4418 = vadd.f32 0.0, %v4417
    %v4419 = vpop.f32.mrb[0].mxu0
    %4420 = vdwg.mxu0
    %v4421 = vpack.c.bf16 %v4394, %v4391
    %v4422 = vpack.c.bf16 %v4402, %v4399
    %v4423 = vpack.c.bf16 %v4410, %v4407
    %v4424 = vpack.c.bf16 %v4418, %v4415
    %4429 = vrot.lane.b32.xlu0 %v4421, 64
    %v4430 = vpop.permute.xlu0 %4429
    %4431 = vrot.lane.b32.xlu0 %v4422, 64
    %v4432 = vpop.permute.xlu0 %4431
    %4433 = vrot.lane.b32.xlu0 %v4423, 64
    %v4434 = vpop.permute.xlu0 %4433
    %4435 = vrot.lane.b32.xlu0 %v4424, 64
    %v4436 = vpop.permute.xlu0 %4435
    %4441 = vst.msk [vmem:[#allocation2 + $0x10] sm:$0xff] %vm3208, %v4430
    %4442 = vst.msk [vmem:[#allocation2 + $0x28] sm:$0xff] %vm3208, %v4432
    %4443 = vst.msk [vmem:[#allocation2 + $0x40] sm:$0xff] %vm3208, %v4434
    %4444 = vst.msk [vmem:[#allocation2 + $0x58] sm:$0xff] %vm3208, %v4436
    %v4445 = vpack.c.bf16 %v1670, %v1666
    %v4446 = vpack.c.bf16 %v1680, %v1676
    %v4447 = vpack.c.bf16 %v1690, %v1686
    %v4448 = vpack.c.bf16 %v1700, %v1696
    %v4449 = vpack.c.bf16 %v1898, %v1894
    %v4450 = vpack.c.bf16 %v1908, %v1904
    %v4451 = vpack.c.bf16 %v1918, %v1914
    %v4452 = vpack.c.bf16 %v1928, %v1924
    %v4453 = vpack.c.bf16 %v2348, %v2344
    %v4454 = vpack.c.bf16 %v2358, %v2354
    %v4455 = vpack.c.bf16 %v2368, %v2364
    %v4456 = vpack.c.bf16 %v2378, %v2374
    %v4458 = vsel %vm2607, %v4445, 0
    %v4461 = vsel %vm2607, %v4446, 0
    %v4464 = vsel %vm2607, %v4447, 0
    %v4467 = vsel %vm2607, %v4448, 0
    %v4470 = vsel %vm2607, %v4449, 0
    %v4473 = vsel %vm2607, %v4450, 0
    %v4476 = vsel %vm2607, %v4451, 0
    %v4479 = vsel %vm2607, %v4452, 0
    %4481 = vmatprep.subr.bf16.mxu0 0
    %4482 = vmatpush1.bf16.xpose.msra.mxu0 %v4470
    %4483 = vmatprep.subr.bf16.mxu0 0
    %4484 = vmatpush1.bf16.xpose.msra.mxu0 %v4473
    %4485 = vmatprep.subr.bf16.mxu0 0
    %4486 = vmatpush1.bf16.xpose.msra.mxu0 %v4476
    %4487 = vmatprep.subr.bf16.mxu0 0
    %4488 = vmatpush1.bf16.xpose.msra.mxu0 %v4479
    %4489 = vmatprep.subr.bf16.mxu0 0
    %4490 = vmatpush1.bf16.xpose.msra.mxu0 0
    %4491 = vmatprep.subr.bf16.mxu0 0
    %4492 = vmatpush1.bf16.xpose.msra.mxu0 0
    %4493 = vmatprep.subr.bf16.mxu0 0
    %4494 = vmatpush1.bf16.xpose.msra.mxu0 0
    %4495 = vmatprep.subr.bf16.mxu0 0
    %4496 = vmatpush1.bf16.xpose.msra.mxu0 0
    %4497 = vmatprep.subr.bf16.mxu0 0
    %4498 = vmatpush1.bf16.xpose.msra.mxu0 0
    %4499 = vmatprep.subr.bf16.mxu0 0
    %4500 = vmatpush1.bf16.xpose.msra.mxu0 0
    %4501 = vmatprep.subr.bf16.mxu0 0
    %4502 = vmatpush1.bf16.xpose.msra.mxu0 0
    %4503 = vmatprep.subr.bf16.mxu0 0
    %4504 = vmatpush1.bf16.xpose.msra.mxu0 0
    %4505 = vmatprep.subr.bf16.mxu0 0
    %4506 = vmatpush1.bf16.xpose.msra.mxu0 0
    %4507 = vmatprep.subr.bf16.mxu0 0
    %4508 = vmatpush1.bf16.xpose.msra.mxu0 0
    %4509 = vmatprep.subr.bf16.mxu0 0
    %4510 = vmatpush1.bf16.xpose.msra.mxu0 0
    %4511 = vmatprep.subr.bf16.mxu0 0
    %4512 = vmatpush1.bf16.xpose.msra.mxu0 0
    %4513 = vmatprep.mubr.bf16.mxu0 0
    %4514 = vmatmul.mubr.bf16.gmra.mrb[0].mxu0 %v4458
    %v4515 = vpop.f32.mrb[0].mxu0
    %v4516 = vadd.f32 0.0, %v4515
    %v4517 = vpop.f32.mrb[0].mxu0
    %v4518 = vpop.f32.mrb[0].mxu0
    %v4519 = vadd.f32 0.0, %v4518
    %v4520 = vpop.f32.mrb[0].mxu0
    %4521 = vmatprep.mubr.bf16.mxu0 0
    %4522 = vmatmul.mubr.bf16.gmra.mrb[0].mxu0 %v4461
    %v4523 = vpop.f32.mrb[0].mxu0
    %v4524 = vadd.f32 0.0, %v4523
    %v4525 = vpop.f32.mrb[0].mxu0
    %v4526 = vpop.f32.mrb[0].mxu0
    %v4527 = vadd.f32 0.0, %v4526
    %v4528 = vpop.f32.mrb[0].mxu0
    %4529 = vmatprep.mubr.bf16.mxu0 0
    %4530 = vmatmul.mubr.bf16.gmra.mrb[0].mxu0 %v4464
    %v4531 = vpop.f32.mrb[0].mxu0
    %v4532 = vadd.f32 0.0, %v4531
    %v4533 = vpop.f32.mrb[0].mxu0
    %v4534 = vpop.f32.mrb[0].mxu0
    %v4535 = vadd.f32 0.0, %v4534
    %v4536 = vpop.f32.mrb[0].mxu0
    %4537 = vmatprep.mubr.bf16.mxu0 0
    %4538 = vmatmul.mubr.bf16.gmra.mrb[0].mxu0 %v4467
    %v4539 = vpop.f32.mrb[0].mxu0
    %v4540 = vadd.f32 0.0, %v4539
    %v4541 = vpop.f32.mrb[0].mxu0
    %v4542 = vpop.f32.mrb[0].mxu0
    %v4543 = vadd.f32 0.0, %v4542
    %v4544 = vpop.f32.mrb[0].mxu0
    %4545 = vdwg.mxu0
    %v4546 = vsel %vm2587, %v4516, -1e+30
    %v4547 = vsel %vm2588, %v4519, -1e+30
    %v4548 = vsel %vm2589, %v4524, -1e+30
    %v4549 = vsel %vm2590, %v4527, -1e+30
    %v4550 = vsel %vm2591, %v4532, -1e+30
    %v4551 = vsel %vm2592, %v4535, -1e+30
    %v4552 = vsel %vm2593, %v4540, -1e+30
    %v4553 = vsel %vm2594, %v4543, -1e+30
    %v4554 = vsel %vm2607, %v4546, -inf
    %4555 = vmax.xlane.f32.xlu0 %v4554
    %v4556 = vpop.xlane.xlu0 %4555
    %v4557 = vsel %vm2607, %v4547, -inf
    %4558 = vmax.xlane.f32.xlu0 %v4557
    %v4559 = vpop.xlane.xlu0 %4558
    %v4560 = vsel %vm2607, %v4548, -inf
    %4561 = vmax.xlane.f32.xlu0 %v4560
    %v4562 = vpop.xlane.xlu0 %4561
    %v4563 = vsel %vm2607, %v4549, -inf
    %4564 = vmax.xlane.f32.xlu0 %v4563
    %v4565 = vpop.xlane.xlu0 %4564
    %v4566 = vsel %vm2607, %v4550, -inf
    %4567 = vmax.xlane.f32.xlu0 %v4566
    %v4568 = vpop.xlane.xlu0 %4567
    %v4569 = vsel %vm2607, %v4551, -inf
    %4570 = vmax.xlane.f32.xlu0 %v4569
    %v4571 = vpop.xlane.xlu0 %4570
    %v4572 = vsel %vm2607, %v4552, -inf
    %4573 = vmax.xlane.f32.xlu0 %v4572
    %v4574 = vpop.xlane.xlu0 %4573
    %v4575 = vsel %vm2607, %v4553, -inf
    %4576 = vmax.xlane.f32.xlu0 %v4575
    %v4577 = vpop.xlane.xlu0 %4576
    %v4578 = vsub.f32 %v4546, %v4556
    %v4579 = vsub.f32 %v4547, %v4559
    %v4580 = vsub.f32 %v4548, %v4562
    %v4581 = vsub.f32 %v4549, %v4565
    %v4582 = vsub.f32 %v4550, %v4568
    %v4583 = vsub.f32 %v4551, %v4571
    %v4584 = vsub.f32 %v4552, %v4574
    %v4585 = vsub.f32 %v4553, %v4577
    %v4586 = vmul.f32 %v4578, 1.442695
    %v4587 = vpow.pop %v4586
    %v4588 = vmul.f32 %v4579, 1.442695
    %v4589 = vpow.pop %v4588
    %v4590 = vmul.f32 %v4580, 1.442695
    %v4591 = vpow.pop %v4590
    %v4592 = vmul.f32 %v4581, 1.442695
    %v4593 = vpow.pop %v4592
    %v4594 = vmul.f32 %v4582, 1.442695
    %v4595 = vpow.pop %v4594
    %v4596 = vmul.f32 %v4583, 1.442695
    %v4597 = vpow.pop %v4596
    %v4598 = vmul.f32 %v4584, 1.442695
    %v4599 = vpow.pop %v4598
    %v4600 = vmul.f32 %v4585, 1.442695
    %v4601 = vpow.pop %v4600
    %v4602 = vsel %vm2607, %v4587, 0.0
    %4603 = vadd.xlane.f32.xlu0 %v4602
    %v4604 = vpop.xlane.xlu0 %4603
    %v4605 = vsel %vm2607, %v4589, 0.0
    %4606 = vadd.xlane.f32.xlu0 %v4605
    %v4607 = vpop.xlane.xlu0 %4606
    %v4608 = vsel %vm2607, %v4591, 0.0
    %4609 = vadd.xlane.f32.xlu0 %v4608
    %v4610 = vpop.xlane.xlu0 %4609
    %v4611 = vsel %vm2607, %v4593, 0.0
    %4612 = vadd.xlane.f32.xlu0 %v4611
    %v4613 = vpop.xlane.xlu0 %4612
    %v4614 = vsel %vm2607, %v4595, 0.0
    %4615 = vadd.xlane.f32.xlu0 %v4614
    %v4616 = vpop.xlane.xlu0 %4615
    %v4617 = vsel %vm2607, %v4597, 0.0
    %4618 = vadd.xlane.f32.xlu0 %v4617
    %v4619 = vpop.xlane.xlu0 %4618
    %v4620 = vsel %vm2607, %v4599, 0.0
    %4621 = vadd.xlane.f32.xlu0 %v4620
    %v4622 = vpop.xlane.xlu0 %4621
    %v4623 = vsel %vm2607, %v4601, 0.0
    %4624 = vadd.xlane.f32.xlu0 %v4623
    %v4625 = vpop.xlane.xlu0 %4624
    %v4626 = vrcp.pop %v4604
    %v4627 = vrcp.pop %v4607
    %v4628 = vrcp.pop %v4610
    %v4629 = vrcp.pop %v4613
    %v4630 = vrcp.pop %v4616
    %v4631 = vrcp.pop %v4619
    %v4632 = vrcp.pop %v4622
    %v4633 = vrcp.pop %v4625
    %v4634 = vmul.f32 %v4587, %v4626
    %v4635 = vmul.f32 %v4589, %v4627
    %v4636 = vmul.f32 %v4591, %v4628
    %v4637 = vmul.f32 %v4593, %v4629
    %v4638 = vmul.f32 %v4595, %v4630
    %v4639 = vmul.f32 %v4597, %v4631
    %v4640 = vmul.f32 %v4599, %v4632
    %v4641 = vmul.f32 %v4601, %v4633
    %v4642 = vpack.c.bf16 %v4635, %v4634
    %v4643 = vpack.c.bf16 %v4637, %v4636
    %v4644 = vpack.c.bf16 %v4639, %v4638
    %v4645 = vpack.c.bf16 %v4641, %v4640
    %v4647 = vsel %vm2607, %v4642, 0
    %v4650 = vsel %vm2607, %v4643, 0
    %v4653 = vsel %vm2607, %v4644, 0
    %v4656 = vsel %vm2607, %v4645, 0
    %4658 = vmatprep.subr.bf16.mxu0 0
    %4659 = vmatpush1.bf16.msra.mxu0 %v4453
    %4660 = vmatprep.subr.bf16.mxu0 0
    %4661 = vmatpush1.bf16.msra.mxu0 %v4454
    %4662 = vmatprep.subr.bf16.mxu0 0
    %4663 = vmatpush1.bf16.msra.mxu0 %v4455
    %4664 = vmatprep.subr.bf16.mxu0 0
    %4665 = vmatpush1.bf16.msra.mxu0 %v4456
    %4666 = vmatprep.subr.bf16.mxu0 0
    %4667 = vmatpush1.bf16.msra.mxu0 0
    %4668 = vmatprep.subr.bf16.mxu0 0
    %4669 = vmatpush1.bf16.msra.mxu0 0
    %4670 = vmatprep.subr.bf16.mxu0 0
    %4671 = vmatpush1.bf16.msra.mxu0 0
    %4672 = vmatprep.subr.bf16.mxu0 0
    %4673 = vmatpush1.bf16.msra.mxu0 0
    %4674 = vmatprep.subr.bf16.mxu0 0
    %4675 = vmatpush1.bf16.msra.mxu0 0
    %4676 = vmatprep.subr.bf16.mxu0 0
    %4677 = vmatpush1.bf16.msra.mxu0 0
    %4678 = vmatprep.subr.bf16.mxu0 0
    %4679 = vmatpush1.bf16.msra.mxu0 0
    %4680 = vmatprep.subr.bf16.mxu0 0
    %4681 = vmatpush1.bf16.msra.mxu0 0
    %4682 = vmatprep.subr.bf16.mxu0 0
    %4683 = vmatpush1.bf16.msra.mxu0 0
    %4684 = vmatprep.subr.bf16.mxu0 0
    %4685 = vmatpush1.bf16.msra.mxu0 0
    %4686 = vmatprep.subr.bf16.mxu0 0
    %4687 = vmatpush1.bf16.msra.mxu0 0
    %4688 = vmatprep.subr.bf16.mxu0 0
    %4689 = vmatpush1.bf16.msra.mxu0 0
    %4690 = vmatprep.mubr.bf16.mxu0 0
    %4691 = vmatmul.mubr.bf16.gmra.mrb[0].mxu0 %v4647
    %v4692 = vpop.f32.mrb[0].mxu0
    %v4693 = vadd.f32 0.0, %v4692
    %v4694 = vpop.f32.mrb[0].mxu0
    %v4695 = vpop.f32.mrb[0].mxu0
    %v4696 = vadd.f32 0.0, %v4695
    %v4697 = vpop.f32.mrb[0].mxu0
    %4698 = vmatprep.mubr.bf16.mxu0 0
    %4699 = vmatmul.mubr.bf16.gmra.mrb[0].mxu0 %v4650
    %v4700 = vpop.f32.mrb[0].mxu0
    %v4701 = vadd.f32 0.0, %v4700
    %v4702 = vpop.f32.mrb[0].mxu0
    %v4703 = vpop.f32.mrb[0].mxu0
    %v4704 = vadd.f32 0.0, %v4703
    %v4705 = vpop.f32.mrb[0].mxu0
    %4706 = vmatprep.mubr.bf16.mxu0 0
    %4707 = vmatmul.mubr.bf16.gmra.mrb[0].mxu0 %v4653
    %v4708 = vpop.f32.mrb[0].mxu0
    %v4709 = vadd.f32 0.0, %v4708
    %v4710 = vpop.f32.mrb[0].mxu0
    %v4711 = vpop.f32.mrb[0].mxu0
    %v4712 = vadd.f32 0.0, %v4711
    %v4713 = vpop.f32.mrb[0].mxu0
    %4714 = vmatprep.mubr.bf16.mxu0 0
    %4715 = vmatmul.mubr.bf16.gmra.mrb[0].mxu0 %v4656
    %v4716 = vpop.f32.mrb[0].mxu0
    %v4717 = vadd.f32 0.0, %v4716
    %v4718 = vpop.f32.mrb[0].mxu0
    %v4719 = vpop.f32.mrb[0].mxu0
    %v4720 = vadd.f32 0.0, %v4719
    %v4721 = vpop.f32.mrb[0].mxu0
    %4722 = vdwg.mxu0
    %v4723 = vpack.c.bf16 %v4696, %v4693
    %v4724 = vpack.c.bf16 %v4704, %v4701
    %v4725 = vpack.c.bf16 %v4712, %v4709
    %v4726 = vpack.c.bf16 %v4720, %v4717
    %4727 = vst.msk [vmem:[#allocation2 + $0x60] sm:$0xff] %vm2607, %v4723
    %4728 = vst.msk [vmem:[#allocation2 + $0x78] sm:$0xff] %vm2607, %v4724
    %4729 = vst.msk [vmem:[#allocation2 + $0x90] sm:$0xff] %vm2607, %v4725
    %4730 = vst.msk [vmem:[#allocation2 + $0xa8] sm:$0xff] %vm2607, %v4726
    %4735 = vrot.lane.b32.xlu0 %v4445, 64
    %v4736 = vpop.permute.xlu0 %4735
    %4737 = vrot.lane.b32.xlu0 %v4446, 64
    %v4738 = vpop.permute.xlu0 %4737
    %4739 = vrot.lane.b32.xlu0 %v4447, 64
    %v4740 = vpop.permute.xlu0 %4739
    %4741 = vrot.lane.b32.xlu0 %v4448, 64
    %v4742 = vpop.permute.xlu0 %4741
    %4747 = vrot.lane.b32.xlu0 %v4449, 64
    %v4748 = vpop.permute.xlu0 %4747
    %4749 = vrot.lane.b32.xlu0 %v4450, 64
    %v4750 = vpop.permute.xlu0 %4749
    %4751 = vrot.lane.b32.xlu0 %v4451, 64
    %v4752 = vpop.permute.xlu0 %4751
    %4753 = vrot.lane.b32.xlu0 %v4452, 64
    %v4754 = vpop.permute.xlu0 %4753
    %v4756 = vsel %vm2607, %v4736, 0
    %v4759 = vsel %vm2607, %v4738, 0
    %v4762 = vsel %vm2607, %v4740, 0
    %v4765 = vsel %vm2607, %v4742, 0
    %v4768 = vsel %vm2607, %v4748, 0
    %v4771 = vsel %vm2607, %v4750, 0
    %v4774 = vsel %vm2607, %v4752, 0
    %v4777 = vsel %vm2607, %v4754, 0
    %4779 = vmatprep.subr.bf16.mxu0 0
    %4780 = vmatpush1.bf16.xpose.msra.mxu0 %v4768
    %4781 = vmatprep.subr.bf16.mxu0 0
    %4782 = vmatpush1.bf16.xpose.msra.mxu0 %v4771
    %4783 = vmatprep.subr.bf16.mxu0 0
    %4784 = vmatpush1.bf16.xpose.msra.mxu0 %v4774
    %4785 = vmatprep.subr.bf16.mxu0 0
    %4786 = vmatpush1.bf16.xpose.msra.mxu0 %v4777
    %4787 = vmatprep.subr.bf16.mxu0 0
    %4788 = vmatpush1.bf16.xpose.msra.mxu0 0
    %4789 = vmatprep.subr.bf16.mxu0 0
    %4790 = vmatpush1.bf16.xpose.msra.mxu0 0
    %4791 = vmatprep.subr.bf16.mxu0 0
    %4792 = vmatpush1.bf16.xpose.msra.mxu0 0
    %4793 = vmatprep.subr.bf16.mxu0 0
    %4794 = vmatpush1.bf16.xpose.msra.mxu0 0
    %4795 = vmatprep.subr.bf16.mxu0 0
    %4796 = vmatpush1.bf16.xpose.msra.mxu0 0
    %4797 = vmatprep.subr.bf16.mxu0 0
    %4798 = vmatpush1.bf16.xpose.msra.mxu0 0
    %4799 = vmatprep.subr.bf16.mxu0 0
    %4800 = vmatpush1.bf16.xpose.msra.mxu0 0
    %4801 = vmatprep.subr.bf16.mxu0 0
    %4802 = vmatpush1.bf16.xpose.msra.mxu0 0
    %4803 = vmatprep.subr.bf16.mxu0 0
    %4804 = vmatpush1.bf16.xpose.msra.mxu0 0
    %4805 = vmatprep.subr.bf16.mxu0 0
    %4806 = vmatpush1.bf16.xpose.msra.mxu0 0
    %4807 = vmatprep.subr.bf16.mxu0 0
    %4808 = vmatpush1.bf16.xpose.msra.mxu0 0
    %4809 = vmatprep.subr.bf16.mxu0 0
    %4810 = vmatpush1.bf16.xpose.msra.mxu0 0
    %4811 = vmatprep.mubr.bf16.mxu0 0
    %4812 = vmatmul.mubr.bf16.gmra.mrb[0].mxu0 %v4756
    %v4813 = vpop.f32.mrb[0].mxu0
    %v4814 = vadd.f32 0.0, %v4813
    %v4815 = vpop.f32.mrb[0].mxu0
    %v4816 = vpop.f32.mrb[0].mxu0
    %v4817 = vadd.f32 0.0, %v4816
    %v4818 = vpop.f32.mrb[0].mxu0
    %4819 = vmatprep.mubr.bf16.mxu0 0
    %4820 = vmatmul.mubr.bf16.gmra.mrb[0].mxu0 %v4759
    %v4821 = vpop.f32.mrb[0].mxu0
    %v4822 = vadd.f32 0.0, %v4821
    %v4823 = vpop.f32.mrb[0].mxu0
    %v4824 = vpop.f32.mrb[0].mxu0
    %v4825 = vadd.f32 0.0, %v4824
    %v4826 = vpop.f32.mrb[0].mxu0
    %4827 = vmatprep.mubr.bf16.mxu0 0
    %4828 = vmatmul.mubr.bf16.gmra.mrb[0].mxu0 %v4762
    %v4829 = vpop.f32.mrb[0].mxu0
    %v4830 = vadd.f32 0.0, %v4829
    %v4831 = vpop.f32.mrb[0].mxu0
    %v4832 = vpop.f32.mrb[0].mxu0
    %v4833 = vadd.f32 0.0, %v4832
    %v4834 = vpop.f32.mrb[0].mxu0
    %4835 = vmatprep.mubr.bf16.mxu0 0
    %4836 = vmatmul.mubr.bf16.gmra.mrb[0].mxu0 %v4765
    %v4837 = vpop.f32.mrb[0].mxu0
    %v4838 = vadd.f32 0.0, %v4837
    %v4839 = vpop.f32.mrb[0].mxu0
    %v4840 = vpop.f32.mrb[0].mxu0
    %v4841 = vadd.f32 0.0, %v4840
    %v4842 = vpop.f32.mrb[0].mxu0
    %4843 = vdwg.mxu0
    %v4844 = vsel %vm2587, %v4814, -1e+30
    %v4845 = vsel %vm2588, %v4817, -1e+30
    %v4846 = vsel %vm2589, %v4822, -1e+30
    %v4847 = vsel %vm2590, %v4825, -1e+30
    %v4848 = vsel %vm2591, %v4830, -1e+30
    %v4849 = vsel %vm2592, %v4833, -1e+30
    %v4850 = vsel %vm2593, %v4838, -1e+30
    %v4851 = vsel %vm2594, %v4841, -1e+30
    %v4852 = vsel %vm2607, %v4844, -inf
    %4853 = vmax.xlane.f32.xlu0 %v4852
    %v4854 = vpop.xlane.xlu0 %4853
    %v4855 = vsel %vm2607, %v4845, -inf
    %4856 = vmax.xlane.f32.xlu0 %v4855
    %v4857 = vpop.xlane.xlu0 %4856
    %v4858 = vsel %vm2607, %v4846, -inf
    %4859 = vmax.xlane.f32.xlu0 %v4858
    %v4860 = vpop.xlane.xlu0 %4859
    %v4861 = vsel %vm2607, %v4847, -inf
    %4862 = vmax.xlane.f32.xlu0 %v4861
    %v4863 = vpop.xlane.xlu0 %4862
    %v4864 = vsel %vm2607, %v4848, -inf
    %4865 = vmax.xlane.f32.xlu0 %v4864
    %v4866 = vpop.xlane.xlu0 %4865
    %v4867 = vsel %vm2607, %v4849, -inf
    %4868 = vmax.xlane.f32.xlu0 %v4867
    %v4869 = vpop.xlane.xlu0 %4868
    %v4870 = vsel %vm2607, %v4850, -inf
    %4871 = vmax.xlane.f32.xlu0 %v4870
    %v4872 = vpop.xlane.xlu0 %4871
    %v4873 = vsel %vm2607, %v4851, -inf
    %4874 = vmax.xlane.f32.xlu0 %v4873
    %v4875 = vpop.xlane.xlu0 %4874
    %v4876 = vsub.f32 %v4844, %v4854
    %v4877 = vsub.f32 %v4845, %v4857
    %v4878 = vsub.f32 %v4846, %v4860
    %v4879 = vsub.f32 %v4847, %v4863
    %v4880 = vsub.f32 %v4848, %v4866
    %v4881 = vsub.f32 %v4849, %v4869
    %v4882 = vsub.f32 %v4850, %v4872
    %v4883 = vsub.f32 %v4851, %v4875
    %v4884 = vmul.f32 %v4876, 1.442695
    %v4885 = vpow.pop %v4884
    %v4886 = vmul.f32 %v4877, 1.442695
    %v4887 = vpow.pop %v4886
    %v4888 = vmul.f32 %v4878, 1.442695
    %v4889 = vpow.pop %v4888
    %v4890 = vmul.f32 %v4879, 1.442695
    %v4891 = vpow.pop %v4890
    %v4892 = vmul.f32 %v4880, 1.442695
    %v4893 = vpow.pop %v4892
    %v4894 = vmul.f32 %v4881, 1.442695
    %v4895 = vpow.pop %v4894
    %v4896 = vmul.f32 %v4882, 1.442695
    %v4897 = vpow.pop %v4896
    %v4898 = vmul.f32 %v4883, 1.442695
    %v4899 = vpow.pop %v4898
    %v4900 = vsel %vm2607, %v4885, 0.0
    %4901 = vadd.xlane.f32.xlu0 %v4900
    %v4902 = vpop.xlane.xlu0 %4901
    %v4903 = vsel %vm2607, %v4887, 0.0
    %4904 = vadd.xlane.f32.xlu0 %v4903
    %v4905 = vpop.xlane.xlu0 %4904
    %v4906 = vsel %vm2607, %v4889, 0.0
    %4907 = vadd.xlane.f32.xlu0 %v4906
    %v4908 = vpop.xlane.xlu0 %4907
    %v4909 = vsel %vm2607, %v4891, 0.0
    %4910 = vadd.xlane.f32.xlu0 %v4909
    %v4911 = vpop.xlane.xlu0 %4910
    %v4912 = vsel %vm2607, %v4893, 0.0
    %4913 = vadd.xlane.f32.xlu0 %v4912
    %v4914 = vpop.xlane.xlu0 %4913
    %v4915 = vsel %vm2607, %v4895, 0.0
    %4916 = vadd.xlane.f32.xlu0 %v4915
    %v4917 = vpop.xlane.xlu0 %4916
    %v4918 = vsel %vm2607, %v4897, 0.0
    %4919 = vadd.xlane.f32.xlu0 %v4918
    %v4920 = vpop.xlane.xlu0 %4919
    %v4921 = vsel %vm2607, %v4899, 0.0
    %4922 = vadd.xlane.f32.xlu0 %v4921
    %v4923 = vpop.xlane.xlu0 %4922
    %v4924 = vrcp.pop %v4902
    %v4925 = vrcp.pop %v4905
    %v4926 = vrcp.pop %v4908
    %v4927 = vrcp.pop %v4911
    %v4928 = vrcp.pop %v4914
    %v4929 = vrcp.pop %v4917
    %v4930 = vrcp.pop %v4920
    %v4931 = vrcp.pop %v4923
    %v4932 = vmul.f32 %v4885, %v4924
    %v4933 = vmul.f32 %v4887, %v4925
    %v4934 = vmul.f32 %v4889, %v4926
    %v4935 = vmul.f32 %v4891, %v4927
    %v4936 = vmul.f32 %v4893, %v4928
    %v4937 = vmul.f32 %v4895, %v4929
    %v4938 = vmul.f32 %v4897, %v4930
    %v4939 = vmul.f32 %v4899, %v4931
    %v4940 = vpack.c.bf16 %v4933, %v4932
    %v4941 = vpack.c.bf16 %v4935, %v4934
    %v4942 = vpack.c.bf16 %v4937, %v4936
    %v4943 = vpack.c.bf16 %v4939, %v4938
    %4948 = vrot.lane.b32.xlu0 %v4453, 64
    %v4949 = vpop.permute.xlu0 %4948
    %4950 = vrot.lane.b32.xlu0 %v4454, 64
    %v4951 = vpop.permute.xlu0 %4950
    %4952 = vrot.lane.b32.xlu0 %v4455, 64
    %v4953 = vpop.permute.xlu0 %4952
    %4954 = vrot.lane.b32.xlu0 %v4456, 64
    %v4955 = vpop.permute.xlu0 %4954
    %v4961 = vsel %vm2607, %v4940, 0
    %v4964 = vsel %vm2607, %v4941, 0
    %v4967 = vsel %vm2607, %v4942, 0
    %v4970 = vsel %vm2607, %v4943, 0
    %4972 = vmatprep.subr.bf16.mxu0 0
    %4973 = vmatpush1.bf16.msra.mxu0 %v4949
    %4974 = vmatprep.subr.bf16.mxu0 0
    %4975 = vmatpush1.bf16.msra.mxu0 %v4951
    %4976 = vmatprep.subr.bf16.mxu0 0
    %4977 = vmatpush1.bf16.msra.mxu0 %v4953
    %4978 = vmatprep.subr.bf16.mxu0 0
    %4979 = vmatpush1.bf16.msra.mxu0 %v4955
    %4980 = vmatprep.subr.bf16.mxu0 0
    %4981 = vmatpush1.bf16.msra.mxu0 0
    %4982 = vmatprep.subr.bf16.mxu0 0
    %4983 = vmatpush1.bf16.msra.mxu0 0
    %4984 = vmatprep.subr.bf16.mxu0 0
    %4985 = vmatpush1.bf16.msra.mxu0 0
    %4986 = vmatprep.subr.bf16.mxu0 0
    %4987 = vmatpush1.bf16.msra.mxu0 0
    %4988 = vmatprep.subr.bf16.mxu0 0
    %4989 = vmatpush1.bf16.msra.mxu0 0
    %4990 = vmatprep.subr.bf16.mxu0 0
    %4991 = vmatpush1.bf16.msra.mxu0 0
    %4992 = vmatprep.subr.bf16.mxu0 0
    %4993 = vmatpush1.bf16.msra.mxu0 0
    %4994 = vmatprep.subr.bf16.mxu0 0
    %4995 = vmatpush1.bf16.msra.mxu0 0
    %4996 = vmatprep.subr.bf16.mxu0 0
    %4997 = vmatpush1.bf16.msra.mxu0 0
    %4998 = vmatprep.subr.bf16.mxu0 0
    %4999 = vmatpush1.bf16.msra.mxu0 0
    %5000 = vmatprep.subr.bf16.mxu0 0
    %5001 = vmatpush1.bf16.msra.mxu0 0
    %5002 = vmatprep.subr.bf16.mxu0 0
    %5003 = vmatpush1.bf16.msra.mxu0 0
    %5004 = vmatprep.mubr.bf16.mxu0 0
    %5005 = vmatmul.mubr.bf16.gmra.mrb[0].mxu0 %v4961
    %v5006 = vpop.f32.mrb[0].mxu0
    %v5007 = vadd.f32 0.0, %v5006
    %v5008 = vpop.f32.mrb[0].mxu0
    %v5009 = vpop.f32.mrb[0].mxu0
    %v5010 = vadd.f32 0.0, %v5009
    %v5011 = vpop.f32.mrb[0].mxu0
    %5012 = vmatprep.mubr.bf16.mxu0 0
    %5013 = vmatmul.mubr.bf16.gmra.mrb[0].mxu0 %v4964
    %v5014 = vpop.f32.mrb[0].mxu0
    %v5015 = vadd.f32 0.0, %v5014
    %v5016 = vpop.f32.mrb[0].mxu0
    %v5017 = vpop.f32.mrb[0].mxu0
    %v5018 = vadd.f32 0.0, %v5017
    %v5019 = vpop.f32.mrb[0].mxu0
    %5020 = vmatprep.mubr.bf16.mxu0 0
    %5021 = vmatmul.mubr.bf16.gmra.mrb[0].mxu0 %v4967
    %v5022 = vpop.f32.mrb[0].mxu0
    %v5023 = vadd.f32 0.0, %v5022
    %v5024 = vpop.f32.mrb[0].mxu0
    %v5025 = vpop.f32.mrb[0].mxu0
    %v5026 = vadd.f32 0.0, %v5025
    %v5027 = vpop.f32.mrb[0].mxu0
    %5028 = vmatprep.mubr.bf16.mxu0 0
    %5029 = vmatmul.mubr.bf16.gmra.mrb[0].mxu0 %v4970
    %v5030 = vpop.f32.mrb[0].mxu0
    %v5031 = vadd.f32 0.0, %v5030
    %v5032 = vpop.f32.mrb[0].mxu0
    %v5033 = vpop.f32.mrb[0].mxu0
    %v5034 = vadd.f32 0.0, %v5033
    %v5035 = vpop.f32.mrb[0].mxu0
    %5036 = vdwg.mxu0
    %v5037 = vpack.c.bf16 %v5010, %v5007
    %v5038 = vpack.c.bf16 %v5018, %v5015
    %v5039 = vpack.c.bf16 %v5026, %v5023
    %v5040 = vpack.c.bf16 %v5034, %v5031
    %5045 = vrot.lane.b32.xlu0 %v5037, 64
    %v5046 = vpop.permute.xlu0 %5045
    %5047 = vrot.lane.b32.xlu0 %v5038, 64
    %v5048 = vpop.permute.xlu0 %5047
    %5049 = vrot.lane.b32.xlu0 %v5039, 64
    %v5050 = vpop.permute.xlu0 %5049
    %5051 = vrot.lane.b32.xlu0 %v5040, 64
    %v5052 = vpop.permute.xlu0 %5051
    %5057 = vst.msk [vmem:[#allocation2 + $0x60] sm:$0xff] %vm3208, %v5046
    %5058 = vst.msk [vmem:[#allocation2 + $0x78] sm:$0xff] %vm3208, %v5048
    %5059 = vst.msk [vmem:[#allocation2 + $0x90] sm:$0xff] %vm3208, %v5050
    %5060 = vst.msk [vmem:[#allocation2 + $0xa8] sm:$0xff] %vm3208, %v5052
    %v5061 = vpack.c.bf16 %v1672, %v1668
    %v5062 = vpack.c.bf16 %v1682, %v1678
    %v5063 = vpack.c.bf16 %v1692, %v1688
    %v5064 = vpack.c.bf16 %v1702, %v1698
    %v5065 = vpack.c.bf16 %v2122, %v2118
    %v5066 = vpack.c.bf16 %v2132, %v2128
    %v5067 = vpack.c.bf16 %v2142, %v2138
    %v5068 = vpack.c.bf16 %v2152, %v2148
    %v5069 = vpack.c.bf16 %v2350, %v2346
    %v5070 = vpack.c.bf16 %v2360, %v2356
    %v5071 = vpack.c.bf16 %v2370, %v2366
    %v5072 = vpack.c.bf16 %v2380, %v2376
    %v5074 = vsel %vm2607, %v5061, 0
    %v5077 = vsel %vm2607, %v5062, 0
    %v5080 = vsel %vm2607, %v5063, 0
    %v5083 = vsel %vm2607, %v5064, 0
    %v5086 = vsel %vm2607, %v5065, 0
    %v5089 = vsel %vm2607, %v5066, 0
    %v5092 = vsel %vm2607, %v5067, 0
    %v5095 = vsel %vm2607, %v5068, 0
    %5097 = vmatprep.subr.bf16.mxu0 0
    %5098 = vmatpush1.bf16.xpose.msra.mxu0 %v5086
    %5099 = vmatprep.subr.bf16.mxu0 0
    %5100 = vmatpush1.bf16.xpose.msra.mxu0 %v5089
    %5101 = vmatprep.subr.bf16.mxu0 0
    %5102 = vmatpush1.bf16.xpose.msra.mxu0 %v5092
    %5103 = vmatprep.subr.bf16.mxu0 0
    %5104 = vmatpush1.bf16.xpose.msra.mxu0 %v5095
    %5105 = vmatprep.subr.bf16.mxu0 0
    %5106 = vmatpush1.bf16.xpose.msra.mxu0 0
    %5107 = vmatprep.subr.bf16.mxu0 0
    %5108 = vmatpush1.bf16.xpose.msra.mxu0 0
    %5109 = vmatprep.subr.bf16.mxu0 0
    %5110 = vmatpush1.bf16.xpose.msra.mxu0 0
    %5111 = vmatprep.subr.bf16.mxu0 0
    %5112 = vmatpush1.bf16.xpose.msra.mxu0 0
    %5113 = vmatprep.subr.bf16.mxu0 0
    %5114 = vmatpush1.bf16.xpose.msra.mxu0 0
    %5115 = vmatprep.subr.bf16.mxu0 0
    %5116 = vmatpush1.bf16.xpose.msra.mxu0 0
    %5117 = vmatprep.subr.bf16.mxu0 0
    %5118 = vmatpush1.bf16.xpose.msra.mxu0 0
    %5119 = vmatprep.subr.bf16.mxu0 0
    %5120 = vmatpush1.bf16.xpose.msra.mxu0 0
    %5121 = vmatprep.subr.bf16.mxu0 0
    %5122 = vmatpush1.bf16.xpose.msra.mxu0 0
    %5123 = vmatprep.subr.bf16.mxu0 0
    %5124 = vmatpush1.bf16.xpose.msra.mxu0 0
    %5125 = vmatprep.subr.bf16.mxu0 0
    %5126 = vmatpush1.bf16.xpose.msra.mxu0 0
    %5127 = vmatprep.subr.bf16.mxu0 0
    %5128 = vmatpush1.bf16.xpose.msra.mxu0 0
    %5129 = vmatprep.mubr.bf16.mxu0 0
    %5130 = vmatmul.mubr.bf16.gmra.mrb[0].mxu0 %v5074
    %v5131 = vpop.f32.mrb[0].mxu0
    %v5132 = vadd.f32 0.0, %v5131
    %v5133 = vpop.f32.mrb[0].mxu0
    %v5134 = vpop.f32.mrb[0].mxu0
    %v5135 = vadd.f32 0.0, %v5134
    %v5136 = vpop.f32.mrb[0].mxu0
    %5137 = vmatprep.mubr.bf16.mxu0 0
    %5138 = vmatmul.mubr.bf16.gmra.mrb[0].mxu0 %v5077
    %v5139 = vpop.f32.mrb[0].mxu0
    %v5140 = vadd.f32 0.0, %v5139
    %v5141 = vpop.f32.mrb[0].mxu0
    %v5142 = vpop.f32.mrb[0].mxu0
    %v5143 = vadd.f32 0.0, %v5142
    %v5144 = vpop.f32.mrb[0].mxu0
    %5145 = vmatprep.mubr.bf16.mxu0 0
    %5146 = vmatmul.mubr.bf16.gmra.mrb[0].mxu0 %v5080
    %v5147 = vpop.f32.mrb[0].mxu0
    %v5148 = vadd.f32 0.0, %v5147
    %v5149 = vpop.f32.mrb[0].mxu0
    %v5150 = vpop.f32.mrb[0].mxu0
    %v5151 = vadd.f32 0.0, %v5150
    %v5152 = vpop.f32.mrb[0].mxu0
    %5153 = vmatprep.mubr.bf16.mxu0 0
    %5154 = vmatmul.mubr.bf16.gmra.mrb[0].mxu0 %v5083
    %v5155 = vpop.f32.mrb[0].mxu0
    %v5156 = vadd.f32 0.0, %v5155
    %v5157 = vpop.f32.mrb[0].mxu0
    %v5158 = vpop.f32.mrb[0].mxu0
    %v5159 = vadd.f32 0.0, %v5158
    %v5160 = vpop.f32.mrb[0].mxu0
    %5161 = vdwg.mxu0
    %v5162 = vsel %vm2587, %v5132, -1e+30
    %v5163 = vsel %vm2588, %v5135, -1e+30
    %v5164 = vsel %vm2589, %v5140, -1e+30
    %v5165 = vsel %vm2590, %v5143, -1e+30
    %v5166 = vsel %vm2591, %v5148, -1e+30
    %v5167 = vsel %vm2592, %v5151, -1e+30
    %v5168 = vsel %vm2593, %v5156, -1e+30
    %v5169 = vsel %vm2594, %v5159, -1e+30
    %v5170 = vsel %vm2607, %v5162, -inf
    %5171 = vmax.xlane.f32.xlu0 %v5170
    %v5172 = vpop.xlane.xlu0 %5171
    %v5173 = vsel %vm2607, %v5163, -inf
    %5174 = vmax.xlane.f32.xlu0 %v5173
    %v5175 = vpop.xlane.xlu0 %5174
    %v5176 = vsel %vm2607, %v5164, -inf
    %5177 = vmax.xlane.f32.xlu0 %v5176
    %v5178 = vpop.xlane.xlu0 %5177
    %v5179 = vsel %vm2607, %v5165, -inf
    %5180 = vmax.xlane.f32.xlu0 %v5179
    %v5181 = vpop.xlane.xlu0 %5180
    %v5182 = vsel %vm2607, %v5166, -inf
    %5183 = vmax.xlane.f32.xlu0 %v5182
    %v5184 = vpop.xlane.xlu0 %5183
    %v5185 = vsel %vm2607, %v5167, -inf
    %5186 = vmax.xlane.f32.xlu0 %v5185
    %v5187 = vpop.xlane.xlu0 %5186
    %v5188 = vsel %vm2607, %v5168, -inf
    %5189 = vmax.xlane.f32.xlu0 %v5188
    %v5190 = vpop.xlane.xlu0 %5189
    %v5191 = vsel %vm2607, %v5169, -inf
    %5192 = vmax.xlane.f32.xlu0 %v5191
    %v5193 = vpop.xlane.xlu0 %5192
    %v5194 = vsub.f32 %v5162, %v5172
    %v5195 = vsub.f32 %v5163, %v5175
    %v5196 = vsub.f32 %v5164, %v5178
    %v5197 = vsub.f32 %v5165, %v5181
    %v5198 = vsub.f32 %v5166, %v5184
    %v5199 = vsub.f32 %v5167, %v5187
    %v5200 = vsub.f32 %v5168, %v5190
    %v5201 = vsub.f32 %v5169, %v5193
    %v5202 = vmul.f32 %v5194, 1.442695
    %v5203 = vpow.pop %v5202
    %v5204 = vmul.f32 %v5195, 1.442695
    %v5205 = vpow.pop %v5204
    %v5206 = vmul.f32 %v5196, 1.442695
    %v5207 = vpow.pop %v5206
    %v5208 = vmul.f32 %v5197, 1.442695
    %v5209 = vpow.pop %v5208
    %v5210 = vmul.f32 %v5198, 1.442695
    %v5211 = vpow.pop %v5210
    %v5212 = vmul.f32 %v5199, 1.442695
    %v5213 = vpow.pop %v5212
    %v5214 = vmul.f32 %v5200, 1.442695
    %v5215 = vpow.pop %v5214
    %v5216 = vmul.f32 %v5201, 1.442695
    %v5217 = vpow.pop %v5216
    %v5218 = vsel %vm2607, %v5203, 0.0
    %5219 = vadd.xlane.f32.xlu0 %v5218
    %v5220 = vpop.xlane.xlu0 %5219
    %v5221 = vsel %vm2607, %v5205, 0.0
    %5222 = vadd.xlane.f32.xlu0 %v5221
    %v5223 = vpop.xlane.xlu0 %5222
    %v5224 = vsel %vm2607, %v5207, 0.0
    %5225 = vadd.xlane.f32.xlu0 %v5224
    %v5226 = vpop.xlane.xlu0 %5225
    %v5227 = vsel %vm2607, %v5209, 0.0
    %5228 = vadd.xlane.f32.xlu0 %v5227
    %v5229 = vpop.xlane.xlu0 %5228
    %v5230 = vsel %vm2607, %v5211, 0.0
    %5231 = vadd.xlane.f32.xlu0 %v5230
    %v5232 = vpop.xlane.xlu0 %5231
    %v5233 = vsel %vm2607, %v5213, 0.0
    %5234 = vadd.xlane.f32.xlu0 %v5233
    %v5235 = vpop.xlane.xlu0 %5234
    %v5236 = vsel %vm2607, %v5215, 0.0
    %5237 = vadd.xlane.f32.xlu0 %v5236
    %v5238 = vpop.xlane.xlu0 %5237
    %v5239 = vsel %vm2607, %v5217, 0.0
    %5240 = vadd.xlane.f32.xlu0 %v5239
    %v5241 = vpop.xlane.xlu0 %5240
    %v5242 = vrcp.pop %v5220
    %v5243 = vrcp.pop %v5223
    %v5244 = vrcp.pop %v5226
    %v5245 = vrcp.pop %v5229
    %v5246 = vrcp.pop %v5232
    %v5247 = vrcp.pop %v5235
    %v5248 = vrcp.pop %v5238
    %v5249 = vrcp.pop %v5241
    %v5250 = vmul.f32 %v5203, %v5242
    %v5251 = vmul.f32 %v5205, %v5243
    %v5252 = vmul.f32 %v5207, %v5244
    %v5253 = vmul.f32 %v5209, %v5245
    %v5254 = vmul.f32 %v5211, %v5246
    %v5255 = vmul.f32 %v5213, %v5247
    %v5256 = vmul.f32 %v5215, %v5248
    %v5257 = vmul.f32 %v5217, %v5249
    %v5258 = vpack.c.bf16 %v5251, %v5250
    %v5259 = vpack.c.bf16 %v5253, %v5252
    %v5260 = vpack.c.bf16 %v5255, %v5254
    %v5261 = vpack.c.bf16 %v5257, %v5256
    %v5263 = vsel %vm2607, %v5258, 0
    %v5266 = vsel %vm2607, %v5259, 0
    %v5269 = vsel %vm2607, %v5260, 0
    %v5272 = vsel %vm2607, %v5261, 0
    %5274 = vmatprep.subr.bf16.mxu0 0
    %5275 = vmatpush1.bf16.msra.mxu0 %v5069
    %5276 = vmatprep.subr.bf16.mxu0 0
    %5277 = vmatpush1.bf16.msra.mxu0 %v5070
    %5278 = vmatprep.subr.bf16.mxu0 0
    %5279 = vmatpush1.bf16.msra.mxu0 %v5071
    %5280 = vmatprep.subr.bf16.mxu0 0
    %5281 = vmatpush1.bf16.msra.mxu0 %v5072
    %5282 = vmatprep.subr.bf16.mxu0 0
    %5283 = vmatpush1.bf16.msra.mxu0 0
    %5284 = vmatprep.subr.bf16.mxu0 0
    %5285 = vmatpush1.bf16.msra.mxu0 0
    %5286 = vmatprep.subr.bf16.mxu0 0
    %5287 = vmatpush1.bf16.msra.mxu0 0
    %5288 = vmatprep.subr.bf16.mxu0 0
    %5289 = vmatpush1.bf16.msra.mxu0 0
    %5290 = vmatprep.subr.bf16.mxu0 0
    %5291 = vmatpush1.bf16.msra.mxu0 0
    %5292 = vmatprep.subr.bf16.mxu0 0
    %5293 = vmatpush1.bf16.msra.mxu0 0
    %5294 = vmatprep.subr.bf16.mxu0 0
    %5295 = vmatpush1.bf16.msra.mxu0 0
    %5296 = vmatprep.subr.bf16.mxu0 0
    %5297 = vmatpush1.bf16.msra.mxu0 0
    %5298 = vmatprep.subr.bf16.mxu0 0
    %5299 = vmatpush1.bf16.msra.mxu0 0
    %5300 = vmatprep.subr.bf16.mxu0 0
    %5301 = vmatpush1.bf16.msra.mxu0 0
    %5302 = vmatprep.subr.bf16.mxu0 0
    %5303 = vmatpush1.bf16.msra.mxu0 0
    %5304 = vmatprep.subr.bf16.mxu0 0
    %5305 = vmatpush1.bf16.msra.mxu0 0
    %5306 = vmatprep.mubr.bf16.mxu0 0
    %5307 = vmatmul.mubr.bf16.gmra.mrb[0].mxu0 %v5263
    %v5308 = vpop.f32.mrb[0].mxu0
    %v5309 = vadd.f32 0.0, %v5308
    %v5310 = vpop.f32.mrb[0].mxu0
    %v5311 = vpop.f32.mrb[0].mxu0
    %v5312 = vadd.f32 0.0, %v5311
    %v5313 = vpop.f32.mrb[0].mxu0
    %5314 = vmatprep.mubr.bf16.mxu0 0
    %5315 = vmatmul.mubr.bf16.gmra.mrb[0].mxu0 %v5266
    %v5316 = vpop.f32.mrb[0].mxu0
    %v5317 = vadd.f32 0.0, %v5316
    %v5318 = vpop.f32.mrb[0].mxu0
    %v5319 = vpop.f32.mrb[0].mxu0
    %v5320 = vadd.f32 0.0, %v5319
    %v5321 = vpop.f32.mrb[0].mxu0
    %5322 = vmatprep.mubr.bf16.mxu0 0
    %5323 = vmatmul.mubr.bf16.gmra.mrb[0].mxu0 %v5269
    %v5324 = vpop.f32.mrb[0].mxu0
    %v5325 = vadd.f32 0.0, %v5324
    %v5326 = vpop.f32.mrb[0].mxu0
    %v5327 = vpop.f32.mrb[0].mxu0
    %v5328 = vadd.f32 0.0, %v5327
    %v5329 = vpop.f32.mrb[0].mxu0
    %5330 = vmatprep.mubr.bf16.mxu0 0
    %5331 = vmatmul.mubr.bf16.gmra.mrb[0].mxu0 %v5272
    %v5332 = vpop.f32.mrb[0].mxu0
    %v5333 = vadd.f32 0.0, %v5332
    %v5334 = vpop.f32.mrb[0].mxu0
    %v5335 = vpop.f32.mrb[0].mxu0
    %v5336 = vadd.f32 0.0, %v5335
    %v5337 = vpop.f32.mrb[0].mxu0
    %5338 = vdwg.mxu0
    %v5339 = vpack.c.bf16 %v5312, %v5309
    %v5340 = vpack.c.bf16 %v5320, %v5317
    %v5341 = vpack.c.bf16 %v5328, %v5325
    %v5342 = vpack.c.bf16 %v5336, %v5333
    %5343 = vst.msk [vmem:[#allocation2 + $0x68] sm:$0xff] %vm2607, %v5339
    %5344 = vst.msk [vmem:[#allocation2 + $0x80] sm:$0xff] %vm2607, %v5340
    %5345 = vst.msk [vmem:[#allocation2 + $0x98] sm:$0xff] %vm2607, %v5341
    %5346 = vst.msk [vmem:[#allocation2 + $0xb0] sm:$0xff] %vm2607, %v5342
    %5351 = vrot.lane.b32.xlu0 %v5061, 64
    %v5352 = vpop.permute.xlu0 %5351
    %5353 = vrot.lane.b32.xlu0 %v5062, 64
    %v5354 = vpop.permute.xlu0 %5353
    %5355 = vrot.lane.b32.xlu0 %v5063, 64
    %v5356 = vpop.permute.xlu0 %5355
    %5357 = vrot.lane.b32.xlu0 %v5064, 64
    %v5358 = vpop.permute.xlu0 %5357
    %5363 = vrot.lane.b32.xlu0 %v5065, 64
    %v5364 = vpop.permute.xlu0 %5363
    %5365 = vrot.lane.b32.xlu0 %v5066, 64
    %v5366 = vpop.permute.xlu0 %5365
    %5367 = vrot.lane.b32.xlu0 %v5067, 64
    %v5368 = vpop.permute.xlu0 %5367
    %5369 = vrot.lane.b32.xlu0 %v5068, 64
    %v5370 = vpop.permute.xlu0 %5369
    %v5372 = vsel %vm2607, %v5352, 0
    %v5375 = vsel %vm2607, %v5354, 0
    %v5378 = vsel %vm2607, %v5356, 0
    %v5381 = vsel %vm2607, %v5358, 0
    %v5384 = vsel %vm2607, %v5364, 0
    %v5387 = vsel %vm2607, %v5366, 0
    %v5390 = vsel %vm2607, %v5368, 0
    %v5393 = vsel %vm2607, %v5370, 0
    %5395 = vmatprep.subr.bf16.mxu0 0
    %5396 = vmatpush1.bf16.xpose.msra.mxu0 %v5384
    %5397 = vmatprep.subr.bf16.mxu0 0
    %5398 = vmatpush1.bf16.xpose.msra.mxu0 %v5387
    %5399 = vmatprep.subr.bf16.mxu0 0
    %5400 = vmatpush1.bf16.xpose.msra.mxu0 %v5390
    %5401 = vmatprep.subr.bf16.mxu0 0
    %5402 = vmatpush1.bf16.xpose.msra.mxu0 %v5393
    %5403 = vmatprep.subr.bf16.mxu0 0
    %5404 = vmatpush1.bf16.xpose.msra.mxu0 0
    %5405 = vmatprep.subr.bf16.mxu0 0
    %5406 = vmatpush1.bf16.xpose.msra.mxu0 0
    %5407 = vmatprep.subr.bf16.mxu0 0
    %5408 = vmatpush1.bf16.xpose.msra.mxu0 0
    %5409 = vmatprep.subr.bf16.mxu0 0
    %5410 = vmatpush1.bf16.xpose.msra.mxu0 0
    %5411 = vmatprep.subr.bf16.mxu0 0
    %5412 = vmatpush1.bf16.xpose.msra.mxu0 0
    %5413 = vmatprep.subr.bf16.mxu0 0
    %5414 = vmatpush1.bf16.xpose.msra.mxu0 0
    %5415 = vmatprep.subr.bf16.mxu0 0
    %5416 = vmatpush1.bf16.xpose.msra.mxu0 0
    %5417 = vmatprep.subr.bf16.mxu0 0
    %5418 = vmatpush1.bf16.xpose.msra.mxu0 0
    %5419 = vmatprep.subr.bf16.mxu0 0
    %5420 = vmatpush1.bf16.xpose.msra.mxu0 0
    %5421 = vmatprep.subr.bf16.mxu0 0
    %5422 = vmatpush1.bf16.xpose.msra.mxu0 0
    %5423 = vmatprep.subr.bf16.mxu0 0
    %5424 = vmatpush1.bf16.xpose.msra.mxu0 0
    %5425 = vmatprep.subr.bf16.mxu0 0
    %5426 = vmatpush1.bf16.xpose.msra.mxu0 0
    %5427 = vmatprep.mubr.bf16.mxu0 0
    %5428 = vmatmul.mubr.bf16.gmra.mrb[0].mxu0 %v5372
    %v5429 = vpop.f32.mrb[0].mxu0
    %v5430 = vadd.f32 0.0, %v5429
    %v5431 = vpop.f32.mrb[0].mxu0
    %v5432 = vpop.f32.mrb[0].mxu0
    %v5433 = vadd.f32 0.0, %v5432
    %v5434 = vpop.f32.mrb[0].mxu0
    %5435 = vmatprep.mubr.bf16.mxu0 0
    %5436 = vmatmul.mubr.bf16.gmra.mrb[0].mxu0 %v5375
    %v5437 = vpop.f32.mrb[0].mxu0
    %v5438 = vadd.f32 0.0, %v5437
    %v5439 = vpop.f32.mrb[0].mxu0
    %v5440 = vpop.f32.mrb[0].mxu0
    %v5441 = vadd.f32 0.0, %v5440
    %v5442 = vpop.f32.mrb[0].mxu0
    %5443 = vmatprep.mubr.bf16.mxu0 0
    %5444 = vmatmul.mubr.bf16.gmra.mrb[0].mxu0 %v5378
    %v5445 = vpop.f32.mrb[0].mxu0
    %v5446 = vadd.f32 0.0, %v5445
    %v5447 = vpop.f32.mrb[0].mxu0
    %v5448 = vpop.f32.mrb[0].mxu0
    %v5449 = vadd.f32 0.0, %v5448
    %v5450 = vpop.f32.mrb[0].mxu0
    %5451 = vmatprep.mubr.bf16.mxu0 0
    %5452 = vmatmul.mubr.bf16.gmra.mrb[0].mxu0 %v5381
    %v5453 = vpop.f32.mrb[0].mxu0
    %v5454 = vadd.f32 0.0, %v5453
    %v5455 = vpop.f32.mrb[0].mxu0
    %v5456 = vpop.f32.mrb[0].mxu0
    %v5457 = vadd.f32 0.0, %v5456
    %v5458 = vpop.f32.mrb[0].mxu0
    %5459 = vdwg.mxu0
    %v5460 = vsel %vm2587, %v5430, -1e+30
    %v5461 = vsel %vm2588, %v5433, -1e+30
    %v5462 = vsel %vm2589, %v5438, -1e+30
    %v5463 = vsel %vm2590, %v5441, -1e+30
    %v5464 = vsel %vm2591, %v5446, -1e+30
    %v5465 = vsel %vm2592, %v5449, -1e+30
    %v5466 = vsel %vm2593, %v5454, -1e+30
    %v5467 = vsel %vm2594, %v5457, -1e+30
    %v5468 = vsel %vm2607, %v5460, -inf
    %5469 = vmax.xlane.f32.xlu0 %v5468
    %v5470 = vpop.xlane.xlu0 %5469
    %v5471 = vsel %vm2607, %v5461, -inf
    %5472 = vmax.xlane.f32.xlu0 %v5471
    %v5473 = vpop.xlane.xlu0 %5472
    %v5474 = vsel %vm2607, %v5462, -inf
    %5475 = vmax.xlane.f32.xlu0 %v5474
    %v5476 = vpop.xlane.xlu0 %5475
    %v5477 = vsel %vm2607, %v5463, -inf
    %5478 = vmax.xlane.f32.xlu0 %v5477
    %v5479 = vpop.xlane.xlu0 %5478
    %v5480 = vsel %vm2607, %v5464, -inf
    %5481 = vmax.xlane.f32.xlu0 %v5480
    %v5482 = vpop.xlane.xlu0 %5481
    %v5483 = vsel %vm2607, %v5465, -inf
    %5484 = vmax.xlane.f32.xlu0 %v5483
    %v5485 = vpop.xlane.xlu0 %5484
    %v5486 = vsel %vm2607, %v5466, -inf
    %5487 = vmax.xlane.f32.xlu0 %v5486
    %v5488 = vpop.xlane.xlu0 %5487
    %v5489 = vsel %vm2607, %v5467, -inf
    %5490 = vmax.xlane.f32.xlu0 %v5489
    %v5491 = vpop.xlane.xlu0 %5490
    %v5492 = vsub.f32 %v5460, %v5470
    %v5493 = vsub.f32 %v5461, %v5473
    %v5494 = vsub.f32 %v5462, %v5476
    %v5495 = vsub.f32 %v5463, %v5479
    %v5496 = vsub.f32 %v5464, %v5482
    %v5497 = vsub.f32 %v5465, %v5485
    %v5498 = vsub.f32 %v5466, %v5488
    %v5499 = vsub.f32 %v5467, %v5491
    %v5500 = vmul.f32 %v5492, 1.442695
    %v5501 = vpow.pop %v5500
    %v5502 = vmul.f32 %v5493, 1.442695
    %v5503 = vpow.pop %v5502
    %v5504 = vmul.f32 %v5494, 1.442695
    %v5505 = vpow.pop %v5504
    %v5506 = vmul.f32 %v5495, 1.442695
    %v5507 = vpow.pop %v5506
    %v5508 = vmul.f32 %v5496, 1.442695
    %v5509 = vpow.pop %v5508
    %v5510 = vmul.f32 %v5497, 1.442695
    %v5511 = vpow.pop %v5510
    %v5512 = vmul.f32 %v5498, 1.442695
    %v5513 = vpow.pop %v5512
    %v5514 = vmul.f32 %v5499, 1.442695
    %v5515 = vpow.pop %v5514
    %v5516 = vsel %vm2607, %v5501, 0.0
    %5517 = vadd.xlane.f32.xlu0 %v5516
    %v5518 = vpop.xlane.xlu0 %5517
    %v5519 = vsel %vm2607, %v5503, 0.0
    %5520 = vadd.xlane.f32.xlu0 %v5519
    %v5521 = vpop.xlane.xlu0 %5520
    %v5522 = vsel %vm2607, %v5505, 0.0
    %5523 = vadd.xlane.f32.xlu0 %v5522
    %v5524 = vpop.xlane.xlu0 %5523
    %v5525 = vsel %vm2607, %v5507, 0.0
    %5526 = vadd.xlane.f32.xlu0 %v5525
    %v5527 = vpop.xlane.xlu0 %5526
    %v5528 = vsel %vm2607, %v5509, 0.0
    %5529 = vadd.xlane.f32.xlu0 %v5528
    %v5530 = vpop.xlane.xlu0 %5529
    %v5531 = vsel %vm2607, %v5511, 0.0
    %5532 = vadd.xlane.f32.xlu0 %v5531
    %v5533 = vpop.xlane.xlu0 %5532
    %v5534 = vsel %vm2607, %v5513, 0.0
    %5535 = vadd.xlane.f32.xlu0 %v5534
    %v5536 = vpop.xlane.xlu0 %5535
    %v5537 = vsel %vm2607, %v5515, 0.0
    %5538 = vadd.xlane.f32.xlu0 %v5537
    %v5539 = vpop.xlane.xlu0 %5538
    %v5540 = vrcp.pop %v5518
    %v5541 = vrcp.pop %v5521
    %v5542 = vrcp.pop %v5524
    %v5543 = vrcp.pop %v5527
    %v5544 = vrcp.pop %v5530
    %v5545 = vrcp.pop %v5533
    %v5546 = vrcp.pop %v5536
    %v5547 = vrcp.pop %v5539
    %v5548 = vmul.f32 %v5501, %v5540
    %v5549 = vmul.f32 %v5503, %v5541
    %v5550 = vmul.f32 %v5505, %v5542
    %v5551 = vmul.f32 %v5507, %v5543
    %v5552 = vmul.f32 %v5509, %v5544
    %v5553 = vmul.f32 %v5511, %v5545
    %v5554 = vmul.f32 %v5513, %v5546
    %v5555 = vmul.f32 %v5515, %v5547
    %v5556 = vpack.c.bf16 %v5549, %v5548
    %v5557 = vpack.c.bf16 %v5551, %v5550
    %v5558 = vpack.c.bf16 %v5553, %v5552
    %v5559 = vpack.c.bf16 %v5555, %v5554
    %5564 = vrot.lane.b32.xlu0 %v5069, 64
    %v5565 = vpop.permute.xlu0 %5564
    %5566 = vrot.lane.b32.xlu0 %v5070, 64
    %v5567 = vpop.permute.xlu0 %5566
    %5568 = vrot.lane.b32.xlu0 %v5071, 64
    %v5569 = vpop.permute.xlu0 %5568
    %5570 = vrot.lane.b32.xlu0 %v5072, 64
    %v5571 = vpop.permute.xlu0 %5570
    %v5577 = vsel %vm2607, %v5556, 0
    %v5580 = vsel %vm2607, %v5557, 0
    %v5583 = vsel %vm2607, %v5558, 0
    %v5586 = vsel %vm2607, %v5559, 0
    %5588 = vmatprep.subr.bf16.mxu0 0
    %5589 = vmatpush1.bf16.msra.mxu0 %v5565
    %5590 = vmatprep.subr.bf16.mxu0 0
    %5591 = vmatpush1.bf16.msra.mxu0 %v5567
    %5592 = vmatprep.subr.bf16.mxu0 0
    %5593 = vmatpush1.bf16.msra.mxu0 %v5569
    %5594 = vmatprep.subr.bf16.mxu0 0
    %5595 = vmatpush1.bf16.msra.mxu0 %v5571
    %5596 = vmatprep.subr.bf16.mxu0 0
    %5597 = vmatpush1.bf16.msra.mxu0 0
    %5598 = vmatprep.subr.bf16.mxu0 0
    %5599 = vmatpush1.bf16.msra.mxu0 0
    %5600 = vmatprep.subr.bf16.mxu0 0
    %5601 = vmatpush1.bf16.msra.mxu0 0
    %5602 = vmatprep.subr.bf16.mxu0 0
    %5603 = vmatpush1.bf16.msra.mxu0 0
    %5604 = vmatprep.subr.bf16.mxu0 0
    %5605 = vmatpush1.bf16.msra.mxu0 0
    %5606 = vmatprep.subr.bf16.mxu0 0
    %5607 = vmatpush1.bf16.msra.mxu0 0
    %5608 = vmatprep.subr.bf16.mxu0 0
    %5609 = vmatpush1.bf16.msra.mxu0 0
    %5610 = vmatprep.subr.bf16.mxu0 0
    %5611 = vmatpush1.bf16.msra.mxu0 0
    %5612 = vmatprep.subr.bf16.mxu0 0
    %5613 = vmatpush1.bf16.msra.mxu0 0
    %5614 = vmatprep.subr.bf16.mxu0 0
    %5615 = vmatpush1.bf16.msra.mxu0 0
    %5616 = vmatprep.subr.bf16.mxu0 0
    %5617 = vmatpush1.bf16.msra.mxu0 0
    %5618 = vmatprep.subr.bf16.mxu0 0
    %5619 = vmatpush1.bf16.msra.mxu0 0
    %5620 = vmatprep.mubr.bf16.mxu0 0
    %5621 = vmatmul.mubr.bf16.gmra.mrb[0].mxu0 %v5577
    %v5622 = vpop.f32.mrb[0].mxu0
    %v5623 = vadd.f32 0.0, %v5622
    %v5624 = vpop.f32.mrb[0].mxu0
    %v5625 = vpop.f32.mrb[0].mxu0
    %v5626 = vadd.f32 0.0, %v5625
    %v5627 = vpop.f32.mrb[0].mxu0
    %5628 = vmatprep.mubr.bf16.mxu0 0
    %5629 = vmatmul.mubr.bf16.gmra.mrb[0].mxu0 %v5580
    %v5630 = vpop.f32.mrb[0].mxu0
    %v5631 = vadd.f32 0.0, %v5630
    %v5632 = vpop.f32.mrb[0].mxu0
    %v5633 = vpop.f32.mrb[0].mxu0
    %v5634 = vadd.f32 0.0, %v5633
    %v5635 = vpop.f32.mrb[0].mxu0
    %5636 = vmatprep.mubr.bf16.mxu0 0
    %5637 = vmatmul.mubr.bf16.gmra.mrb[0].mxu0 %v5583
    %v5638 = vpop.f32.mrb[0].mxu0
    %v5639 = vadd.f32 0.0, %v5638
    %v5640 = vpop.f32.mrb[0].mxu0
    %v5641 = vpop.f32.mrb[0].mxu0
    %v5642 = vadd.f32 0.0, %v5641
    %v5643 = vpop.f32.mrb[0].mxu0
    %5644 = vmatprep.mubr.bf16.mxu0 0
    %5645 = vmatmul.mubr.bf16.gmra.mrb[0].mxu0 %v5586
    %v5646 = vpop.f32.mrb[0].mxu0
    %v5647 = vadd.f32 0.0, %v5646
    %v5648 = vpop.f32.mrb[0].mxu0
    %v5649 = vpop.f32.mrb[0].mxu0
    %v5650 = vadd.f32 0.0, %v5649
    %v5651 = vpop.f32.mrb[0].mxu0
    %5652 = vdwg.mxu0
    %v5653 = vpack.c.bf16 %v5626, %v5623
    %v5654 = vpack.c.bf16 %v5634, %v5631
    %v5655 = vpack.c.bf16 %v5642, %v5639
    %v5656 = vpack.c.bf16 %v5650, %v5647
    %5661 = vrot.lane.b32.xlu0 %v5653, 64
    %v5662 = vpop.permute.xlu0 %5661
    %5663 = vrot.lane.b32.xlu0 %v5654, 64
    %v5664 = vpop.permute.xlu0 %5663
    %5665 = vrot.lane.b32.xlu0 %v5655, 64
    %v5666 = vpop.permute.xlu0 %5665
    %5667 = vrot.lane.b32.xlu0 %v5656, 64
    %v5668 = vpop.permute.xlu0 %5667
    %5673 = vst.msk [vmem:[#allocation2 + $0x68] sm:$0xff] %vm3208, %v5662
    %5674 = vst.msk [vmem:[#allocation2 + $0x80] sm:$0xff] %vm3208, %v5664
    %5675 = vst.msk [vmem:[#allocation2 + $0x98] sm:$0xff] %vm3208, %v5666
    %5676 = vst.msk [vmem:[#allocation2 + $0xb0] sm:$0xff] %vm3208, %v5668
    %v5677 = vpack.c.bf16 %v1896, %v1892
    %v5678 = vpack.c.bf16 %v1906, %v1902
    %v5679 = vpack.c.bf16 %v1916, %v1912
    %v5680 = vpack.c.bf16 %v1926, %v1922
    %v5681 = vpack.c.bf16 %v2124, %v2120
    %v5682 = vpack.c.bf16 %v2134, %v2130
    %v5683 = vpack.c.bf16 %v2144, %v2140
    %v5684 = vpack.c.bf16 %v2154, %v2150
    %v5685 = vpack.c.bf16 %v2549, %v2546
    %v5686 = vpack.c.bf16 %v2557, %v2554
    %v5687 = vpack.c.bf16 %v2565, %v2562
    %v5688 = vpack.c.bf16 %v2573, %v2570
    %v5690 = vsel %vm2607, %v5677, 0
    %v5693 = vsel %vm2607, %v5678, 0
    %v5696 = vsel %vm2607, %v5679, 0
    %v5699 = vsel %vm2607, %v5680, 0
    %v5702 = vsel %vm2607, %v5681, 0
    %v5705 = vsel %vm2607, %v5682, 0
    %v5708 = vsel %vm2607, %v5683, 0
    %v5711 = vsel %vm2607, %v5684, 0
    %5713 = vmatprep.subr.bf16.mxu0 0
    %5714 = vmatpush1.bf16.xpose.msra.mxu0 %v5702
    %5715 = vmatprep.subr.bf16.mxu0 0
    %5716 = vmatpush1.bf16.xpose.msra.mxu0 %v5705
    %5717 = vmatprep.subr.bf16.mxu0 0
    %5718 = vmatpush1.bf16.xpose.msra.mxu0 %v5708
    %5719 = vmatprep.subr.bf16.mxu0 0
    %5720 = vmatpush1.bf16.xpose.msra.mxu0 %v5711
    %5721 = vmatprep.subr.bf16.mxu0 0
    %5722 = vmatpush1.bf16.xpose.msra.mxu0 0
    %5723 = vmatprep.subr.bf16.mxu0 0
    %5724 = vmatpush1.bf16.xpose.msra.mxu0 0
    %5725 = vmatprep.subr.bf16.mxu0 0
    %5726 = vmatpush1.bf16.xpose.msra.mxu0 0
    %5727 = vmatprep.subr.bf16.mxu0 0
    %5728 = vmatpush1.bf16.xpose.msra.mxu0 0
    %5729 = vmatprep.subr.bf16.mxu0 0
    %5730 = vmatpush1.bf16.xpose.msra.mxu0 0
    %5731 = vmatprep.subr.bf16.mxu0 0
    %5732 = vmatpush1.bf16.xpose.msra.mxu0 0
    %5733 = vmatprep.subr.bf16.mxu0 0
    %5734 = vmatpush1.bf16.xpose.msra.mxu0 0
    %5735 = vmatprep.subr.bf16.mxu0 0
    %5736 = vmatpush1.bf16.xpose.msra.mxu0 0
    %5737 = vmatprep.subr.bf16.mxu0 0
    %5738 = vmatpush1.bf16.xpose.msra.mxu0 0
    %5739 = vmatprep.subr.bf16.mxu0 0
    %5740 = vmatpush1.bf16.xpose.msra.mxu0 0
    %5741 = vmatprep.subr.bf16.mxu0 0
    %5742 = vmatpush1.bf16.xpose.msra.mxu0 0
    %5743 = vmatprep.subr.bf16.mxu0 0
    %5744 = vmatpush1.bf16.xpose.msra.mxu0 0
    %5745 = vmatprep.mubr.bf16.mxu0 0
    %5746 = vmatmul.mubr.bf16.gmra.mrb[0].mxu0 %v5690
    %v5747 = vpop.f32.mrb[0].mxu0
    %v5748 = vadd.f32 0.0, %v5747
    %v5749 = vpop.f32.mrb[0].mxu0
    %v5750 = vpop.f32.mrb[0].mxu0
    %v5751 = vadd.f32 0.0, %v5750
    %v5752 = vpop.f32.mrb[0].mxu0
    %5753 = vmatprep.mubr.bf16.mxu0 0
    %5754 = vmatmul.mubr.bf16.gmra.mrb[0].mxu0 %v5693
    %v5755 = vpop.f32.mrb[0].mxu0
    %v5756 = vadd.f32 0.0, %v5755
    %v5757 = vpop.f32.mrb[0].mxu0
    %v5758 = vpop.f32.mrb[0].mxu0
    %v5759 = vadd.f32 0.0, %v5758
    %v5760 = vpop.f32.mrb[0].mxu0
    %5761 = vmatprep.mubr.bf16.mxu0 0
    %5762 = vmatmul.mubr.bf16.gmra.mrb[0].mxu0 %v5696
    %v5763 = vpop.f32.mrb[0].mxu0
    %v5764 = vadd.f32 0.0, %v5763
    %v5765 = vpop.f32.mrb[0].mxu0
    %v5766 = vpop.f32.mrb[0].mxu0
    %v5767 = vadd.f32 0.0, %v5766
    %v5768 = vpop.f32.mrb[0].mxu0
    %5769 = vmatprep.mubr.bf16.mxu0 0
    %5770 = vmatmul.mubr.bf16.gmra.mrb[0].mxu0 %v5699
    %v5771 = vpop.f32.mrb[0].mxu0
    %v5772 = vadd.f32 0.0, %v5771
    %v5773 = vpop.f32.mrb[0].mxu0
    %v5774 = vpop.f32.mrb[0].mxu0
    %v5775 = vadd.f32 0.0, %v5774
    %v5776 = vpop.f32.mrb[0].mxu0
    %5777 = vdwg.mxu0
    %v5778 = vsel %vm2587, %v5748, -1e+30
    %v5779 = vsel %vm2588, %v5751, -1e+30
    %v5780 = vsel %vm2589, %v5756, -1e+30
    %v5781 = vsel %vm2590, %v5759, -1e+30
    %v5782 = vsel %vm2591, %v5764, -1e+30
    %v5783 = vsel %vm2592, %v5767, -1e+30
    %v5784 = vsel %vm2593, %v5772, -1e+30
    %v5785 = vsel %vm2594, %v5775, -1e+30
    %v5786 = vsel %vm2607, %v5778, -inf
    %5787 = vmax.xlane.f32.xlu0 %v5786
    %v5788 = vpop.xlane.xlu0 %5787
    %v5789 = vsel %vm2607, %v5779, -inf
    %5790 = vmax.xlane.f32.xlu0 %v5789
    %v5791 = vpop.xlane.xlu0 %5790
    %v5792 = vsel %vm2607, %v5780, -inf
    %5793 = vmax.xlane.f32.xlu0 %v5792
    %v5794 = vpop.xlane.xlu0 %5793
    %v5795 = vsel %vm2607, %v5781, -inf
    %5796 = vmax.xlane.f32.xlu0 %v5795
    %v5797 = vpop.xlane.xlu0 %5796
    %v5798 = vsel %vm2607, %v5782, -inf
    %5799 = vmax.xlane.f32.xlu0 %v5798
    %v5800 = vpop.xlane.xlu0 %5799
    %v5801 = vsel %vm2607, %v5783, -inf
    %5802 = vmax.xlane.f32.xlu0 %v5801
    %v5803 = vpop.xlane.xlu0 %5802
    %v5804 = vsel %vm2607, %v5784, -inf
    %5805 = vmax.xlane.f32.xlu0 %v5804
    %v5806 = vpop.xlane.xlu0 %5805
    %v5807 = vsel %vm2607, %v5785, -inf
    %5808 = vmax.xlane.f32.xlu0 %v5807
    %v5809 = vpop.xlane.xlu0 %5808
    %v5810 = vsub.f32 %v5778, %v5788
    %v5811 = vsub.f32 %v5779, %v5791
    %v5812 = vsub.f32 %v5780, %v5794
    %v5813 = vsub.f32 %v5781, %v5797
    %v5814 = vsub.f32 %v5782, %v5800
    %v5815 = vsub.f32 %v5783, %v5803
    %v5816 = vsub.f32 %v5784, %v5806
    %v5817 = vsub.f32 %v5785, %v5809
    %v5818 = vmul.f32 %v5810, 1.442695
    %v5819 = vpow.pop %v5818
    %v5820 = vmul.f32 %v5811, 1.442695
    %v5821 = vpow.pop %v5820
    %v5822 = vmul.f32 %v5812, 1.442695
    %v5823 = vpow.pop %v5822
    %v5824 = vmul.f32 %v5813, 1.442695
    %v5825 = vpow.pop %v5824
    %v5826 = vmul.f32 %v5814, 1.442695
    %v5827 = vpow.pop %v5826
    %v5828 = vmul.f32 %v5815, 1.442695
    %v5829 = vpow.pop %v5828
    %v5830 = vmul.f32 %v5816, 1.442695
    %v5831 = vpow.pop %v5830
    %v5832 = vmul.f32 %v5817, 1.442695
    %v5833 = vpow.pop %v5832
    %v5834 = vsel %vm2607, %v5819, 0.0
    %5835 = vadd.xlane.f32.xlu0 %v5834
    %v5836 = vpop.xlane.xlu0 %5835
    %v5837 = vsel %vm2607, %v5821, 0.0
    %5838 = vadd.xlane.f32.xlu0 %v5837
    %v5839 = vpop.xlane.xlu0 %5838
    %v5840 = vsel %vm2607, %v5823, 0.0
    %5841 = vadd.xlane.f32.xlu0 %v5840
    %v5842 = vpop.xlane.xlu0 %5841
    %v5843 = vsel %vm2607, %v5825, 0.0
    %5844 = vadd.xlane.f32.xlu0 %v5843
    %v5845 = vpop.xlane.xlu0 %5844
    %v5846 = vsel %vm2607, %v5827, 0.0
    %5847 = vadd.xlane.f32.xlu0 %v5846
    %v5848 = vpop.xlane.xlu0 %5847
    %v5849 = vsel %vm2607, %v5829, 0.0
    %5850 = vadd.xlane.f32.xlu0 %v5849
    %v5851 = vpop.xlane.xlu0 %5850
    %v5852 = vsel %vm2607, %v5831, 0.0
    %5853 = vadd.xlane.f32.xlu0 %v5852
    %v5854 = vpop.xlane.xlu0 %5853
    %v5855 = vsel %vm2607, %v5833, 0.0
    %5856 = vadd.xlane.f32.xlu0 %v5855
    %v5857 = vpop.xlane.xlu0 %5856
    %v5858 = vrcp.pop %v5836
    %v5859 = vrcp.pop %v5839
    %v5860 = vrcp.pop %v5842
    %v5861 = vrcp.pop %v5845
    %v5862 = vrcp.pop %v5848
    %v5863 = vrcp.pop %v5851
    %v5864 = vrcp.pop %v5854
    %v5865 = vrcp.pop %v5857
    %v5866 = vmul.f32 %v5819, %v5858
    %v5867 = vmul.f32 %v5821, %v5859
    %v5868 = vmul.f32 %v5823, %v5860
    %v5869 = vmul.f32 %v5825, %v5861
    %v5870 = vmul.f32 %v5827, %v5862
    %v5871 = vmul.f32 %v5829, %v5863
    %v5872 = vmul.f32 %v5831, %v5864
    %v5873 = vmul.f32 %v5833, %v5865
    %v5874 = vpack.c.bf16 %v5867, %v5866
    %v5875 = vpack.c.bf16 %v5869, %v5868
    %v5876 = vpack.c.bf16 %v5871, %v5870
    %v5877 = vpack.c.bf16 %v5873, %v5872
    %v5879 = vsel %vm2607, %v5874, 0
    %v5882 = vsel %vm2607, %v5875, 0
    %v5885 = vsel %vm2607, %v5876, 0
    %v5888 = vsel %vm2607, %v5877, 0
    %5890 = vmatprep.subr.bf16.mxu0 0
    %5891 = vmatpush1.bf16.msra.mxu0 %v5685
    %5892 = vmatprep.subr.bf16.mxu0 0
    %5893 = vmatpush1.bf16.msra.mxu0 %v5686
    %5894 = vmatprep.subr.bf16.mxu0 0
    %5895 = vmatpush1.bf16.msra.mxu0 %v5687
    %5896 = vmatprep.subr.bf16.mxu0 0
    %5897 = vmatpush1.bf16.msra.mxu0 %v5688
    %5898 = vmatprep.subr.bf16.mxu0 0
    %5899 = vmatpush1.bf16.msra.mxu0 0
    %5900 = vmatprep.subr.bf16.mxu0 0
    %5901 = vmatpush1.bf16.msra.mxu0 0
    %5902 = vmatprep.subr.bf16.mxu0 0
    %5903 = vmatpush1.bf16.msra.mxu0 0
    %5904 = vmatprep.subr.bf16.mxu0 0
    %5905 = vmatpush1.bf16.msra.mxu0 0
    %5906 = vmatprep.subr.bf16.mxu0 0
    %5907 = vmatpush1.bf16.msra.mxu0 0
    %5908 = vmatprep.subr.bf16.mxu0 0
    %5909 = vmatpush1.bf16.msra.mxu0 0
    %5910 = vmatprep.subr.bf16.mxu0 0
    %5911 = vmatpush1.bf16.msra.mxu0 0
    %5912 = vmatprep.subr.bf16.mxu0 0
    %5913 = vmatpush1.bf16.msra.mxu0 0
    %5914 = vmatprep.subr.bf16.mxu0 0
    %5915 = vmatpush1.bf16.msra.mxu0 0
    %5916 = vmatprep.subr.bf16.mxu0 0
    %5917 = vmatpush1.bf16.msra.mxu0 0
    %5918 = vmatprep.subr.bf16.mxu0 0
    %5919 = vmatpush1.bf16.msra.mxu0 0
    %5920 = vmatprep.subr.bf16.mxu0 0
    %5921 = vmatpush1.bf16.msra.mxu0 0
    %5922 = vmatprep.mubr.bf16.mxu0 0
    %5923 = vmatmul.mubr.bf16.gmra.mrb[0].mxu0 %v5879
    %v5924 = vpop.f32.mrb[0].mxu0
    %v5925 = vadd.f32 0.0, %v5924
    %v5926 = vpop.f32.mrb[0].mxu0
    %v5927 = vpop.f32.mrb[0].mxu0
    %v5928 = vadd.f32 0.0, %v5927
    %v5929 = vpop.f32.mrb[0].mxu0
    %5930 = vmatprep.mubr.bf16.mxu0 0
    %5931 = vmatmul.mubr.bf16.gmra.mrb[0].mxu0 %v5882
    %v5932 = vpop.f32.mrb[0].mxu0
    %v5933 = vadd.f32 0.0, %v5932
    %v5934 = vpop.f32.mrb[0].mxu0
    %v5935 = vpop.f32.mrb[0].mxu0
    %v5936 = vadd.f32 0.0, %v5935
    %v5937 = vpop.f32.mrb[0].mxu0
    %5938 = vmatprep.mubr.bf16.mxu0 0
    %5939 = vmatmul.mubr.bf16.gmra.mrb[0].mxu0 %v5885
    %v5940 = vpop.f32.mrb[0].mxu0
    %v5941 = vadd.f32 0.0, %v5940
    %v5942 = vpop.f32.mrb[0].mxu0
    %v5943 = vpop.f32.mrb[0].mxu0
    %v5944 = vadd.f32 0.0, %v5943
    %v5945 = vpop.f32.mrb[0].mxu0
    %5946 = vmatprep.mubr.bf16.mxu0 0
    %5947 = vmatmul.mubr.bf16.gmra.mrb[0].mxu0 %v5888
    %v5948 = vpop.f32.mrb[0].mxu0
    %v5949 = vadd.f32 0.0, %v5948
    %v5950 = vpop.f32.mrb[0].mxu0
    %v5951 = vpop.f32.mrb[0].mxu0
    %v5952 = vadd.f32 0.0, %v5951
    %v5953 = vpop.f32.mrb[0].mxu0
    %5954 = vdwg.mxu0
    %v5955 = vpack.c.bf16 %v5928, %v5925
    %v5956 = vpack.c.bf16 %v5936, %v5933
    %v5957 = vpack.c.bf16 %v5944, %v5941
    %v5958 = vpack.c.bf16 %v5952, %v5949
    %5959 = vst.msk [vmem:[#allocation2 + $0x70] sm:$0xff] %vm2607, %v5955
    %5960 = vst.msk [vmem:[#allocation2 + $0x88] sm:$0xff] %vm2607, %v5956
    %5961 = vst.msk [vmem:[#allocation2 + $0xa0] sm:$0xff] %vm2607, %v5957
    %5962 = vst.msk [vmem:[#allocation2 + $0xb8] sm:$0xff] %vm2607, %v5958
    %5967 = vrot.lane.b32.xlu0 %v5677, 64
    %v5968 = vpop.permute.xlu0 %5967
    %5969 = vrot.lane.b32.xlu0 %v5678, 64
    %v5970 = vpop.permute.xlu0 %5969
    %5971 = vrot.lane.b32.xlu0 %v5679, 64
    %v5972 = vpop.permute.xlu0 %5971
    %5973 = vrot.lane.b32.xlu0 %v5680, 64
    %v5974 = vpop.permute.xlu0 %5973
    %5979 = vrot.lane.b32.xlu0 %v5681, 64
    %v5980 = vpop.permute.xlu0 %5979
    %5981 = vrot.lane.b32.xlu0 %v5682, 64
    %v5982 = vpop.permute.xlu0 %5981
    %5983 = vrot.lane.b32.xlu0 %v5683, 64
    %v5984 = vpop.permute.xlu0 %5983
    %5985 = vrot.lane.b32.xlu0 %v5684, 64
    %v5986 = vpop.permute.xlu0 %5985
    %v5988 = vsel %vm2607, %v5968, 0
    %v5991 = vsel %vm2607, %v5970, 0
    %v5994 = vsel %vm2607, %v5972, 0
    %v5997 = vsel %vm2607, %v5974, 0
    %v6000 = vsel %vm2607, %v5980, 0
    %v6003 = vsel %vm2607, %v5982, 0
    %v6006 = vsel %vm2607, %v5984, 0
    %v6009 = vsel %vm2607, %v5986, 0
    %6011 = vmatprep.subr.bf16.mxu0 0
    %6012 = vmatpush1.bf16.xpose.msra.mxu0 %v6000
    %6013 = vmatprep.subr.bf16.mxu0 0
    %6014 = vmatpush1.bf16.xpose.msra.mxu0 %v6003
    %6015 = vmatprep.subr.bf16.mxu0 0
    %6016 = vmatpush1.bf16.xpose.msra.mxu0 %v6006
    %6017 = vmatprep.subr.bf16.mxu0 0
    %6018 = vmatpush1.bf16.xpose.msra.mxu0 %v6009
    %6019 = vmatprep.subr.bf16.mxu0 0
    %6020 = vmatpush1.bf16.xpose.msra.mxu0 0
    %6021 = vmatprep.subr.bf16.mxu0 0
    %6022 = vmatpush1.bf16.xpose.msra.mxu0 0
    %6023 = vmatprep.subr.bf16.mxu0 0
    %6024 = vmatpush1.bf16.xpose.msra.mxu0 0
    %6025 = vmatprep.subr.bf16.mxu0 0
    %6026 = vmatpush1.bf16.xpose.msra.mxu0 0
    %6027 = vmatprep.subr.bf16.mxu0 0
    %6028 = vmatpush1.bf16.xpose.msra.mxu0 0
    %6029 = vmatprep.subr.bf16.mxu0 0
    %6030 = vmatpush1.bf16.xpose.msra.mxu0 0
    %6031 = vmatprep.subr.bf16.mxu0 0
    %6032 = vmatpush1.bf16.xpose.msra.mxu0 0
    %6033 = vmatprep.subr.bf16.mxu0 0
    %6034 = vmatpush1.bf16.xpose.msra.mxu0 0
    %6035 = vmatprep.subr.bf16.mxu0 0
    %6036 = vmatpush1.bf16.xpose.msra.mxu0 0
    %6037 = vmatprep.subr.bf16.mxu0 0
    %6038 = vmatpush1.bf16.xpose.msra.mxu0 0
    %6039 = vmatprep.subr.bf16.mxu0 0
    %6040 = vmatpush1.bf16.xpose.msra.mxu0 0
    %6041 = vmatprep.subr.bf16.mxu0 0
    %6042 = vmatpush1.bf16.xpose.msra.mxu0 0
    %6043 = vmatprep.mubr.bf16.mxu0 0
    %6044 = vmatmul.mubr.bf16.gmra.mrb[0].mxu0 %v5988
    %v6045 = vpop.f32.mrb[0].mxu0
    %v6046 = vadd.f32 0.0, %v6045
    %v6047 = vpop.f32.mrb[0].mxu0
    %v6048 = vpop.f32.mrb[0].mxu0
    %v6049 = vadd.f32 0.0, %v6048
    %v6050 = vpop.f32.mrb[0].mxu0
    %6051 = vmatprep.mubr.bf16.mxu0 0
    %6052 = vmatmul.mubr.bf16.gmra.mrb[0].mxu0 %v5991
    %v6053 = vpop.f32.mrb[0].mxu0
    %v6054 = vadd.f32 0.0, %v6053
    %v6055 = vpop.f32.mrb[0].mxu0
    %v6056 = vpop.f32.mrb[0].mxu0
    %v6057 = vadd.f32 0.0, %v6056
    %v6058 = vpop.f32.mrb[0].mxu0
    %6059 = vmatprep.mubr.bf16.mxu0 0
    %6060 = vmatmul.mubr.bf16.gmra.mrb[0].mxu0 %v5994
    %v6061 = vpop.f32.mrb[0].mxu0
    %v6062 = vadd.f32 0.0, %v6061
    %v6063 = vpop.f32.mrb[0].mxu0
    %v6064 = vpop.f32.mrb[0].mxu0
    %v6065 = vadd.f32 0.0, %v6064
    %v6066 = vpop.f32.mrb[0].mxu0
    %6067 = vmatprep.mubr.bf16.mxu0 0
    %6068 = vmatmul.mubr.bf16.gmra.mrb[0].mxu0 %v5997
    %v6069 = vpop.f32.mrb[0].mxu0
    %v6070 = vadd.f32 0.0, %v6069
    %v6071 = vpop.f32.mrb[0].mxu0
    %v6072 = vpop.f32.mrb[0].mxu0
    %v6073 = vadd.f32 0.0, %v6072
    %v6074 = vpop.f32.mrb[0].mxu0
    %6075 = vdwg.mxu0
    %v6076 = vsel %vm2587, %v6046, -1e+30
    %v6077 = vsel %vm2588, %v6049, -1e+30
    %v6078 = vsel %vm2589, %v6054, -1e+30
    %v6079 = vsel %vm2590, %v6057, -1e+30
    %v6080 = vsel %vm2591, %v6062, -1e+30
    %v6081 = vsel %vm2592, %v6065, -1e+30
    %v6082 = vsel %vm2593, %v6070, -1e+30
    %v6083 = vsel %vm2594, %v6073, -1e+30
    %v6084 = vsel %vm2607, %v6076, -inf
    %6085 = vmax.xlane.f32.xlu0 %v6084
    %v6086 = vpop.xlane.xlu0 %6085
    %v6087 = vsel %vm2607, %v6077, -inf
    %6088 = vmax.xlane.f32.xlu0 %v6087
    %v6089 = vpop.xlane.xlu0 %6088
    %v6090 = vsel %vm2607, %v6078, -inf
    %6091 = vmax.xlane.f32.xlu0 %v6090
    %v6092 = vpop.xlane.xlu0 %6091
    %v6093 = vsel %vm2607, %v6079, -inf
    %6094 = vmax.xlane.f32.xlu0 %v6093
    %v6095 = vpop.xlane.xlu0 %6094
    %v6096 = vsel %vm2607, %v6080, -inf
    %6097 = vmax.xlane.f32.xlu0 %v6096
    %v6098 = vpop.xlane.xlu0 %6097
    %v6099 = vsel %vm2607, %v6081, -inf
    %6100 = vmax.xlane.f32.xlu0 %v6099
    %v6101 = vpop.xlane.xlu0 %6100
    %v6102 = vsel %vm2607, %v6082, -inf
    %6103 = vmax.xlane.f32.xlu0 %v6102
    %v6104 = vpop.xlane.xlu0 %6103
    %v6105 = vsel %vm2607, %v6083, -inf
    %6106 = vmax.xlane.f32.xlu0 %v6105
    %v6107 = vpop.xlane.xlu0 %6106
    %v6108 = vsub.f32 %v6076, %v6086
    %v6109 = vsub.f32 %v6077, %v6089
    %v6110 = vsub.f32 %v6078, %v6092
    %v6111 = vsub.f32 %v6079, %v6095
    %v6112 = vsub.f32 %v6080, %v6098
    %v6113 = vsub.f32 %v6081, %v6101
    %v6114 = vsub.f32 %v6082, %v6104
    %v6115 = vsub.f32 %v6083, %v6107
    %v6116 = vmul.f32 %v6108, 1.442695
    %v6117 = vpow.pop %v6116
    %v6118 = vmul.f32 %v6109, 1.442695
    %v6119 = vpow.pop %v6118
    %v6120 = vmul.f32 %v6110, 1.442695
    %v6121 = vpow.pop %v6120
    %v6122 = vmul.f32 %v6111, 1.442695
    %v6123 = vpow.pop %v6122
    %v6124 = vmul.f32 %v6112, 1.442695
    %v6125 = vpow.pop %v6124
    %v6126 = vmul.f32 %v6113, 1.442695
    %v6127 = vpow.pop %v6126
    %v6128 = vmul.f32 %v6114, 1.442695
    %v6129 = vpow.pop %v6128
    %v6130 = vmul.f32 %v6115, 1.442695
    %v6131 = vpow.pop %v6130
    %v6132 = vsel %vm2607, %v6117, 0.0
    %6133 = vadd.xlane.f32.xlu0 %v6132
    %v6134 = vpop.xlane.xlu0 %6133
    %v6135 = vsel %vm2607, %v6119, 0.0
    %6136 = vadd.xlane.f32.xlu0 %v6135
    %v6137 = vpop.xlane.xlu0 %6136
    %v6138 = vsel %vm2607, %v6121, 0.0
    %6139 = vadd.xlane.f32.xlu0 %v6138
    %v6140 = vpop.xlane.xlu0 %6139
    %v6141 = vsel %vm2607, %v6123, 0.0
    %6142 = vadd.xlane.f32.xlu0 %v6141
    %v6143 = vpop.xlane.xlu0 %6142
    %v6144 = vsel %vm2607, %v6125, 0.0
    %6145 = vadd.xlane.f32.xlu0 %v6144
    %v6146 = vpop.xlane.xlu0 %6145
    %v6147 = vsel %vm2607, %v6127, 0.0
    %6148 = vadd.xlane.f32.xlu0 %v6147
    %v6149 = vpop.xlane.xlu0 %6148
    %v6150 = vsel %vm2607, %v6129, 0.0
    %6151 = vadd.xlane.f32.xlu0 %v6150
    %v6152 = vpop.xlane.xlu0 %6151
    %v6153 = vsel %vm2607, %v6131, 0.0
    %6154 = vadd.xlane.f32.xlu0 %v6153
    %v6155 = vpop.xlane.xlu0 %6154
    %v6156 = vrcp.pop %v6134
    %v6157 = vrcp.pop %v6137
    %v6158 = vrcp.pop %v6140
    %v6159 = vrcp.pop %v6143
    %v6160 = vrcp.pop %v6146
    %v6161 = vrcp.pop %v6149
    %v6162 = vrcp.pop %v6152
    %v6163 = vrcp.pop %v6155
    %v6164 = vmul.f32 %v6117, %v6156
    %v6165 = vmul.f32 %v6119, %v6157
    %v6166 = vmul.f32 %v6121, %v6158
    %v6167 = vmul.f32 %v6123, %v6159
    %v6168 = vmul.f32 %v6125, %v6160
    %v6169 = vmul.f32 %v6127, %v6161
    %v6170 = vmul.f32 %v6129, %v6162
    %v6171 = vmul.f32 %v6131, %v6163
    %v6172 = vpack.c.bf16 %v6165, %v6164
    %v6173 = vpack.c.bf16 %v6167, %v6166
    %v6174 = vpack.c.bf16 %v6169, %v6168
    %v6175 = vpack.c.bf16 %v6171, %v6170
    %6180 = vrot.lane.b32.xlu0 %v5685, 64
    %v6181 = vpop.permute.xlu0 %6180
    %6182 = vrot.lane.b32.xlu0 %v5686, 64
    %v6183 = vpop.permute.xlu0 %6182
    %6184 = vrot.lane.b32.xlu0 %v5687, 64
    %v6185 = vpop.permute.xlu0 %6184
    %6186 = vrot.lane.b32.xlu0 %v5688, 64
    %v6187 = vpop.permute.xlu0 %6186
    %v6193 = vsel %vm2607, %v6172, 0
    %v6196 = vsel %vm2607, %v6173, 0
    %v6199 = vsel %vm2607, %v6174, 0
    %v6202 = vsel %vm2607, %v6175, 0
    %6204 = vmatprep.subr.bf16.mxu0 0
    %6205 = vmatpush1.bf16.msra.mxu0 %v6181
    %6206 = vmatprep.subr.bf16.mxu0 0
    %6207 = vmatpush1.bf16.msra.mxu0 %v6183
    %6208 = vmatprep.subr.bf16.mxu0 0
    %6209 = vmatpush1.bf16.msra.mxu0 %v6185
    %6210 = vmatprep.subr.bf16.mxu0 0
    %6211 = vmatpush1.bf16.msra.mxu0 %v6187
    %6212 = vmatprep.subr.bf16.mxu0 0
    %6213 = vmatpush1.bf16.msra.mxu0 0
    %6214 = vmatprep.subr.bf16.mxu0 0
    %6215 = vmatpush1.bf16.msra.mxu0 0
    %6216 = vmatprep.subr.bf16.mxu0 0
    %6217 = vmatpush1.bf16.msra.mxu0 0
    %6218 = vmatprep.subr.bf16.mxu0 0
    %6219 = vmatpush1.bf16.msra.mxu0 0
    %6220 = vmatprep.subr.bf16.mxu0 0
    %6221 = vmatpush1.bf16.msra.mxu0 0
    %6222 = vmatprep.subr.bf16.mxu0 0
    %6223 = vmatpush1.bf16.msra.mxu0 0
    %6224 = vmatprep.subr.bf16.mxu0 0
    %6225 = vmatpush1.bf16.msra.mxu0 0
    %6226 = vmatprep.subr.bf16.mxu0 0
    %6227 = vmatpush1.bf16.msra.mxu0 0
    %6228 = vmatprep.subr.bf16.mxu0 0
    %6229 = vmatpush1.bf16.msra.mxu0 0
    %6230 = vmatprep.subr.bf16.mxu0 0
    %6231 = vmatpush1.bf16.msra.mxu0 0
    %6232 = vmatprep.subr.bf16.mxu0 0
    %6233 = vmatpush1.bf16.msra.mxu0 0
    %6234 = vmatprep.subr.bf16.mxu0 0
    %6235 = vmatpush1.bf16.msra.mxu0 0
    %6236 = vmatprep.mubr.bf16.mxu0 0
    %6237 = vmatmul.mubr.bf16.gmra.mrb[0].mxu0 %v6193
    %v6238 = vpop.f32.mrb[0].mxu0
    %v6239 = vadd.f32 0.0, %v6238
    %v6240 = vpop.f32.mrb[0].mxu0
    %v6241 = vpop.f32.mrb[0].mxu0
    %v6242 = vadd.f32 0.0, %v6241
    %v6243 = vpop.f32.mrb[0].mxu0
    %6244 = vmatprep.mubr.bf16.mxu0 0
    %6245 = vmatmul.mubr.bf16.gmra.mrb[0].mxu0 %v6196
    %v6246 = vpop.f32.mrb[0].mxu0
    %v6247 = vadd.f32 0.0, %v6246
    %v6248 = vpop.f32.mrb[0].mxu0
    %v6249 = vpop.f32.mrb[0].mxu0
    %v6250 = vadd.f32 0.0, %v6249
    %v6251 = vpop.f32.mrb[0].mxu0
    %6252 = vmatprep.mubr.bf16.mxu0 0
    %6253 = vmatmul.mubr.bf16.gmra.mrb[0].mxu0 %v6199
    %v6254 = vpop.f32.mrb[0].mxu0
    %v6255 = vadd.f32 0.0, %v6254
    %v6256 = vpop.f32.mrb[0].mxu0
    %v6257 = vpop.f32.mrb[0].mxu0
    %v6258 = vadd.f32 0.0, %v6257
    %v6259 = vpop.f32.mrb[0].mxu0
    %6260 = vmatprep.mubr.bf16.mxu0 0
    %6261 = vmatmul.mubr.bf16.gmra.mrb[0].mxu0 %v6202
    %v6262 = vpop.f32.mrb[0].mxu0
    %v6263 = vadd.f32 0.0, %v6262
    %v6264 = vpop.f32.mrb[0].mxu0
    %v6265 = vpop.f32.mrb[0].mxu0
    %v6266 = vadd.f32 0.0, %v6265
    %v6267 = vpop.f32.mrb[0].mxu0
    %6268 = vdwg.mxu0
    %v6269 = vpack.c.bf16 %v6242, %v6239
    %v6270 = vpack.c.bf16 %v6250, %v6247
    %v6271 = vpack.c.bf16 %v6258, %v6255
    %v6272 = vpack.c.bf16 %v6266, %v6263
    %6277 = vrot.lane.b32.xlu0 %v6269, 64
    %v6278 = vpop.permute.xlu0 %6277
    %6279 = vrot.lane.b32.xlu0 %v6270, 64
    %v6280 = vpop.permute.xlu0 %6279
    %6281 = vrot.lane.b32.xlu0 %v6271, 64
    %v6282 = vpop.permute.xlu0 %6281
    %6283 = vrot.lane.b32.xlu0 %v6272, 64
    %v6284 = vpop.permute.xlu0 %6283
    %6289 = vst.msk [vmem:[#allocation2 + $0x70] sm:$0xff] %vm3208, %v6278
    %6290 = vst.msk [vmem:[#allocation2 + $0x88] sm:$0xff] %vm3208, %v6280
    %6291 = vst.msk [vmem:[#allocation2 + $0xa0] sm:$0xff] %vm3208, %v6282
    %6292 = vst.msk [vmem:[#allocation2 + $0xb8] sm:$0xff] %vm3208, %v6284
    %v6293 = vld [vmem:[#allocation2] sm:$0xff]
    %v6294 = vld [vmem:[#allocation2 + $0x8] sm:$0xff]
    %v6295 = vld [vmem:[#allocation2 + $0x10] sm:$0xff]
    %v6296 = vld [vmem:[#allocation2 + $0x18] sm:$0xff]
    %v6297 = vld [vmem:[#allocation2 + $0x20] sm:$0xff]
    %v6298 = vld [vmem:[#allocation2 + $0x28] sm:$0xff]
    %v6299 = vld [vmem:[#allocation2 + $0x30] sm:$0xff]
    %v6300 = vld [vmem:[#allocation2 + $0x38] sm:$0xff]
    %v6301 = vld [vmem:[#allocation2 + $0x40] sm:$0xff]
    %v6302 = vld [vmem:[#allocation2 + $0x48] sm:$0xff]
    %v6303 = vld [vmem:[#allocation2 + $0x50] sm:$0xff]
    %v6304 = vld [vmem:[#allocation2 + $0x58] sm:$0xff]
    %v6305 = vld [vmem:[#allocation2 + $0x60] sm:$0xff]
    %v6306 = vld [vmem:[#allocation2 + $0x68] sm:$0xff]
    %v6307 = vld [vmem:[#allocation2 + $0x70] sm:$0xff]
    %v6308 = vld [vmem:[#allocation2 + $0x78] sm:$0xff]
    %v6309 = vld [vmem:[#allocation2 + $0x80] sm:$0xff]
    %v6310 = vld [vmem:[#allocation2 + $0x88] sm:$0xff]
    %v6311 = vld [vmem:[#allocation2 + $0x90] sm:$0xff]
    %v6312 = vld [vmem:[#allocation2 + $0x98] sm:$0xff]
    %v6313 = vld [vmem:[#allocation2 + $0xa0] sm:$0xff]
    %v6314 = vld [vmem:[#allocation2 + $0xa8] sm:$0xff]
    %v6315 = vld [vmem:[#allocation2 + $0xb0] sm:$0xff]
    %v6316 = vld [vmem:[#allocation2 + $0xb8] sm:$0xff]
    %v6317 = vld [vmem:[#allocation10] sm:$0xff]
    %v6318 = vld [vmem:[#allocation10 + $0x8] sm:$0xf]
    %v6319 = vld [vmem:[#allocation10 + $0xc] sm:$0xff]
    %v6320 = vld [vmem:[#allocation10 + $0x14] sm:$0xf]
    %v6321 = vld [vmem:[#allocation10 + $0x18] sm:$0xff]
    %v6322 = vld [vmem:[#allocation10 + $0x20] sm:$0xf]
    %v6323 = vld [vmem:[#allocation10 + $0x24] sm:$0xff]
    %v6324 = vld [vmem:[#allocation10 + $0x2c] sm:$0xf]
    %v6325 = vld [vmem:[#allocation10 + $0x30] sm:$0xff]
    %v6326 = vld [vmem:[#allocation10 + $0x38] sm:$0xf]
    %v6327 = vld [vmem:[#allocation10 + $0x3c] sm:$0xff]
    %v6328 = vld [vmem:[#allocation10 + $0x44] sm:$0xf]
    %v6329 = vld [vmem:[#allocation10 + $0x48] sm:$0xff]
    %v6330 = vld [vmem:[#allocation10 + $0x50] sm:$0xf]
    %v6331 = vld [vmem:[#allocation10 + $0x54] sm:$0xff]
    %v6332 = vld [vmem:[#allocation10 + $0x5c] sm:$0xf]
    %v6333 = vld [vmem:[#allocation10 + $0x60] sm:$0xff]
    %v6334 = vld [vmem:[#allocation10 + $0x68] sm:$0xf]
    %v6335 = vld [vmem:[#allocation10 + $0x6c] sm:$0xff]
    %v6336 = vld [vmem:[#allocation10 + $0x74] sm:$0xf]
    %v6337 = vld [vmem:[#allocation10 + $0x78] sm:$0xff]
    %v6338 = vld [vmem:[#allocation10 + $0x80] sm:$0xf]
    %v6339 = vld [vmem:[#allocation10 + $0x84] sm:$0xff]
    %v6340 = vld [vmem:[#allocation10 + $0x8c] sm:$0xf]
    %v6341 = vld [vmem:[#allocation10 + $0x90] sm:$0xff]
    %v6342 = vld [vmem:[#allocation10 + $0x98] sm:$0xf]
    %v6343 = vld [vmem:[#allocation10 + $0x9c] sm:$0xff]
    %v6344 = vld [vmem:[#allocation10 + $0xa4] sm:$0xf]
    %v6345 = vld [vmem:[#allocation10 + $0xa8] sm:$0xff]
    %v6346 = vld [vmem:[#allocation10 + $0xb0] sm:$0xf]
    %v6347 = vld [vmem:[#allocation10 + $0xb4] sm:$0xff]
    %v6348 = vld [vmem:[#allocation10 + $0xbc] sm:$0xf]
    %v6349 = vld [vmem:[#allocation10 + $0xc0] sm:$0xff]
    %v6350 = vld [vmem:[#allocation10 + $0xc8] sm:$0xf]
    %v6351 = vld [vmem:[#allocation10 + $0xcc] sm:$0xff]
    %v6352 = vld [vmem:[#allocation10 + $0xd4] sm:$0xf]
    %v6353 = vld [vmem:[#allocation10 + $0xd8] sm:$0xff]
    %v6354 = vld [vmem:[#allocation10 + $0xe0] sm:$0xf]
    %v6355 = vld [vmem:[#allocation10 + $0xe4] sm:$0xff]
    %v6356 = vld [vmem:[#allocation10 + $0xec] sm:$0xf]
    %v6357 = vld [vmem:[#allocation10 + $0xf0] sm:$0xff]
    %v6358 = vld [vmem:[#allocation10 + $0xf8] sm:$0xf]
    %v6359 = vld [vmem:[#allocation10 + $0xfc] sm:$0xff]
    %v6360 = vld [vmem:[#allocation10 + $0x104] sm:$0xf]
    %v6361 = vld [vmem:[#allocation10 + $0x108] sm:$0xff]
    %v6362 = vld [vmem:[#allocation10 + $0x110] sm:$0xf]
    %v6363 = vld [vmem:[#allocation10 + $0x114] sm:$0xff]
    %v6364 = vld [vmem:[#allocation10 + $0x11c] sm:$0xf]
    %v6365 = vld [vmem:[#allocation10 + $0x120] sm:$0xff]
    %v6366 = vld [vmem:[#allocation10 + $0x128] sm:$0xf]
    %v6367 = vld [vmem:[#allocation10 + $0x12c] sm:$0xff]
    %v6368 = vld [vmem:[#allocation10 + $0x134] sm:$0xf]
    %v6369 = vld [vmem:[#allocation10 + $0x138] sm:$0xff]
    %v6370 = vld [vmem:[#allocation10 + $0x140] sm:$0xf]
    %v6371 = vld [vmem:[#allocation10 + $0x144] sm:$0xff]
    %v6372 = vld [vmem:[#allocation10 + $0x14c] sm:$0xf]
    %v6373 = vld [vmem:[#allocation10 + $0x150] sm:$0xff]
    %v6374 = vld [vmem:[#allocation10 + $0x158] sm:$0xf]
    %v6375 = vld [vmem:[#allocation10 + $0x15c] sm:$0xff]
    %v6376 = vld [vmem:[#allocation10 + $0x164] sm:$0xf]
    %v6377 = vld [vmem:[#allocation10 + $0x168] sm:$0xff]
    %v6378 = vld [vmem:[#allocation10 + $0x170] sm:$0xf]
    %v6379 = vld [vmem:[#allocation10 + $0x174] sm:$0xff]
    %v6380 = vld [vmem:[#allocation10 + $0x17c] sm:$0xf]
    %v6381 = vld [vmem:[#allocation10 + $0x180] sm:$0xff]
    %v6382 = vld [vmem:[#allocation10 + $0x188] sm:$0xf]
    %v6383 = vld [vmem:[#allocation10 + $0x18c] sm:$0xff]
    %v6384 = vld [vmem:[#allocation10 + $0x194] sm:$0xf]
    %v6385 = vld [vmem:[#allocation10 + $0x198] sm:$0xff]
    %v6386 = vld [vmem:[#allocation10 + $0x1a0] sm:$0xf]
    %v6387 = vld [vmem:[#allocation10 + $0x1a4] sm:$0xff]
    %v6388 = vld [vmem:[#allocation10 + $0x1ac] sm:$0xf]
    %v6389 = vld [vmem:[#allocation10 + $0x1b0] sm:$0xff]
    %v6390 = vld [vmem:[#allocation10 + $0x1b8] sm:$0xf]
    %v6391 = vld [vmem:[#allocation10 + $0x1bc] sm:$0xff]
    %v6392 = vld [vmem:[#allocation10 + $0x1c4] sm:$0xf]
    %v6393 = vld [vmem:[#allocation10 + $0x1c8] sm:$0xff]
    %v6394 = vld [vmem:[#allocation10 + $0x1d0] sm:$0xf]
    %v6395 = vld [vmem:[#allocation10 + $0x1d4] sm:$0xff]
    %v6396 = vld [vmem:[#allocation10 + $0x1dc] sm:$0xf]
    %v6397 = vld [vmem:[#allocation10 + $0x1e0] sm:$0xff]
    %v6398 = vld [vmem:[#allocation10 + $0x1e8] sm:$0xf]
    %v6399 = vld [vmem:[#allocation10 + $0x1ec] sm:$0xff]
    %v6400 = vld [vmem:[#allocation10 + $0x1f4] sm:$0xf]
    %v6401 = vld [vmem:[#allocation10 + $0x1f8] sm:$0xff]
    %v6402 = vld [vmem:[#allocation10 + $0x200] sm:$0xf]
    %v6403 = vld [vmem:[#allocation10 + $0x204] sm:$0xff]
    %v6404 = vld [vmem:[#allocation10 + $0x20c] sm:$0xf]
    %v6405 = vld [vmem:[#allocation10 + $0x210] sm:$0xff]
    %v6406 = vld [vmem:[#allocation10 + $0x218] sm:$0xf]
    %v6407 = vld [vmem:[#allocation10 + $0x21c] sm:$0xff]
    %v6408 = vld [vmem:[#allocation10 + $0x224] sm:$0xf]
    %v6409 = vld [vmem:[#allocation10 + $0x228] sm:$0xff]
    %v6410 = vld [vmem:[#allocation10 + $0x230] sm:$0xf]
    %v6411 = vld [vmem:[#allocation10 + $0x234] sm:$0xff]
    %v6412 = vld [vmem:[#allocation10 + $0x23c] sm:$0xf]
    %v6413 = vld [vmem:[%s4] sm:$0x7]
    %v6415 = vlaneseq
    %v6416 = vshrl.u32 %v6415, 7
    %v6417 = vsub.s32 0, %v6416
    %v6418 = vrot.slane %v6413, %v6417
    %v6419 = vlaneseq
    %v6420 = vshrl.u32 %v6419, 7
    %v6421 = vsub.s32 1, %v6420
    %v6422 = vrot.slane %v6413, %v6421
    %v6423 = vlaneseq
    %v6424 = vshrl.u32 %v6423, 7
    %v6425 = vsub.s32 2, %v6424
    %v6426 = vrot.slane %v6413, %v6425
    %v6526 = vunpack.c.l.b16 %v6317
    %v6527 = vunpack.c.h.b16 %v6317
    %v6528 = vunpack.c.l.b16 %v6318
    %v6529 = vunpack.c.l.b16 %v6319
    %v6530 = vunpack.c.h.b16 %v6319
    %v6531 = vunpack.c.l.b16 %v6320
    %v6532 = vunpack.c.l.b16 %v6321
    %v6533 = vunpack.c.h.b16 %v6321
    %v6534 = vunpack.c.l.b16 %v6322
    %v6535 = vunpack.c.l.b16 %v6323
    %v6536 = vunpack.c.h.b16 %v6323
    %v6537 = vunpack.c.l.b16 %v6324
    %v6538 = vunpack.c.l.b16 %v6325
    %v6539 = vunpack.c.h.b16 %v6325
    %v6540 = vunpack.c.l.b16 %v6326
    %v6541 = vunpack.c.l.b16 %v6327
    %v6542 = vunpack.c.h.b16 %v6327
    %v6543 = vunpack.c.l.b16 %v6328
    %v6544 = vunpack.c.l.b16 %v6329
    %v6545 = vunpack.c.h.b16 %v6329
    %v6546 = vunpack.c.l.b16 %v6330
    %v6547 = vunpack.c.l.b16 %v6331
    %v6548 = vunpack.c.h.b16 %v6331
    %v6549 = vunpack.c.l.b16 %v6332
    %v6550 = vunpack.c.l.b16 %v6333
    %v6551 = vunpack.c.h.b16 %v6333
    %v6552 = vunpack.c.l.b16 %v6334
    %v6553 = vunpack.c.l.b16 %v6335
    %v6554 = vunpack.c.h.b16 %v6335
    %v6555 = vunpack.c.l.b16 %v6336
    %v6556 = vunpack.c.l.b16 %v6337
    %v6557 = vunpack.c.h.b16 %v6337
    %v6558 = vunpack.c.l.b16 %v6338
    %v6559 = vunpack.c.l.b16 %v6339
    %v6560 = vunpack.c.h.b16 %v6339
    %v6561 = vunpack.c.l.b16 %v6340
    %v6562 = vunpack.c.l.b16 %v6341
    %v6563 = vunpack.c.h.b16 %v6341
    %v6564 = vunpack.c.l.b16 %v6342
    %v6565 = vunpack.c.l.b16 %v6343
    %v6566 = vunpack.c.h.b16 %v6343
    %v6567 = vunpack.c.l.b16 %v6344
    %v6568 = vunpack.c.l.b16 %v6345
    %v6569 = vunpack.c.h.b16 %v6345
    %v6570 = vunpack.c.l.b16 %v6346
    %v6571 = vunpack.c.l.b16 %v6347
    %v6572 = vunpack.c.h.b16 %v6347
    %v6573 = vunpack.c.l.b16 %v6348
    %v6574 = vunpack.c.l.b16 %v6349
    %v6575 = vunpack.c.h.b16 %v6349
    %v6576 = vunpack.c.l.b16 %v6350
    %v6577 = vunpack.c.l.b16 %v6351
    %v6578 = vunpack.c.h.b16 %v6351
    %v6579 = vunpack.c.l.b16 %v6352
    %v6580 = vunpack.c.l.b16 %v6353
    %v6581 = vunpack.c.h.b16 %v6353
    %v6582 = vunpack.c.l.b16 %v6354
    %v6583 = vunpack.c.l.b16 %v6355
    %v6584 = vunpack.c.h.b16 %v6355
    %v6585 = vunpack.c.l.b16 %v6356
    %v6586 = vunpack.c.l.b16 %v6357
    %v6587 = vunpack.c.h.b16 %v6357
    %v6588 = vunpack.c.l.b16 %v6358
    %v6589 = vunpack.c.l.b16 %v6359
    %v6590 = vunpack.c.h.b16 %v6359
    %v6591 = vunpack.c.l.b16 %v6360
    %v6592 = vunpack.c.l.b16 %v6361
    %v6593 = vunpack.c.h.b16 %v6361
    %v6594 = vunpack.c.l.b16 %v6362
    %v6595 = vunpack.c.l.b16 %v6363
    %v6596 = vunpack.c.h.b16 %v6363
    %v6597 = vunpack.c.l.b16 %v6364
    %v6598 = vunpack.c.l.b16 %v6365
    %v6599 = vunpack.c.h.b16 %v6365
    %v6600 = vunpack.c.l.b16 %v6366
    %v6601 = vunpack.c.l.b16 %v6367
    %v6602 = vunpack.c.h.b16 %v6367
    %v6603 = vunpack.c.l.b16 %v6368
    %v6604 = vunpack.c.l.b16 %v6369
    %v6605 = vunpack.c.h.b16 %v6369
    %v6606 = vunpack.c.l.b16 %v6370
    %v6607 = vunpack.c.l.b16 %v6371
    %v6608 = vunpack.c.h.b16 %v6371
    %v6609 = vunpack.c.l.b16 %v6372
    %v6610 = vunpack.c.l.b16 %v6373
    %v6611 = vunpack.c.h.b16 %v6373
    %v6612 = vunpack.c.l.b16 %v6374
    %v6613 = vunpack.c.l.b16 %v6375
    %v6614 = vunpack.c.h.b16 %v6375
    %v6615 = vunpack.c.l.b16 %v6376
    %v6616 = vunpack.c.l.b16 %v6377
    %v6617 = vunpack.c.h.b16 %v6377
    %v6618 = vunpack.c.l.b16 %v6378
    %v6619 = vunpack.c.l.b16 %v6379
    %v6620 = vunpack.c.h.b16 %v6379
    %v6621 = vunpack.c.l.b16 %v6380
    %v6622 = vunpack.c.l.b16 %v6381
    %v6623 = vunpack.c.h.b16 %v6381
    %v6624 = vunpack.c.l.b16 %v6382
    %v6625 = vunpack.c.l.b16 %v6383
    %v6626 = vunpack.c.h.b16 %v6383
    %v6627 = vunpack.c.l.b16 %v6384
    %v6628 = vunpack.c.l.b16 %v6385
    %v6629 = vunpack.c.h.b16 %v6385
    %v6630 = vunpack.c.l.b16 %v6386
    %v6631 = vunpack.c.l.b16 %v6387
    %v6632 = vunpack.c.h.b16 %v6387
    %v6633 = vunpack.c.l.b16 %v6388
    %v6634 = vunpack.c.l.b16 %v6389
    %v6635 = vunpack.c.h.b16 %v6389
    %v6636 = vunpack.c.l.b16 %v6390
    %v6637 = vunpack.c.l.b16 %v6391
    %v6638 = vunpack.c.h.b16 %v6391
    %v6639 = vunpack.c.l.b16 %v6392
    %v6640 = vunpack.c.l.b16 %v6393
    %v6641 = vunpack.c.h.b16 %v6393
    %v6642 = vunpack.c.l.b16 %v6394
    %v6643 = vunpack.c.l.b16 %v6395
    %v6644 = vunpack.c.h.b16 %v6395
    %v6645 = vunpack.c.l.b16 %v6396
    %v6646 = vunpack.c.l.b16 %v6397
    %v6647 = vunpack.c.h.b16 %v6397
    %v6648 = vunpack.c.l.b16 %v6398
    %v6649 = vunpack.c.l.b16 %v6399
    %v6650 = vunpack.c.h.b16 %v6399
    %v6651 = vunpack.c.l.b16 %v6400
    %v6652 = vunpack.c.l.b16 %v6401
    %v6653 = vunpack.c.h.b16 %v6401
    %v6654 = vunpack.c.l.b16 %v6402
    %v6655 = vunpack.c.l.b16 %v6403
    %v6656 = vunpack.c.h.b16 %v6403
    %v6657 = vunpack.c.l.b16 %v6404
    %v6658 = vunpack.c.l.b16 %v6405
    %v6659 = vunpack.c.h.b16 %v6405
    %v6660 = vunpack.c.l.b16 %v6406
    %v6661 = vunpack.c.l.b16 %v6407
    %v6662 = vunpack.c.h.b16 %v6407
    %v6663 = vunpack.c.l.b16 %v6408
    %v6664 = vunpack.c.l.b16 %v6409
    %v6665 = vunpack.c.h.b16 %v6409
    %v6666 = vunpack.c.l.b16 %v6410
    %v6667 = vunpack.c.l.b16 %v6411
    %v6668 = vunpack.c.h.b16 %v6411
    %v6669 = vunpack.c.l.b16 %v6412
    %v6670 = vpack.c.b16 %v6529, %v6526
    %v6671 = vpack.c.b16 %v6530, %v6527
    %v6672 = vpack.c.b16 %v6531, %v6528
    %v6673 = vpack.c.b16 %v6535, %v6532
    %v6674 = vpack.c.b16 %v6536, %v6533
    %v6675 = vpack.c.b16 %v6537, %v6534
    %v6676 = vpack.c.b16 %v6541, %v6538
    %v6677 = vpack.c.b16 %v6542, %v6539
    %v6678 = vpack.c.b16 %v6543, %v6540
    %v6679 = vpack.c.b16 %v6547, %v6544
    %v6680 = vpack.c.b16 %v6548, %v6545
    %v6681 = vpack.c.b16 %v6549, %v6546
    %v6682 = vpack.c.b16 %v6553, %v6550
    %v6683 = vpack.c.b16 %v6554, %v6551
    %v6684 = vpack.c.b16 %v6555, %v6552
    %v6685 = vpack.c.b16 %v6559, %v6556
    %v6686 = vpack.c.b16 %v6560, %v6557
    %v6687 = vpack.c.b16 %v6561, %v6558
    %v6688 = vpack.c.b16 %v6565, %v6562
    %v6689 = vpack.c.b16 %v6566, %v6563
    %v6690 = vpack.c.b16 %v6567, %v6564
    %v6691 = vpack.c.b16 %v6571, %v6568
    %v6692 = vpack.c.b16 %v6572, %v6569
    %v6693 = vpack.c.b16 %v6573, %v6570
    %v6694 = vpack.c.b16 %v6577, %v6574
    %v6695 = vpack.c.b16 %v6578, %v6575
    %v6696 = vpack.c.b16 %v6579, %v6576
    %v6697 = vpack.c.b16 %v6583, %v6580
    %v6698 = vpack.c.b16 %v6584, %v6581
    %v6699 = vpack.c.b16 %v6585, %v6582
    %v6700 = vpack.c.b16 %v6589, %v6586
    %v6701 = vpack.c.b16 %v6590, %v6587
    %v6702 = vpack.c.b16 %v6591, %v6588
    %v6703 = vpack.c.b16 %v6595, %v6592
    %v6704 = vpack.c.b16 %v6596, %v6593
    %v6705 = vpack.c.b16 %v6597, %v6594
    %v6706 = vpack.c.b16 %v6601, %v6598
    %v6707 = vpack.c.b16 %v6602, %v6599
    %v6708 = vpack.c.b16 %v6603, %v6600
    %v6709 = vpack.c.b16 %v6607, %v6604
    %v6710 = vpack.c.b16 %v6608, %v6605
    %v6711 = vpack.c.b16 %v6609, %v6606
    %v6712 = vpack.c.b16 %v6613, %v6610
    %v6713 = vpack.c.b16 %v6614, %v6611
    %v6714 = vpack.c.b16 %v6615, %v6612
    %v6715 = vpack.c.b16 %v6619, %v6616
    %v6716 = vpack.c.b16 %v6620, %v6617
    %v6717 = vpack.c.b16 %v6621, %v6618
    %v6718 = vpack.c.b16 %v6625, %v6622
    %v6719 = vpack.c.b16 %v6626, %v6623
    %v6720 = vpack.c.b16 %v6627, %v6624
    %v6721 = vpack.c.b16 %v6631, %v6628
    %v6722 = vpack.c.b16 %v6632, %v6629
    %v6723 = vpack.c.b16 %v6633, %v6630
    %v6724 = vpack.c.b16 %v6637, %v6634
    %v6725 = vpack.c.b16 %v6638, %v6635
    %v6726 = vpack.c.b16 %v6639, %v6636
    %v6727 = vpack.c.b16 %v6643, %v6640
    %v6728 = vpack.c.b16 %v6644, %v6641
    %v6729 = vpack.c.b16 %v6645, %v6642
    %v6730 = vpack.c.b16 %v6649, %v6646
    %v6731 = vpack.c.b16 %v6650, %v6647
    %v6732 = vpack.c.b16 %v6651, %v6648
    %v6733 = vpack.c.b16 %v6655, %v6652
    %v6734 = vpack.c.b16 %v6656, %v6653
    %v6735 = vpack.c.b16 %v6657, %v6654
    %v6736 = vpack.c.b16 %v6661, %v6658
    %v6737 = vpack.c.b16 %v6662, %v6659
    %v6738 = vpack.c.b16 %v6663, %v6660
    %v6739 = vpack.c.b16 %v6667, %v6664
    %v6740 = vpack.c.b16 %v6668, %v6665
    %v6741 = vpack.c.b16 %v6669, %v6666
    %6814 = vmatprep.subr.bf16.mxu0 %v6671
    %6815 = vmatpush1.bf16.msra.mxu0 %v6670
    %6816 = vmatprep.subr.bf16.mxu0 %v6674
    %6817 = vmatpush1.bf16.msra.mxu0 %v6673
    %6818 = vmatprep.subr.bf16.mxu0 %v6677
    %6819 = vmatpush1.bf16.msra.mxu0 %v6676
    %6820 = vmatprep.subr.bf16.mxu0 %v6680
    %6821 = vmatpush1.bf16.msra.mxu0 %v6679
    %6822 = vmatprep.subr.bf16.mxu0 %v6683
    %6823 = vmatpush1.bf16.msra.mxu0 %v6682
    %6824 = vmatprep.subr.bf16.mxu0 %v6686
    %6825 = vmatpush1.bf16.msra.mxu0 %v6685
    %6826 = vmatprep.subr.bf16.mxu0 %v6689
    %6827 = vmatpush1.bf16.msra.mxu0 %v6688
    %6828 = vmatprep.subr.bf16.mxu0 %v6692
    %6829 = vmatpush1.bf16.msra.mxu0 %v6691
    %6830 = vmatprep.subr.bf16.mxu0 %v6695
    %6831 = vmatpush1.bf16.msra.mxu0 %v6694
    %6832 = vmatprep.subr.bf16.mxu0 %v6698
    %6833 = vmatpush1.bf16.msra.mxu0 %v6697
    %6834 = vmatprep.subr.bf16.mxu0 %v6701
    %6835 = vmatpush1.bf16.msra.mxu0 %v6700
    %6836 = vmatprep.subr.bf16.mxu0 %v6704
    %6837 = vmatpush1.bf16.msra.mxu0 %v6703
    %6838 = vmatprep.subr.bf16.mxu0 %v6707
    %6839 = vmatpush1.bf16.msra.mxu0 %v6706
    %6840 = vmatprep.subr.bf16.mxu0 %v6710
    %6841 = vmatpush1.bf16.msra.mxu0 %v6709
    %6842 = vmatprep.subr.bf16.mxu0 %v6713
    %6843 = vmatpush1.bf16.msra.mxu0 %v6712
    %6844 = vmatprep.subr.bf16.mxu0 %v6716
    %6845 = vmatpush1.bf16.msra.mxu0 %v6715
    %6846 = vmatprep.mubr.bf16.mxu0 %v6294
    %6847 = vmatmul.mubr.bf16.gmra.mrb[0].mxu0 %v6293
    %v6848 = vpop.f32.mrb[0].mxu0
    %v6849 = vadd.f32 %v6418, %v6848
    %v6850 = vpop.f32.mrb[0].mxu0
    %v6851 = vadd.f32 %v6422, %v6850
    %v6852 = vpop.f32.mrb[0].mxu0
    %v6853 = vadd.f32 %v6418, %v6852
    %v6854 = vpop.f32.mrb[0].mxu0
    %v6855 = vadd.f32 %v6422, %v6854
    %6856 = vmatprep.mubr.bf16.mxu0 %v6297
    %6857 = vmatmul.mubr.bf16.gmra.mrb[0].mxu0 %v6296
    %v6858 = vpop.f32.mrb[0].mxu0
    %v6859 = vadd.f32 %v6418, %v6858
    %v6860 = vpop.f32.mrb[0].mxu0
    %v6861 = vadd.f32 %v6422, %v6860
    %v6862 = vpop.f32.mrb[0].mxu0
    %v6863 = vadd.f32 %v6418, %v6862
    %v6864 = vpop.f32.mrb[0].mxu0
    %v6865 = vadd.f32 %v6422, %v6864
    %6866 = vmatprep.mubr.bf16.mxu0 %v6300
    %6867 = vmatmul.mubr.bf16.gmra.mrb[0].mxu0 %v6299
    %v6868 = vpop.f32.mrb[0].mxu0
    %v6869 = vadd.f32 %v6418, %v6868
    %v6870 = vpop.f32.mrb[0].mxu0
    %v6871 = vadd.f32 %v6422, %v6870
    %v6872 = vpop.f32.mrb[0].mxu0
    %v6873 = vadd.f32 %v6418, %v6872
    %v6874 = vpop.f32.mrb[0].mxu0
    %v6875 = vadd.f32 %v6422, %v6874
    %6876 = vmatprep.mubr.bf16.mxu0 %v6303
    %6877 = vmatmul.mubr.bf16.gmra.mrb[0].mxu0 %v6302
    %v6878 = vpop.f32.mrb[0].mxu0
    %v6879 = vadd.f32 %v6418, %v6878
    %v6880 = vpop.f32.mrb[0].mxu0
    %v6881 = vadd.f32 %v6422, %v6880
    %v6882 = vpop.f32.mrb[0].mxu0
    %v6883 = vadd.f32 %v6418, %v6882
    %v6884 = vpop.f32.mrb[0].mxu0
    %v6885 = vadd.f32 %v6422, %v6884
    %6886 = vmatprep.mubr.bf16.mxu0 %v6306
    %6887 = vmatmul.mubr.bf16.gmra.mrb[0].mxu0 %v6305
    %v6888 = vpop.f32.mrb[0].mxu0
    %v6889 = vadd.f32 %v6418, %v6888
    %v6890 = vpop.f32.mrb[0].mxu0
    %v6891 = vadd.f32 %v6422, %v6890
    %v6892 = vpop.f32.mrb[0].mxu0
    %v6893 = vadd.f32 %v6418, %v6892
    %v6894 = vpop.f32.mrb[0].mxu0
    %v6895 = vadd.f32 %v6422, %v6894
    %6896 = vmatprep.mubr.bf16.mxu0 %v6309
    %6897 = vmatmul.mubr.bf16.gmra.mrb[0].mxu0 %v6308
    %v6898 = vpop.f32.mrb[0].mxu0
    %v6899 = vadd.f32 %v6418, %v6898
    %v6900 = vpop.f32.mrb[0].mxu0
    %v6901 = vadd.f32 %v6422, %v6900
    %v6902 = vpop.f32.mrb[0].mxu0
    %v6903 = vadd.f32 %v6418, %v6902
    %v6904 = vpop.f32.mrb[0].mxu0
    %v6905 = vadd.f32 %v6422, %v6904
    %6906 = vmatprep.mubr.bf16.mxu0 %v6312
    %6907 = vmatmul.mubr.bf16.gmra.mrb[0].mxu0 %v6311
    %v6908 = vpop.f32.mrb[0].mxu0
    %v6909 = vadd.f32 %v6418, %v6908
    %v6910 = vpop.f32.mrb[0].mxu0
    %v6911 = vadd.f32 %v6422, %v6910
    %v6912 = vpop.f32.mrb[0].mxu0
    %v6913 = vadd.f32 %v6418, %v6912
    %v6914 = vpop.f32.mrb[0].mxu0
    %v6915 = vadd.f32 %v6422, %v6914
    %6916 = vmatprep.mubr.bf16.mxu0 %v6315
    %6917 = vmatmul.mubr.bf16.gmra.mrb[0].mxu0 %v6314
    %v6918 = vpop.f32.mrb[0].mxu0
    %v6919 = vadd.f32 %v6418, %v6918
    %v6920 = vpop.f32.mrb[0].mxu0
    %v6921 = vadd.f32 %v6422, %v6920
    %v6922 = vpop.f32.mrb[0].mxu0
    %v6923 = vadd.f32 %v6418, %v6922
    %v6924 = vpop.f32.mrb[0].mxu0
    %v6925 = vadd.f32 %v6422, %v6924
    %6926 = vdwg.mxu0
    %6927 = vmatprep.subr.bf16.mxu0 %v6719
    %6928 = vmatpush1.bf16.msra.mxu0 %v6718
    %6929 = vmatprep.subr.bf16.mxu0 %v6722
    %6930 = vmatpush1.bf16.msra.mxu0 %v6721
    %6931 = vmatprep.subr.bf16.mxu0 %v6725
    %6932 = vmatpush1.bf16.msra.mxu0 %v6724
    %6933 = vmatprep.subr.bf16.mxu0 %v6728
    %6934 = vmatpush1.bf16.msra.mxu0 %v6727
    %6935 = vmatprep.subr.bf16.mxu0 %v6731
    %6936 = vmatpush1.bf16.msra.mxu0 %v6730
    %6937 = vmatprep.subr.bf16.mxu0 %v6734
    %6938 = vmatpush1.bf16.msra.mxu0 %v6733
    %6939 = vmatprep.subr.bf16.mxu0 %v6737
    %6940 = vmatpush1.bf16.msra.mxu0 %v6736
    %6941 = vmatprep.subr.bf16.mxu0 %v6740
    %6942 = vmatpush1.bf16.msra.mxu0 %v6739
    %6943 = vmatprep.subr.bf16.mxu0 0
    %6944 = vmatpush1.bf16.msra.mxu0 0
    %6945 = vmatprep.subr.bf16.mxu0 0
    %6946 = vmatpush1.bf16.msra.mxu0 0
    %6947 = vmatprep.subr.bf16.mxu0 0
    %6948 = vmatpush1.bf16.msra.mxu0 0
    %6949 = vmatprep.subr.bf16.mxu0 0
    %6950 = vmatpush1.bf16.msra.mxu0 0
    %6951 = vmatprep.subr.bf16.mxu0 0
    %6952 = vmatpush1.bf16.msra.mxu0 0
    %6953 = vmatprep.subr.bf16.mxu0 0
    %6954 = vmatpush1.bf16.msra.mxu0 0
    %6955 = vmatprep.subr.bf16.mxu0 0
    %6956 = vmatpush1.bf16.msra.mxu0 0
    %6957 = vmatprep.subr.bf16.mxu0 0
    %6958 = vmatpush1.bf16.msra.mxu0 0
    %6959 = vmatprep.mubr.bf16.mxu0 0
    %6960 = vmatmul.mubr.bf16.gmra.mrb[0].mxu0 %v6295
    %v6961 = vpop.f32.mrb[0].mxu0
    %v6962 = vadd.f32 %v6849, %v6961
    %v6963 = vpop.f32.mrb[0].mxu0
    %v6964 = vadd.f32 %v6851, %v6963
    %v6965 = vpop.f32.mrb[0].mxu0
    %v6966 = vadd.f32 %v6853, %v6965
    %v6967 = vpop.f32.mrb[0].mxu0
    %v6968 = vadd.f32 %v6855, %v6967
    %6969 = vmatprep.mubr.bf16.mxu0 0
    %6970 = vmatmul.mubr.bf16.gmra.mrb[0].mxu0 %v6298
    %v6971 = vpop.f32.mrb[0].mxu0
    %v6972 = vadd.f32 %v6859, %v6971
    %v6973 = vpop.f32.mrb[0].mxu0
    %v6974 = vadd.f32 %v6861, %v6973
    %v6975 = vpop.f32.mrb[0].mxu0
    %v6976 = vadd.f32 %v6863, %v6975
    %v6977 = vpop.f32.mrb[0].mxu0
    %v6978 = vadd.f32 %v6865, %v6977
    %6979 = vmatprep.mubr.bf16.mxu0 0
    %6980 = vmatmul.mubr.bf16.gmra.mrb[0].mxu0 %v6301
    %v6981 = vpop.f32.mrb[0].mxu0
    %v6982 = vadd.f32 %v6869, %v6981
    %v6983 = vpop.f32.mrb[0].mxu0
    %v6984 = vadd.f32 %v6871, %v6983
    %v6985 = vpop.f32.mrb[0].mxu0
    %v6986 = vadd.f32 %v6873, %v6985
    %v6987 = vpop.f32.mrb[0].mxu0
    %v6988 = vadd.f32 %v6875, %v6987
    %6989 = vmatprep.mubr.bf16.mxu0 0
    %6990 = vmatmul.mubr.bf16.gmra.mrb[0].mxu0 %v6304
    %v6991 = vpop.f32.mrb[0].mxu0
    %v6992 = vadd.f32 %v6879, %v6991
    %v6993 = vpop.f32.mrb[0].mxu0
    %v6994 = vadd.f32 %v6881, %v6993
    %v6995 = vpop.f32.mrb[0].mxu0
    %v6996 = vadd.f32 %v6883, %v6995
    %v6997 = vpop.f32.mrb[0].mxu0
    %v6998 = vadd.f32 %v6885, %v6997
    %6999 = vmatprep.mubr.bf16.mxu0 0
    %7000 = vmatmul.mubr.bf16.gmra.mrb[0].mxu0 %v6307
    %v7001 = vpop.f32.mrb[0].mxu0
    %v7002 = vadd.f32 %v6889, %v7001
    %v7003 = vpop.f32.mrb[0].mxu0
    %v7004 = vadd.f32 %v6891, %v7003
    %v7005 = vpop.f32.mrb[0].mxu0
    %v7006 = vadd.f32 %v6893, %v7005
    %v7007 = vpop.f32.mrb[0].mxu0
    %v7008 = vadd.f32 %v6895, %v7007
    %7009 = vmatprep.mubr.bf16.mxu0 0
    %7010 = vmatmul.mubr.bf16.gmra.mrb[0].mxu0 %v6310
    %v7011 = vpop.f32.mrb[0].mxu0
    %v7012 = vadd.f32 %v6899, %v7011
    %v7013 = vpop.f32.mrb[0].mxu0
    %v7014 = vadd.f32 %v6901, %v7013
    %v7015 = vpop.f32.mrb[0].mxu0
    %v7016 = vadd.f32 %v6903, %v7015
    %v7017 = vpop.f32.mrb[0].mxu0
    %v7018 = vadd.f32 %v6905, %v7017
    %7019 = vmatprep.mubr.bf16.mxu0 0
    %7020 = vmatmul.mubr.bf16.gmra.mrb[0].mxu0 %v6313
    %v7021 = vpop.f32.mrb[0].mxu0
    %v7022 = vadd.f32 %v6909, %v7021
    %v7023 = vpop.f32.mrb[0].mxu0
    %v7024 = vadd.f32 %v6911, %v7023
    %v7025 = vpop.f32.mrb[0].mxu0
    %v7026 = vadd.f32 %v6913, %v7025
    %v7027 = vpop.f32.mrb[0].mxu0
    %v7028 = vadd.f32 %v6915, %v7027
    %7029 = vmatprep.mubr.bf16.mxu0 0
    %7030 = vmatmul.mubr.bf16.gmra.mrb[0].mxu0 %v6316
    %v7031 = vpop.f32.mrb[0].mxu0
    %v7032 = vadd.f32 %v6919, %v7031
    %v7033 = vpop.f32.mrb[0].mxu0
    %v7034 = vadd.f32 %v6921, %v7033
    %v7035 = vpop.f32.mrb[0].mxu0
    %v7036 = vadd.f32 %v6923, %v7035
    %v7037 = vpop.f32.mrb[0].mxu0
    %v7038 = vadd.f32 %v6925, %v7037
    %7039 = vdwg.mxu0
    %7040 = vmatprep.subr.bf16.mxu0 0
    %7041 = vmatpush1.bf16.msra.mxu0 %v6672
    %7042 = vmatprep.subr.bf16.mxu0 0
    %7043 = vmatpush1.bf16.msra.mxu0 %v6675
    %7044 = vmatprep.subr.bf16.mxu0 0
    %7045 = vmatpush1.bf16.msra.mxu0 %v6678
    %7046 = vmatprep.subr.bf16.mxu0 0
    %7047 = vmatpush1.bf16.msra.mxu0 %v6681
    %7048 = vmatprep.subr.bf16.mxu0 0
    %7049 = vmatpush1.bf16.msra.mxu0 %v6684
    %7050 = vmatprep.subr.bf16.mxu0 0
    %7051 = vmatpush1.bf16.msra.mxu0 %v6687
    %7052 = vmatprep.subr.bf16.mxu0 0
    %7053 = vmatpush1.bf16.msra.mxu0 %v6690
    %7054 = vmatprep.subr.bf16.mxu0 0
    %7055 = vmatpush1.bf16.msra.mxu0 %v6693
    %7056 = vmatprep.subr.bf16.mxu0 0
    %7057 = vmatpush1.bf16.msra.mxu0 %v6696
    %7058 = vmatprep.subr.bf16.mxu0 0
    %7059 = vmatpush1.bf16.msra.mxu0 %v6699
    %7060 = vmatprep.subr.bf16.mxu0 0
    %7061 = vmatpush1.bf16.msra.mxu0 %v6702
    %7062 = vmatprep.subr.bf16.mxu0 0
    %7063 = vmatpush1.bf16.msra.mxu0 %v6705
    %7064 = vmatprep.subr.bf16.mxu0 0
    %7065 = vmatpush1.bf16.msra.mxu0 %v6708
    %7066 = vmatprep.subr.bf16.mxu0 0
    %7067 = vmatpush1.bf16.msra.mxu0 %v6711
    %7068 = vmatprep.subr.bf16.mxu0 0
    %7069 = vmatpush1.bf16.msra.mxu0 %v6714
    %7070 = vmatprep.subr.bf16.mxu0 0
    %7071 = vmatpush1.bf16.msra.mxu0 %v6717
    %7072 = vmatprep.mubr.bf16.mxu0 %v6294
    %7073 = vmatmul.mubr.bf16.gmra.mrb[0].mxu0 %v6293
    %v7074 = vpop.f32.mrb[0].mxu0
    %v7075 = vadd.f32 %v6426, %v7074
    %v7076 = vpop.f32.mrb[0].mxu0
    %v7077 = vpop.f32.mrb[0].mxu0
    %v7078 = vadd.f32 %v6426, %v7077
    %v7079 = vpop.f32.mrb[0].mxu0
    %7080 = vmatprep.mubr.bf16.mxu0 %v6297
    %7081 = vmatmul.mubr.bf16.gmra.mrb[0].mxu0 %v6296
    %v7082 = vpop.f32.mrb[0].mxu0
    %v7083 = vadd.f32 %v6426, %v7082
    %v7084 = vpop.f32.mrb[0].mxu0
    %v7085 = vpop.f32.mrb[0].mxu0
    %v7086 = vadd.f32 %v6426, %v7085
    %v7087 = vpop.f32.mrb[0].mxu0
    %7088 = vmatprep.mubr.bf16.mxu0 %v6300
    %7089 = vmatmul.mubr.bf16.gmra.mrb[0].mxu0 %v6299
    %v7090 = vpop.f32.mrb[0].mxu0
    %v7091 = vadd.f32 %v6426, %v7090
    %v7092 = vpop.f32.mrb[0].mxu0
    %v7093 = vpop.f32.mrb[0].mxu0
    %v7094 = vadd.f32 %v6426, %v7093
    %v7095 = vpop.f32.mrb[0].mxu0
    %7096 = vmatprep.mubr.bf16.mxu0 %v6303
    %7097 = vmatmul.mubr.bf16.gmra.mrb[0].mxu0 %v6302
    %v7098 = vpop.f32.mrb[0].mxu0
    %v7099 = vadd.f32 %v6426, %v7098
    %v7100 = vpop.f32.mrb[0].mxu0
    %v7101 = vpop.f32.mrb[0].mxu0
    %v7102 = vadd.f32 %v6426, %v7101
    %v7103 = vpop.f32.mrb[0].mxu0
    %7104 = vmatprep.mubr.bf16.mxu0 %v6306
    %7105 = vmatmul.mubr.bf16.gmra.mrb[0].mxu0 %v6305
    %v7106 = vpop.f32.mrb[0].mxu0
    %v7107 = vadd.f32 %v6426, %v7106
    %v7108 = vpop.f32.mrb[0].mxu0
    %v7109 = vpop.f32.mrb[0].mxu0
    %v7110 = vadd.f32 %v6426, %v7109
    %v7111 = vpop.f32.mrb[0].mxu0
    %7112 = vmatprep.mubr.bf16.mxu0 %v6309
    %7113 = vmatmul.mubr.bf16.gmra.mrb[0].mxu0 %v6308
    %v7114 = vpop.f32.mrb[0].mxu0
    %v7115 = vadd.f32 %v6426, %v7114
    %v7116 = vpop.f32.mrb[0].mxu0
    %v7117 = vpop.f32.mrb[0].mxu0
    %v7118 = vadd.f32 %v6426, %v7117
    %v7119 = vpop.f32.mrb[0].mxu0
    %7120 = vmatprep.mubr.bf16.mxu0 %v6312
    %7121 = vmatmul.mubr.bf16.gmra.mrb[0].mxu0 %v6311
    %v7122 = vpop.f32.mrb[0].mxu0
    %v7123 = vadd.f32 %v6426, %v7122
    %v7124 = vpop.f32.mrb[0].mxu0
    %v7125 = vpop.f32.mrb[0].mxu0
    %v7126 = vadd.f32 %v6426, %v7125
    %v7127 = vpop.f32.mrb[0].mxu0
    %7128 = vmatprep.mubr.bf16.mxu0 %v6315
    %7129 = vmatmul.mubr.bf16.gmra.mrb[0].mxu0 %v6314
    %v7130 = vpop.f32.mrb[0].mxu0
    %v7131 = vadd.f32 %v6426, %v7130
    %v7132 = vpop.f32.mrb[0].mxu0
    %v7133 = vpop.f32.mrb[0].mxu0
    %v7134 = vadd.f32 %v6426, %v7133
    %v7135 = vpop.f32.mrb[0].mxu0
    %7136 = vdwg.mxu0
    %7137 = vmatprep.subr.bf16.mxu0 0
    %7138 = vmatpush1.bf16.msra.mxu0 %v6720
    %7139 = vmatprep.subr.bf16.mxu0 0
    %7140 = vmatpush1.bf16.msra.mxu0 %v6723
    %7141 = vmatprep.subr.bf16.mxu0 0
    %7142 = vmatpush1.bf16.msra.mxu0 %v6726
    %7143 = vmatprep.subr.bf16.mxu0 0
    %7144 = vmatpush1.bf16.msra.mxu0 %v6729
    %7145 = vmatprep.subr.bf16.mxu0 0
    %7146 = vmatpush1.bf16.msra.mxu0 %v6732
    %7147 = vmatprep.subr.bf16.mxu0 0
    %7148 = vmatpush1.bf16.msra.mxu0 %v6735
    %7149 = vmatprep.subr.bf16.mxu0 0
    %7150 = vmatpush1.bf16.msra.mxu0 %v6738
    %7151 = vmatprep.subr.bf16.mxu0 0
    %7152 = vmatpush1.bf16.msra.mxu0 %v6741
    %7153 = vmatprep.subr.bf16.mxu0 0
    %7154 = vmatpush1.bf16.msra.mxu0 0
    %7155 = vmatprep.subr.bf16.mxu0 0
    %7156 = vmatpush1.bf16.msra.mxu0 0
    %7157 = vmatprep.subr.bf16.mxu0 0
    %7158 = vmatpush1.bf16.msra.mxu0 0
    %7159 = vmatprep.subr.bf16.mxu0 0
    %7160 = vmatpush1.bf16.msra.mxu0 0
    %7161 = vmatprep.subr.bf16.mxu0 0
    %7162 = vmatpush1.bf16.msra.mxu0 0
    %7163 = vmatprep.subr.bf16.mxu0 0
    %7164 = vmatpush1.bf16.msra.mxu0 0
    %7165 = vmatprep.subr.bf16.mxu0 0
    %7166 = vmatpush1.bf16.msra.mxu0 0
    %7167 = vmatprep.subr.bf16.mxu0 0
    %7168 = vmatpush1.bf16.msra.mxu0 0
    %7169 = vmatprep.mubr.bf16.mxu0 0
    %7170 = vmatmul.mubr.bf16.gmra.mrb[0].mxu0 %v6295
    %v7171 = vpop.f32.mrb[0].mxu0
    %v7172 = vadd.f32 %v7075, %v7171
    %v7173 = vpop.f32.mrb[0].mxu0
    %v7174 = vpop.f32.mrb[0].mxu0
    %v7175 = vadd.f32 %v7078, %v7174
    %v7176 = vpop.f32.mrb[0].mxu0
    %7177 = vmatprep.mubr.bf16.mxu0 0
    %7178 = vmatmul.mubr.bf16.gmra.mrb[0].mxu0 %v6298
    %v7179 = vpop.f32.mrb[0].mxu0
    %v7180 = vadd.f32 %v7083, %v7179
    %v7181 = vpop.f32.mrb[0].mxu0
    %v7182 = vpop.f32.mrb[0].mxu0
    %v7183 = vadd.f32 %v7086, %v7182
    %v7184 = vpop.f32.mrb[0].mxu0
    %7185 = vmatprep.mubr.bf16.mxu0 0
    %7186 = vmatmul.mubr.bf16.gmra.mrb[0].mxu0 %v6301
    %v7187 = vpop.f32.mrb[0].mxu0
    %v7188 = vadd.f32 %v7091, %v7187
    %v7189 = vpop.f32.mrb[0].mxu0
    %v7190 = vpop.f32.mrb[0].mxu0
    %v7191 = vadd.f32 %v7094, %v7190
    %v7192 = vpop.f32.mrb[0].mxu0
    %7193 = vmatprep.mubr.bf16.mxu0 0
    %7194 = vmatmul.mubr.bf16.gmra.mrb[0].mxu0 %v6304
    %v7195 = vpop.f32.mrb[0].mxu0
    %v7196 = vadd.f32 %v7099, %v7195
    %v7197 = vpop.f32.mrb[0].mxu0
    %v7198 = vpop.f32.mrb[0].mxu0
    %v7199 = vadd.f32 %v7102, %v7198
    %v7200 = vpop.f32.mrb[0].mxu0
    %7201 = vmatprep.mubr.bf16.mxu0 0
    %7202 = vmatmul.mubr.bf16.gmra.mrb[0].mxu0 %v6307
    %v7203 = vpop.f32.mrb[0].mxu0
    %v7204 = vadd.f32 %v7107, %v7203
    %v7205 = vpop.f32.mrb[0].mxu0
    %v7206 = vpop.f32.mrb[0].mxu0
    %v7207 = vadd.f32 %v7110, %v7206
    %v7208 = vpop.f32.mrb[0].mxu0
    %7209 = vmatprep.mubr.bf16.mxu0 0
    %7210 = vmatmul.mubr.bf16.gmra.mrb[0].mxu0 %v6310
    %v7211 = vpop.f32.mrb[0].mxu0
    %v7212 = vadd.f32 %v7115, %v7211
    %v7213 = vpop.f32.mrb[0].mxu0
    %v7214 = vpop.f32.mrb[0].mxu0
    %v7215 = vadd.f32 %v7118, %v7214
    %v7216 = vpop.f32.mrb[0].mxu0
    %7217 = vmatprep.mubr.bf16.mxu0 0
    %7218 = vmatmul.mubr.bf16.gmra.mrb[0].mxu0 %v6313
    %v7219 = vpop.f32.mrb[0].mxu0
    %v7220 = vadd.f32 %v7123, %v7219
    %v7221 = vpop.f32.mrb[0].mxu0
    %v7222 = vpop.f32.mrb[0].mxu0
    %v7223 = vadd.f32 %v7126, %v7222
    %v7224 = vpop.f32.mrb[0].mxu0
    %7225 = vmatprep.mubr.bf16.mxu0 0
    %7226 = vmatmul.mubr.bf16.gmra.mrb[0].mxu0 %v6316
    %v7227 = vpop.f32.mrb[0].mxu0
    %v7228 = vadd.f32 %v7131, %v7227
    %v7229 = vpop.f32.mrb[0].mxu0
    %v7230 = vpop.f32.mrb[0].mxu0
    %v7231 = vadd.f32 %v7134, %v7230
    %v7232 = vpop.f32.mrb[0].mxu0
    %7233 = vdwg.mxu0
    %7234 = vst [vmem:[#allocation11] sm:$0xff] %v6962
    %7235 = vst [vmem:[#allocation11 + $0x8] sm:$0xff] %v6964
    %7236 = vst [vmem:[#allocation11 + $0x10] sm:$0xff] %v7172
    %7237 = vst [vmem:[#allocation11 + $0x18] sm:$0xff] %v6966
    %7238 = vst [vmem:[#allocation11 + $0x20] sm:$0xff] %v6968
    %7239 = vst [vmem:[#allocation11 + $0x28] sm:$0xff] %v7175
    %7240 = vst [vmem:[#allocation11 + $0x30] sm:$0xff] %v6972
    %7241 = vst [vmem:[#allocation11 + $0x38] sm:$0xff] %v6974
    %7242 = vst [vmem:[#allocation11 + $0x40] sm:$0xff] %v7180
    %7243 = vst [vmem:[#allocation11 + $0x48] sm:$0xff] %v6976
    %7244 = vst [vmem:[#allocation11 + $0x50] sm:$0xff] %v6978
    %7245 = vst [vmem:[#allocation11 + $0x58] sm:$0xff] %v7183
    %7246 = vst [vmem:[#allocation11 + $0x60] sm:$0xff] %v6982
    %7247 = vst [vmem:[#allocation11 + $0x68] sm:$0xff] %v6984
    %7248 = vst [vmem:[#allocation11 + $0x70] sm:$0xff] %v7188
    %7249 = vst [vmem:[#allocation11 + $0x78] sm:$0xff] %v6986
    %7250 = vst [vmem:[#allocation11 + $0x80] sm:$0xff] %v6988
    %7251 = vst [vmem:[#allocation11 + $0x88] sm:$0xff] %v7191
    %7252 = vst [vmem:[#allocation11 + $0x90] sm:$0xff] %v6992
    %7253 = vst [vmem:[#allocation11 + $0x98] sm:$0xff] %v6994
    %7254 = vst [vmem:[#allocation11 + $0xa0] sm:$0xff] %v7196
    %7255 = vst [vmem:[#allocation11 + $0xa8] sm:$0xff] %v6996
    %7256 = vst [vmem:[#allocation11 + $0xb0] sm:$0xff] %v6998
    %7257 = vst [vmem:[#allocation11 + $0xb8] sm:$0xff] %v7199
    %7258 = vst [vmem:[#allocation11 + $0xc0] sm:$0xff] %v7002
    %7259 = vst [vmem:[#allocation11 + $0xc8] sm:$0xff] %v7004
    %7260 = vst [vmem:[#allocation11 + $0xd0] sm:$0xff] %v7204
    %7261 = vst [vmem:[#allocation11 + $0xd8] sm:$0xff] %v7006
    %7262 = vst [vmem:[#allocation11 + $0xe0] sm:$0xff] %v7008
    %7263 = vst [vmem:[#allocation11 + $0xe8] sm:$0xff] %v7207
    %7264 = vst [vmem:[#allocation11 + $0xf0] sm:$0xff] %v7012
    %7265 = vst [vmem:[#allocation11 + $0xf8] sm:$0xff] %v7014
    %7266 = vst [vmem:[#allocation11 + $0x100] sm:$0xff] %v7212
    %7267 = vst [vmem:[#allocation11 + $0x108] sm:$0xff] %v7016
    %7268 = vst [vmem:[#allocation11 + $0x110] sm:$0xff] %v7018
    %7269 = vst [vmem:[#allocation11 + $0x118] sm:$0xff] %v7215
    %7270 = vst [vmem:[#allocation11 + $0x120] sm:$0xff] %v7022
    %7271 = vst [vmem:[#allocation11 + $0x128] sm:$0xff] %v7024
    %7272 = vst [vmem:[#allocation11 + $0x130] sm:$0xff] %v7220
    %7273 = vst [vmem:[#allocation11 + $0x138] sm:$0xff] %v7026
    %7274 = vst [vmem:[#allocation11 + $0x140] sm:$0xff] %v7028
    %7275 = vst [vmem:[#allocation11 + $0x148] sm:$0xff] %v7223
    %7276 = vst [vmem:[#allocation11 + $0x150] sm:$0xff] %v7032
    %7277 = vst [vmem:[#allocation11 + $0x158] sm:$0xff] %v7034
    %7278 = vst [vmem:[#allocation11 + $0x160] sm:$0xff] %v7228
    %7279 = vst [vmem:[#allocation11 + $0x168] sm:$0xff] %v7036
    %7280 = vst [vmem:[#allocation11 + $0x170] sm:$0xff] %v7038
    %7281 = vst [vmem:[#allocation11 + $0x178] sm:$0xff] %v7231
    // Predicated region
    $region30: #{tpu_custom_call.1} parent=1 // pred_check
      _
    $region31: #{tpu_custom_call.1} parent=1 // pred_check_branch
      %7283 = sbr.rel (0) target = $region33
    $region32: #{tpu_custom_call.1} parent=1 // pred_region
      %s7285 = ssub.s32 6144, 6144
      %7286 = vsyncadd [#allocation7], %s7285
      %s7287 = sshll.u32 [#allocation11], 4
      %s7288 = int_to_ptr.vmem [resolvable:$true] %s7287
      %7293 = dma.vmem_to_hbm [thread:$0]  %s7288, 6144, %s5, [#allocation7], 384, 384, 24
    $region33: #{tpu_custom_call.1} parent=1 // pred_fallthru
      _
    // Predicated region
    $region34: #{tpu_custom_call.1} parent=1 // pred_check
      _
    $region35: #{tpu_custom_call.1} parent=1 // pred_check_branch
      %7295 = sbr.rel (0) target = $region37
    $region36: #{tpu_custom_call.1} parent=1 // pred_region
      %7296 = dma.done [#allocation7], 6144
    $region37: #{tpu_custom_call.1} parent=1 // pred_fallthru
      _
    %7297 = vsyncpa [#allocation6], 1
    %7298 = vsyncpa [#allocation9], 1
    %7299 = vsyncpa [#allocation7], 1

</llo_original>
